<compile_context>
chip_gen: v7x
topology: tpu7x:2x2x1
jax: 0.10.0
libtpu: 0.0.40
codegen_flags: <defaults>
</compile_context>

<pallas_src>
import jax
import jax.numpy as jnp
from jax.experimental import pallas as pl
from jax.experimental.pallas import tpu as pltpu

BN_EPS = 1e-5


def _device_kind():
    try:
        return jax.devices()[0].device_kind.lower()
    except Exception:
        return ""


_KIND = _device_kind()
if ("v5" in _KIND) or ("v6" in _KIND):
    TILE_M = 1024                       # 128 MiB VMEM parts: fat row tiles
    _VMEM_LIMIT = 64 * 1024 * 1024      # explicit headroom past the scoped default
else:
    TILE_M = 512                        # v7x (64 MiB / TC) and unknown: conservative
    _VMEM_LIMIT = None

_COMPILER_PARAMS = pltpu.CompilerParams(
    dimension_semantics=("parallel",),
    vmem_limit_bytes=_VMEM_LIMIT,
)


def _round_up(v, m):
    return ((v + m - 1) // m) * m


# ----------------------------- Pallas kernels ------------------------------

def _make_gemm_kernel(has_res, has_act, need_raw):
    """im2col GEMM kernel (used for the stride-2 downsample conv and as a
    fallback path) with fused residual add and fused next-layer BN+ReLU.

    Ref order: x, w, [r], [s, b], [o_raw], [o_act]
    """
    def kernel(*refs):
        i = 0
        x_ref = refs[i]; w_ref = refs[i + 1]; i += 2
        r_ref = None
        if has_res:
            r_ref = refs[i]; i += 1
        if has_act:
            s_ref, b_ref = refs[i], refs[i + 1]; i += 2
        acc = jnp.dot(x_ref[...], w_ref[...],
                      preferred_element_type=jnp.float32)
        if has_res:
            acc = acc + r_ref[...].astype(jnp.float32)
        if need_raw:
            refs[i][...] = acc.astype(refs[i].dtype); i += 1
        if has_act:
            refs[i][...] = jnp.maximum(acc * s_ref[...] + b_ref[...],
                                       0.0).astype(refs[i].dtype)
    return kernel


def _make_tap_kernel(has_res, has_act, need_raw, tm, G, wp2):
    """Shift/tap stride-1 3x3 conv kernel (no materialized im2col).

    Ref order: x0, x1, w9, [r], [s, b], [o_raw], [o_act], win(scratch)
      x0 = row tile i of the padded-flat activation, x1 = row tile i+1 (halo),
      win = assembled (tm + 2G, C) window, w9 = (9, C, Cout) tap weights.
    """
    offs = [G + (ky - 1) * wp2 + (kx - 1) for ky in range(3) for kx in range(3)]

    def kernel(*refs):
        i = 0
        x0 = refs[i]; x1 = refs[i + 1]; w9 = refs[i + 2]; i += 3
        r_ref = None
        if has_res:
            r_ref = refs[i]; i += 1
        if has_act:
            s_ref, b_ref = refs[i], refs[i + 1]; i += 2
        win = refs[-1]                   # scratch ref is last
        outs = refs[i:-1]

        # assemble the halo window once per row tile (tm >= 2G by construction)
        win[0:tm, :] = x0[...]
        win[tm:tm + 2 * G, :] = x1[0:2 * G, :]

        acc = None
        for t in range(9):               # unrolled tap reduction on the MXU
            part = jnp.dot(win[pl.ds(offs[t], tm), :], w9[t],
                           preferred_element_type=jnp.float32)
            acc = part if acc is None else acc + part
        if has_res:
            acc = acc + r_ref[...].astype(jnp.float32)
        oi = 0
        if need_raw:
            outs[oi][...] = acc.astype(outs[oi].dtype); oi += 1
        if has_act:
            outs[oi][...] = jnp.maximum(acc * s_ref[...] + b_ref[...],
                                        0.0).astype(outs[oi].dtype)
    return kernel


# --------------------------- layout helpers ---------------------------------

def _s1_geom(N, H, W):
    """Geometry of the padded-flat row space used by the stride-1 tap kernel."""
    wp2 = W + 2
    G = wp2 + 1                          # max |tap offset| = (W+2) + 1
    R = N * (H + 2) * wp2                # rows of the spatially padded map
    tm = min(TILE_M, _round_up(R, 16))
    tm = max(tm, _round_up(2 * G, 16))   # halo must fit in one extra tile
    Rp = _round_up(R, tm)
    return {"wp2": wp2, "G": G, "R": R, "tm": tm, "Rp": Rp}


def _nhwc_to_slab(v, geom):
    """(N,H,W,C) -> (Rp, C) padded-flat slab (zero ring, zero tail rows)."""
    N, H, W, C = v.shape
    vp = jnp.pad(v, ((0, 0), (1, 1), (1, 1), (0, 0)))
    s = vp.reshape(geom["R"], C)
    return jnp.pad(s, ((0, geom["Rp"] - geom["R"]), (0, 0)))


def _slab_interior(slab, N, H, W):
    """(Rp, C) padded-flat slab -> (N,H,W,C) interior."""
    C = slab.shape[-1]
    R = N * (H + 2) * (W + 2)
    return slab[:R].reshape(N, H + 2, W + 2, C)[:, 1:-1, 1:-1, :]


# ------------------------------ conv wrappers --------------------------------

def _im2col_conv(a_nhwc, w, stride, residual=None, next_bn=None,
                 need_raw=True, raw_dtype=jnp.bfloat16):
    """Generic 3x3 conv (pad=1, no bias) as an im2col GEMM with fused epilogue.
    Returns compact row-slab outputs (raw, act, (N,Ho,Wo,Cout))."""
    N, H, W, Cin = a_nhwc.shape
    Cout = w.shape[-1]
    Ho = (H - 1) // stride + 1
    Wo = (W - 1) // stride + 1

    ap = jnp.pad(a_nhwc.astype(jnp.bfloat16), ((0, 0), (1, 1), (1, 1), (0, 0)))
    taps = [ap[:, ky:ky + stride * (Ho - 1) + 1:stride,
               kx:kx + stride * (Wo - 1) + 1:stride, :]
            for ky in range(3) for kx in range(3)]
    K = 9 * Cin
    x_col = jnp.concatenate(taps, axis=-1).reshape(N * Ho * Wo, K)
    w_mat = w.reshape(K, Cout).astype(jnp.bfloat16)

    M = N * Ho * Wo
    Mk = M
    if Mk < 16:                          # tiny-map corner: keep block <= array
        x_col = jnp.pad(x_col, ((0, 16 - Mk), (0, 0)))
        if residual is not None:
            residual = jnp.pad(residual, ((0, 16 - Mk), (0, 0)))
        Mk = 16
    tm = min(TILE_M, (Mk // 16) * 16)
    grid = pl.cdiv(Mk, tm)               # ragged last tile; no full-buffer pad

    has_res = residual is not None
    has_act = next_bn is not None

    inputs = [x_col, w_mat]
    in_specs = [pl.BlockSpec((tm, K), lambda i: (i, 0)),
                pl.BlockSpec((K, Cout), lambda i: (0, 0))]
    if has_res:
        inputs.append(residual)
        in_specs.append(pl.BlockSpec((tm, Cout), lambda i: (i, 0)))
    if has_act:
        s, b = next_bn
        inputs += [s.reshape(1, Cout).astype(jnp.float32),
                   b.reshape(1, Cout).astype(jnp.float32)]
        in_specs += [pl.BlockSpec((1, Cout), lambda i: (0, 0)),
                     pl.BlockSpec((1, Cout), lambda i: (0, 0))]

    out_shape, out_specs = [], []
    if need_raw:
        out_shape.append(jax.ShapeDtypeStruct((Mk, Cout), raw_dtype))
        out_specs.append(pl.BlockSpec((tm, Cout), lambda i: (i, 0)))
    if has_act:
        out_shape.append(jax.ShapeDtypeStruct((Mk, Cout), jnp.bfloat16))
        out_specs.append(pl.BlockSpec((tm, Cout), lambda i: (i, 0)))

    outs = pl.pallas_call(
        _make_gemm_kernel(has_res, has_act, need_raw),
        out_shape=tuple(out_shape),
        grid=(grid,),
        in_specs=in_specs,
        out_specs=tuple(out_specs),
        compiler_params=_COMPILER_PARAMS,
    )(*inputs)
    outs = list(outs)
    raw = outs.pop(0)[:M] if need_raw else None
    act = outs.pop(0)[:M] if has_act else None
    return raw, act, (N, Ho, Wo, Cout)


def conv3x3_down(a_nhwc, w, next_bn):
    """Stride-2 downsample conv + fused next BN+ReLU.  Returns NHWC (raw, act)."""
    raw, act, shp = _im2col_conv(a_nhwc, w, 2, None, next_bn,
                                 need_raw=True, raw_dtype=jnp.bfloat16)
    N, Ho, Wo, Cout = shp
    return raw.reshape(N, Ho, Wo, Cout), act.reshape(N, Ho, Wo, Cout)


def _conv3x3_s1_tap(a_nhwc, w, residual_slab, next_bn, need_raw, raw_dtype, geom):
    """Stride-1 conv via the halo/tap kernel (no HBM im2col)."""
    N, H, W, C = a_nhwc.shape
    Cout = w.shape[-1]
    tm, G, R, Rp, wp2 = geom["tm"], geom["G"], geom["R"], geom["Rp"], geom["wp2"]
    nt = Rp // tm

    ap = jnp.pad(a_nhwc.astype(jnp.bfloat16), ((0, 0), (1, 1), (1, 1), (0, 0)))
    A = ap.reshape(R, C)
    # shift by G rows so all tap offsets are in bounds; pad tail so that the
    # i+1 halo block of the last tile is fully in bounds (total rows = Rp + tm).
    A_pad = jnp.pad(A, ((G, Rp + tm - G - R), (0, 0)))
    w9 = w.reshape(9, C, Cout).astype(jnp.bfloat16)

    has_res = residual_slab is not None
    has_act = next_bn is not None

    inputs = [A_pad, A_pad, w9]
    in_specs = [pl.BlockSpec((tm, C), lambda i: (i, 0)),
                pl.BlockSpec((tm, C), lambda i: (i + 1, 0)),
                pl.BlockSpec((9, C, Cout), lambda i: (0, 0, 0))]
    if has_res:
        inputs.append(residual_slab)
        in_specs.append(pl.BlockSpec((tm, Cout), lambda i: (i, 0)))
    if has_act:
        s, b = next_bn
        inputs += [s.reshape(1, Cout).astype(jnp.float32),
                   b.reshape(1, Cout).astype(jnp.float32)]
        in_specs += [pl.BlockSpec((1, Cout), lambda i: (0, 0)),
                     pl.BlockSpec((1, Cout), lambda i: (0, 0))]

    out_shape, out_specs = [], []
    if need_raw:
        out_shape.append(jax.ShapeDtypeStruct((Rp, Cout), raw_dtype))
        out_specs.append(pl.BlockSpec((tm, Cout), lambda i: (i, 0)))
    if has_act:
        out_shape.append(jax.ShapeDtypeStruct((Rp, Cout), jnp.bfloat16))
        out_specs.append(pl.BlockSpec((tm, Cout), lambda i: (i, 0)))

    outs = pl.pallas_call(
        _make_tap_kernel(has_res, has_act, need_raw, tm, G, wp2),
        out_shape=tuple(out_shape),
        grid=(nt,),
        in_specs=in_specs,
        out_specs=tuple(out_specs),
        scratch_shapes=[pltpu.VMEM((tm + 2 * G, C), jnp.bfloat16)],
        compiler_params=_COMPILER_PARAMS,
    )(*inputs)
    outs = list(outs)
    raw_slab = outs.pop(0) if need_raw else None
    act = _slab_interior(outs.pop(0), N, H, W) if has_act else None
    return raw_slab, act


_TAP_KERNEL_OK = [None]


def _tap_kernel_supported():
    """One-time compile + numeric probe of the tap kernel; falls back if needed."""
    if _TAP_KERNEL_OK[0] is None:
        ok = False
        try:
            key = jax.random.PRNGKey(123)
            ka, kw = jax.random.split(key)
            a = jax.random.normal(ka, (1, 5, 6, 8), jnp.float32)
            w = 0.2 * jax.random.normal(kw, (3, 3, 8, 16), jnp.float32)
            s = jnp.ones((16,), jnp.float32)
            b = jnp.zeros((16,), jnp.float32)
            geom = _s1_geom(1, 5, 6)
            raw_slab, _ = _conv3x3_s1_tap(a.astype(jnp.bfloat16), w, None,
                                          (s, b), True, jnp.float32, geom)
            got = _slab_interior(raw_slab, 1, 5, 6)
            ref = jax.lax.conv_general_dilated(
                a, w, (1, 1), ((1, 1), (1, 1)),
                dimension_numbers=("NHWC", "HWIO", "NHWC"),
                precision=jax.lax.Precision.HIGHEST)
            got = jax.block_until_ready(got)
            err = float(jnp.max(jnp.abs(got - ref)))
            den = float(jnp.max(jnp.abs(ref))) + 1e-6
            ok = bool(err / den < 0.05)
        except Exception:
            ok = False
        _TAP_KERNEL_OK[0] = ok
    return _TAP_KERNEL_OK[0]


def conv3x3_s1(a_nhwc, w, residual_slab=None, residual_nhwc=None,
               next_bn=None, need_raw=True, raw_dtype=jnp.bfloat16):
    """Stride-1 3x3 conv with fused residual + next BN+ReLU.

    Residuals and the raw output live in the padded-flat (Rp, Cout) row space;
    the activated output is returned as compact NHWC bf16.
    """
    N, H, W, _ = a_nhwc.shape
    Cout = w.shape[-1]
    geom = _s1_geom(N, H, W)
    if residual_nhwc is not None:
        residual_slab = _nhwc_to_slab(residual_nhwc, geom)
    if _tap_kernel_supported():
        return _conv3x3_s1_tap(a_nhwc, w, residual_slab, next_bn,
                               need_raw, raw_dtype, geom)
    # Fallback: fused im2col GEMM (kept for toolchains without the tap kernel).
    res_c = None
    if residual_slab is not None:
        res_c = _slab_interior(residual_slab, N, H, W).reshape(N * H * W, Cout)
    raw_c, act_c, _ = _im2col_conv(a_nhwc, w, 1, res_c, next_bn,
                                   need_raw, raw_dtype)
    raw_slab = (_nhwc_to_slab(raw_c.reshape(N, H, W, Cout), geom)
                if need_raw else None)
    act = act_c.reshape(N, H, W, Cout) if next_bn is not None else None
    return raw_slab, act


# ----------------------- parameters (deterministic init) --------------------

def _bn_params(key, c):
    k1, k2, k3, k4 = jax.random.split(key, 4)
    gamma = 1.0 + 0.1 * jax.random.normal(k1, (c,), jnp.float32)
    beta = 0.1 * jax.random.normal(k2, (c,), jnp.float32)
    mean = 0.1 * jax.random.normal(k3, (c,), jnp.float32)
    var = jnp.abs(1.0 + 0.1 * jax.random.normal(k4, (c,), jnp.float32))
    scale = gamma / jnp.sqrt(var + BN_EPS)      # eval-mode folded BN
    bias = beta - mean * scale
    return scale, bias


def _conv_w(key, cin, cout):
    # (3,3,Cin,Cout) == PyTorch (Cout,Cin,3,3) transposed to (kH,kW,Cin,Cout)
    std = (2.0 / (9 * cin)) ** 0.5
    return std * jax.random.normal(key, (3, 3, cin, cout), jnp.float32)


def init_feature_encoder(key, in_channels, chns):
    params = []
    prev = in_channels
    for out_c in chns:
        key, *ks = jax.random.split(key, 11)
        stage = {
            "down_bn": _bn_params(ks[0], prev),
            "down_w": _conv_w(ks[1], prev, out_c),
            "res": [],
        }
        for r in range(2):
            stage["res"].append({
                "bn1": _bn_params(ks[2 + 4 * r], out_c),
                "w1": _conv_w(ks[3 + 4 * r], out_c, out_c),
                "bn2": _bn_params(ks[4 + 4 * r], out_c),
                "w2": _conv_w(ks[5 + 4 * r], out_c, out_c),
            })
        params.append(stage)
        prev = out_c
    return params


# ------------------------------- forward ------------------------------------

def feature_encoder_forward(params, x_nchw):
    """Replicates FeatureEncoder.forward: returns list of NCHW feature maps.

    Pre-activation wiring with fused epilogues:
      downsample conv      -> emits y and relu(bn11(y))
      resblock conv1       -> emits relu(bn12(h)) only
      resblock conv2 (+res)-> emits z (or the stage feature) and the next BN+ReLU
    """
    x = jnp.transpose(x_nchw, (0, 2, 3, 1)).astype(jnp.float32)  # NCHW -> NHWC
    n_stages = len(params)
    feats = []
    a = None
    for si, stage in enumerate(params):
        if si == 0:
            s, b = stage["down_bn"]
            a = jnp.maximum(x * s + b, 0.0)   # first BN+ReLU: plain jnp (XLA-fused)
        rp1, rp2 = stage["res"]
        # Downsample: stride-2 conv; epilogue applies ResBlock1's first BN+ReLU.
        y, a1 = conv3x3_down(a, stage["down_w"], next_bn=rp1["bn1"])
        N, Ho, Wo, Cout = a1.shape
        # ResBlock 1
        _, a2 = conv3x3_s1(a1, rp1["w1"], next_bn=rp1["bn2"], need_raw=False)
        z, a3 = conv3x3_s1(a2, rp1["w2"], residual_nhwc=y, next_bn=rp2["bn1"],
                           need_raw=True, raw_dtype=jnp.bfloat16)
        # ResBlock 2
        _, a4 = conv3x3_s1(a3, rp2["w1"], next_bn=rp2["bn2"], need_raw=False)
        next_bn = params[si + 1]["down_bn"] if si + 1 < n_stages else None
        out_slab, a_next = conv3x3_s1(a4, rp2["w2"], residual_slab=z,
                                      next_bn=next_bn, need_raw=True,
                                      raw_dtype=jnp.float32)
        a = a_next
        feat = _slab_interior(out_slab, N, Ho, Wo)            # (N,Ho,Wo,Cout) f32
        feats.append(jnp.transpose(feat, (0, 3, 1, 2)))       # back to NCHW
    return feats


# ------------------------- pure-JAX reference (f32) --------------------------

def _reference_forward(params, x_nchw):
    x = jnp.transpose(x_nchw, (0, 2, 3, 1)).astype(jnp.float32)

    def bnrelu(v, sb):
        s, b = sb
        return jnp.maximum(v * s + b, 0.0)

    def conv(v, w, stride):
        return jax.lax.conv_general_dilated(
            v, w, (stride, stride), ((1, 1), (1, 1)),
            dimension_numbers=("NHWC", "HWIO", "NHWC"),
            precision=jax.lax.Precision.HIGHEST)

    feats = []
    for stage in params:
        x = conv(bnrelu(x, stage["down_bn"]), stage["down_w"], 2)
        for rp in stage["res"]:
            h = conv(bnrelu(x, rp["bn1"]), rp["w1"], 1)
            x = conv(bnrelu(h, rp["bn2"]), rp["w2"], 1) + x
        feats.append(jnp.transpose(x, (0, 3, 1, 2)))
    return feats


if __name__ == "__main__":
    key = jax.random.PRNGKey(0)
    kx, kp = jax.random.split(key)

    N, C_in, H, W = 2, 4, 16, 16
    chns = [8, 16, 32, 32, 32]            # small synthetic channel config

    x = jax.random.normal(kx, (N, C_in, H, W), jnp.float32)
    params = init_feature_encoder(kp, C_in, chns)

    _ = _tap_kernel_supported()           # decide tap-kernel vs fallback up front

    forward = jax.jit(feature_encoder_forward)
    feats = forward(params, x)
    feats = jax.block_until_ready(feats)

    # shape check (stride-2, pad-1, k=3:  h -> (h-1)//2 + 1)
    expected, h, w = [], H, W
    for c in chns:
        h = (h - 1) // 2 + 1
        w = (w - 1) // 2 + 1
        expected.append((N, c, h, w))
    got = [tuple(int(d) for d in f.shape) for f in feats]
    assert got == expected, (got, expected)
    assert all(bool(jnp.isfinite(f).all()) for f in feats)

    # numerical check vs pure-JAX f32 reference.  bf16 MXU operands + bf16
    # activations + bf16 residual slabs over 25 convs => ~1-2% expected relative
    # L2; gate at 5% (2x tighter than before) to catch real regressions.
    ref = jax.block_until_ready(_reference_forward(params, x))
    for f, r in zip(feats, ref):
        err = float(jnp.linalg.norm((f - r).ravel()))
        den = float(jnp.linalg.norm(r.ravel())) + 1e-6
        assert err / den < 5e-2, ("relative L2 error too large", err / den)

    print("KERNEL_OK")
</pallas_src>

<mosaic_0001>
module attributes {stable_mosaic.version = 11 : i64} {
  func.func @kernel(%arg0: i32, %arg1: memref<64x8xbf16, #tpu.memory_space<vmem>>, %arg2: memref<64x8xbf16, #tpu.memory_space<vmem>>, %arg3: memref<9x8x16xbf16, #tpu.memory_space<vmem>>, %arg4: memref<1x16xf32, #tpu.memory_space<vmem>>, %arg5: memref<1x16xf32, #tpu.memory_space<vmem>>, %arg6: memref<64x16xf32, #tpu.memory_space<vmem>>, %arg7: memref<64x16xbf16, #tpu.memory_space<vmem>>, %arg8: memref<82x8xbf16, #tpu.memory_space<vmem>>) attributes {dimension_semantics = [#tpu.dimension_semantics<parallel>], iteration_bounds = array<i64: 1>, scalar_prefetch = 0 : i64, scratch_operands = 1 : i64, tpu.core_type = #tpu.core_type<tc>, window_params = [{transform_indices = @transform_0, window_bounds = array<i64: 64, 8>}, {transform_indices = @transform_1, window_bounds = array<i64: 64, 8>}, {pipeline_mode = #tpu.pipeline_mode<synchronous>, transform_indices = @transform_2, window_bounds = array<i64: 9, 8, 16>}, {pipeline_mode = #tpu.pipeline_mode<synchronous>, transform_indices = @transform_3, window_bounds = array<i64: 1, 16>}, {pipeline_mode = #tpu.pipeline_mode<synchronous>, transform_indices = @transform_4, window_bounds = array<i64: 1, 16>}, {transform_indices = @transform_5, window_bounds = array<i64: 64, 16>}, {transform_indices = @transform_6, window_bounds = array<i64: 64, 16>}]} {
    %c0 = arith.constant 0 : index
    %c0_0 = arith.constant 0 : index
    %0 = vector.load %arg1[%c0, %c0_0] : memref<64x8xbf16, #tpu.memory_space<vmem>>, vector<64x8xbf16>
    %c0_1 = arith.constant 0 : index
    %c0_2 = arith.constant 0 : index
    %1 = vector.load %arg8[%c0_1, %c0_2] : memref<82x8xbf16, #tpu.memory_space<vmem>>, vector<64x8xbf16>
    tpu.vector_store %arg8[%c0_1, %c0_2], %0 {strides = array<i32>} : memref<82x8xbf16, #tpu.memory_space<vmem>>, vector<64x8xbf16>,
    %c0_3 = arith.constant 0 : index
    %c0_4 = arith.constant 0 : index
    %2 = vector.load %arg2[%c0_3, %c0_4] : memref<64x8xbf16, #tpu.memory_space<vmem>>, vector<18x8xbf16>
    %c64 = arith.constant 64 : index
    %c0_5 = arith.constant 0 : index
    %3 = vector.load %arg8[%c64, %c0_5] : memref<82x8xbf16, #tpu.memory_space<vmem>>, vector<18x8xbf16>
    tpu.vector_store %arg8[%c64, %c0_5], %2 {strides = array<i32>} : memref<82x8xbf16, #tpu.memory_space<vmem>>, vector<18x8xbf16>,
    %c0_6 = arith.constant 0 : index
    %c0_7 = arith.constant 0 : index
    %4 = vector.load %arg8[%c0_6, %c0_7] : memref<82x8xbf16, #tpu.memory_space<vmem>>, vector<64x8xbf16>
    %c0_8 = arith.constant 0 : index
    %c0_9 = arith.constant 0 : index
    %c0_10 = arith.constant 0 : index
    %5 = vector.load %arg3[%c0_8, %c0_9, %c0_10] : memref<9x8x16xbf16, #tpu.memory_space<vmem>>, vector<1x8x16xbf16>
    %6 = vector.shape_cast %5 : vector<1x8x16xbf16> to vector<8x16xbf16>
    %cst = arith.constant dense<0.000000e+00> : vector<64x16xf32>
    %7 = tpu.matmul %4, %6, %cst {dimension_numbers = #tpu.dot_dimension_numbers<[1], [0], [0], [1], [0, 0, 1, 1], [], []>} : vector<64x8xbf16>, vector<8x16xbf16>, vector<64x16xf32> -> vector<64x16xf32>
    %c1 = arith.constant 1 : index
    %c0_11 = arith.constant 0 : index
    %8 = vector.load %arg8[%c1, %c0_11] : memref<82x8xbf16, #tpu.memory_space<vmem>>, vector<64x8xbf16>
    %c1_12 = arith.constant 1 : index
    %c0_13 = arith.constant 0 : index
    %c0_14 = arith.constant 0 : index
    %9 = vector.load %arg3[%c1_12, %c0_13, %c0_14] : memref<9x8x16xbf16, #tpu.memory_space<vmem>>, vector<1x8x16xbf16>
    %10 = vector.shape_cast %9 : vector<1x8x16xbf16> to vector<8x16xbf16>
    %cst_15 = arith.constant dense<0.000000e+00> : vector<64x16xf32>
    %11 = tpu.matmul %8, %10, %cst_15 {dimension_numbers = #tpu.dot_dimension_numbers<[1], [0], [0], [1], [0, 0, 1, 1], [], []>} : vector<64x8xbf16>, vector<8x16xbf16>, vector<64x16xf32> -> vector<64x16xf32>
    %12 = arith.addf %7, %11 : vector<64x16xf32>
    %c2 = arith.constant 2 : index
    %c0_16 = arith.constant 0 : index
    %13 = vector.load %arg8[%c2, %c0_16] : memref<82x8xbf16, #tpu.memory_space<vmem>>, vector<64x8xbf16>
    %c2_17 = arith.constant 2 : index
    %c0_18 = arith.constant 0 : index
    %c0_19 = arith.constant 0 : index
    %14 = vector.load %arg3[%c2_17, %c0_18, %c0_19] : memref<9x8x16xbf16, #tpu.memory_space<vmem>>, vector<1x8x16xbf16>
    %15 = vector.shape_cast %14 : vector<1x8x16xbf16> to vector<8x16xbf16>
    %cst_20 = arith.constant dense<0.000000e+00> : vector<64x16xf32>
    %16 = tpu.matmul %13, %15, %cst_20 {dimension_numbers = #tpu.dot_dimension_numbers<[1], [0], [0], [1], [0, 0, 1, 1], [], []>} : vector<64x8xbf16>, vector<8x16xbf16>, vector<64x16xf32> -> vector<64x16xf32>
    %17 = arith.addf %12, %16 : vector<64x16xf32>
    %c8 = arith.constant 8 : index
    %c0_21 = arith.constant 0 : index
    %18 = vector.load %arg8[%c8, %c0_21] : memref<82x8xbf16, #tpu.memory_space<vmem>>, vector<64x8xbf16>
    %c3 = arith.constant 3 : index
    %c0_22 = arith.constant 0 : index
    %c0_23 = arith.constant 0 : index
    %19 = vector.load %arg3[%c3, %c0_22, %c0_23] : memref<9x8x16xbf16, #tpu.memory_space<vmem>>, vector<1x8x16xbf16>
    %20 = vector.shape_cast %19 : vector<1x8x16xbf16> to vector<8x16xbf16>
    %cst_24 = arith.constant dense<0.000000e+00> : vector<64x16xf32>
    %21 = tpu.matmul %18, %20, %cst_24 {dimension_numbers = #tpu.dot_dimension_numbers<[1], [0], [0], [1], [0, 0, 1, 1], [], []>} : vector<64x8xbf16>, vector<8x16xbf16>, vector<64x16xf32> -> vector<64x16xf32>
    %22 = arith.addf %17, %21 : vector<64x16xf32>
    %c9 = arith.constant 9 : index
    %c0_25 = arith.constant 0 : index
    %23 = vector.load %arg8[%c9, %c0_25] : memref<82x8xbf16, #tpu.memory_space<vmem>>, vector<64x8xbf16>
    %c4 = arith.constant 4 : index
    %c0_26 = arith.constant 0 : index
    %c0_27 = arith.constant 0 : index
    %24 = vector.load %arg3[%c4, %c0_26, %c0_27] : memref<9x8x16xbf16, #tpu.memory_space<vmem>>, vector<1x8x16xbf16>
    %25 = vector.shape_cast %24 : vector<1x8x16xbf16> to vector<8x16xbf16>
    %cst_28 = arith.constant dense<0.000000e+00> : vector<64x16xf32>
    %26 = tpu.matmul %23, %25, %cst_28 {dimension_numbers = #tpu.dot_dimension_numbers<[1], [0], [0], [1], [0, 0, 1, 1], [], []>} : vector<64x8xbf16>, vector<8x16xbf16>, vector<64x16xf32> -> vector<64x16xf32>
    %27 = arith.addf %22, %26 : vector<64x16xf32>
    %c10 = arith.constant 10 : index
    %c0_29 = arith.constant 0 : index
    %28 = vector.load %arg8[%c10, %c0_29] : memref<82x8xbf16, #tpu.memory_space<vmem>>, vector<64x8xbf16>
    %c5 = arith.constant 5 : index
    %c0_30 = arith.constant 0 : index
    %c0_31 = arith.constant 0 : index
    %29 = vector.load %arg3[%c5, %c0_30, %c0_31] : memref<9x8x16xbf16, #tpu.memory_space<vmem>>, vector<1x8x16xbf16>
    %30 = vector.shape_cast %29 : vector<1x8x16xbf16> to vector<8x16xbf16>
    %cst_32 = arith.constant dense<0.000000e+00> : vector<64x16xf32>
    %31 = tpu.matmul %28, %30, %cst_32 {dimension_numbers = #tpu.dot_dimension_numbers<[1], [0], [0], [1], [0, 0, 1, 1], [], []>} : vector<64x8xbf16>, vector<8x16xbf16>, vector<64x16xf32> -> vector<64x16xf32>
    %32 = arith.addf %27, %31 : vector<64x16xf32>
    %c16 = arith.constant 16 : index
    %c0_33 = arith.constant 0 : index
    %33 = vector.load %arg8[%c16, %c0_33] : memref<82x8xbf16, #tpu.memory_space<vmem>>, vector<64x8xbf16>
    %c6 = arith.constant 6 : index
    %c0_34 = arith.constant 0 : index
    %c0_35 = arith.constant 0 : index
    %34 = vector.load %arg3[%c6, %c0_34, %c0_35] : memref<9x8x16xbf16, #tpu.memory_space<vmem>>, vector<1x8x16xbf16>
    %35 = vector.shape_cast %34 : vector<1x8x16xbf16> to vector<8x16xbf16>
    %cst_36 = arith.constant dense<0.000000e+00> : vector<64x16xf32>
    %36 = tpu.matmul %33, %35, %cst_36 {dimension_numbers = #tpu.dot_dimension_numbers<[1], [0], [0], [1], [0, 0, 1, 1], [], []>} : vector<64x8xbf16>, vector<8x16xbf16>, vector<64x16xf32> -> vector<64x16xf32>
    %37 = arith.addf %32, %36 : vector<64x16xf32>
    %c17 = arith.constant 17 : index
    %c0_37 = arith.constant 0 : index
    %38 = vector.load %arg8[%c17, %c0_37] : memref<82x8xbf16, #tpu.memory_space<vmem>>, vector<64x8xbf16>
    %c7 = arith.constant 7 : index
    %c0_38 = arith.constant 0 : index
    %c0_39 = arith.constant 0 : index
    %39 = vector.load %arg3[%c7, %c0_38, %c0_39] : memref<9x8x16xbf16, #tpu.memory_space<vmem>>, vector<1x8x16xbf16>
    %40 = vector.shape_cast %39 : vector<1x8x16xbf16> to vector<8x16xbf16>
    %cst_40 = arith.constant dense<0.000000e+00> : vector<64x16xf32>
    %41 = tpu.matmul %38, %40, %cst_40 {dimension_numbers = #tpu.dot_dimension_numbers<[1], [0], [0], [1], [0, 0, 1, 1], [], []>} : vector<64x8xbf16>, vector<8x16xbf16>, vector<64x16xf32> -> vector<64x16xf32>
    %42 = arith.addf %37, %41 : vector<64x16xf32>
    %c18 = arith.constant 18 : index
    %c0_41 = arith.constant 0 : index
    %43 = vector.load %arg8[%c18, %c0_41] : memref<82x8xbf16, #tpu.memory_space<vmem>>, vector<64x8xbf16>
    %c8_42 = arith.constant 8 : index
    %c0_43 = arith.constant 0 : index
    %c0_44 = arith.constant 0 : index
    %44 = vector.load %arg3[%c8_42, %c0_43, %c0_44] : memref<9x8x16xbf16, #tpu.memory_space<vmem>>, vector<1x8x16xbf16>
    %45 = vector.shape_cast %44 : vector<1x8x16xbf16> to vector<8x16xbf16>
    %cst_45 = arith.constant dense<0.000000e+00> : vector<64x16xf32>
    %46 = tpu.matmul %43, %45, %cst_45 {dimension_numbers = #tpu.dot_dimension_numbers<[1], [0], [0], [1], [0, 0, 1, 1], [], []>} : vector<64x8xbf16>, vector<8x16xbf16>, vector<64x16xf32> -> vector<64x16xf32>
    %47 = arith.addf %42, %46 : vector<64x16xf32>
    %c0_46 = arith.constant 0 : index
    %c0_47 = arith.constant 0 : index
    %48 = vector.load %arg6[%c0_46, %c0_47] : memref<64x16xf32, #tpu.memory_space<vmem>>, vector<64x16xf32>
    tpu.vector_store %arg6[%c0_46, %c0_47], %47 {strides = array<i32>} : memref<64x16xf32, #tpu.memory_space<vmem>>, vector<64x16xf32>,
    %c0_48 = arith.constant 0 : index
    %c0_49 = arith.constant 0 : index
    %49 = vector.load %arg4[%c0_48, %c0_49] : memref<1x16xf32, #tpu.memory_space<vmem>>, vector<1x16xf32>
    %50 = vector.broadcast %49 : vector<1x16xf32> to vector<64x16xf32>
    %51 = arith.mulf %47, %50 : vector<64x16xf32>
    %c0_50 = arith.constant 0 : index
    %c0_51 = arith.constant 0 : index
    %52 = vector.load %arg5[%c0_50, %c0_51] : memref<1x16xf32, #tpu.memory_space<vmem>>, vector<1x16xf32>
    %53 = vector.broadcast %52 : vector<1x16xf32> to vector<64x16xf32>
    %54 = arith.addf %51, %53 : vector<64x16xf32>
    %cst_52 = arith.constant 0.000000e+00 : f32
    %55 = vector.broadcast %cst_52 : f32 to vector<64x16xf32>
    %56 = arith.maximumf %54, %55 : vector<64x16xf32>
    %57 = arith.truncf %56 : vector<64x16xf32> to vector<64x16xbf16>
    %c0_53 = arith.constant 0 : index
    %c0_54 = arith.constant 0 : index
    %58 = vector.load %arg7[%c0_53, %c0_54] : memref<64x16xbf16, #tpu.memory_space<vmem>>, vector<64x16xbf16>
    tpu.vector_store %arg7[%c0_53, %c0_54], %57 {strides = array<i32>} : memref<64x16xbf16, #tpu.memory_space<vmem>>, vector<64x16xbf16>,
    return
  }
  func.func @transform_0(%arg0: i32) -> (i32, i32) {
    %c0_i32 = arith.constant 0 : i32
    %c0_i32_0 = arith.constant 0 : i32
    return %arg0, %c0_i32 : i32, i32
  }
  func.func @transform_1(%arg0: i32) -> (i32, i32) {
    %c1_i32 = arith.constant 1 : i32
    %0 = arith.addi %arg0, %c1_i32 : i32
    %c0_i32 = arith.constant 0 : i32
    %c0_i32_0 = arith.constant 0 : i32
    return %0, %c0_i32 : i32, i32
  }
  func.func @transform_2(%arg0: i32) -> (i32, i32, i32) {
    %c0_i32 = arith.constant 0 : i32
    %c0_i32_0 = arith.constant 0 : i32
    %c0_i32_1 = arith.constant 0 : i32
    %c0_i32_2 = arith.constant 0 : i32
    return %c0_i32, %c0_i32_0, %c0_i32_1 : i32, i32, i32
  }
  func.func @transform_3(%arg0: i32) -> (i32, i32) {
    %c0_i32 = arith.constant 0 : i32
    %c0_i32_0 = arith.constant 0 : i32
    %c0_i32_1 = arith.constant 0 : i32
    return %c0_i32, %c0_i32_0 : i32, i32
  }
  func.func @transform_4(%arg0: i32) -> (i32, i32) {
    %c0_i32 = arith.constant 0 : i32
    %c0_i32_0 = arith.constant 0 : i32
    %c0_i32_1 = arith.constant 0 : i32
    return %c0_i32, %c0_i32_0 : i32, i32
  }
  func.func @transform_5(%arg0: i32) -> (i32, i32) {
    %c0_i32 = arith.constant 0 : i32
    %c0_i32_0 = arith.constant 0 : i32
    return %arg0, %c0_i32 : i32, i32
  }
  func.func @transform_6(%arg0: i32) -> (i32, i32) {
    %c0_i32 = arith.constant 0 : i32
    %c0_i32_0 = arith.constant 0 : i32
    return %arg0, %c0_i32 : i32, i32
  }
}

module attributes {stable_mosaic.version = 11 : i64} {
  func.func @kernel(%arg0: i32, %arg1: memref<128x36xbf16, #tpu.memory_space<vmem>>, %arg2: memref<36x8xbf16, #tpu.memory_space<vmem>>, %arg3: memref<1x8xf32, #tpu.memory_space<vmem>>, %arg4: memref<1x8xf32, #tpu.memory_space<vmem>>, %arg5: memref<128x8xbf16, #tpu.memory_space<vmem>>, %arg6: memref<128x8xbf16, #tpu.memory_space<vmem>>) attributes {dimension_semantics = [#tpu.dimension_semantics<parallel>], iteration_bounds = array<i64: 1>, scalar_prefetch = 0 : i64, scratch_operands = 0 : i64, tpu.core_type = #tpu.core_type<tc>, window_params = [{transform_indices = @transform_0, window_bounds = array<i64: 128, 36>}, {pipeline_mode = #tpu.pipeline_mode<synchronous>, transform_indices = @transform_1, window_bounds = array<i64: 36, 8>}, {pipeline_mode = #tpu.pipeline_mode<synchronous>, transform_indices = @transform_2, window_bounds = array<i64: 1, 8>}, {pipeline_mode = #tpu.pipeline_mode<synchronous>, transform_indices = @transform_3, window_bounds = array<i64: 1, 8>}, {transform_indices = @transform_4, window_bounds = array<i64: 128, 8>}, {transform_indices = @transform_5, window_bounds = array<i64: 128, 8>}]} {
    %c0 = arith.constant 0 : index
    %c0_0 = arith.constant 0 : index
    %0 = vector.load %arg1[%c0, %c0_0] : memref<128x36xbf16, #tpu.memory_space<vmem>>, vector<128x36xbf16>
    %c0_1 = arith.constant 0 : index
    %c0_2 = arith.constant 0 : index
    %1 = vector.load %arg2[%c0_1, %c0_2] : memref<36x8xbf16, #tpu.memory_space<vmem>>, vector<36x8xbf16>
    %cst = arith.constant dense<0.000000e+00> : vector<128x8xf32>
    %2 = tpu.matmul %0, %1, %cst {dimension_numbers = #tpu.dot_dimension_numbers<[1], [0], [0], [1], [0, 0, 1, 1], [], []>} : vector<128x36xbf16>, vector<36x8xbf16>, vector<128x8xf32> -> vector<128x8xf32>
    %3 = arith.truncf %2 : vector<128x8xf32> to vector<128x8xbf16>
    %c0_3 = arith.constant 0 : index
    %c0_4 = arith.constant 0 : index
    %4 = vector.load %arg5[%c0_3, %c0_4] : memref<128x8xbf16, #tpu.memory_space<vmem>>, vector<128x8xbf16>
    tpu.vector_store %arg5[%c0_3, %c0_4], %3 {strides = array<i32>} : memref<128x8xbf16, #tpu.memory_space<vmem>>, vector<128x8xbf16>,
    %c0_5 = arith.constant 0 : index
    %c0_6 = arith.constant 0 : index
    %5 = vector.load %arg3[%c0_5, %c0_6] : memref<1x8xf32, #tpu.memory_space<vmem>>, vector<1x8xf32>
    %6 = vector.broadcast %5 : vector<1x8xf32> to vector<128x8xf32>
    %7 = arith.mulf %2, %6 : vector<128x8xf32>
    %c0_7 = arith.constant 0 : index
    %c0_8 = arith.constant 0 : index
    %8 = vector.load %arg4[%c0_7, %c0_8] : memref<1x8xf32, #tpu.memory_space<vmem>>, vector<1x8xf32>
    %9 = vector.broadcast %8 : vector<1x8xf32> to vector<128x8xf32>
    %10 = arith.addf %7, %9 : vector<128x8xf32>
    %cst_9 = arith.constant 0.000000e+00 : f32
    %11 = vector.broadcast %cst_9 : f32 to vector<128x8xf32>
    %12 = arith.maximumf %10, %11 : vector<128x8xf32>
    %13 = arith.truncf %12 : vector<128x8xf32> to vector<128x8xbf16>
    %c0_10 = arith.constant 0 : index
    %c0_11 = arith.constant 0 : index
    %14 = vector.load %arg6[%c0_10, %c0_11] : memref<128x8xbf16, #tpu.memory_space<vmem>>, vector<128x8xbf16>
    tpu.vector_store %arg6[%c0_10, %c0_11], %13 {strides = array<i32>} : memref<128x8xbf16, #tpu.memory_space<vmem>>, vector<128x8xbf16>,
    return
  }
  func.func @transform_0(%arg0: i32) -> (i32, i32) {
    %c0_i32 = arith.constant 0 : i32
    %c0_i32_0 = arith.constant 0 : i32
    return %arg0, %c0_i32 : i32, i32
  }
  func.func @transform_1(%arg0: i32) -> (i32, i32) {
    %c0_i32 = arith.constant 0 : i32
    %c0_i32_0 = arith.constant 0 : i32
    %c0_i32_1 = arith.constant 0 : i32
    return %c0_i32, %c0_i32_0 : i32, i32
  }
  func.func @transform_2(%arg0: i32) -> (i32, i32) {
    %c0_i32 = arith.constant 0 : i32
    %c0_i32_0 = arith.constant 0 : i32
    %c0_i32_1 = arith.constant 0 : i32
    return %c0_i32, %c0_i32_0 : i32, i32
  }
  func.func @transform_3(%arg0: i32) -> (i32, i32) {
    %c0_i32 = arith.constant 0 : i32
    %c0_i32_0 = arith.constant 0 : i32
    %c0_i32_1 = arith.constant 0 : i32
    return %c0_i32, %c0_i32_0 : i32, i32
  }
  func.func @transform_4(%arg0: i32) -> (i32, i32) {
    %c0_i32 = arith.constant 0 : i32
    %c0_i32_0 = arith.constant 0 : i32
    return %arg0, %c0_i32 : i32, i32
  }
  func.func @transform_5(%arg0: i32) -> (i32, i32) {
    %c0_i32 = arith.constant 0 : i32
    %c0_i32_0 = arith.constant 0 : i32
    return %arg0, %c0_i32 : i32, i32
  }
}

module attributes {stable_mosaic.version = 11 : i64} {
  func.func @kernel(%arg0: i32, %arg1: memref<128x72xbf16, #tpu.memory_space<vmem>>, %arg2: memref<72x8xbf16, #tpu.memory_space<vmem>>, %arg3: memref<1x8xf32, #tpu.memory_space<vmem>>, %arg4: memref<1x8xf32, #tpu.memory_space<vmem>>, %arg5: memref<128x8xbf16, #tpu.memory_space<vmem>>) attributes {dimension_semantics = [#tpu.dimension_semantics<parallel>], iteration_bounds = array<i64: 1>, scalar_prefetch = 0 : i64, scratch_operands = 0 : i64, tpu.core_type = #tpu.core_type<tc>, window_params = [{transform_indices = @transform_0, window_bounds = array<i64: 128, 72>}, {pipeline_mode = #tpu.pipeline_mode<synchronous>, transform_indices = @transform_1, window_bounds = array<i64: 72, 8>}, {pipeline_mode = #tpu.pipeline_mode<synchronous>, transform_indices = @transform_2, window_bounds = array<i64: 1, 8>}, {pipeline_mode = #tpu.pipeline_mode<synchronous>, transform_indices = @transform_3, window_bounds = array<i64: 1, 8>}, {transform_indices = @transform_4, window_bounds = array<i64: 128, 8>}]} {
    %c0 = arith.constant 0 : index
    %c0_0 = arith.constant 0 : index
    %0 = vector.load %arg1[%c0, %c0_0] : memref<128x72xbf16, #tpu.memory_space<vmem>>, vector<128x72xbf16>
    %c0_1 = arith.constant 0 : index
    %c0_2 = arith.constant 0 : index
    %1 = vector.load %arg2[%c0_1, %c0_2] : memref<72x8xbf16, #tpu.memory_space<vmem>>, vector<72x8xbf16>
    %cst = arith.constant dense<0.000000e+00> : vector<128x8xf32>
    %2 = tpu.matmul %0, %1, %cst {dimension_numbers = #tpu.dot_dimension_numbers<[1], [0], [0], [1], [0, 0, 1, 1], [], []>} : vector<128x72xbf16>, vector<72x8xbf16>, vector<128x8xf32> -> vector<128x8xf32>
    %c0_3 = arith.constant 0 : index
    %c0_4 = arith.constant 0 : index
    %3 = vector.load %arg3[%c0_3, %c0_4] : memref<1x8xf32, #tpu.memory_space<vmem>>, vector<1x8xf32>
    %4 = vector.broadcast %3 : vector<1x8xf32> to vector<128x8xf32>
    %5 = arith.mulf %2, %4 : vector<128x8xf32>
    %c0_5 = arith.constant 0 : index
    %c0_6 = arith.constant 0 : index
    %6 = vector.load %arg4[%c0_5, %c0_6] : memref<1x8xf32, #tpu.memory_space<vmem>>, vector<1x8xf32>
    %7 = vector.broadcast %6 : vector<1x8xf32> to vector<128x8xf32>
    %8 = arith.addf %5, %7 : vector<128x8xf32>
    %cst_7 = arith.constant 0.000000e+00 : f32
    %9 = vector.broadcast %cst_7 : f32 to vector<128x8xf32>
    %10 = arith.maximumf %8, %9 : vector<128x8xf32>
    %11 = arith.truncf %10 : vector<128x8xf32> to vector<128x8xbf16>
    %c0_8 = arith.constant 0 : index
    %c0_9 = arith.constant 0 : index
    %12 = vector.load %arg5[%c0_8, %c0_9] : memref<128x8xbf16, #tpu.memory_space<vmem>>, vector<128x8xbf16>
    tpu.vector_store %arg5[%c0_8, %c0_9], %11 {strides = array<i32>} : memref<128x8xbf16, #tpu.memory_space<vmem>>, vector<128x8xbf16>,
    return
  }
  func.func @transform_0(%arg0: i32) -> (i32, i32) {
    %c0_i32 = arith.constant 0 : i32
    %c0_i32_0 = arith.constant 0 : i32
    return %arg0, %c0_i32 : i32, i32
  }
  func.func @transform_1(%arg0: i32) -> (i32, i32) {
    %c0_i32 = arith.constant 0 : i32
    %c0_i32_0 = arith.constant 0 : i32
    %c0_i32_1 = arith.constant 0 : i32
    return %c0_i32, %c0_i32_0 : i32, i32
  }
  func.func @transform_2(%arg0: i32) -> (i32, i32) {
    %c0_i32 = arith.constant 0 : i32
    %c0_i32_0 = arith.constant 0 : i32
    %c0_i32_1 = arith.constant 0 : i32
    return %c0_i32, %c0_i32_0 : i32, i32
  }
  func.func @transform_3(%arg0: i32) -> (i32, i32) {
    %c0_i32 = arith.constant 0 : i32
    %c0_i32_0 = arith.constant 0 : i32
    %c0_i32_1 = arith.constant 0 : i32
    return %c0_i32, %c0_i32_0 : i32, i32
  }
  func.func @transform_4(%arg0: i32) -> (i32, i32) {
    %c0_i32 = arith.constant 0 : i32
    %c0_i32_0 = arith.constant 0 : i32
    return %arg0, %c0_i32 : i32, i32
  }
}

module attributes {stable_mosaic.version = 11 : i64} {
  func.func @kernel(%arg0: i32, %arg1: memref<128x72xbf16, #tpu.memory_space<vmem>>, %arg2: memref<72x8xbf16, #tpu.memory_space<vmem>>, %arg3: memref<128x8xbf16, #tpu.memory_space<vmem>>, %arg4: memref<1x8xf32, #tpu.memory_space<vmem>>, %arg5: memref<1x8xf32, #tpu.memory_space<vmem>>, %arg6: memref<128x8xf32, #tpu.memory_space<vmem>>, %arg7: memref<128x8xbf16, #tpu.memory_space<vmem>>) attributes {dimension_semantics = [#tpu.dimension_semantics<parallel>], iteration_bounds = array<i64: 1>, scalar_prefetch = 0 : i64, scratch_operands = 0 : i64, tpu.core_type = #tpu.core_type<tc>, window_params = [{transform_indices = @transform_0, window_bounds = array<i64: 128, 72>}, {pipeline_mode = #tpu.pipeline_mode<synchronous>, transform_indices = @transform_1, window_bounds = array<i64: 72, 8>}, {transform_indices = @transform_2, window_bounds = array<i64: 128, 8>}, {pipeline_mode = #tpu.pipeline_mode<synchronous>, transform_indices = @transform_3, window_bounds = array<i64: 1, 8>}, {pipeline_mode = #tpu.pipeline_mode<synchronous>, transform_indices = @transform_4, window_bounds = array<i64: 1, 8>}, {transform_indices = @transform_5, window_bounds = array<i64: 128, 8>}, {transform_indices = @transform_6, window_bounds = array<i64: 128, 8>}]} {
    %c0 = arith.constant 0 : index
    %c0_0 = arith.constant 0 : index
    %0 = vector.load %arg1[%c0, %c0_0] : memref<128x72xbf16, #tpu.memory_space<vmem>>, vector<128x72xbf16>
    %c0_1 = arith.constant 0 : index
    %c0_2 = arith.constant 0 : index
    %1 = vector.load %arg2[%c0_1, %c0_2] : memref<72x8xbf16, #tpu.memory_space<vmem>>, vector<72x8xbf16>
    %cst = arith.constant dense<0.000000e+00> : vector<128x8xf32>
    %2 = tpu.matmul %0, %1, %cst {dimension_numbers = #tpu.dot_dimension_numbers<[1], [0], [0], [1], [0, 0, 1, 1], [], []>} : vector<128x72xbf16>, vector<72x8xbf16>, vector<128x8xf32> -> vector<128x8xf32>
    %c0_3 = arith.constant 0 : index
    %c0_4 = arith.constant 0 : index
    %3 = vector.load %arg3[%c0_3, %c0_4] : memref<128x8xbf16, #tpu.memory_space<vmem>>, vector<128x8xbf16>
    %4 = arith.extf %3 : vector<128x8xbf16> to vector<128x8xf32>
    %5 = arith.addf %2, %4 : vector<128x8xf32>
    %c0_5 = arith.constant 0 : index
    %c0_6 = arith.constant 0 : index
    %6 = vector.load %arg6[%c0_5, %c0_6] : memref<128x8xf32, #tpu.memory_space<vmem>>, vector<128x8xf32>
    tpu.vector_store %arg6[%c0_5, %c0_6], %5 {strides = array<i32>} : memref<128x8xf32, #tpu.memory_space<vmem>>, vector<128x8xf32>,
    %c0_7 = arith.constant 0 : index
    %c0_8 = arith.constant 0 : index
    %7 = vector.load %arg4[%c0_7, %c0_8] : memref<1x8xf32, #tpu.memory_space<vmem>>, vector<1x8xf32>
    %8 = vector.broadcast %7 : vector<1x8xf32> to vector<128x8xf32>
    %9 = arith.mulf %5, %8 : vector<128x8xf32>
    %c0_9 = arith.constant 0 : index
    %c0_10 = arith.constant 0 : index
    %10 = vector.load %arg5[%c0_9, %c0_10] : memref<1x8xf32, #tpu.memory_space<vmem>>, vector<1x8xf32>
    %11 = vector.broadcast %10 : vector<1x8xf32> to vector<128x8xf32>
    %12 = arith.addf %9, %11 : vector<128x8xf32>
    %cst_11 = arith.constant 0.000000e+00 : f32
    %13 = vector.broadcast %cst_11 : f32 to vector<128x8xf32>
    %14 = arith.maximumf %12, %13 : vector<128x8xf32>
    %15 = arith.truncf %14 : vector<128x8xf32> to vector<128x8xbf16>
    %c0_12 = arith.constant 0 : index
    %c0_13 = arith.constant 0 : index
    %16 = vector.load %arg7[%c0_12, %c0_13] : memref<128x8xbf16, #tpu.memory_space<vmem>>, vector<128x8xbf16>
    tpu.vector_store %arg7[%c0_12, %c0_13], %15 {strides = array<i32>} : memref<128x8xbf16, #tpu.memory_space<vmem>>, vector<128x8xbf16>,
    return
  }
  func.func @transform_0(%arg0: i32) -> (i32, i32) {
    %c0_i32 = arith.constant 0 : i32
    %c0_i32_0 = arith.constant 0 : i32
    return %arg0, %c0_i32 : i32, i32
  }
  func.func @transform_1(%arg0: i32) -> (i32, i32) {
    %c0_i32 = arith.constant 0 : i32
    %c0_i32_0 = arith.constant 0 : i32
    %c0_i32_1 = arith.constant 0 : i32
    return %c0_i32, %c0_i32_0 : i32, i32
  }
  func.func @transform_2(%arg0: i32) -> (i32, i32) {
    %c0_i32 = arith.constant 0 : i32
    %c0_i32_0 = arith.constant 0 : i32
    return %arg0, %c0_i32 : i32, i32
  }
  func.func @transform_3(%arg0: i32) -> (i32, i32) {
    %c0_i32 = arith.constant 0 : i32
    %c0_i32_0 = arith.constant 0 : i32
    %c0_i32_1 = arith.constant 0 : i32
    return %c0_i32, %c0_i32_0 : i32, i32
  }
  func.func @transform_4(%arg0: i32) -> (i32, i32) {
    %c0_i32 = arith.constant 0 : i32
    %c0_i32_0 = arith.constant 0 : i32
    %c0_i32_1 = arith.constant 0 : i32
    return %c0_i32, %c0_i32_0 : i32, i32
  }
  func.func @transform_5(%arg0: i32) -> (i32, i32) {
    %c0_i32 = arith.constant 0 : i32
    %c0_i32_0 = arith.constant 0 : i32
    return %arg0, %c0_i32 : i32, i32
  }
  func.func @transform_6(%arg0: i32) -> (i32, i32) {
    %c0_i32 = arith.constant 0 : i32
    %c0_i32_0 = arith.constant 0 : i32
    return %arg0, %c0_i32 : i32, i32
  }
}

module attributes {stable_mosaic.version = 11 : i64} {
  func.func @kernel(%arg0: i32, %arg1: memref<128x72xbf16, #tpu.memory_space<vmem>>, %arg2: memref<72x8xbf16, #tpu.memory_space<vmem>>, %arg3: memref<128x8xbf16, #tpu.memory_space<vmem>>, %arg4: memref<1x8xf32, #tpu.memory_space<vmem>>, %arg5: memref<1x8xf32, #tpu.memory_space<vmem>>, %arg6: memref<128x8xbf16, #tpu.memory_space<vmem>>, %arg7: memref<128x8xbf16, #tpu.memory_space<vmem>>) attributes {dimension_semantics = [#tpu.dimension_semantics<parallel>], iteration_bounds = array<i64: 1>, scalar_prefetch = 0 : i64, scratch_operands = 0 : i64, tpu.core_type = #tpu.core_type<tc>, window_params = [{transform_indices = @transform_0, window_bounds = array<i64: 128, 72>}, {pipeline_mode = #tpu.pipeline_mode<synchronous>, transform_indices = @transform_1, window_bounds = array<i64: 72, 8>}, {transform_indices = @transform_2, window_bounds = array<i64: 128, 8>}, {pipeline_mode = #tpu.pipeline_mode<synchronous>, transform_indices = @transform_3, window_bounds = array<i64: 1, 8>}, {pipeline_mode = #tpu.pipeline_mode<synchronous>, transform_indices = @transform_4, window_bounds = array<i64: 1, 8>}, {transform_indices = @transform_5, window_bounds = array<i64: 128, 8>}, {transform_indices = @transform_6, window_bounds = array<i64: 128, 8>}]} {
    %c0 = arith.constant 0 : index
    %c0_0 = arith.constant 0 : index
    %0 = vector.load %arg1[%c0, %c0_0] : memref<128x72xbf16, #tpu.memory_space<vmem>>, vector<128x72xbf16>
    %c0_1 = arith.constant 0 : index
    %c0_2 = arith.constant 0 : index
    %1 = vector.load %arg2[%c0_1, %c0_2] : memref<72x8xbf16, #tpu.memory_space<vmem>>, vector<72x8xbf16>
    %cst = arith.constant dense<0.000000e+00> : vector<128x8xf32>
    %2 = tpu.matmul %0, %1, %cst {dimension_numbers = #tpu.dot_dimension_numbers<[1], [0], [0], [1], [0, 0, 1, 1], [], []>} : vector<128x72xbf16>, vector<72x8xbf16>, vector<128x8xf32> -> vector<128x8xf32>
    %c0_3 = arith.constant 0 : index
    %c0_4 = arith.constant 0 : index
    %3 = vector.load %arg3[%c0_3, %c0_4] : memref<128x8xbf16, #tpu.memory_space<vmem>>, vector<128x8xbf16>
    %4 = arith.extf %3 : vector<128x8xbf16> to vector<128x8xf32>
    %5 = arith.addf %2, %4 : vector<128x8xf32>
    %6 = arith.truncf %5 : vector<128x8xf32> to vector<128x8xbf16>
    %c0_5 = arith.constant 0 : index
    %c0_6 = arith.constant 0 : index
    %7 = vector.load %arg6[%c0_5, %c0_6] : memref<128x8xbf16, #tpu.memory_space<vmem>>, vector<128x8xbf16>
    tpu.vector_store %arg6[%c0_5, %c0_6], %6 {strides = array<i32>} : memref<128x8xbf16, #tpu.memory_space<vmem>>, vector<128x8xbf16>,
    %c0_7 = arith.constant 0 : index
    %c0_8 = arith.constant 0 : index
    %8 = vector.load %arg4[%c0_7, %c0_8] : memref<1x8xf32, #tpu.memory_space<vmem>>, vector<1x8xf32>
    %9 = vector.broadcast %8 : vector<1x8xf32> to vector<128x8xf32>
    %10 = arith.mulf %5, %9 : vector<128x8xf32>
    %c0_9 = arith.constant 0 : index
    %c0_10 = arith.constant 0 : index
    %11 = vector.load %arg5[%c0_9, %c0_10] : memref<1x8xf32, #tpu.memory_space<vmem>>, vector<1x8xf32>
    %12 = vector.broadcast %11 : vector<1x8xf32> to vector<128x8xf32>
    %13 = arith.addf %10, %12 : vector<128x8xf32>
    %cst_11 = arith.constant 0.000000e+00 : f32
    %14 = vector.broadcast %cst_11 : f32 to vector<128x8xf32>
    %15 = arith.maximumf %13, %14 : vector<128x8xf32>
    %16 = arith.truncf %15 : vector<128x8xf32> to vector<128x8xbf16>
    %c0_12 = arith.constant 0 : index
    %c0_13 = arith.constant 0 : index
    %17 = vector.load %arg7[%c0_12, %c0_13] : memref<128x8xbf16, #tpu.memory_space<vmem>>, vector<128x8xbf16>
    tpu.vector_store %arg7[%c0_12, %c0_13], %16 {strides = array<i32>} : memref<128x8xbf16, #tpu.memory_space<vmem>>, vector<128x8xbf16>,
    return
  }
  func.func @transform_0(%arg0: i32) -> (i32, i32) {
    %c0_i32 = arith.constant 0 : i32
    %c0_i32_0 = arith.constant 0 : i32
    return %arg0, %c0_i32 : i32, i32
  }
  func.func @transform_1(%arg0: i32) -> (i32, i32) {
    %c0_i32 = arith.constant 0 : i32
    %c0_i32_0 = arith.constant 0 : i32
    %c0_i32_1 = arith.constant 0 : i32
    return %c0_i32, %c0_i32_0 : i32, i32
  }
  func.func @transform_2(%arg0: i32) -> (i32, i32) {
    %c0_i32 = arith.constant 0 : i32
    %c0_i32_0 = arith.constant 0 : i32
    return %arg0, %c0_i32 : i32, i32
  }
  func.func @transform_3(%arg0: i32) -> (i32, i32) {
    %c0_i32 = arith.constant 0 : i32
    %c0_i32_0 = arith.constant 0 : i32
    %c0_i32_1 = arith.constant 0 : i32
    return %c0_i32, %c0_i32_0 : i32, i32
  }
  func.func @transform_4(%arg0: i32) -> (i32, i32) {
    %c0_i32 = arith.constant 0 : i32
    %c0_i32_0 = arith.constant 0 : i32
    %c0_i32_1 = arith.constant 0 : i32
    return %c0_i32, %c0_i32_0 : i32, i32
  }
  func.func @transform_5(%arg0: i32) -> (i32, i32) {
    %c0_i32 = arith.constant 0 : i32
    %c0_i32_0 = arith.constant 0 : i32
    return %arg0, %c0_i32 : i32, i32
  }
  func.func @transform_6(%arg0: i32) -> (i32, i32) {
    %c0_i32 = arith.constant 0 : i32
    %c0_i32_0 = arith.constant 0 : i32
    return %arg0, %c0_i32 : i32, i32
  }
}

module attributes {stable_mosaic.version = 11 : i64} {
  func.func @kernel(%arg0: i32, %arg1: memref<32x72xbf16, #tpu.memory_space<vmem>>, %arg2: memref<72x16xbf16, #tpu.memory_space<vmem>>, %arg3: memref<1x16xf32, #tpu.memory_space<vmem>>, %arg4: memref<1x16xf32, #tpu.memory_space<vmem>>, %arg5: memref<32x16xbf16, #tpu.memory_space<vmem>>, %arg6: memref<32x16xbf16, #tpu.memory_space<vmem>>) attributes {dimension_semantics = [#tpu.dimension_semantics<parallel>], iteration_bounds = array<i64: 1>, scalar_prefetch = 0 : i64, scratch_operands = 0 : i64, tpu.core_type = #tpu.core_type<tc>, window_params = [{transform_indices = @transform_0, window_bounds = array<i64: 32, 72>}, {pipeline_mode = #tpu.pipeline_mode<synchronous>, transform_indices = @transform_1, window_bounds = array<i64: 72, 16>}, {pipeline_mode = #tpu.pipeline_mode<synchronous>, transform_indices = @transform_2, window_bounds = array<i64: 1, 16>}, {pipeline_mode = #tpu.pipeline_mode<synchronous>, transform_indices = @transform_3, window_bounds = array<i64: 1, 16>}, {transform_indices = @transform_4, window_bounds = array<i64: 32, 16>}, {transform_indices = @transform_5, window_bounds = array<i64: 32, 16>}]} {
    %c0 = arith.constant 0 : index
    %c0_0 = arith.constant 0 : index
    %0 = vector.load %arg1[%c0, %c0_0] : memref<32x72xbf16, #tpu.memory_space<vmem>>, vector<32x72xbf16>
    %c0_1 = arith.constant 0 : index
    %c0_2 = arith.constant 0 : index
    %1 = vector.load %arg2[%c0_1, %c0_2] : memref<72x16xbf16, #tpu.memory_space<vmem>>, vector<72x16xbf16>
    %cst = arith.constant dense<0.000000e+00> : vector<32x16xf32>
    %2 = tpu.matmul %0, %1, %cst {dimension_numbers = #tpu.dot_dimension_numbers<[1], [0], [0], [1], [0, 0, 1, 1], [], []>} : vector<32x72xbf16>, vector<72x16xbf16>, vector<32x16xf32> -> vector<32x16xf32>
    %3 = arith.truncf %2 : vector<32x16xf32> to vector<32x16xbf16>
    %c0_3 = arith.constant 0 : index
    %c0_4 = arith.constant 0 : index
    %4 = vector.load %arg5[%c0_3, %c0_4] : memref<32x16xbf16, #tpu.memory_space<vmem>>, vector<32x16xbf16>
    tpu.vector_store %arg5[%c0_3, %c0_4], %3 {strides = array<i32>} : memref<32x16xbf16, #tpu.memory_space<vmem>>, vector<32x16xbf16>,
    %c0_5 = arith.constant 0 : index
    %c0_6 = arith.constant 0 : index
    %5 = vector.load %arg3[%c0_5, %c0_6] : memref<1x16xf32, #tpu.memory_space<vmem>>, vector<1x16xf32>
    %6 = vector.broadcast %5 : vector<1x16xf32> to vector<32x16xf32>
    %7 = arith.mulf %2, %6 : vector<32x16xf32>
    %c0_7 = arith.constant 0 : index
    %c0_8 = arith.constant 0 : index
    %8 = vector.load %arg4[%c0_7, %c0_8] : memref<1x16xf32, #tpu.memory_space<vmem>>, vector<1x16xf32>
    %9 = vector.broadcast %8 : vector<1x16xf32> to vector<32x16xf32>
    %10 = arith.addf %7, %9 : vector<32x16xf32>
    %cst_9 = arith.constant 0.000000e+00 : f32
    %11 = vector.broadcast %cst_9 : f32 to vector<32x16xf32>
    %12 = arith.maximumf %10, %11 : vector<32x16xf32>
    %13 = arith.truncf %12 : vector<32x16xf32> to vector<32x16xbf16>
    %c0_10 = arith.constant 0 : index
    %c0_11 = arith.constant 0 : index
    %14 = vector.load %arg6[%c0_10, %c0_11] : memref<32x16xbf16, #tpu.memory_space<vmem>>, vector<32x16xbf16>
    tpu.vector_store %arg6[%c0_10, %c0_11], %13 {strides = array<i32>} : memref<32x16xbf16, #tpu.memory_space<vmem>>, vector<32x16xbf16>,
    return
  }
  func.func @transform_0(%arg0: i32) -> (i32, i32) {
    %c0_i32 = arith.constant 0 : i32
    %c0_i32_0 = arith.constant 0 : i32
    return %arg0, %c0_i32 : i32, i32
  }
  func.func @transform_1(%arg0: i32) -> (i32, i32) {
    %c0_i32 = arith.constant 0 : i32
    %c0_i32_0 = arith.constant 0 : i32
    %c0_i32_1 = arith.constant 0 : i32
    return %c0_i32, %c0_i32_0 : i32, i32
  }
  func.func @transform_2(%arg0: i32) -> (i32, i32) {
    %c0_i32 = arith.constant 0 : i32
    %c0_i32_0 = arith.constant 0 : i32
    %c0_i32_1 = arith.constant 0 : i32
    return %c0_i32, %c0_i32_0 : i32, i32
  }
  func.func @transform_3(%arg0: i32) -> (i32, i32) {
    %c0_i32 = arith.constant 0 : i32
    %c0_i32_0 = arith.constant 0 : i32
    %c0_i32_1 = arith.constant 0 : i32
    return %c0_i32, %c0_i32_0 : i32, i32
  }
  func.func @transform_4(%arg0: i32) -> (i32, i32) {
    %c0_i32 = arith.constant 0 : i32
    %c0_i32_0 = arith.constant 0 : i32
    return %arg0, %c0_i32 : i32, i32
  }
  func.func @transform_5(%arg0: i32) -> (i32, i32) {
    %c0_i32 = arith.constant 0 : i32
    %c0_i32_0 = arith.constant 0 : i32
    return %arg0, %c0_i32 : i32, i32
  }
}

module attributes {stable_mosaic.version = 11 : i64} {
  func.func @kernel(%arg0: i32, %arg1: memref<32x144xbf16, #tpu.memory_space<vmem>>, %arg2: memref<144x16xbf16, #tpu.memory_space<vmem>>, %arg3: memref<1x16xf32, #tpu.memory_space<vmem>>, %arg4: memref<1x16xf32, #tpu.memory_space<vmem>>, %arg5: memref<32x16xbf16, #tpu.memory_space<vmem>>) attributes {dimension_semantics = [#tpu.dimension_semantics<parallel>], iteration_bounds = array<i64: 1>, scalar_prefetch = 0 : i64, scratch_operands = 0 : i64, tpu.core_type = #tpu.core_type<tc>, window_params = [{transform_indices = @transform_0, window_bounds = array<i64: 32, 144>}, {pipeline_mode = #tpu.pipeline_mode<synchronous>, transform_indices = @transform_1, window_bounds = array<i64: 144, 16>}, {pipeline_mode = #tpu.pipeline_mode<synchronous>, transform_indices = @transform_2, window_bounds = array<i64: 1, 16>}, {pipeline_mode = #tpu.pipeline_mode<synchronous>, transform_indices = @transform_3, window_bounds = array<i64: 1, 16>}, {transform_indices = @transform_4, window_bounds = array<i64: 32, 16>}]} {
    %c0 = arith.constant 0 : index
    %c0_0 = arith.constant 0 : index
    %0 = vector.load %arg1[%c0, %c0_0] : memref<32x144xbf16, #tpu.memory_space<vmem>>, vector<32x144xbf16>
    %c0_1 = arith.constant 0 : index
    %c0_2 = arith.constant 0 : index
    %1 = vector.load %arg2[%c0_1, %c0_2] : memref<144x16xbf16, #tpu.memory_space<vmem>>, vector<144x16xbf16>
    %cst = arith.constant dense<0.000000e+00> : vector<32x16xf32>
    %2 = tpu.matmul %0, %1, %cst {dimension_numbers = #tpu.dot_dimension_numbers<[1], [0], [0], [1], [0, 0, 1, 1], [], []>} : vector<32x144xbf16>, vector<144x16xbf16>, vector<32x16xf32> -> vector<32x16xf32>
    %c0_3 = arith.constant 0 : index
    %c0_4 = arith.constant 0 : index
    %3 = vector.load %arg3[%c0_3, %c0_4] : memref<1x16xf32, #tpu.memory_space<vmem>>, vector<1x16xf32>
    %4 = vector.broadcast %3 : vector<1x16xf32> to vector<32x16xf32>
    %5 = arith.mulf %2, %4 : vector<32x16xf32>
    %c0_5 = arith.constant 0 : index
    %c0_6 = arith.constant 0 : index
    %6 = vector.load %arg4[%c0_5, %c0_6] : memref<1x16xf32, #tpu.memory_space<vmem>>, vector<1x16xf32>
    %7 = vector.broadcast %6 : vector<1x16xf32> to vector<32x16xf32>
    %8 = arith.addf %5, %7 : vector<32x16xf32>
    %cst_7 = arith.constant 0.000000e+00 : f32
    %9 = vector.broadcast %cst_7 : f32 to vector<32x16xf32>
    %10 = arith.maximumf %8, %9 : vector<32x16xf32>
    %11 = arith.truncf %10 : vector<32x16xf32> to vector<32x16xbf16>
    %c0_8 = arith.constant 0 : index
    %c0_9 = arith.constant 0 : index
    %12 = vector.load %arg5[%c0_8, %c0_9] : memref<32x16xbf16, #tpu.memory_space<vmem>>, vector<32x16xbf16>
    tpu.vector_store %arg5[%c0_8, %c0_9], %11 {strides = array<i32>} : memref<32x16xbf16, #tpu.memory_space<vmem>>, vector<32x16xbf16>,
    return
  }
  func.func @transform_0(%arg0: i32) -> (i32, i32) {
    %c0_i32 = arith.constant 0 : i32
    %c0_i32_0 = arith.constant 0 : i32
    return %arg0, %c0_i32 : i32, i32
  }
  func.func @transform_1(%arg0: i32) -> (i32, i32) {
    %c0_i32 = arith.constant 0 : i32
    %c0_i32_0 = arith.constant 0 : i32
    %c0_i32_1 = arith.constant 0 : i32
    return %c0_i32, %c0_i32_0 : i32, i32
  }
  func.func @transform_2(%arg0: i32) -> (i32, i32) {
    %c0_i32 = arith.constant 0 : i32
    %c0_i32_0 = arith.constant 0 : i32
    %c0_i32_1 = arith.constant 0 : i32
    return %c0_i32, %c0_i32_0 : i32, i32
  }
  func.func @transform_3(%arg0: i32) -> (i32, i32) {
    %c0_i32 = arith.constant 0 : i32
    %c0_i32_0 = arith.constant 0 : i32
    %c0_i32_1 = arith.constant 0 : i32
    return %c0_i32, %c0_i32_0 : i32, i32
  }
  func.func @transform_4(%arg0: i32) -> (i32, i32) {
    %c0_i32 = arith.constant 0 : i32
    %c0_i32_0 = arith.constant 0 : i32
    return %arg0, %c0_i32 : i32, i32
  }
}

module attributes {stable_mosaic.version = 11 : i64} {
  func.func @kernel(%arg0: i32, %arg1: memref<32x144xbf16, #tpu.memory_space<vmem>>, %arg2: memref<144x16xbf16, #tpu.memory_space<vmem>>, %arg3: memref<32x16xbf16, #tpu.memory_space<vmem>>, %arg4: memref<1x16xf32, #tpu.memory_space<vmem>>, %arg5: memref<1x16xf32, #tpu.memory_space<vmem>>, %arg6: memref<32x16xbf16, #tpu.memory_space<vmem>>, %arg7: memref<32x16xbf16, #tpu.memory_space<vmem>>) attributes {dimension_semantics = [#tpu.dimension_semantics<parallel>], iteration_bounds = array<i64: 1>, scalar_prefetch = 0 : i64, scratch_operands = 0 : i64, tpu.core_type = #tpu.core_type<tc>, window_params = [{transform_indices = @transform_0, window_bounds = array<i64: 32, 144>}, {pipeline_mode = #tpu.pipeline_mode<synchronous>, transform_indices = @transform_1, window_bounds = array<i64: 144, 16>}, {transform_indices = @transform_2, window_bounds = array<i64: 32, 16>}, {pipeline_mode = #tpu.pipeline_mode<synchronous>, transform_indices = @transform_3, window_bounds = array<i64: 1, 16>}, {pipeline_mode = #tpu.pipeline_mode<synchronous>, transform_indices = @transform_4, window_bounds = array<i64: 1, 16>}, {transform_indices = @transform_5, window_bounds = array<i64: 32, 16>}, {transform_indices = @transform_6, window_bounds = array<i64: 32, 16>}]} {
    %c0 = arith.constant 0 : index
    %c0_0 = arith.constant 0 : index
    %0 = vector.load %arg1[%c0, %c0_0] : memref<32x144xbf16, #tpu.memory_space<vmem>>, vector<32x144xbf16>
    %c0_1 = arith.constant 0 : index
    %c0_2 = arith.constant 0 : index
    %1 = vector.load %arg2[%c0_1, %c0_2] : memref<144x16xbf16, #tpu.memory_space<vmem>>, vector<144x16xbf16>
    %cst = arith.constant dense<0.000000e+00> : vector<32x16xf32>
    %2 = tpu.matmul %0, %1, %cst {dimension_numbers = #tpu.dot_dimension_numbers<[1], [0], [0], [1], [0, 0, 1, 1], [], []>} : vector<32x144xbf16>, vector<144x16xbf16>, vector<32x16xf32> -> vector<32x16xf32>
    %c0_3 = arith.constant 0 : index
    %c0_4 = arith.constant 0 : index
    %3 = vector.load %arg3[%c0_3, %c0_4] : memref<32x16xbf16, #tpu.memory_space<vmem>>, vector<32x16xbf16>
    %4 = arith.extf %3 : vector<32x16xbf16> to vector<32x16xf32>
    %5 = arith.addf %2, %4 : vector<32x16xf32>
    %6 = arith.truncf %5 : vector<32x16xf32> to vector<32x16xbf16>
    %c0_5 = arith.constant 0 : index
    %c0_6 = arith.constant 0 : index
    %7 = vector.load %arg6[%c0_5, %c0_6] : memref<32x16xbf16, #tpu.memory_space<vmem>>, vector<32x16xbf16>
    tpu.vector_store %arg6[%c0_5, %c0_6], %6 {strides = array<i32>} : memref<32x16xbf16, #tpu.memory_space<vmem>>, vector<32x16xbf16>,
    %c0_7 = arith.constant 0 : index
    %c0_8 = arith.constant 0 : index
    %8 = vector.load %arg4[%c0_7, %c0_8] : memref<1x16xf32, #tpu.memory_space<vmem>>, vector<1x16xf32>
    %9 = vector.broadcast %8 : vector<1x16xf32> to vector<32x16xf32>
    %10 = arith.mulf %5, %9 : vector<32x16xf32>
    %c0_9 = arith.constant 0 : index
    %c0_10 = arith.constant 0 : index
    %11 = vector.load %arg5[%c0_9, %c0_10] : memref<1x16xf32, #tpu.memory_space<vmem>>, vector<1x16xf32>
    %12 = vector.broadcast %11 : vector<1x16xf32> to vector<32x16xf32>
    %13 = arith.addf %10, %12 : vector<32x16xf32>
    %cst_11 = arith.constant 0.000000e+00 : f32
    %14 = vector.broadcast %cst_11 : f32 to vector<32x16xf32>
    %15 = arith.maximumf %13, %14 : vector<32x16xf32>
    %16 = arith.truncf %15 : vector<32x16xf32> to vector<32x16xbf16>
    %c0_12 = arith.constant 0 : index
    %c0_13 = arith.constant 0 : index
    %17 = vector.load %arg7[%c0_12, %c0_13] : memref<32x16xbf16, #tpu.memory_space<vmem>>, vector<32x16xbf16>
    tpu.vector_store %arg7[%c0_12, %c0_13], %16 {strides = array<i32>} : memref<32x16xbf16, #tpu.memory_space<vmem>>, vector<32x16xbf16>,
    return
  }
  func.func @transform_0(%arg0: i32) -> (i32, i32) {
    %c0_i32 = arith.constant 0 : i32
    %c0_i32_0 = arith.constant 0 : i32
    return %arg0, %c0_i32 : i32, i32
  }
  func.func @transform_1(%arg0: i32) -> (i32, i32) {
    %c0_i32 = arith.constant 0 : i32
    %c0_i32_0 = arith.constant 0 : i32
    %c0_i32_1 = arith.constant 0 : i32
    return %c0_i32, %c0_i32_0 : i32, i32
  }
  func.func @transform_2(%arg0: i32) -> (i32, i32) {
    %c0_i32 = arith.constant 0 : i32
    %c0_i32_0 = arith.constant 0 : i32
    return %arg0, %c0_i32 : i32, i32
  }
  func.func @transform_3(%arg0: i32) -> (i32, i32) {
    %c0_i32 = arith.constant 0 : i32
    %c0_i32_0 = arith.constant 0 : i32
    %c0_i32_1 = arith.constant 0 : i32
    return %c0_i32, %c0_i32_0 : i32, i32
  }
  func.func @transform_4(%arg0: i32) -> (i32, i32) {
    %c0_i32 = arith.constant 0 : i32
    %c0_i32_0 = arith.constant 0 : i32
    %c0_i32_1 = arith.constant 0 : i32
    return %c0_i32, %c0_i32_0 : i32, i32
  }
  func.func @transform_5(%arg0: i32) -> (i32, i32) {
    %c0_i32 = arith.constant 0 : i32
    %c0_i32_0 = arith.constant 0 : i32
    return %arg0, %c0_i32 : i32, i32
  }
  func.func @transform_6(%arg0: i32) -> (i32, i32) {
    %c0_i32 = arith.constant 0 : i32
    %c0_i32_0 = arith.constant 0 : i32
    return %arg0, %c0_i32 : i32, i32
  }
}

module attributes {stable_mosaic.version = 11 : i64} {
  func.func @kernel(%arg0: i32, %arg1: memref<32x144xbf16, #tpu.memory_space<vmem>>, %arg2: memref<144x16xbf16, #tpu.memory_space<vmem>>, %arg3: memref<32x16xbf16, #tpu.memory_space<vmem>>, %arg4: memref<1x16xf32, #tpu.memory_space<vmem>>, %arg5: memref<1x16xf32, #tpu.memory_space<vmem>>, %arg6: memref<32x16xf32, #tpu.memory_space<vmem>>, %arg7: memref<32x16xbf16, #tpu.memory_space<vmem>>) attributes {dimension_semantics = [#tpu.dimension_semantics<parallel>], iteration_bounds = array<i64: 1>, scalar_prefetch = 0 : i64, scratch_operands = 0 : i64, tpu.core_type = #tpu.core_type<tc>, window_params = [{transform_indices = @transform_0, window_bounds = array<i64: 32, 144>}, {pipeline_mode = #tpu.pipeline_mode<synchronous>, transform_indices = @transform_1, window_bounds = array<i64: 144, 16>}, {transform_indices = @transform_2, window_bounds = array<i64: 32, 16>}, {pipeline_mode = #tpu.pipeline_mode<synchronous>, transform_indices = @transform_3, window_bounds = array<i64: 1, 16>}, {pipeline_mode = #tpu.pipeline_mode<synchronous>, transform_indices = @transform_4, window_bounds = array<i64: 1, 16>}, {transform_indices = @transform_5, window_bounds = array<i64: 32, 16>}, {transform_indices = @transform_6, window_bounds = array<i64: 32, 16>}]} {
    %c0 = arith.constant 0 : index
    %c0_0 = arith.constant 0 : index
    %0 = vector.load %arg1[%c0, %c0_0] : memref<32x144xbf16, #tpu.memory_space<vmem>>, vector<32x144xbf16>
    %c0_1 = arith.constant 0 : index
    %c0_2 = arith.constant 0 : index
    %1 = vector.load %arg2[%c0_1, %c0_2] : memref<144x16xbf16, #tpu.memory_space<vmem>>, vector<144x16xbf16>
    %cst = arith.constant dense<0.000000e+00> : vector<32x16xf32>
    %2 = tpu.matmul %0, %1, %cst {dimension_numbers = #tpu.dot_dimension_numbers<[1], [0], [0], [1], [0, 0, 1, 1], [], []>} : vector<32x144xbf16>, vector<144x16xbf16>, vector<32x16xf32> -> vector<32x16xf32>
    %c0_3 = arith.constant 0 : index
    %c0_4 = arith.constant 0 : index
    %3 = vector.load %arg3[%c0_3, %c0_4] : memref<32x16xbf16, #tpu.memory_space<vmem>>, vector<32x16xbf16>
    %4 = arith.extf %3 : vector<32x16xbf16> to vector<32x16xf32>
    %5 = arith.addf %2, %4 : vector<32x16xf32>
    %c0_5 = arith.constant 0 : index
    %c0_6 = arith.constant 0 : index
    %6 = vector.load %arg6[%c0_5, %c0_6] : memref<32x16xf32, #tpu.memory_space<vmem>>, vector<32x16xf32>
    tpu.vector_store %arg6[%c0_5, %c0_6], %5 {strides = array<i32>} : memref<32x16xf32, #tpu.memory_space<vmem>>, vector<32x16xf32>,
    %c0_7 = arith.constant 0 : index
    %c0_8 = arith.constant 0 : index
    %7 = vector.load %arg4[%c0_7, %c0_8] : memref<1x16xf32, #tpu.memory_space<vmem>>, vector<1x16xf32>
    %8 = vector.broadcast %7 : vector<1x16xf32> to vector<32x16xf32>
    %9 = arith.mulf %5, %8 : vector<32x16xf32>
    %c0_9 = arith.constant 0 : index
    %c0_10 = arith.constant 0 : index
    %10 = vector.load %arg5[%c0_9, %c0_10] : memref<1x16xf32, #tpu.memory_space<vmem>>, vector<1x16xf32>
    %11 = vector.broadcast %10 : vector<1x16xf32> to vector<32x16xf32>
    %12 = arith.addf %9, %11 : vector<32x16xf32>
    %cst_11 = arith.constant 0.000000e+00 : f32
    %13 = vector.broadcast %cst_11 : f32 to vector<32x16xf32>
    %14 = arith.maximumf %12, %13 : vector<32x16xf32>
    %15 = arith.truncf %14 : vector<32x16xf32> to vector<32x16xbf16>
    %c0_12 = arith.constant 0 : index
    %c0_13 = arith.constant 0 : index
    %16 = vector.load %arg7[%c0_12, %c0_13] : memref<32x16xbf16, #tpu.memory_space<vmem>>, vector<32x16xbf16>
    tpu.vector_store %arg7[%c0_12, %c0_13], %15 {strides = array<i32>} : memref<32x16xbf16, #tpu.memory_space<vmem>>, vector<32x16xbf16>,
    return
  }
  func.func @transform_0(%arg0: i32) -> (i32, i32) {
    %c0_i32 = arith.constant 0 : i32
    %c0_i32_0 = arith.constant 0 : i32
    return %arg0, %c0_i32 : i32, i32
  }
  func.func @transform_1(%arg0: i32) -> (i32, i32) {
    %c0_i32 = arith.constant 0 : i32
    %c0_i32_0 = arith.constant 0 : i32
    %c0_i32_1 = arith.constant 0 : i32
    return %c0_i32, %c0_i32_0 : i32, i32
  }
  func.func @transform_2(%arg0: i32) -> (i32, i32) {
    %c0_i32 = arith.constant 0 : i32
    %c0_i32_0 = arith.constant 0 : i32
    return %arg0, %c0_i32 : i32, i32
  }
  func.func @transform_3(%arg0: i32) -> (i32, i32) {
    %c0_i32 = arith.constant 0 : i32
    %c0_i32_0 = arith.constant 0 : i32
    %c0_i32_1 = arith.constant 0 : i32
    return %c0_i32, %c0_i32_0 : i32, i32
  }
  func.func @transform_4(%arg0: i32) -> (i32, i32) {
    %c0_i32 = arith.constant 0 : i32
    %c0_i32_0 = arith.constant 0 : i32
    %c0_i32_1 = arith.constant 0 : i32
    return %c0_i32, %c0_i32_0 : i32, i32
  }
  func.func @transform_5(%arg0: i32) -> (i32, i32) {
    %c0_i32 = arith.constant 0 : i32
    %c0_i32_0 = arith.constant 0 : i32
    return %arg0, %c0_i32 : i32, i32
  }
  func.func @transform_6(%arg0: i32) -> (i32, i32) {
    %c0_i32 = arith.constant 0 : i32
    %c0_i32_0 = arith.constant 0 : i32
    return %arg0, %c0_i32 : i32, i32
  }
}

module attributes {stable_mosaic.version = 11 : i64} {
  func.func @kernel(%arg0: i32, %arg1: memref<16x144xbf16, #tpu.memory_space<vmem>>, %arg2: memref<144x32xbf16, #tpu.memory_space<vmem>>, %arg3: memref<1x32xf32, #tpu.memory_space<vmem>>, %arg4: memref<1x32xf32, #tpu.memory_space<vmem>>, %arg5: memref<16x32xbf16, #tpu.memory_space<vmem>>, %arg6: memref<16x32xbf16, #tpu.memory_space<vmem>>) attributes {dimension_semantics = [#tpu.dimension_semantics<parallel>], iteration_bounds = array<i64: 1>, scalar_prefetch = 0 : i64, scratch_operands = 0 : i64, tpu.core_type = #tpu.core_type<tc>, window_params = [{transform_indices = @transform_0, window_bounds = array<i64: 16, 144>}, {pipeline_mode = #tpu.pipeline_mode<synchronous>, transform_indices = @transform_1, window_bounds = array<i64: 144, 32>}, {pipeline_mode = #tpu.pipeline_mode<synchronous>, transform_indices = @transform_2, window_bounds = array<i64: 1, 32>}, {pipeline_mode = #tpu.pipeline_mode<synchronous>, transform_indices = @transform_3, window_bounds = array<i64: 1, 32>}, {transform_indices = @transform_4, window_bounds = array<i64: 16, 32>}, {transform_indices = @transform_5, window_bounds = array<i64: 16, 32>}]} {
    %c0 = arith.constant 0 : index
    %c0_0 = arith.constant 0 : index
    %0 = vector.load %arg1[%c0, %c0_0] : memref<16x144xbf16, #tpu.memory_space<vmem>>, vector<16x144xbf16>
    %c0_1 = arith.constant 0 : index
    %c0_2 = arith.constant 0 : index
    %1 = vector.load %arg2[%c0_1, %c0_2] : memref<144x32xbf16, #tpu.memory_space<vmem>>, vector<144x32xbf16>
    %cst = arith.constant dense<0.000000e+00> : vector<16x32xf32>
    %2 = tpu.matmul %0, %1, %cst {dimension_numbers = #tpu.dot_dimension_numbers<[1], [0], [0], [1], [0, 0, 1, 1], [], []>} : vector<16x144xbf16>, vector<144x32xbf16>, vector<16x32xf32> -> vector<16x32xf32>
    %3 = arith.truncf %2 : vector<16x32xf32> to vector<16x32xbf16>
    %c0_3 = arith.constant 0 : index
    %c0_4 = arith.constant 0 : index
    %4 = vector.load %arg5[%c0_3, %c0_4] : memref<16x32xbf16, #tpu.memory_space<vmem>>, vector<16x32xbf16>
    tpu.vector_store %arg5[%c0_3, %c0_4], %3 {strides = array<i32>} : memref<16x32xbf16, #tpu.memory_space<vmem>>, vector<16x32xbf16>,
    %c0_5 = arith.constant 0 : index
    %c0_6 = arith.constant 0 : index
    %5 = vector.load %arg3[%c0_5, %c0_6] : memref<1x32xf32, #tpu.memory_space<vmem>>, vector<1x32xf32>
    %6 = vector.broadcast %5 : vector<1x32xf32> to vector<16x32xf32>
    %7 = arith.mulf %2, %6 : vector<16x32xf32>
    %c0_7 = arith.constant 0 : index
    %c0_8 = arith.constant 0 : index
    %8 = vector.load %arg4[%c0_7, %c0_8] : memref<1x32xf32, #tpu.memory_space<vmem>>, vector<1x32xf32>
    %9 = vector.broadcast %8 : vector<1x32xf32> to vector<16x32xf32>
    %10 = arith.addf %7, %9 : vector<16x32xf32>
    %cst_9 = arith.constant 0.000000e+00 : f32
    %11 = vector.broadcast %cst_9 : f32 to vector<16x32xf32>
    %12 = arith.maximumf %10, %11 : vector<16x32xf32>
    %13 = arith.truncf %12 : vector<16x32xf32> to vector<16x32xbf16>
    %c0_10 = arith.constant 0 : index
    %c0_11 = arith.constant 0 : index
    %14 = vector.load %arg6[%c0_10, %c0_11] : memref<16x32xbf16, #tpu.memory_space<vmem>>, vector<16x32xbf16>
    tpu.vector_store %arg6[%c0_10, %c0_11], %13 {strides = array<i32>} : memref<16x32xbf16, #tpu.memory_space<vmem>>, vector<16x32xbf16>,
    return
  }
  func.func @transform_0(%arg0: i32) -> (i32, i32) {
    %c0_i32 = arith.constant 0 : i32
    %c0_i32_0 = arith.constant 0 : i32
    return %arg0, %c0_i32 : i32, i32
  }
  func.func @transform_1(%arg0: i32) -> (i32, i32) {
    %c0_i32 = arith.constant 0 : i32
    %c0_i32_0 = arith.constant 0 : i32
    %c0_i32_1 = arith.constant 0 : i32
    return %c0_i32, %c0_i32_0 : i32, i32
  }
  func.func @transform_2(%arg0: i32) -> (i32, i32) {
    %c0_i32 = arith.constant 0 : i32
    %c0_i32_0 = arith.constant 0 : i32
    %c0_i32_1 = arith.constant 0 : i32
    return %c0_i32, %c0_i32_0 : i32, i32
  }
  func.func @transform_3(%arg0: i32) -> (i32, i32) {
    %c0_i32 = arith.constant 0 : i32
    %c0_i32_0 = arith.constant 0 : i32
    %c0_i32_1 = arith.constant 0 : i32
    return %c0_i32, %c0_i32_0 : i32, i32
  }
  func.func @transform_4(%arg0: i32) -> (i32, i32) {
    %c0_i32 = arith.constant 0 : i32
    %c0_i32_0 = arith.constant 0 : i32
    return %arg0, %c0_i32 : i32, i32
  }
  func.func @transform_5(%arg0: i32) -> (i32, i32) {
    %c0_i32 = arith.constant 0 : i32
    %c0_i32_0 = arith.constant 0 : i32
    return %arg0, %c0_i32 : i32, i32
  }
}

module attributes {stable_mosaic.version = 11 : i64} {
  func.func @kernel(%arg0: i32, %arg1: memref<16x288xbf16, #tpu.memory_space<vmem>>, %arg2: memref<288x32xbf16, #tpu.memory_space<vmem>>, %arg3: memref<16x32xbf16, #tpu.memory_space<vmem>>, %arg4: memref<1x32xf32, #tpu.memory_space<vmem>>, %arg5: memref<1x32xf32, #tpu.memory_space<vmem>>, %arg6: memref<16x32xbf16, #tpu.memory_space<vmem>>, %arg7: memref<16x32xbf16, #tpu.memory_space<vmem>>) attributes {dimension_semantics = [#tpu.dimension_semantics<parallel>], iteration_bounds = array<i64: 1>, scalar_prefetch = 0 : i64, scratch_operands = 0 : i64, tpu.core_type = #tpu.core_type<tc>, window_params = [{transform_indices = @transform_0, window_bounds = array<i64: 16, 288>}, {pipeline_mode = #tpu.pipeline_mode<synchronous>, transform_indices = @transform_1, window_bounds = array<i64: 288, 32>}, {transform_indices = @transform_2, window_bounds = array<i64: 16, 32>}, {pipeline_mode = #tpu.pipeline_mode<synchronous>, transform_indices = @transform_3, window_bounds = array<i64: 1, 32>}, {pipeline_mode = #tpu.pipeline_mode<synchronous>, transform_indices = @transform_4, window_bounds = array<i64: 1, 32>}, {transform_indices = @transform_5, window_bounds = array<i64: 16, 32>}, {transform_indices = @transform_6, window_bounds = array<i64: 16, 32>}]} {
    %c0 = arith.constant 0 : index
    %c0_0 = arith.constant 0 : index
    %0 = vector.load %arg1[%c0, %c0_0] : memref<16x288xbf16, #tpu.memory_space<vmem>>, vector<16x288xbf16>
    %c0_1 = arith.constant 0 : index
    %c0_2 = arith.constant 0 : index
    %1 = vector.load %arg2[%c0_1, %c0_2] : memref<288x32xbf16, #tpu.memory_space<vmem>>, vector<288x32xbf16>
    %cst = arith.constant dense<0.000000e+00> : vector<16x32xf32>
    %2 = tpu.matmul %0, %1, %cst {dimension_numbers = #tpu.dot_dimension_numbers<[1], [0], [0], [1], [0, 0, 1, 1], [], []>} : vector<16x288xbf16>, vector<288x32xbf16>, vector<16x32xf32> -> vector<16x32xf32>
    %c0_3 = arith.constant 0 : index
    %c0_4 = arith.constant 0 : index
    %3 = vector.load %arg3[%c0_3, %c0_4] : memref<16x32xbf16, #tpu.memory_space<vmem>>, vector<16x32xbf16>
    %4 = arith.extf %3 : vector<16x32xbf16> to vector<16x32xf32>
    %5 = arith.addf %2, %4 : vector<16x32xf32>
    %6 = arith.truncf %5 : vector<16x32xf32> to vector<16x32xbf16>
    %c0_5 = arith.constant 0 : index
    %c0_6 = arith.constant 0 : index
    %7 = vector.load %arg6[%c0_5, %c0_6] : memref<16x32xbf16, #tpu.memory_space<vmem>>, vector<16x32xbf16>
    tpu.vector_store %arg6[%c0_5, %c0_6], %6 {strides = array<i32>} : memref<16x32xbf16, #tpu.memory_space<vmem>>, vector<16x32xbf16>,
    %c0_7 = arith.constant 0 : index
    %c0_8 = arith.constant 0 : index
    %8 = vector.load %arg4[%c0_7, %c0_8] : memref<1x32xf32, #tpu.memory_space<vmem>>, vector<1x32xf32>
    %9 = vector.broadcast %8 : vector<1x32xf32> to vector<16x32xf32>
    %10 = arith.mulf %5, %9 : vector<16x32xf32>
    %c0_9 = arith.constant 0 : index
    %c0_10 = arith.constant 0 : index
    %11 = vector.load %arg5[%c0_9, %c0_10] : memref<1x32xf32, #tpu.memory_space<vmem>>, vector<1x32xf32>
    %12 = vector.broadcast %11 : vector<1x32xf32> to vector<16x32xf32>
    %13 = arith.addf %10, %12 : vector<16x32xf32>
    %cst_11 = arith.constant 0.000000e+00 : f32
    %14 = vector.broadcast %cst_11 : f32 to vector<16x32xf32>
    %15 = arith.maximumf %13, %14 : vector<16x32xf32>
    %16 = arith.truncf %15 : vector<16x32xf32> to vector<16x32xbf16>
    %c0_12 = arith.constant 0 : index
    %c0_13 = arith.constant 0 : index
    %17 = vector.load %arg7[%c0_12, %c0_13] : memref<16x32xbf16, #tpu.memory_space<vmem>>, vector<16x32xbf16>
    tpu.vector_store %arg7[%c0_12, %c0_13], %16 {strides = array<i32>} : memref<16x32xbf16, #tpu.memory_space<vmem>>, vector<16x32xbf16>,
    return
  }
  func.func @transform_0(%arg0: i32) -> (i32, i32) {
    %c0_i32 = arith.constant 0 : i32
    %c0_i32_0 = arith.constant 0 : i32
    return %arg0, %c0_i32 : i32, i32
  }
  func.func @transform_1(%arg0: i32) -> (i32, i32) {
    %c0_i32 = arith.constant 0 : i32
    %c0_i32_0 = arith.constant 0 : i32
    %c0_i32_1 = arith.constant 0 : i32
    return %c0_i32, %c0_i32_0 : i32, i32
  }
  func.func @transform_2(%arg0: i32) -> (i32, i32) {
    %c0_i32 = arith.constant 0 : i32
    %c0_i32_0 = arith.constant 0 : i32
    return %arg0, %c0_i32 : i32, i32
  }
  func.func @transform_3(%arg0: i32) -> (i32, i32) {
    %c0_i32 = arith.constant 0 : i32
    %c0_i32_0 = arith.constant 0 : i32
    %c0_i32_1 = arith.constant 0 : i32
    return %c0_i32, %c0_i32_0 : i32, i32
  }
  func.func @transform_4(%arg0: i32) -> (i32, i32) {
    %c0_i32 = arith.constant 0 : i32
    %c0_i32_0 = arith.constant 0 : i32
    %c0_i32_1 = arith.constant 0 : i32
    return %c0_i32, %c0_i32_0 : i32, i32
  }
  func.func @transform_5(%arg0: i32) -> (i32, i32) {
    %c0_i32 = arith.constant 0 : i32
    %c0_i32_0 = arith.constant 0 : i32
    return %arg0, %c0_i32 : i32, i32
  }
  func.func @transform_6(%arg0: i32) -> (i32, i32) {
    %c0_i32 = arith.constant 0 : i32
    %c0_i32_0 = arith.constant 0 : i32
    return %arg0, %c0_i32 : i32, i32
  }
}

module attributes {stable_mosaic.version = 11 : i64} {
  func.func @kernel(%arg0: i32, %arg1: memref<16x288xbf16, #tpu.memory_space<vmem>>, %arg2: memref<288x32xbf16, #tpu.memory_space<vmem>>, %arg3: memref<1x32xf32, #tpu.memory_space<vmem>>, %arg4: memref<1x32xf32, #tpu.memory_space<vmem>>, %arg5: memref<16x32xbf16, #tpu.memory_space<vmem>>) attributes {dimension_semantics = [#tpu.dimension_semantics<parallel>], iteration_bounds = array<i64: 1>, scalar_prefetch = 0 : i64, scratch_operands = 0 : i64, tpu.core_type = #tpu.core_type<tc>, window_params = [{transform_indices = @transform_0, window_bounds = array<i64: 16, 288>}, {pipeline_mode = #tpu.pipeline_mode<synchronous>, transform_indices = @transform_1, window_bounds = array<i64: 288, 32>}, {pipeline_mode = #tpu.pipeline_mode<synchronous>, transform_indices = @transform_2, window_bounds = array<i64: 1, 32>}, {pipeline_mode = #tpu.pipeline_mode<synchronous>, transform_indices = @transform_3, window_bounds = array<i64: 1, 32>}, {transform_indices = @transform_4, window_bounds = array<i64: 16, 32>}]} {
    %c0 = arith.constant 0 : index
    %c0_0 = arith.constant 0 : index
    %0 = vector.load %arg1[%c0, %c0_0] : memref<16x288xbf16, #tpu.memory_space<vmem>>, vector<16x288xbf16>
    %c0_1 = arith.constant 0 : index
    %c0_2 = arith.constant 0 : index
    %1 = vector.load %arg2[%c0_1, %c0_2] : memref<288x32xbf16, #tpu.memory_space<vmem>>, vector<288x32xbf16>
    %cst = arith.constant dense<0.000000e+00> : vector<16x32xf32>
    %2 = tpu.matmul %0, %1, %cst {dimension_numbers = #tpu.dot_dimension_numbers<[1], [0], [0], [1], [0, 0, 1, 1], [], []>} : vector<16x288xbf16>, vector<288x32xbf16>, vector<16x32xf32> -> vector<16x32xf32>
    %c0_3 = arith.constant 0 : index
    %c0_4 = arith.constant 0 : index
    %3 = vector.load %arg3[%c0_3, %c0_4] : memref<1x32xf32, #tpu.memory_space<vmem>>, vector<1x32xf32>
    %4 = vector.broadcast %3 : vector<1x32xf32> to vector<16x32xf32>
    %5 = arith.mulf %2, %4 : vector<16x32xf32>
    %c0_5 = arith.constant 0 : index
    %c0_6 = arith.constant 0 : index
    %6 = vector.load %arg4[%c0_5, %c0_6] : memref<1x32xf32, #tpu.memory_space<vmem>>, vector<1x32xf32>
    %7 = vector.broadcast %6 : vector<1x32xf32> to vector<16x32xf32>
    %8 = arith.addf %5, %7 : vector<16x32xf32>
    %cst_7 = arith.constant 0.000000e+00 : f32
    %9 = vector.broadcast %cst_7 : f32 to vector<16x32xf32>
    %10 = arith.maximumf %8, %9 : vector<16x32xf32>
    %11 = arith.truncf %10 : vector<16x32xf32> to vector<16x32xbf16>
    %c0_8 = arith.constant 0 : index
    %c0_9 = arith.constant 0 : index
    %12 = vector.load %arg5[%c0_8, %c0_9] : memref<16x32xbf16, #tpu.memory_space<vmem>>, vector<16x32xbf16>
    tpu.vector_store %arg5[%c0_8, %c0_9], %11 {strides = array<i32>} : memref<16x32xbf16, #tpu.memory_space<vmem>>, vector<16x32xbf16>,
    return
  }
  func.func @transform_0(%arg0: i32) -> (i32, i32) {
    %c0_i32 = arith.constant 0 : i32
    %c0_i32_0 = arith.constant 0 : i32
    return %arg0, %c0_i32 : i32, i32
  }
  func.func @transform_1(%arg0: i32) -> (i32, i32) {
    %c0_i32 = arith.constant 0 : i32
    %c0_i32_0 = arith.constant 0 : i32
    %c0_i32_1 = arith.constant 0 : i32
    return %c0_i32, %c0_i32_0 : i32, i32
  }
  func.func @transform_2(%arg0: i32) -> (i32, i32) {
    %c0_i32 = arith.constant 0 : i32
    %c0_i32_0 = arith.constant 0 : i32
    %c0_i32_1 = arith.constant 0 : i32
    return %c0_i32, %c0_i32_0 : i32, i32
  }
  func.func @transform_3(%arg0: i32) -> (i32, i32) {
    %c0_i32 = arith.constant 0 : i32
    %c0_i32_0 = arith.constant 0 : i32
    %c0_i32_1 = arith.constant 0 : i32
    return %c0_i32, %c0_i32_0 : i32, i32
  }
  func.func @transform_4(%arg0: i32) -> (i32, i32) {
    %c0_i32 = arith.constant 0 : i32
    %c0_i32_0 = arith.constant 0 : i32
    return %arg0, %c0_i32 : i32, i32
  }
}

module attributes {stable_mosaic.version = 11 : i64} {
  func.func @kernel(%arg0: i32, %arg1: memref<16x288xbf16, #tpu.memory_space<vmem>>, %arg2: memref<288x32xbf16, #tpu.memory_space<vmem>>, %arg3: memref<16x32xbf16, #tpu.memory_space<vmem>>, %arg4: memref<1x32xf32, #tpu.memory_space<vmem>>, %arg5: memref<1x32xf32, #tpu.memory_space<vmem>>, %arg6: memref<16x32xf32, #tpu.memory_space<vmem>>, %arg7: memref<16x32xbf16, #tpu.memory_space<vmem>>) attributes {dimension_semantics = [#tpu.dimension_semantics<parallel>], iteration_bounds = array<i64: 1>, scalar_prefetch = 0 : i64, scratch_operands = 0 : i64, tpu.core_type = #tpu.core_type<tc>, window_params = [{transform_indices = @transform_0, window_bounds = array<i64: 16, 288>}, {pipeline_mode = #tpu.pipeline_mode<synchronous>, transform_indices = @transform_1, window_bounds = array<i64: 288, 32>}, {transform_indices = @transform_2, window_bounds = array<i64: 16, 32>}, {pipeline_mode = #tpu.pipeline_mode<synchronous>, transform_indices = @transform_3, window_bounds = array<i64: 1, 32>}, {pipeline_mode = #tpu.pipeline_mode<synchronous>, transform_indices = @transform_4, window_bounds = array<i64: 1, 32>}, {transform_indices = @transform_5, window_bounds = array<i64: 16, 32>}, {transform_indices = @transform_6, window_bounds = array<i64: 16, 32>}]} {
    %c0 = arith.constant 0 : index
    %c0_0 = arith.constant 0 : index
    %0 = vector.load %arg1[%c0, %c0_0] : memref<16x288xbf16, #tpu.memory_space<vmem>>, vector<16x288xbf16>
    %c0_1 = arith.constant 0 : index
    %c0_2 = arith.constant 0 : index
    %1 = vector.load %arg2[%c0_1, %c0_2] : memref<288x32xbf16, #tpu.memory_space<vmem>>, vector<288x32xbf16>
    %cst = arith.constant dense<0.000000e+00> : vector<16x32xf32>
    %2 = tpu.matmul %0, %1, %cst {dimension_numbers = #tpu.dot_dimension_numbers<[1], [0], [0], [1], [0, 0, 1, 1], [], []>} : vector<16x288xbf16>, vector<288x32xbf16>, vector<16x32xf32> -> vector<16x32xf32>
    %c0_3 = arith.constant 0 : index
    %c0_4 = arith.constant 0 : index
    %3 = vector.load %arg3[%c0_3, %c0_4] : memref<16x32xbf16, #tpu.memory_space<vmem>>, vector<16x32xbf16>
    %4 = arith.extf %3 : vector<16x32xbf16> to vector<16x32xf32>
    %5 = arith.addf %2, %4 : vector<16x32xf32>
    %c0_5 = arith.constant 0 : index
    %c0_6 = arith.constant 0 : index
    %6 = vector.load %arg6[%c0_5, %c0_6] : memref<16x32xf32, #tpu.memory_space<vmem>>, vector<16x32xf32>
    tpu.vector_store %arg6[%c0_5, %c0_6], %5 {strides = array<i32>} : memref<16x32xf32, #tpu.memory_space<vmem>>, vector<16x32xf32>,
    %c0_7 = arith.constant 0 : index
    %c0_8 = arith.constant 0 : index
    %7 = vector.load %arg4[%c0_7, %c0_8] : memref<1x32xf32, #tpu.memory_space<vmem>>, vector<1x32xf32>
    %8 = vector.broadcast %7 : vector<1x32xf32> to vector<16x32xf32>
    %9 = arith.mulf %5, %8 : vector<16x32xf32>
    %c0_9 = arith.constant 0 : index
    %c0_10 = arith.constant 0 : index
    %10 = vector.load %arg5[%c0_9, %c0_10] : memref<1x32xf32, #tpu.memory_space<vmem>>, vector<1x32xf32>
    %11 = vector.broadcast %10 : vector<1x32xf32> to vector<16x32xf32>
    %12 = arith.addf %9, %11 : vector<16x32xf32>
    %cst_11 = arith.constant 0.000000e+00 : f32
    %13 = vector.broadcast %cst_11 : f32 to vector<16x32xf32>
    %14 = arith.maximumf %12, %13 : vector<16x32xf32>
    %15 = arith.truncf %14 : vector<16x32xf32> to vector<16x32xbf16>
    %c0_12 = arith.constant 0 : index
    %c0_13 = arith.constant 0 : index
    %16 = vector.load %arg7[%c0_12, %c0_13] : memref<16x32xbf16, #tpu.memory_space<vmem>>, vector<16x32xbf16>
    tpu.vector_store %arg7[%c0_12, %c0_13], %15 {strides = array<i32>} : memref<16x32xbf16, #tpu.memory_space<vmem>>, vector<16x32xbf16>,
    return
  }
  func.func @transform_0(%arg0: i32) -> (i32, i32) {
    %c0_i32 = arith.constant 0 : i32
    %c0_i32_0 = arith.constant 0 : i32
    return %arg0, %c0_i32 : i32, i32
  }
  func.func @transform_1(%arg0: i32) -> (i32, i32) {
    %c0_i32 = arith.constant 0 : i32
    %c0_i32_0 = arith.constant 0 : i32
    %c0_i32_1 = arith.constant 0 : i32
    return %c0_i32, %c0_i32_0 : i32, i32
  }
  func.func @transform_2(%arg0: i32) -> (i32, i32) {
    %c0_i32 = arith.constant 0 : i32
    %c0_i32_0 = arith.constant 0 : i32
    return %arg0, %c0_i32 : i32, i32
  }
  func.func @transform_3(%arg0: i32) -> (i32, i32) {
    %c0_i32 = arith.constant 0 : i32
    %c0_i32_0 = arith.constant 0 : i32
    %c0_i32_1 = arith.constant 0 : i32
    return %c0_i32, %c0_i32_0 : i32, i32
  }
  func.func @transform_4(%arg0: i32) -> (i32, i32) {
    %c0_i32 = arith.constant 0 : i32
    %c0_i32_0 = arith.constant 0 : i32
    %c0_i32_1 = arith.constant 0 : i32
    return %c0_i32, %c0_i32_0 : i32, i32
  }
  func.func @transform_5(%arg0: i32) -> (i32, i32) {
    %c0_i32 = arith.constant 0 : i32
    %c0_i32_0 = arith.constant 0 : i32
    return %arg0, %c0_i32 : i32, i32
  }
  func.func @transform_6(%arg0: i32) -> (i32, i32) {
    %c0_i32 = arith.constant 0 : i32
    %c0_i32_0 = arith.constant 0 : i32
    return %arg0, %c0_i32 : i32, i32
  }
}

module attributes {stable_mosaic.version = 11 : i64} {
  func.func @kernel(%arg0: i32, %arg1: memref<16x288xbf16, #tpu.memory_space<vmem>>, %arg2: memref<288x32xbf16, #tpu.memory_space<vmem>>, %arg3: memref<1x32xf32, #tpu.memory_space<vmem>>, %arg4: memref<1x32xf32, #tpu.memory_space<vmem>>, %arg5: memref<16x32xbf16, #tpu.memory_space<vmem>>, %arg6: memref<16x32xbf16, #tpu.memory_space<vmem>>) attributes {dimension_semantics = [#tpu.dimension_semantics<parallel>], iteration_bounds = array<i64: 1>, scalar_prefetch = 0 : i64, scratch_operands = 0 : i64, tpu.core_type = #tpu.core_type<tc>, window_params = [{transform_indices = @transform_0, window_bounds = array<i64: 16, 288>}, {pipeline_mode = #tpu.pipeline_mode<synchronous>, transform_indices = @transform_1, window_bounds = array<i64: 288, 32>}, {pipeline_mode = #tpu.pipeline_mode<synchronous>, transform_indices = @transform_2, window_bounds = array<i64: 1, 32>}, {pipeline_mode = #tpu.pipeline_mode<synchronous>, transform_indices = @transform_3, window_bounds = array<i64: 1, 32>}, {transform_indices = @transform_4, window_bounds = array<i64: 16, 32>}, {transform_indices = @transform_5, window_bounds = array<i64: 16, 32>}]} {
    %c0 = arith.constant 0 : index
    %c0_0 = arith.constant 0 : index
    %0 = vector.load %arg1[%c0, %c0_0] : memref<16x288xbf16, #tpu.memory_space<vmem>>, vector<16x288xbf16>
    %c0_1 = arith.constant 0 : index
    %c0_2 = arith.constant 0 : index
    %1 = vector.load %arg2[%c0_1, %c0_2] : memref<288x32xbf16, #tpu.memory_space<vmem>>, vector<288x32xbf16>
    %cst = arith.constant dense<0.000000e+00> : vector<16x32xf32>
    %2 = tpu.matmul %0, %1, %cst {dimension_numbers = #tpu.dot_dimension_numbers<[1], [0], [0], [1], [0, 0, 1, 1], [], []>} : vector<16x288xbf16>, vector<288x32xbf16>, vector<16x32xf32> -> vector<16x32xf32>
    %3 = arith.truncf %2 : vector<16x32xf32> to vector<16x32xbf16>
    %c0_3 = arith.constant 0 : index
    %c0_4 = arith.constant 0 : index
    %4 = vector.load %arg5[%c0_3, %c0_4] : memref<16x32xbf16, #tpu.memory_space<vmem>>, vector<16x32xbf16>
    tpu.vector_store %arg5[%c0_3, %c0_4], %3 {strides = array<i32>} : memref<16x32xbf16, #tpu.memory_space<vmem>>, vector<16x32xbf16>,
    %c0_5 = arith.constant 0 : index
    %c0_6 = arith.constant 0 : index
    %5 = vector.load %arg3[%c0_5, %c0_6] : memref<1x32xf32, #tpu.memory_space<vmem>>, vector<1x32xf32>
    %6 = vector.broadcast %5 : vector<1x32xf32> to vector<16x32xf32>
    %7 = arith.mulf %2, %6 : vector<16x32xf32>
    %c0_7 = arith.constant 0 : index
    %c0_8 = arith.constant 0 : index
    %8 = vector.load %arg4[%c0_7, %c0_8] : memref<1x32xf32, #tpu.memory_space<vmem>>, vector<1x32xf32>
    %9 = vector.broadcast %8 : vector<1x32xf32> to vector<16x32xf32>
    %10 = arith.addf %7, %9 : vector<16x32xf32>
    %cst_9 = arith.constant 0.000000e+00 : f32
    %11 = vector.broadcast %cst_9 : f32 to vector<16x32xf32>
    %12 = arith.maximumf %10, %11 : vector<16x32xf32>
    %13 = arith.truncf %12 : vector<16x32xf32> to vector<16x32xbf16>
    %c0_10 = arith.constant 0 : index
    %c0_11 = arith.constant 0 : index
    %14 = vector.load %arg6[%c0_10, %c0_11] : memref<16x32xbf16, #tpu.memory_space<vmem>>, vector<16x32xbf16>
    tpu.vector_store %arg6[%c0_10, %c0_11], %13 {strides = array<i32>} : memref<16x32xbf16, #tpu.memory_space<vmem>>, vector<16x32xbf16>,
    return
  }
  func.func @transform_0(%arg0: i32) -> (i32, i32) {
    %c0_i32 = arith.constant 0 : i32
    %c0_i32_0 = arith.constant 0 : i32
    return %arg0, %c0_i32 : i32, i32
  }
  func.func @transform_1(%arg0: i32) -> (i32, i32) {
    %c0_i32 = arith.constant 0 : i32
    %c0_i32_0 = arith.constant 0 : i32
    %c0_i32_1 = arith.constant 0 : i32
    return %c0_i32, %c0_i32_0 : i32, i32
  }
  func.func @transform_2(%arg0: i32) -> (i32, i32) {
    %c0_i32 = arith.constant 0 : i32
    %c0_i32_0 = arith.constant 0 : i32
    %c0_i32_1 = arith.constant 0 : i32
    return %c0_i32, %c0_i32_0 : i32, i32
  }
  func.func @transform_3(%arg0: i32) -> (i32, i32) {
    %c0_i32 = arith.constant 0 : i32
    %c0_i32_0 = arith.constant 0 : i32
    %c0_i32_1 = arith.constant 0 : i32
    return %c0_i32, %c0_i32_0 : i32, i32
  }
  func.func @transform_4(%arg0: i32) -> (i32, i32) {
    %c0_i32 = arith.constant 0 : i32
    %c0_i32_0 = arith.constant 0 : i32
    return %arg0, %c0_i32 : i32, i32
  }
  func.func @transform_5(%arg0: i32) -> (i32, i32) {
    %c0_i32 = arith.constant 0 : i32
    %c0_i32_0 = arith.constant 0 : i32
    return %arg0, %c0_i32 : i32, i32
  }
}

module attributes {stable_mosaic.version = 11 : i64} {
  func.func @kernel(%arg0: i32, %arg1: memref<16x288xbf16, #tpu.memory_space<vmem>>, %arg2: memref<288x32xbf16, #tpu.memory_space<vmem>>, %arg3: memref<16x32xbf16, #tpu.memory_space<vmem>>, %arg4: memref<16x32xf32, #tpu.memory_space<vmem>>) attributes {dimension_semantics = [#tpu.dimension_semantics<parallel>], iteration_bounds = array<i64: 1>, scalar_prefetch = 0 : i64, scratch_operands = 0 : i64, tpu.core_type = #tpu.core_type<tc>, window_params = [{transform_indices = @transform_0, window_bounds = array<i64: 16, 288>}, {pipeline_mode = #tpu.pipeline_mode<synchronous>, transform_indices = @transform_1, window_bounds = array<i64: 288, 32>}, {transform_indices = @transform_2, window_bounds = array<i64: 16, 32>}, {transform_indices = @transform_3, window_bounds = array<i64: 16, 32>}]} {
    %c0 = arith.constant 0 : index
    %c0_0 = arith.constant 0 : index
    %0 = vector.load %arg1[%c0, %c0_0] : memref<16x288xbf16, #tpu.memory_space<vmem>>, vector<16x288xbf16>
    %c0_1 = arith.constant 0 : index
    %c0_2 = arith.constant 0 : index
    %1 = vector.load %arg2[%c0_1, %c0_2] : memref<288x32xbf16, #tpu.memory_space<vmem>>, vector<288x32xbf16>
    %cst = arith.constant dense<0.000000e+00> : vector<16x32xf32>
    %2 = tpu.matmul %0, %1, %cst {dimension_numbers = #tpu.dot_dimension_numbers<[1], [0], [0], [1], [0, 0, 1, 1], [], []>} : vector<16x288xbf16>, vector<288x32xbf16>, vector<16x32xf32> -> vector<16x32xf32>
    %c0_3 = arith.constant 0 : index
    %c0_4 = arith.constant 0 : index
    %3 = vector.load %arg3[%c0_3, %c0_4] : memref<16x32xbf16, #tpu.memory_space<vmem>>, vector<16x32xbf16>
    %4 = arith.extf %3 : vector<16x32xbf16> to vector<16x32xf32>
    %5 = arith.addf %2, %4 : vector<16x32xf32>
    %c0_5 = arith.constant 0 : index
    %c0_6 = arith.constant 0 : index
    %6 = vector.load %arg4[%c0_5, %c0_6] : memref<16x32xf32, #tpu.memory_space<vmem>>, vector<16x32xf32>
    tpu.vector_store %arg4[%c0_5, %c0_6], %5 {strides = array<i32>} : memref<16x32xf32, #tpu.memory_space<vmem>>, vector<16x32xf32>,
    return
  }
  func.func @transform_0(%arg0: i32) -> (i32, i32) {
    %c0_i32 = arith.constant 0 : i32
    %c0_i32_0 = arith.constant 0 : i32
    return %arg0, %c0_i32 : i32, i32
  }
  func.func @transform_1(%arg0: i32) -> (i32, i32) {
    %c0_i32 = arith.constant 0 : i32
    %c0_i32_0 = arith.constant 0 : i32
    %c0_i32_1 = arith.constant 0 : i32
    return %c0_i32, %c0_i32_0 : i32, i32
  }
  func.func @transform_2(%arg0: i32) -> (i32, i32) {
    %c0_i32 = arith.constant 0 : i32
    %c0_i32_0 = arith.constant 0 : i32
    return %arg0, %c0_i32 : i32, i32
  }
  func.func @transform_3(%arg0: i32) -> (i32, i32) {
    %c0_i32 = arith.constant 0 : i32
    %c0_i32_0 = arith.constant 0 : i32
    return %arg0, %c0_i32 : i32, i32
  }
}

</mosaic_0001>

<llo_original>
// kernel: tpu_custom_call.1
$region0: #{tpu_custom_call.1}
  #allocation0 [shape = 'u32[]', space=smem, size = 0x4, offset = 0x4, fixed_abs, tag = 'smem constant byte address 0x4 - core index']
  #allocation1 [shape = 'u32[144,128]{1,0:T(1,128)}', space=vmem, size = 0x12000, scoped, tag = 'internal scratch']
  #allocation2 [shape = 'bf16[82,8]{1,0:T(8,128)(2,1)}', space=vmem, size = 0x5800, scoped, tag = 'scratch operand']
  %s0 = inlined_call_operand.vmem [shape: bf16[128,8], index: 0, kind: input, shape index: {}]
  %s1 = inlined_call_operand.vmem [shape: bf16[128,8], index: 1, kind: input, shape index: {}]
  %s2 = inlined_call_operand.vmem [shape: bf16[9,8,16], index: 2, kind: input, shape index: {}]
  %s3 = inlined_call_operand.vmem [shape: f32[1,16], index: 3, kind: input, shape index: {}]
  %s4 = inlined_call_operand.vmem [shape: f32[1,16], index: 4, kind: input, shape index: {}]
  %s5 = inlined_call_operand.vmem [shape: f32[64,16], index: 5, kind: output, shape index: {0}]
  %s6 = inlined_call_operand.vmem [shape: bf16[64,16], index: 6, kind: output, shape index: {1}]
  %7 = xla_tuple %s5, %s6
  %s8 = sld [smem:[#allocation0]]
  $region38: #{tpu_custom_call.1} parent=0
    _
  %s10 = ssub.s32 1, %s8
  %s11 = scalar_select 0, %s10, %s8
  // Predicated region
  $region2: #{tpu_custom_call.1} parent=0 // pred_check
    _
  $region3: #{tpu_custom_call.1} parent=0 // pred_check_branch
    %13 = sbr.rel (0) target = $region5
  $region4: #{tpu_custom_call.1} parent=0 // pred_region
    _
  $region5: #{tpu_custom_call.1} parent=0 // pred_fallthru
    _
  // Predicated region
  $region6: #{tpu_custom_call.1} parent=0 // pred_check
    _
  $region7: #{tpu_custom_call.1} parent=0 // pred_check_branch
    %15 = sbr.rel (0) target = $region9
  $region8: #{tpu_custom_call.1} parent=0 // pred_region
    %s16 = sadd.s32 0, 1
    %s17 = smul.u32 8, %s16
    %p18 = scmp.lt.s32.totalorder %s17, 15
    %s19 = scalar_select %p18, %s17, 15
    %s20 = smul.addr %s19, 4
    %s21 = scalar_lea.vmem %s1, %s20
    %s22 = sadd.s32 0, 1
    %s23 = smul.u32 8, %s22
  $region9: #{tpu_custom_call.1} parent=0 // pred_fallthru
    _
  // Predicated region
  $region10: #{tpu_custom_call.1} parent=0 // pred_check
    _
  $region11: #{tpu_custom_call.1} parent=0 // pred_check_branch
    %25 = sbr.rel (0) target = $region13
  $region12: #{tpu_custom_call.1} parent=0 // pred_region
    _
  $region13: #{tpu_custom_call.1} parent=0 // pred_fallthru
    _
  // Predicated region
  $region14: #{tpu_custom_call.1} parent=0 // pred_check
    _
  $region15: #{tpu_custom_call.1} parent=0 // pred_check_branch
    %27 = sbr.rel (0) target = $region17
  $region16: #{tpu_custom_call.1} parent=0 // pred_region
    _
  $region17: #{tpu_custom_call.1} parent=0 // pred_fallthru
    _
  // Predicated region
  $region18: #{tpu_custom_call.1} parent=0 // pred_check
    _
  $region19: #{tpu_custom_call.1} parent=0 // pred_check_branch
    %29 = sbr.rel (0) target = $region21
  $region20: #{tpu_custom_call.1} parent=0 // pred_region
    _
  $region21: #{tpu_custom_call.1} parent=0 // pred_fallthru
    _
  %s30 = sadd.s32 0, 1
  %s31 = smul.u32 8, %s30
  %p32 = scmp.lt.s32.totalorder %s31, 15
  %s33 = scalar_select %p32, %s31, 15
  %s34 = smul.addr %s33, 4
  %s35 = scalar_lea.vmem %s1, %s34
  %s36 = sadd.s32 0, 1
  %s37 = smul.u32 8, %s36
  %p38 = scmp.lt.s32.totalorder %s37, 15
  %s39 = scalar_select %p38, %s37, 15
  %s40 = smul.addr %s39, 4
  %s41 = scalar_lea.vmem %s1, %s40
  %s42 = sadd.s32 0, 1
  %s43 = smul.u32 8, %s42
  %v45 = vld [vmem:[%s0] sm:$0xf]
  %v46 = vld [vmem:[%s0 + $0x4] sm:$0xf]
  %v47 = vld [vmem:[%s0 + $0x8] sm:$0xf]
  %v48 = vld [vmem:[%s0 + $0xc] sm:$0xf]
  %v49 = vld [vmem:[%s0 + $0x10] sm:$0xf]
  %v50 = vld [vmem:[%s0 + $0x14] sm:$0xf]
  %v51 = vld [vmem:[%s0 + $0x18] sm:$0xf]
  %v52 = vld [vmem:[%s0 + $0x1c] sm:$0xf]
  %vm53 = vcmask 60416
  %54 = vst.msk [vmem:[#allocation2] sm:$0xf] %vm53, %v45
  %55 = vst.msk [vmem:[#allocation2 + $0x4] sm:$0xf] %vm53, %v46
  %56 = vst.msk [vmem:[#allocation2 + $0x8] sm:$0xf] %vm53, %v47
  %57 = vst.msk [vmem:[#allocation2 + $0xc] sm:$0xf] %vm53, %v48
  %58 = vst.msk [vmem:[#allocation2 + $0x10] sm:$0xf] %vm53, %v49
  %59 = vst.msk [vmem:[#allocation2 + $0x14] sm:$0xf] %vm53, %v50
  %60 = vst.msk [vmem:[#allocation2 + $0x18] sm:$0xf] %vm53, %v51
  %61 = vst.msk [vmem:[#allocation2 + $0x1c] sm:$0xf] %vm53, %v52
  %v62 = vld [vmem:[%s41] sm:$0xf]
  %v63 = vld [vmem:[%s41 + $0x4] sm:$0xf]
  %v64 = vld [vmem:[%s41 + $0x8] sm:$0x1]
  %65 = vst.msk [vmem:[#allocation2 + $0x20] sm:$0xf] %vm53, %v62
  %66 = vst.msk [vmem:[#allocation2 + $0x24] sm:$0xf] %vm53, %v63
  %vm67 = vcmask 57344
  %68 = vst.msk [vmem:[#allocation2 + $0x28] sm:$0x1] %vm67, %v64
  %v69 = vld [vmem:[#allocation2] sm:$0xf]
  %v70 = vld [vmem:[#allocation2 + $0x4] sm:$0xf]
  %v71 = vld [vmem:[#allocation2 + $0x8] sm:$0xf]
  %v72 = vld [vmem:[#allocation2 + $0xc] sm:$0xf]
  %v73 = vld [vmem:[#allocation2 + $0x10] sm:$0xf]
  %v74 = vld [vmem:[#allocation2 + $0x14] sm:$0xf]
  %v75 = vld [vmem:[#allocation2 + $0x18] sm:$0xf]
  %v76 = vld [vmem:[#allocation2 + $0x1c] sm:$0xf]
  %v77 = vld [vmem:[%s2] sm:$0xf]
  %v78 = vld [vmem:[#allocation2 + $0x20] sm:$0x1]
  %s79 = scalar_lea.vmem %s2, 4
  %v80 = vld [vmem:[%s79] sm:$0xf]
  %v90 = vunpack.c.l.b16 %v69
  %v91 = vunpack.c.l.b16 %v70
  %v92 = vunpack.c.l.b16 %v71
  %v93 = vunpack.c.l.b16 %v72
  %v94 = vunpack.c.l.b16 %v73
  %v95 = vunpack.c.l.b16 %v74
  %v96 = vunpack.c.l.b16 %v75
  %v97 = vunpack.c.l.b16 %v76
  %v98 = vunpack.c.l.b16 %v78
  %v99 = vpack.c.b16 %v91, %v90
  %v100 = vpack.c.b16 %v93, %v92
  %v101 = vpack.c.b16 %v95, %v94
  %v102 = vpack.c.b16 %v97, %v96
  %v103 = vpack.c.b16 %v98, %v98
  %vm104 = vsmask.f32 7424
  %v106 = vshrl.u32 %v99, 16
  %v108 = vshll.u32 %v99, 16
  %v110 = vrot.slane %v108, 1
  %v111 = vor.u32 %v106, %v110
  %v113 = vshll.u32 %v100, 16
  %v115 = vrot.slane %v113, 1
  %v116 = vsel %vm104, %v111, %v115
  %v117 = vshrl.u32 %v100, 16
  %v119 = vor.u32 %v117, %v115
  %v121 = vshll.u32 %v101, 16
  %v123 = vrot.slane %v121, 1
  %v124 = vsel %vm104, %v119, %v123
  %v125 = vshrl.u32 %v101, 16
  %v127 = vor.u32 %v125, %v123
  %v129 = vshll.u32 %v102, 16
  %v131 = vrot.slane %v129, 1
  %v132 = vsel %vm104, %v127, %v131
  %v133 = vshrl.u32 %v102, 16
  %v135 = vor.u32 %v133, %v131
  %v137 = vshll.u32 %v103, 16
  %v139 = vrot.slane %v137, 1
  %v140 = vsel %vm104, %v135, %v139
  %vm141 = vcmask 64512
  %v143 = vsel %vm141, %v116, 0
  %v146 = vsel %vm141, %v124, 0
  %v149 = vsel %vm141, %v132, 0
  %v152 = vsel %vm141, %v140, 0
  %vm154 = vcmask 1043456
  %v156 = vsel %vm154, %v80, 0
  %158 = vmatprep.subr.bf16.mxu0 0
  %159 = vmatpush1.bf16.msra.mxu0 %v156
  %160 = vmatprep.subr.bf16.mxu0 0
  %161 = vmatpush1.bf16.msra.mxu0 0
  %162 = vmatprep.subr.bf16.mxu0 0
  %163 = vmatpush1.bf16.msra.mxu0 0
  %164 = vmatprep.subr.bf16.mxu0 0
  %165 = vmatpush1.bf16.msra.mxu0 0
  %166 = vmatprep.subr.bf16.mxu0 0
  %167 = vmatpush1.bf16.msra.mxu0 0
  %168 = vmatprep.subr.bf16.mxu0 0
  %169 = vmatpush1.bf16.msra.mxu0 0
  %170 = vmatprep.subr.bf16.mxu0 0
  %171 = vmatpush1.bf16.msra.mxu0 0
  %172 = vmatprep.subr.bf16.mxu0 0
  %173 = vmatpush1.bf16.msra.mxu0 0
  %174 = vmatprep.subr.bf16.mxu0 0
  %175 = vmatpush1.bf16.msra.mxu0 0
  %176 = vmatprep.subr.bf16.mxu0 0
  %177 = vmatpush1.bf16.msra.mxu0 0
  %178 = vmatprep.subr.bf16.mxu0 0
  %179 = vmatpush1.bf16.msra.mxu0 0
  %180 = vmatprep.subr.bf16.mxu0 0
  %181 = vmatpush1.bf16.msra.mxu0 0
  %182 = vmatprep.subr.bf16.mxu0 0
  %183 = vmatpush1.bf16.msra.mxu0 0
  %184 = vmatprep.subr.bf16.mxu0 0
  %185 = vmatpush1.bf16.msra.mxu0 0
  %186 = vmatprep.subr.bf16.mxu0 0
  %187 = vmatpush1.bf16.msra.mxu0 0
  %188 = vmatprep.subr.bf16.mxu0 0
  %189 = vmatpush1.bf16.msra.mxu0 0
  %190 = vmatprep.mubr.bf16.mxu0 0
  %191 = vmatmul.mubr.bf16.gmra.mrb[0].mxu0 %v143
  %v192 = vpop.f32.mrb[0].mxu0
  %v193 = vadd.f32 0.0, %v192
  %v194 = vpop.f32.mrb[0].mxu0
  %v195 = vpop.f32.mrb[0].mxu0
  %v196 = vadd.f32 0.0, %v195
  %v197 = vpop.f32.mrb[0].mxu0
  %198 = vmatprep.mubr.bf16.mxu0 0
  %199 = vmatmul.mubr.bf16.gmra.mrb[0].mxu0 %v146
  %v200 = vpop.f32.mrb[0].mxu0
  %v201 = vadd.f32 0.0, %v200
  %v202 = vpop.f32.mrb[0].mxu0
  %v203 = vpop.f32.mrb[0].mxu0
  %v204 = vadd.f32 0.0, %v203
  %v205 = vpop.f32.mrb[0].mxu0
  %206 = vmatprep.mubr.bf16.mxu0 0
  %207 = vmatmul.mubr.bf16.gmra.mrb[0].mxu0 %v149
  %v208 = vpop.f32.mrb[0].mxu0
  %v209 = vadd.f32 0.0, %v208
  %v210 = vpop.f32.mrb[0].mxu0
  %v211 = vpop.f32.mrb[0].mxu0
  %v212 = vadd.f32 0.0, %v211
  %v213 = vpop.f32.mrb[0].mxu0
  %214 = vmatprep.mubr.bf16.mxu0 0
  %215 = vmatmul.mubr.bf16.gmra.mrb[0].mxu0 %v152
  %v216 = vpop.f32.mrb[0].mxu0
  %v217 = vadd.f32 0.0, %v216
  %v218 = vpop.f32.mrb[0].mxu0
  %v219 = vpop.f32.mrb[0].mxu0
  %v220 = vadd.f32 0.0, %v219
  %v221 = vpop.f32.mrb[0].mxu0
  %222 = vdwg.mxu0
  %v223 = vsel %vm141, %v99, 0
  %v225 = vsel %vm141, %v100, 0
  %v227 = vsel %vm141, %v101, 0
  %v229 = vsel %vm141, %v102, 0
  %v232 = vsel %vm154, %v77, 0
  %234 = vmatprep.subr.bf16.mxu0 0
  %235 = vmatpush1.bf16.msra.mxu0 %v232
  %236 = vmatprep.subr.bf16.mxu0 0
  %237 = vmatpush1.bf16.msra.mxu0 0
  %238 = vmatprep.subr.bf16.mxu0 0
  %239 = vmatpush1.bf16.msra.mxu0 0
  %240 = vmatprep.subr.bf16.mxu0 0
  %241 = vmatpush1.bf16.msra.mxu0 0
  %242 = vmatprep.subr.bf16.mxu0 0
  %243 = vmatpush1.bf16.msra.mxu0 0
  %244 = vmatprep.subr.bf16.mxu0 0
  %245 = vmatpush1.bf16.msra.mxu0 0
  %246 = vmatprep.subr.bf16.mxu0 0
  %247 = vmatpush1.bf16.msra.mxu0 0
  %248 = vmatprep.subr.bf16.mxu0 0
  %249 = vmatpush1.bf16.msra.mxu0 0
  %250 = vmatprep.subr.bf16.mxu0 0
  %251 = vmatpush1.bf16.msra.mxu0 0
  %252 = vmatprep.subr.bf16.mxu0 0
  %253 = vmatpush1.bf16.msra.mxu0 0
  %254 = vmatprep.subr.bf16.mxu0 0
  %255 = vmatpush1.bf16.msra.mxu0 0
  %256 = vmatprep.subr.bf16.mxu0 0
  %257 = vmatpush1.bf16.msra.mxu0 0
  %258 = vmatprep.subr.bf16.mxu0 0
  %259 = vmatpush1.bf16.msra.mxu0 0
  %260 = vmatprep.subr.bf16.mxu0 0
  %261 = vmatpush1.bf16.msra.mxu0 0
  %262 = vmatprep.subr.bf16.mxu0 0
  %263 = vmatpush1.bf16.msra.mxu0 0
  %264 = vmatprep.subr.bf16.mxu0 0
  %265 = vmatpush1.bf16.msra.mxu0 0
  %266 = vmatprep.mubr.bf16.mxu0 0
  %267 = vmatmul.mubr.bf16.gmra.mrb[0].mxu0 %v223
  %v268 = vpop.f32.mrb[0].mxu0
  %v269 = vadd.f32 %v193, %v268
  %v270 = vpop.f32.mrb[0].mxu0
  %v271 = vpop.f32.mrb[0].mxu0
  %v272 = vadd.f32 %v196, %v271
  %v273 = vpop.f32.mrb[0].mxu0
  %274 = vmatprep.mubr.bf16.mxu0 0
  %275 = vmatmul.mubr.bf16.gmra.mrb[0].mxu0 %v225
  %v276 = vpop.f32.mrb[0].mxu0
  %v277 = vadd.f32 %v201, %v276
  %v278 = vpop.f32.mrb[0].mxu0
  %v279 = vpop.f32.mrb[0].mxu0
  %v280 = vadd.f32 %v204, %v279
  %v281 = vpop.f32.mrb[0].mxu0
  %282 = vmatprep.mubr.bf16.mxu0 0
  %283 = vmatmul.mubr.bf16.gmra.mrb[0].mxu0 %v227
  %v284 = vpop.f32.mrb[0].mxu0
  %v285 = vadd.f32 %v209, %v284
  %v286 = vpop.f32.mrb[0].mxu0
  %v287 = vpop.f32.mrb[0].mxu0
  %v288 = vadd.f32 %v212, %v287
  %v289 = vpop.f32.mrb[0].mxu0
  %290 = vmatprep.mubr.bf16.mxu0 0
  %291 = vmatmul.mubr.bf16.gmra.mrb[0].mxu0 %v229
  %v292 = vpop.f32.mrb[0].mxu0
  %v293 = vadd.f32 %v217, %v292
  %v294 = vpop.f32.mrb[0].mxu0
  %v295 = vpop.f32.mrb[0].mxu0
  %v296 = vadd.f32 %v220, %v295
  %v297 = vpop.f32.mrb[0].mxu0
  %298 = vdwg.mxu0
  %v299 = vld [vmem:[#allocation2] sm:$0xe]
  %s300 = scalar_lea.vmem %s2, 8
  %v301 = vld [vmem:[%s300] sm:$0xf]
  %v303 = vunpack.c.l.b16 %v299
  %v304 = vpack.c.b16 %v91, %v303
  %vm305 = vcmask 1046528
  %v306 = vrot.slane %v304, 1
  %v307 = vrot.slane %v100, 1
  %v308 = vsel %vm305, %v306, %v307
  %v309 = vrot.slane %v101, 1
  %v310 = vsel %vm305, %v307, %v309
  %v311 = vrot.slane %v102, 1
  %v312 = vsel %vm305, %v309, %v311
  %v313 = vrot.slane %v103, 1
  %v314 = vsel %vm305, %v311, %v313
  %v316 = vsel %vm141, %v308, 0
  %v319 = vsel %vm141, %v310, 0
  %v322 = vsel %vm141, %v312, 0
  %v325 = vsel %vm141, %v314, 0
  %v328 = vsel %vm154, %v301, 0
  %330 = vmatprep.subr.bf16.mxu0 0
  %331 = vmatpush1.bf16.msra.mxu0 %v328
  %332 = vmatprep.subr.bf16.mxu0 0
  %333 = vmatpush1.bf16.msra.mxu0 0
  %334 = vmatprep.subr.bf16.mxu0 0
  %335 = vmatpush1.bf16.msra.mxu0 0
  %336 = vmatprep.subr.bf16.mxu0 0
  %337 = vmatpush1.bf16.msra.mxu0 0
  %338 = vmatprep.subr.bf16.mxu0 0
  %339 = vmatpush1.bf16.msra.mxu0 0
  %340 = vmatprep.subr.bf16.mxu0 0
  %341 = vmatpush1.bf16.msra.mxu0 0
  %342 = vmatprep.subr.bf16.mxu0 0
  %343 = vmatpush1.bf16.msra.mxu0 0
  %344 = vmatprep.subr.bf16.mxu0 0
  %345 = vmatpush1.bf16.msra.mxu0 0
  %346 = vmatprep.subr.bf16.mxu0 0
  %347 = vmatpush1.bf16.msra.mxu0 0
  %348 = vmatprep.subr.bf16.mxu0 0
  %349 = vmatpush1.bf16.msra.mxu0 0
  %350 = vmatprep.subr.bf16.mxu0 0
  %351 = vmatpush1.bf16.msra.mxu0 0
  %352 = vmatprep.subr.bf16.mxu0 0
  %353 = vmatpush1.bf16.msra.mxu0 0
  %354 = vmatprep.subr.bf16.mxu0 0
  %355 = vmatpush1.bf16.msra.mxu0 0
  %356 = vmatprep.subr.bf16.mxu0 0
  %357 = vmatpush1.bf16.msra.mxu0 0
  %358 = vmatprep.subr.bf16.mxu0 0
  %359 = vmatpush1.bf16.msra.mxu0 0
  %360 = vmatprep.subr.bf16.mxu0 0
  %361 = vmatpush1.bf16.msra.mxu0 0
  %362 = vmatprep.mubr.bf16.mxu0 0
  %363 = vmatmul.mubr.bf16.gmra.mrb[0].mxu0 %v316
  %v364 = vpop.f32.mrb[0].mxu0
  %v365 = vadd.f32 0.0, %v364
  %v366 = vpop.f32.mrb[0].mxu0
  %v367 = vpop.f32.mrb[0].mxu0
  %v368 = vadd.f32 0.0, %v367
  %v369 = vpop.f32.mrb[0].mxu0
  %370 = vmatprep.mubr.bf16.mxu0 0
  %371 = vmatmul.mubr.bf16.gmra.mrb[0].mxu0 %v319
  %v372 = vpop.f32.mrb[0].mxu0
  %v373 = vadd.f32 0.0, %v372
  %v374 = vpop.f32.mrb[0].mxu0
  %v375 = vpop.f32.mrb[0].mxu0
  %v376 = vadd.f32 0.0, %v375
  %v377 = vpop.f32.mrb[0].mxu0
  %378 = vmatprep.mubr.bf16.mxu0 0
  %379 = vmatmul.mubr.bf16.gmra.mrb[0].mxu0 %v322
  %v380 = vpop.f32.mrb[0].mxu0
  %v381 = vadd.f32 0.0, %v380
  %v382 = vpop.f32.mrb[0].mxu0
  %v383 = vpop.f32.mrb[0].mxu0
  %v384 = vadd.f32 0.0, %v383
  %v385 = vpop.f32.mrb[0].mxu0
  %386 = vmatprep.mubr.bf16.mxu0 0
  %387 = vmatmul.mubr.bf16.gmra.mrb[0].mxu0 %v325
  %v388 = vpop.f32.mrb[0].mxu0
  %v389 = vadd.f32 0.0, %v388
  %v390 = vpop.f32.mrb[0].mxu0
  %v391 = vpop.f32.mrb[0].mxu0
  %v392 = vadd.f32 0.0, %v391
  %v393 = vpop.f32.mrb[0].mxu0
  %394 = vdwg.mxu0
  %v395 = vadd.f32 %v269, %v365
  %v396 = vadd.f32 %v272, %v368
  %v397 = vadd.f32 %v277, %v373
  %v398 = vadd.f32 %v280, %v376
  %v399 = vadd.f32 %v285, %v381
  %v400 = vadd.f32 %v288, %v384
  %v401 = vadd.f32 %v293, %v389
  %v402 = vadd.f32 %v296, %v392
  %v403 = vld [vmem:[#allocation2 + $0x20] sm:$0xf]
  %s404 = scalar_lea.vmem %s2, 12
  %v405 = vld [vmem:[%s404] sm:$0xf]
  %v407 = vunpack.c.l.b16 %v403
  %v408 = vpack.c.b16 %v92, %v91
  %v409 = vpack.c.b16 %v94, %v93
  %v410 = vpack.c.b16 %v96, %v95
  %v411 = vpack.c.b16 %v407, %v97
  %v413 = vsel %vm141, %v408, 0
  %v416 = vsel %vm141, %v409, 0
  %v419 = vsel %vm141, %v410, 0
  %v422 = vsel %vm141, %v411, 0
  %v425 = vsel %vm154, %v405, 0
  %427 = vmatprep.subr.bf16.mxu0 0
  %428 = vmatpush1.bf16.msra.mxu0 %v425
  %429 = vmatprep.subr.bf16.mxu0 0
  %430 = vmatpush1.bf16.msra.mxu0 0
  %431 = vmatprep.subr.bf16.mxu0 0
  %432 = vmatpush1.bf16.msra.mxu0 0
  %433 = vmatprep.subr.bf16.mxu0 0
  %434 = vmatpush1.bf16.msra.mxu0 0
  %435 = vmatprep.subr.bf16.mxu0 0
  %436 = vmatpush1.bf16.msra.mxu0 0
  %437 = vmatprep.subr.bf16.mxu0 0
  %438 = vmatpush1.bf16.msra.mxu0 0
  %439 = vmatprep.subr.bf16.mxu0 0
  %440 = vmatpush1.bf16.msra.mxu0 0
  %441 = vmatprep.subr.bf16.mxu0 0
  %442 = vmatpush1.bf16.msra.mxu0 0
  %443 = vmatprep.subr.bf16.mxu0 0
  %444 = vmatpush1.bf16.msra.mxu0 0
  %445 = vmatprep.subr.bf16.mxu0 0
  %446 = vmatpush1.bf16.msra.mxu0 0
  %447 = vmatprep.subr.bf16.mxu0 0
  %448 = vmatpush1.bf16.msra.mxu0 0
  %449 = vmatprep.subr.bf16.mxu0 0
  %450 = vmatpush1.bf16.msra.mxu0 0
  %451 = vmatprep.subr.bf16.mxu0 0
  %452 = vmatpush1.bf16.msra.mxu0 0
  %453 = vmatprep.subr.bf16.mxu0 0
  %454 = vmatpush1.bf16.msra.mxu0 0
  %455 = vmatprep.subr.bf16.mxu0 0
  %456 = vmatpush1.bf16.msra.mxu0 0
  %457 = vmatprep.subr.bf16.mxu0 0
  %458 = vmatpush1.bf16.msra.mxu0 0
  %459 = vmatprep.mubr.bf16.mxu0 0
  %460 = vmatmul.mubr.bf16.gmra.mrb[0].mxu0 %v413
  %v461 = vpop.f32.mrb[0].mxu0
  %v462 = vadd.f32 0.0, %v461
  %v463 = vpop.f32.mrb[0].mxu0
  %v464 = vpop.f32.mrb[0].mxu0
  %v465 = vadd.f32 0.0, %v464
  %v466 = vpop.f32.mrb[0].mxu0
  %467 = vmatprep.mubr.bf16.mxu0 0
  %468 = vmatmul.mubr.bf16.gmra.mrb[0].mxu0 %v416
  %v469 = vpop.f32.mrb[0].mxu0
  %v470 = vadd.f32 0.0, %v469
  %v471 = vpop.f32.mrb[0].mxu0
  %v472 = vpop.f32.mrb[0].mxu0
  %v473 = vadd.f32 0.0, %v472
  %v474 = vpop.f32.mrb[0].mxu0
  %475 = vmatprep.mubr.bf16.mxu0 0
  %476 = vmatmul.mubr.bf16.gmra.mrb[0].mxu0 %v419
  %v477 = vpop.f32.mrb[0].mxu0
  %v478 = vadd.f32 0.0, %v477
  %v479 = vpop.f32.mrb[0].mxu0
  %v480 = vpop.f32.mrb[0].mxu0
  %v481 = vadd.f32 0.0, %v480
  %v482 = vpop.f32.mrb[0].mxu0
  %483 = vmatprep.mubr.bf16.mxu0 0
  %484 = vmatmul.mubr.bf16.gmra.mrb[0].mxu0 %v422
  %v485 = vpop.f32.mrb[0].mxu0
  %v486 = vadd.f32 0.0, %v485
  %v487 = vpop.f32.mrb[0].mxu0
  %v488 = vpop.f32.mrb[0].mxu0
  %v489 = vadd.f32 0.0, %v488
  %v490 = vpop.f32.mrb[0].mxu0
  %491 = vdwg.mxu0
  %v492 = vadd.f32 %v395, %v462
  %v493 = vadd.f32 %v396, %v465
  %v494 = vadd.f32 %v397, %v470
  %v495 = vadd.f32 %v398, %v473
  %v496 = vadd.f32 %v399, %v478
  %v497 = vadd.f32 %v400, %v481
  %v498 = vadd.f32 %v401, %v486
  %v499 = vadd.f32 %v402, %v489
  %v500 = vld [vmem:[#allocation2 + $0x4] sm:$0xf]
  %v501 = vld [vmem:[#allocation2 + $0x8] sm:$0xf]
  %v502 = vld [vmem:[#allocation2 + $0xc] sm:$0xf]
  %v503 = vld [vmem:[#allocation2 + $0x10] sm:$0xf]
  %v504 = vld [vmem:[#allocation2 + $0x14] sm:$0xf]
  %v505 = vld [vmem:[#allocation2 + $0x18] sm:$0xf]
  %v506 = vld [vmem:[#allocation2 + $0x1c] sm:$0xf]
  %v507 = vld [vmem:[#allocation2 + $0x20] sm:$0xf]
  %v508 = vld [vmem:[#allocation2 + $0x24] sm:$0x1]
  %s509 = scalar_lea.vmem %s2, 16
  %v510 = vld [vmem:[%s509] sm:$0xf]
  %v520 = vunpack.c.l.b16 %v500
  %v521 = vunpack.c.l.b16 %v501
  %v522 = vunpack.c.l.b16 %v502
  %v523 = vunpack.c.l.b16 %v503
  %v524 = vunpack.c.l.b16 %v504
  %v525 = vunpack.c.l.b16 %v505
  %v526 = vunpack.c.l.b16 %v506
  %v527 = vunpack.c.l.b16 %v507
  %v528 = vunpack.c.l.b16 %v508
  %v529 = vpack.c.b16 %v521, %v520
  %v530 = vpack.c.b16 %v523, %v522
  %v531 = vpack.c.b16 %v525, %v524
  %v532 = vpack.c.b16 %v527, %v526
  %v533 = vpack.c.b16 %v528, %v528
  %v535 = vshrl.u32 %v529, 16
  %v537 = vshll.u32 %v529, 16
  %v539 = vrot.slane %v537, 1
  %v540 = vor.u32 %v535, %v539
  %v542 = vshll.u32 %v530, 16
  %v544 = vrot.slane %v542, 1
  %v545 = vsel %vm104, %v540, %v544
  %v546 = vshrl.u32 %v530, 16
  %v548 = vor.u32 %v546, %v544
  %v550 = vshll.u32 %v531, 16
  %v552 = vrot.slane %v550, 1
  %v553 = vsel %vm104, %v548, %v552
  %v554 = vshrl.u32 %v531, 16
  %v556 = vor.u32 %v554, %v552
  %v558 = vshll.u32 %v532, 16
  %v560 = vrot.slane %v558, 1
  %v561 = vsel %vm104, %v556, %v560
  %v562 = vshrl.u32 %v532, 16
  %v564 = vor.u32 %v562, %v560
  %v566 = vshll.u32 %v533, 16
  %v568 = vrot.slane %v566, 1
  %v569 = vsel %vm104, %v564, %v568
  %v571 = vsel %vm141, %v545, 0
  %v574 = vsel %vm141, %v553, 0
  %v577 = vsel %vm141, %v561, 0
  %v580 = vsel %vm141, %v569, 0
  %v583 = vsel %vm154, %v510, 0
  %585 = vmatprep.subr.bf16.mxu0 0
  %586 = vmatpush1.bf16.msra.mxu0 %v583
  %587 = vmatprep.subr.bf16.mxu0 0
  %588 = vmatpush1.bf16.msra.mxu0 0
  %589 = vmatprep.subr.bf16.mxu0 0
  %590 = vmatpush1.bf16.msra.mxu0 0
  %591 = vmatprep.subr.bf16.mxu0 0
  %592 = vmatpush1.bf16.msra.mxu0 0
  %593 = vmatprep.subr.bf16.mxu0 0
  %594 = vmatpush1.bf16.msra.mxu0 0
  %595 = vmatprep.subr.bf16.mxu0 0
  %596 = vmatpush1.bf16.msra.mxu0 0
  %597 = vmatprep.subr.bf16.mxu0 0
  %598 = vmatpush1.bf16.msra.mxu0 0
  %599 = vmatprep.subr.bf16.mxu0 0
  %600 = vmatpush1.bf16.msra.mxu0 0
  %601 = vmatprep.subr.bf16.mxu0 0
  %602 = vmatpush1.bf16.msra.mxu0 0
  %603 = vmatprep.subr.bf16.mxu0 0
  %604 = vmatpush1.bf16.msra.mxu0 0
  %605 = vmatprep.subr.bf16.mxu0 0
  %606 = vmatpush1.bf16.msra.mxu0 0
  %607 = vmatprep.subr.bf16.mxu0 0
  %608 = vmatpush1.bf16.msra.mxu0 0
  %609 = vmatprep.subr.bf16.mxu0 0
  %610 = vmatpush1.bf16.msra.mxu0 0
  %611 = vmatprep.subr.bf16.mxu0 0
  %612 = vmatpush1.bf16.msra.mxu0 0
  %613 = vmatprep.subr.bf16.mxu0 0
  %614 = vmatpush1.bf16.msra.mxu0 0
  %615 = vmatprep.subr.bf16.mxu0 0
  %616 = vmatpush1.bf16.msra.mxu0 0
  %617 = vmatprep.mubr.bf16.mxu0 0
  %618 = vmatmul.mubr.bf16.gmra.mrb[0].mxu0 %v571
  %v619 = vpop.f32.mrb[0].mxu0
  %v620 = vadd.f32 0.0, %v619
  %v621 = vpop.f32.mrb[0].mxu0
  %v622 = vpop.f32.mrb[0].mxu0
  %v623 = vadd.f32 0.0, %v622
  %v624 = vpop.f32.mrb[0].mxu0
  %625 = vmatprep.mubr.bf16.mxu0 0
  %626 = vmatmul.mubr.bf16.gmra.mrb[0].mxu0 %v574
  %v627 = vpop.f32.mrb[0].mxu0
  %v628 = vadd.f32 0.0, %v627
  %v629 = vpop.f32.mrb[0].mxu0
  %v630 = vpop.f32.mrb[0].mxu0
  %v631 = vadd.f32 0.0, %v630
  %v632 = vpop.f32.mrb[0].mxu0
  %633 = vmatprep.mubr.bf16.mxu0 0
  %634 = vmatmul.mubr.bf16.gmra.mrb[0].mxu0 %v577
  %v635 = vpop.f32.mrb[0].mxu0
  %v636 = vadd.f32 0.0, %v635
  %v637 = vpop.f32.mrb[0].mxu0
  %v638 = vpop.f32.mrb[0].mxu0
  %v639 = vadd.f32 0.0, %v638
  %v640 = vpop.f32.mrb[0].mxu0
  %641 = vmatprep.mubr.bf16.mxu0 0
  %642 = vmatmul.mubr.bf16.gmra.mrb[0].mxu0 %v580
  %v643 = vpop.f32.mrb[0].mxu0
  %v644 = vadd.f32 0.0, %v643
  %v645 = vpop.f32.mrb[0].mxu0
  %v646 = vpop.f32.mrb[0].mxu0
  %v647 = vadd.f32 0.0, %v646
  %v648 = vpop.f32.mrb[0].mxu0
  %649 = vdwg.mxu0
  %v650 = vadd.f32 %v492, %v620
  %v651 = vadd.f32 %v493, %v623
  %v652 = vadd.f32 %v494, %v628
  %v653 = vadd.f32 %v495, %v631
  %v654 = vadd.f32 %v496, %v636
  %v655 = vadd.f32 %v497, %v639
  %v656 = vadd.f32 %v498, %v644
  %v657 = vadd.f32 %v499, %v647
  %v658 = vld [vmem:[#allocation2 + $0x4] sm:$0xe]
  %s659 = scalar_lea.vmem %s2, 20
  %v660 = vld [vmem:[%s659] sm:$0xf]
  %v662 = vunpack.c.l.b16 %v658
  %v663 = vpack.c.b16 %v521, %v662
  %v664 = vrot.slane %v663, 1
  %v665 = vrot.slane %v530, 1
  %v666 = vsel %vm305, %v664, %v665
  %v667 = vrot.slane %v531, 1
  %v668 = vsel %vm305, %v665, %v667
  %v669 = vrot.slane %v532, 1
  %v670 = vsel %vm305, %v667, %v669
  %v671 = vrot.slane %v533, 1
  %v672 = vsel %vm305, %v669, %v671
  %v674 = vsel %vm141, %v666, 0
  %v677 = vsel %vm141, %v668, 0
  %v680 = vsel %vm141, %v670, 0
  %v683 = vsel %vm141, %v672, 0
  %v686 = vsel %vm154, %v660, 0
  %688 = vmatprep.subr.bf16.mxu0 0
  %689 = vmatpush1.bf16.msra.mxu0 %v686
  %690 = vmatprep.subr.bf16.mxu0 0
  %691 = vmatpush1.bf16.msra.mxu0 0
  %692 = vmatprep.subr.bf16.mxu0 0
  %693 = vmatpush1.bf16.msra.mxu0 0
  %694 = vmatprep.subr.bf16.mxu0 0
  %695 = vmatpush1.bf16.msra.mxu0 0
  %696 = vmatprep.subr.bf16.mxu0 0
  %697 = vmatpush1.bf16.msra.mxu0 0
  %698 = vmatprep.subr.bf16.mxu0 0
  %699 = vmatpush1.bf16.msra.mxu0 0
  %700 = vmatprep.subr.bf16.mxu0 0
  %701 = vmatpush1.bf16.msra.mxu0 0
  %702 = vmatprep.subr.bf16.mxu0 0
  %703 = vmatpush1.bf16.msra.mxu0 0
  %704 = vmatprep.subr.bf16.mxu0 0
  %705 = vmatpush1.bf16.msra.mxu0 0
  %706 = vmatprep.subr.bf16.mxu0 0
  %707 = vmatpush1.bf16.msra.mxu0 0
  %708 = vmatprep.subr.bf16.mxu0 0
  %709 = vmatpush1.bf16.msra.mxu0 0
  %710 = vmatprep.subr.bf16.mxu0 0
  %711 = vmatpush1.bf16.msra.mxu0 0
  %712 = vmatprep.subr.bf16.mxu0 0
  %713 = vmatpush1.bf16.msra.mxu0 0
  %714 = vmatprep.subr.bf16.mxu0 0
  %715 = vmatpush1.bf16.msra.mxu0 0
  %716 = vmatprep.subr.bf16.mxu0 0
  %717 = vmatpush1.bf16.msra.mxu0 0
  %718 = vmatprep.subr.bf16.mxu0 0
  %719 = vmatpush1.bf16.msra.mxu0 0
  %720 = vmatprep.mubr.bf16.mxu0 0
  %721 = vmatmul.mubr.bf16.gmra.mrb[0].mxu0 %v674
  %v722 = vpop.f32.mrb[0].mxu0
  %v723 = vadd.f32 0.0, %v722
  %v724 = vpop.f32.mrb[0].mxu0
  %v725 = vpop.f32.mrb[0].mxu0
  %v726 = vadd.f32 0.0, %v725
  %v727 = vpop.f32.mrb[0].mxu0
  %728 = vmatprep.mubr.bf16.mxu0 0
  %729 = vmatmul.mubr.bf16.gmra.mrb[0].mxu0 %v677
  %v730 = vpop.f32.mrb[0].mxu0
  %v731 = vadd.f32 0.0, %v730
  %v732 = vpop.f32.mrb[0].mxu0
  %v733 = vpop.f32.mrb[0].mxu0
  %v734 = vadd.f32 0.0, %v733
  %v735 = vpop.f32.mrb[0].mxu0
  %736 = vmatprep.mubr.bf16.mxu0 0
  %737 = vmatmul.mubr.bf16.gmra.mrb[0].mxu0 %v680
  %v738 = vpop.f32.mrb[0].mxu0
  %v739 = vadd.f32 0.0, %v738
  %v740 = vpop.f32.mrb[0].mxu0
  %v741 = vpop.f32.mrb[0].mxu0
  %v742 = vadd.f32 0.0, %v741
  %v743 = vpop.f32.mrb[0].mxu0
  %744 = vmatprep.mubr.bf16.mxu0 0
  %745 = vmatmul.mubr.bf16.gmra.mrb[0].mxu0 %v683
  %v746 = vpop.f32.mrb[0].mxu0
  %v747 = vadd.f32 0.0, %v746
  %v748 = vpop.f32.mrb[0].mxu0
  %v749 = vpop.f32.mrb[0].mxu0
  %v750 = vadd.f32 0.0, %v749
  %v751 = vpop.f32.mrb[0].mxu0
  %752 = vdwg.mxu0
  %v753 = vadd.f32 %v650, %v723
  %v754 = vadd.f32 %v651, %v726
  %v755 = vadd.f32 %v652, %v731
  %v756 = vadd.f32 %v653, %v734
  %v757 = vadd.f32 %v654, %v739
  %v758 = vadd.f32 %v655, %v742
  %v759 = vadd.f32 %v656, %v747
  %v760 = vadd.f32 %v657, %v750
  %v761 = vld [vmem:[#allocation2 + $0x24] sm:$0xf]
  %s762 = scalar_lea.vmem %s2, 24
  %v763 = vld [vmem:[%s762] sm:$0xf]
  %v765 = vunpack.c.l.b16 %v761
  %v766 = vpack.c.b16 %v522, %v521
  %v767 = vpack.c.b16 %v524, %v523
  %v768 = vpack.c.b16 %v526, %v525
  %v769 = vpack.c.b16 %v765, %v527
  %v771 = vsel %vm141, %v766, 0
  %v774 = vsel %vm141, %v767, 0
  %v777 = vsel %vm141, %v768, 0
  %v780 = vsel %vm141, %v769, 0
  %v783 = vsel %vm154, %v763, 0
  %785 = vmatprep.subr.bf16.mxu0 0
  %786 = vmatpush1.bf16.msra.mxu0 %v783
  %787 = vmatprep.subr.bf16.mxu0 0
  %788 = vmatpush1.bf16.msra.mxu0 0
  %789 = vmatprep.subr.bf16.mxu0 0
  %790 = vmatpush1.bf16.msra.mxu0 0
  %791 = vmatprep.subr.bf16.mxu0 0
  %792 = vmatpush1.bf16.msra.mxu0 0
  %793 = vmatprep.subr.bf16.mxu0 0
  %794 = vmatpush1.bf16.msra.mxu0 0
  %795 = vmatprep.subr.bf16.mxu0 0
  %796 = vmatpush1.bf16.msra.mxu0 0
  %797 = vmatprep.subr.bf16.mxu0 0
  %798 = vmatpush1.bf16.msra.mxu0 0
  %799 = vmatprep.subr.bf16.mxu0 0
  %800 = vmatpush1.bf16.msra.mxu0 0
  %801 = vmatprep.subr.bf16.mxu0 0
  %802 = vmatpush1.bf16.msra.mxu0 0
  %803 = vmatprep.subr.bf16.mxu0 0
  %804 = vmatpush1.bf16.msra.mxu0 0
  %805 = vmatprep.subr.bf16.mxu0 0
  %806 = vmatpush1.bf16.msra.mxu0 0
  %807 = vmatprep.subr.bf16.mxu0 0
  %808 = vmatpush1.bf16.msra.mxu0 0
  %809 = vmatprep.subr.bf16.mxu0 0
  %810 = vmatpush1.bf16.msra.mxu0 0
  %811 = vmatprep.subr.bf16.mxu0 0
  %812 = vmatpush1.bf16.msra.mxu0 0
  %813 = vmatprep.subr.bf16.mxu0 0
  %814 = vmatpush1.bf16.msra.mxu0 0
  %815 = vmatprep.subr.bf16.mxu0 0
  %816 = vmatpush1.bf16.msra.mxu0 0
  %817 = vmatprep.mubr.bf16.mxu0 0
  %818 = vmatmul.mubr.bf16.gmra.mrb[0].mxu0 %v771
  %v819 = vpop.f32.mrb[0].mxu0
  %v820 = vadd.f32 0.0, %v819
  %v821 = vpop.f32.mrb[0].mxu0
  %v822 = vpop.f32.mrb[0].mxu0
  %v823 = vadd.f32 0.0, %v822
  %v824 = vpop.f32.mrb[0].mxu0
  %825 = vmatprep.mubr.bf16.mxu0 0
  %826 = vmatmul.mubr.bf16.gmra.mrb[0].mxu0 %v774
  %v827 = vpop.f32.mrb[0].mxu0
  %v828 = vadd.f32 0.0, %v827
  %v829 = vpop.f32.mrb[0].mxu0
  %v830 = vpop.f32.mrb[0].mxu0
  %v831 = vadd.f32 0.0, %v830
  %v832 = vpop.f32.mrb[0].mxu0
  %833 = vmatprep.mubr.bf16.mxu0 0
  %834 = vmatmul.mubr.bf16.gmra.mrb[0].mxu0 %v777
  %v835 = vpop.f32.mrb[0].mxu0
  %v836 = vadd.f32 0.0, %v835
  %v837 = vpop.f32.mrb[0].mxu0
  %v838 = vpop.f32.mrb[0].mxu0
  %v839 = vadd.f32 0.0, %v838
  %v840 = vpop.f32.mrb[0].mxu0
  %841 = vmatprep.mubr.bf16.mxu0 0
  %842 = vmatmul.mubr.bf16.gmra.mrb[0].mxu0 %v780
  %v843 = vpop.f32.mrb[0].mxu0
  %v844 = vadd.f32 0.0, %v843
  %v845 = vpop.f32.mrb[0].mxu0
  %v846 = vpop.f32.mrb[0].mxu0
  %v847 = vadd.f32 0.0, %v846
  %v848 = vpop.f32.mrb[0].mxu0
  %849 = vdwg.mxu0
  %v850 = vadd.f32 %v753, %v820
  %v851 = vadd.f32 %v754, %v823
  %v852 = vadd.f32 %v755, %v828
  %v853 = vadd.f32 %v756, %v831
  %v854 = vadd.f32 %v757, %v836
  %v855 = vadd.f32 %v758, %v839
  %v856 = vadd.f32 %v759, %v844
  %v857 = vadd.f32 %v760, %v847
  %v858 = vld [vmem:[#allocation2 + $0x8] sm:$0xf]
  %v859 = vld [vmem:[#allocation2 + $0xc] sm:$0xf]
  %v860 = vld [vmem:[#allocation2 + $0x10] sm:$0xf]
  %v861 = vld [vmem:[#allocation2 + $0x14] sm:$0xf]
  %v862 = vld [vmem:[#allocation2 + $0x18] sm:$0xf]
  %v863 = vld [vmem:[#allocation2 + $0x1c] sm:$0xf]
  %v864 = vld [vmem:[#allocation2 + $0x20] sm:$0xf]
  %v865 = vld [vmem:[#allocation2 + $0x24] sm:$0xf]
  %v866 = vld [vmem:[#allocation2 + $0x28] sm:$0x1]
  %s867 = scalar_lea.vmem %s2, 28
  %v868 = vld [vmem:[%s867] sm:$0xf]
  %v878 = vunpack.c.l.b16 %v858
  %v879 = vunpack.c.l.b16 %v859
  %v880 = vunpack.c.l.b16 %v860
  %v881 = vunpack.c.l.b16 %v861
  %v882 = vunpack.c.l.b16 %v862
  %v883 = vunpack.c.l.b16 %v863
  %v884 = vunpack.c.l.b16 %v864
  %v885 = vunpack.c.l.b16 %v865
  %v886 = vunpack.c.l.b16 %v866
  %v887 = vpack.c.b16 %v879, %v878
  %v888 = vpack.c.b16 %v881, %v880
  %v889 = vpack.c.b16 %v883, %v882
  %v890 = vpack.c.b16 %v885, %v884
  %v891 = vpack.c.b16 %v886, %v886
  %v893 = vshrl.u32 %v887, 16
  %v895 = vshll.u32 %v887, 16
  %v897 = vrot.slane %v895, 1
  %v898 = vor.u32 %v893, %v897
  %v900 = vshll.u32 %v888, 16
  %v902 = vrot.slane %v900, 1
  %v903 = vsel %vm104, %v898, %v902
  %v904 = vshrl.u32 %v888, 16
  %v906 = vor.u32 %v904, %v902
  %v908 = vshll.u32 %v889, 16
  %v910 = vrot.slane %v908, 1
  %v911 = vsel %vm104, %v906, %v910
  %v912 = vshrl.u32 %v889, 16
  %v914 = vor.u32 %v912, %v910
  %v916 = vshll.u32 %v890, 16
  %v918 = vrot.slane %v916, 1
  %v919 = vsel %vm104, %v914, %v918
  %v920 = vshrl.u32 %v890, 16
  %v922 = vor.u32 %v920, %v918
  %v924 = vshll.u32 %v891, 16
  %v926 = vrot.slane %v924, 1
  %v927 = vsel %vm104, %v922, %v926
  %v929 = vsel %vm141, %v903, 0
  %v932 = vsel %vm141, %v911, 0
  %v935 = vsel %vm141, %v919, 0
  %v938 = vsel %vm141, %v927, 0
  %v941 = vsel %vm154, %v868, 0
  %943 = vmatprep.subr.bf16.mxu0 0
  %944 = vmatpush1.bf16.msra.mxu0 %v941
  %945 = vmatprep.subr.bf16.mxu0 0
  %946 = vmatpush1.bf16.msra.mxu0 0
  %947 = vmatprep.subr.bf16.mxu0 0
  %948 = vmatpush1.bf16.msra.mxu0 0
  %949 = vmatprep.subr.bf16.mxu0 0
  %950 = vmatpush1.bf16.msra.mxu0 0
  %951 = vmatprep.subr.bf16.mxu0 0
  %952 = vmatpush1.bf16.msra.mxu0 0
  %953 = vmatprep.subr.bf16.mxu0 0
  %954 = vmatpush1.bf16.msra.mxu0 0
  %955 = vmatprep.subr.bf16.mxu0 0
  %956 = vmatpush1.bf16.msra.mxu0 0
  %957 = vmatprep.subr.bf16.mxu0 0
  %958 = vmatpush1.bf16.msra.mxu0 0
  %959 = vmatprep.subr.bf16.mxu0 0
  %960 = vmatpush1.bf16.msra.mxu0 0
  %961 = vmatprep.subr.bf16.mxu0 0
  %962 = vmatpush1.bf16.msra.mxu0 0
  %963 = vmatprep.subr.bf16.mxu0 0
  %964 = vmatpush1.bf16.msra.mxu0 0
  %965 = vmatprep.subr.bf16.mxu0 0
  %966 = vmatpush1.bf16.msra.mxu0 0
  %967 = vmatprep.subr.bf16.mxu0 0
  %968 = vmatpush1.bf16.msra.mxu0 0
  %969 = vmatprep.subr.bf16.mxu0 0
  %970 = vmatpush1.bf16.msra.mxu0 0
  %971 = vmatprep.subr.bf16.mxu0 0
  %972 = vmatpush1.bf16.msra.mxu0 0
  %973 = vmatprep.subr.bf16.mxu0 0
  %974 = vmatpush1.bf16.msra.mxu0 0
  %975 = vmatprep.mubr.bf16.mxu0 0
  %976 = vmatmul.mubr.bf16.gmra.mrb[0].mxu0 %v929
  %v977 = vpop.f32.mrb[0].mxu0
  %v978 = vadd.f32 0.0, %v977
  %v979 = vpop.f32.mrb[0].mxu0
  %v980 = vpop.f32.mrb[0].mxu0
  %v981 = vadd.f32 0.0, %v980
  %v982 = vpop.f32.mrb[0].mxu0
  %983 = vmatprep.mubr.bf16.mxu0 0
  %984 = vmatmul.mubr.bf16.gmra.mrb[0].mxu0 %v932
  %v985 = vpop.f32.mrb[0].mxu0
  %v986 = vadd.f32 0.0, %v985
  %v987 = vpop.f32.mrb[0].mxu0
  %v988 = vpop.f32.mrb[0].mxu0
  %v989 = vadd.f32 0.0, %v988
  %v990 = vpop.f32.mrb[0].mxu0
  %991 = vmatprep.mubr.bf16.mxu0 0
  %992 = vmatmul.mubr.bf16.gmra.mrb[0].mxu0 %v935
  %v993 = vpop.f32.mrb[0].mxu0
  %v994 = vadd.f32 0.0, %v993
  %v995 = vpop.f32.mrb[0].mxu0
  %v996 = vpop.f32.mrb[0].mxu0
  %v997 = vadd.f32 0.0, %v996
  %v998 = vpop.f32.mrb[0].mxu0
  %999 = vmatprep.mubr.bf16.mxu0 0
  %1000 = vmatmul.mubr.bf16.gmra.mrb[0].mxu0 %v938
  %v1001 = vpop.f32.mrb[0].mxu0
  %v1002 = vadd.f32 0.0, %v1001
  %v1003 = vpop.f32.mrb[0].mxu0
  %v1004 = vpop.f32.mrb[0].mxu0
  %v1005 = vadd.f32 0.0, %v1004
  %v1006 = vpop.f32.mrb[0].mxu0
  %1007 = vdwg.mxu0
  %v1008 = vadd.f32 %v850, %v978
  %v1009 = vadd.f32 %v851, %v981
  %v1010 = vadd.f32 %v852, %v986
  %v1011 = vadd.f32 %v853, %v989
  %v1012 = vadd.f32 %v854, %v994
  %v1013 = vadd.f32 %v855, %v997
  %v1014 = vadd.f32 %v856, %v1002
  %v1015 = vadd.f32 %v857, %v1005
  %v1016 = vld [vmem:[#allocation2 + $0x8] sm:$0xe]
  %s1017 = scalar_lea.vmem %s2, 32
  %v1018 = vld [vmem:[%s1017] sm:$0xf]
  %v1020 = vunpack.c.l.b16 %v1016
  %v1021 = vpack.c.b16 %v879, %v1020
  %v1022 = vrot.slane %v1021, 1
  %v1023 = vrot.slane %v888, 1
  %v1024 = vsel %vm305, %v1022, %v1023
  %v1025 = vrot.slane %v889, 1
  %v1026 = vsel %vm305, %v1023, %v1025
  %v1027 = vrot.slane %v890, 1
  %v1028 = vsel %vm305, %v1025, %v1027
  %v1029 = vrot.slane %v891, 1
  %v1030 = vsel %vm305, %v1027, %v1029
  %v1032 = vsel %vm141, %v1024, 0
  %v1035 = vsel %vm141, %v1026, 0
  %v1038 = vsel %vm141, %v1028, 0
  %v1041 = vsel %vm141, %v1030, 0
  %v1044 = vsel %vm154, %v1018, 0
  %1046 = vmatprep.subr.bf16.mxu0 0
  %1047 = vmatpush1.bf16.msra.mxu0 %v1044
  %1048 = vmatprep.subr.bf16.mxu0 0
  %1049 = vmatpush1.bf16.msra.mxu0 0
  %1050 = vmatprep.subr.bf16.mxu0 0
  %1051 = vmatpush1.bf16.msra.mxu0 0
  %1052 = vmatprep.subr.bf16.mxu0 0
  %1053 = vmatpush1.bf16.msra.mxu0 0
  %1054 = vmatprep.subr.bf16.mxu0 0
  %1055 = vmatpush1.bf16.msra.mxu0 0
  %1056 = vmatprep.subr.bf16.mxu0 0
  %1057 = vmatpush1.bf16.msra.mxu0 0
  %1058 = vmatprep.subr.bf16.mxu0 0
  %1059 = vmatpush1.bf16.msra.mxu0 0
  %1060 = vmatprep.subr.bf16.mxu0 0
  %1061 = vmatpush1.bf16.msra.mxu0 0
  %1062 = vmatprep.subr.bf16.mxu0 0
  %1063 = vmatpush1.bf16.msra.mxu0 0
  %1064 = vmatprep.subr.bf16.mxu0 0
  %1065 = vmatpush1.bf16.msra.mxu0 0
  %1066 = vmatprep.subr.bf16.mxu0 0
  %1067 = vmatpush1.bf16.msra.mxu0 0
  %1068 = vmatprep.subr.bf16.mxu0 0
  %1069 = vmatpush1.bf16.msra.mxu0 0
  %1070 = vmatprep.subr.bf16.mxu0 0
  %1071 = vmatpush1.bf16.msra.mxu0 0
  %1072 = vmatprep.subr.bf16.mxu0 0
  %1073 = vmatpush1.bf16.msra.mxu0 0
  %1074 = vmatprep.subr.bf16.mxu0 0
  %1075 = vmatpush1.bf16.msra.mxu0 0
  %1076 = vmatprep.subr.bf16.mxu0 0
  %1077 = vmatpush1.bf16.msra.mxu0 0
  %1078 = vmatprep.mubr.bf16.mxu0 0
  %1079 = vmatmul.mubr.bf16.gmra.mrb[0].mxu0 %v1032
  %v1080 = vpop.f32.mrb[0].mxu0
  %v1081 = vadd.f32 0.0, %v1080
  %v1082 = vpop.f32.mrb[0].mxu0
  %v1083 = vpop.f32.mrb[0].mxu0
  %v1084 = vadd.f32 0.0, %v1083
  %v1085 = vpop.f32.mrb[0].mxu0
  %1086 = vmatprep.mubr.bf16.mxu0 0
  %1087 = vmatmul.mubr.bf16.gmra.mrb[0].mxu0 %v1035
  %v1088 = vpop.f32.mrb[0].mxu0
  %v1089 = vadd.f32 0.0, %v1088
  %v1090 = vpop.f32.mrb[0].mxu0
  %v1091 = vpop.f32.mrb[0].mxu0
  %v1092 = vadd.f32 0.0, %v1091
  %v1093 = vpop.f32.mrb[0].mxu0
  %1094 = vmatprep.mubr.bf16.mxu0 0
  %1095 = vmatmul.mubr.bf16.gmra.mrb[0].mxu0 %v1038
  %v1096 = vpop.f32.mrb[0].mxu0
  %v1097 = vadd.f32 0.0, %v1096
  %v1098 = vpop.f32.mrb[0].mxu0
  %v1099 = vpop.f32.mrb[0].mxu0
  %v1100 = vadd.f32 0.0, %v1099
  %v1101 = vpop.f32.mrb[0].mxu0
  %1102 = vmatprep.mubr.bf16.mxu0 0
  %1103 = vmatmul.mubr.bf16.gmra.mrb[0].mxu0 %v1041
  %v1104 = vpop.f32.mrb[0].mxu0
  %v1105 = vadd.f32 0.0, %v1104
  %v1106 = vpop.f32.mrb[0].mxu0
  %v1107 = vpop.f32.mrb[0].mxu0
  %v1108 = vadd.f32 0.0, %v1107
  %v1109 = vpop.f32.mrb[0].mxu0
  %1110 = vdwg.mxu0
  %v1111 = vadd.f32 %v1008, %v1081
  %v1112 = vadd.f32 %v1009, %v1084
  %v1113 = vadd.f32 %v1010, %v1089
  %v1114 = vadd.f32 %v1011, %v1092
  %v1115 = vadd.f32 %v1012, %v1097
  %v1116 = vadd.f32 %v1013, %v1100
  %v1117 = vadd.f32 %v1014, %v1105
  %v1118 = vadd.f32 %v1015, %v1108
  %vm1119 = vcmask 130048
  %1120 = vst.msk [vmem:[%s5] sm:$0xff] %vm1119, %v1111
  %1121 = vst.msk [vmem:[%s5 + $0x8] sm:$0xff] %vm1119, %v1112
  %1122 = vst.msk [vmem:[%s5 + $0x10] sm:$0xff] %vm1119, %v1113
  %1123 = vst.msk [vmem:[%s5 + $0x18] sm:$0xff] %vm1119, %v1114
  %1124 = vst.msk [vmem:[%s5 + $0x20] sm:$0xff] %vm1119, %v1115
  %1125 = vst.msk [vmem:[%s5 + $0x28] sm:$0xff] %vm1119, %v1116
  %1126 = vst.msk [vmem:[%s5 + $0x30] sm:$0xff] %vm1119, %v1117
  %1127 = vst.msk [vmem:[%s5 + $0x38] sm:$0xff] %vm1119, %v1118
  %v1128 = vld [vmem:[%s3] sm:$0x1]
  %v1130 = vlaneseq
  %v1131 = vshrl.u32 %v1130, 7
  %v1132 = vsub.s32 0, %v1131
  %v1133 = vrot.slane %v1128, %v1132
  %v1135 = vmul.f32 %v1111, %v1133
  %v1136 = vmul.f32 %v1112, %v1133
  %v1137 = vmul.f32 %v1113, %v1133
  %v1138 = vmul.f32 %v1114, %v1133
  %v1139 = vmul.f32 %v1115, %v1133
  %v1140 = vmul.f32 %v1116, %v1133
  %v1141 = vmul.f32 %v1117, %v1133
  %v1142 = vmul.f32 %v1118, %v1133
  %v1143 = vld [vmem:[%s4] sm:$0x1]
  %v1145 = vlaneseq
  %v1146 = vshrl.u32 %v1145, 7
  %v1147 = vsub.s32 0, %v1146
  %v1148 = vrot.slane %v1143, %v1147
  %v1150 = vadd.f32 %v1135, %v1148
  %v1151 = vadd.f32 %v1136, %v1148
  %v1152 = vadd.f32 %v1137, %v1148
  %v1153 = vadd.f32 %v1138, %v1148
  %v1154 = vadd.f32 %v1139, %v1148
  %v1155 = vadd.f32 %v1140, %v1148
  %v1156 = vadd.f32 %v1141, %v1148
  %v1157 = vadd.f32 %v1142, %v1148
  %v1158 = vmax.f32 %v1150, 0.0
  %v1159 = vmax.f32 %v1151, 0.0
  %v1160 = vmax.f32 %v1152, 0.0
  %v1161 = vmax.f32 %v1153, 0.0
  %v1162 = vmax.f32 %v1154, 0.0
  %v1163 = vmax.f32 %v1155, 0.0
  %v1164 = vmax.f32 %v1156, 0.0
  %v1165 = vmax.f32 %v1157, 0.0
  %v1166 = vpack.c.bf16 %v1159, %v1158
  %v1167 = vpack.c.bf16 %v1161, %v1160
  %v1168 = vpack.c.bf16 %v1163, %v1162
  %v1169 = vpack.c.bf16 %v1165, %v1164
  %v1174 = vunpack.c.l.b16 %v1166
  %v1175 = vunpack.c.h.b16 %v1166
  %v1176 = vunpack.c.l.b16 %v1167
  %v1177 = vunpack.c.h.b16 %v1167
  %v1178 = vunpack.c.l.b16 %v1168
  %v1179 = vunpack.c.h.b16 %v1168
  %v1180 = vunpack.c.l.b16 %v1169
  %v1181 = vunpack.c.h.b16 %v1169
  %v1182 = vpack.c.b16 %v1174, %v1174
  %v1183 = vpack.c.b16 %v1175, %v1175
  %v1184 = vpack.c.b16 %v1176, %v1176
  %v1185 = vpack.c.b16 %v1177, %v1177
  %v1186 = vpack.c.b16 %v1178, %v1178
  %v1187 = vpack.c.b16 %v1179, %v1179
  %v1188 = vpack.c.b16 %v1180, %v1180
  %v1189 = vpack.c.b16 %v1181, %v1181
  %vm1198 = vcmask 125952
  %1199 = vst.msk [vmem:[%s6] sm:$0xf] %vm1198, %v1182
  %1200 = vst.msk [vmem:[%s6 + $0x4] sm:$0xf] %vm1198, %v1183
  %1201 = vst.msk [vmem:[%s6 + $0x8] sm:$0xf] %vm1198, %v1184
  %1202 = vst.msk [vmem:[%s6 + $0xc] sm:$0xf] %vm1198, %v1185
  %1203 = vst.msk [vmem:[%s6 + $0x10] sm:$0xf] %vm1198, %v1186
  %1204 = vst.msk [vmem:[%s6 + $0x14] sm:$0xf] %vm1198, %v1187
  %1205 = vst.msk [vmem:[%s6 + $0x18] sm:$0xf] %vm1198, %v1188
  %1206 = vst.msk [vmem:[%s6 + $0x1c] sm:$0xf] %vm1198, %v1189
  // Predicated region
  $region22: #{tpu_custom_call.1} parent=0 // pred_check
    _
  $region23: #{tpu_custom_call.1} parent=0 // pred_check_branch
    %1208 = sbr.rel (0) target = $region25
  $region24: #{tpu_custom_call.1} parent=0 // pred_region
    _
  $region25: #{tpu_custom_call.1} parent=0 // pred_fallthru
    _
  // Predicated region
  $region26: #{tpu_custom_call.1} parent=0 // pred_check
    _
  $region27: #{tpu_custom_call.1} parent=0 // pred_check_branch
    %1210 = sbr.rel (0) target = $region29
  $region28: #{tpu_custom_call.1} parent=0 // pred_region
    _
  $region29: #{tpu_custom_call.1} parent=0 // pred_fallthru
    _
  // Predicated region
  $region30: #{tpu_custom_call.1} parent=0 // pred_check
    _
  $region31: #{tpu_custom_call.1} parent=0 // pred_check_branch
    %1212 = sbr.rel (0) target = $region33
  $region32: #{tpu_custom_call.1} parent=0 // pred_region
    _
  $region33: #{tpu_custom_call.1} parent=0 // pred_fallthru
    _
  // Predicated region
  $region34: #{tpu_custom_call.1} parent=0 // pred_check
    _
  $region35: #{tpu_custom_call.1} parent=0 // pred_check_branch
    %1214 = sbr.rel (0) target = $region37
  $region36: #{tpu_custom_call.1} parent=0 // pred_region
    _
  $region37: #{tpu_custom_call.1} parent=0 // pred_fallthru
    _

// kernel: feature_encoder_forward.25
$region0: #{feature_encoder_forward.25}
  #allocation0 [shape = 'u32[]', space=smem, size = 0x4, offset = 0x4, fixed_abs, tag = 'smem constant byte address 0x4 - core index']
  #allocation1 [shape = 'u32[144,128]{1,0:T(1,128)}', space=vmem, size = 0x12000, scoped, tag = 'internal scratch']
  %s0 = inlined_call_operand.vmem [shape: bf16[128,36], index: 0, kind: input, shape index: {}]
  %s1 = inlined_call_operand.vmem [shape: bf16[36,8], index: 1, kind: input, shape index: {}]
  %s2 = inlined_call_operand.vmem [shape: f32[1,8], index: 2, kind: input, shape index: {}]
  %s3 = inlined_call_operand.vmem [shape: f32[1,8], index: 3, kind: input, shape index: {}]
  %s4 = inlined_call_operand.vmem [shape: bf16[128,8], index: 4, kind: output, shape index: {0}]
  %s5 = inlined_call_operand.vmem [shape: bf16[128,8], index: 5, kind: output, shape index: {1}]
  %6 = xla_tuple %s4, %s5
  %s7 = sld [smem:[#allocation0]]
  $region34: #{feature_encoder_forward.25} parent=0
    _
  %s9 = ssub.s32 1, %s7
  %s10 = scalar_select 0, %s9, %s7
  // Predicated region
  $region2: #{feature_encoder_forward.25} parent=0 // pred_check
    _
  $region3: #{feature_encoder_forward.25} parent=0 // pred_check_branch
    %12 = sbr.rel (0) target = $region5
  $region4: #{feature_encoder_forward.25} parent=0 // pred_region
    _
  $region5: #{feature_encoder_forward.25} parent=0 // pred_fallthru
    _
  // Predicated region
  $region6: #{feature_encoder_forward.25} parent=0 // pred_check
    _
  $region7: #{feature_encoder_forward.25} parent=0 // pred_check_branch
    %14 = sbr.rel (0) target = $region9
  $region8: #{feature_encoder_forward.25} parent=0 // pred_region
    _
  $region9: #{feature_encoder_forward.25} parent=0 // pred_fallthru
    _
  // Predicated region
  $region10: #{feature_encoder_forward.25} parent=0 // pred_check
    _
  $region11: #{feature_encoder_forward.25} parent=0 // pred_check_branch
    %16 = sbr.rel (0) target = $region13
  $region12: #{feature_encoder_forward.25} parent=0 // pred_region
    _
  $region13: #{feature_encoder_forward.25} parent=0 // pred_fallthru
    _
  // Predicated region
  $region14: #{feature_encoder_forward.25} parent=0 // pred_check
    _
  $region15: #{feature_encoder_forward.25} parent=0 // pred_check_branch
    %18 = sbr.rel (0) target = $region17
  $region16: #{feature_encoder_forward.25} parent=0 // pred_region
    _
  $region17: #{feature_encoder_forward.25} parent=0 // pred_fallthru
    _
  %v20 = vld [vmem:[%s0] sm:$0xf]
  %v21 = vld [vmem:[%s0 + $0x4] sm:$0xf]
  %v22 = vld [vmem:[%s0 + $0x8] sm:$0xf]
  %v23 = vld [vmem:[%s0 + $0xc] sm:$0xf]
  %v24 = vld [vmem:[%s0 + $0x10] sm:$0xf]
  %v25 = vld [vmem:[%s0 + $0x14] sm:$0xf]
  %v26 = vld [vmem:[%s0 + $0x18] sm:$0xf]
  %v27 = vld [vmem:[%s0 + $0x1c] sm:$0xf]
  %v28 = vld [vmem:[%s0 + $0x20] sm:$0xf]
  %v29 = vld [vmem:[%s0 + $0x24] sm:$0xf]
  %v30 = vld [vmem:[%s0 + $0x28] sm:$0xf]
  %v31 = vld [vmem:[%s0 + $0x2c] sm:$0xf]
  %v32 = vld [vmem:[%s0 + $0x30] sm:$0xf]
  %v33 = vld [vmem:[%s0 + $0x34] sm:$0xf]
  %v34 = vld [vmem:[%s0 + $0x38] sm:$0xf]
  %v35 = vld [vmem:[%s0 + $0x3c] sm:$0xf]
  %v36 = vld [vmem:[%s1] sm:$0xf]
  %v37 = vld [vmem:[%s1 + $0x4] sm:$0xf]
  %v38 = vld [vmem:[%s1 + $0x8] sm:$0xf]
  %v39 = vld [vmem:[%s1 + $0xc] sm:$0xf]
  %v40 = vld [vmem:[%s1 + $0x10] sm:$0x3]
  %v57 = vunpack.c.l.b16 %v20
  %v58 = vunpack.c.l.b16 %v21
  %v59 = vunpack.c.l.b16 %v22
  %v60 = vunpack.c.l.b16 %v23
  %v61 = vunpack.c.l.b16 %v24
  %v62 = vunpack.c.l.b16 %v25
  %v63 = vunpack.c.l.b16 %v26
  %v64 = vunpack.c.l.b16 %v27
  %v65 = vunpack.c.l.b16 %v28
  %v66 = vunpack.c.l.b16 %v29
  %v67 = vunpack.c.l.b16 %v30
  %v68 = vunpack.c.l.b16 %v31
  %v69 = vunpack.c.l.b16 %v32
  %v70 = vunpack.c.l.b16 %v33
  %v71 = vunpack.c.l.b16 %v34
  %v72 = vunpack.c.l.b16 %v35
  %v73 = vpack.c.b16 %v58, %v57
  %v74 = vpack.c.b16 %v60, %v59
  %v75 = vpack.c.b16 %v62, %v61
  %v76 = vpack.c.b16 %v64, %v63
  %v77 = vpack.c.b16 %v66, %v65
  %v78 = vpack.c.b16 %v68, %v67
  %v79 = vpack.c.b16 %v70, %v69
  %v80 = vpack.c.b16 %v72, %v71
  %v86 = vunpack.c.l.b16 %v36
  %v87 = vunpack.c.l.b16 %v37
  %v88 = vunpack.c.l.b16 %v38
  %v89 = vunpack.c.l.b16 %v39
  %v90 = vunpack.c.l.b16 %v40
  %v91 = vpack.c.b16 %v87, %v86
  %v92 = vpack.c.b16 %v89, %v88
  %v93 = vpack.c.b16 %v90, %v90
  %vm96 = vcmask 293888
  %v98 = vsel %vm96, %v73, 0
  %v101 = vsel %vm96, %v74, 0
  %v104 = vsel %vm96, %v75, 0
  %v107 = vsel %vm96, %v76, 0
  %v110 = vsel %vm96, %v77, 0
  %v113 = vsel %vm96, %v78, 0
  %v116 = vsel %vm96, %v79, 0
  %v119 = vsel %vm96, %v80, 0
  %vm121 = vcmask 1041408
  %v123 = vsel %vm121, %v93, 0
  %125 = vmatprep.subr.bf16.mxu0 0
  %126 = vmatpush1.bf16.msra.mxu0 %v91
  %127 = vmatprep.subr.bf16.mxu0 0
  %128 = vmatpush1.bf16.msra.mxu0 %v92
  %129 = vmatprep.subr.bf16.mxu0 0
  %130 = vmatpush1.bf16.msra.mxu0 %v123
  %131 = vmatprep.subr.bf16.mxu0 0
  %132 = vmatpush1.bf16.msra.mxu0 0
  %133 = vmatprep.subr.bf16.mxu0 0
  %134 = vmatpush1.bf16.msra.mxu0 0
  %135 = vmatprep.subr.bf16.mxu0 0
  %136 = vmatpush1.bf16.msra.mxu0 0
  %137 = vmatprep.subr.bf16.mxu0 0
  %138 = vmatpush1.bf16.msra.mxu0 0
  %139 = vmatprep.subr.bf16.mxu0 0
  %140 = vmatpush1.bf16.msra.mxu0 0
  %141 = vmatprep.subr.bf16.mxu0 0
  %142 = vmatpush1.bf16.msra.mxu0 0
  %143 = vmatprep.subr.bf16.mxu0 0
  %144 = vmatpush1.bf16.msra.mxu0 0
  %145 = vmatprep.subr.bf16.mxu0 0
  %146 = vmatpush1.bf16.msra.mxu0 0
  %147 = vmatprep.subr.bf16.mxu0 0
  %148 = vmatpush1.bf16.msra.mxu0 0
  %149 = vmatprep.subr.bf16.mxu0 0
  %150 = vmatpush1.bf16.msra.mxu0 0
  %151 = vmatprep.subr.bf16.mxu0 0
  %152 = vmatpush1.bf16.msra.mxu0 0
  %153 = vmatprep.subr.bf16.mxu0 0
  %154 = vmatpush1.bf16.msra.mxu0 0
  %155 = vmatprep.subr.bf16.mxu0 0
  %156 = vmatpush1.bf16.msra.mxu0 0
  %157 = vmatprep.mubr.bf16.mxu0 0
  %158 = vmatmul.mubr.bf16.gmra.mrb[0].mxu0 %v98
  %v159 = vpop.f32.mrb[0].mxu0
  %v160 = vadd.f32 0.0, %v159
  %v161 = vpop.f32.mrb[0].mxu0
  %v162 = vpop.f32.mrb[0].mxu0
  %v163 = vadd.f32 0.0, %v162
  %v164 = vpop.f32.mrb[0].mxu0
  %165 = vmatprep.mubr.bf16.mxu0 0
  %166 = vmatmul.mubr.bf16.gmra.mrb[0].mxu0 %v101
  %v167 = vpop.f32.mrb[0].mxu0
  %v168 = vadd.f32 0.0, %v167
  %v169 = vpop.f32.mrb[0].mxu0
  %v170 = vpop.f32.mrb[0].mxu0
  %v171 = vadd.f32 0.0, %v170
  %v172 = vpop.f32.mrb[0].mxu0
  %173 = vmatprep.mubr.bf16.mxu0 0
  %174 = vmatmul.mubr.bf16.gmra.mrb[0].mxu0 %v104
  %v175 = vpop.f32.mrb[0].mxu0
  %v176 = vadd.f32 0.0, %v175
  %v177 = vpop.f32.mrb[0].mxu0
  %v178 = vpop.f32.mrb[0].mxu0
  %v179 = vadd.f32 0.0, %v178
  %v180 = vpop.f32.mrb[0].mxu0
  %181 = vmatprep.mubr.bf16.mxu0 0
  %182 = vmatmul.mubr.bf16.gmra.mrb[0].mxu0 %v107
  %v183 = vpop.f32.mrb[0].mxu0
  %v184 = vadd.f32 0.0, %v183
  %v185 = vpop.f32.mrb[0].mxu0
  %v186 = vpop.f32.mrb[0].mxu0
  %v187 = vadd.f32 0.0, %v186
  %v188 = vpop.f32.mrb[0].mxu0
  %189 = vmatprep.mubr.bf16.mxu0 0
  %190 = vmatmul.mubr.bf16.gmra.mrb[0].mxu0 %v110
  %v191 = vpop.f32.mrb[0].mxu0
  %v192 = vadd.f32 0.0, %v191
  %v193 = vpop.f32.mrb[0].mxu0
  %v194 = vpop.f32.mrb[0].mxu0
  %v195 = vadd.f32 0.0, %v194
  %v196 = vpop.f32.mrb[0].mxu0
  %197 = vmatprep.mubr.bf16.mxu0 0
  %198 = vmatmul.mubr.bf16.gmra.mrb[0].mxu0 %v113
  %v199 = vpop.f32.mrb[0].mxu0
  %v200 = vadd.f32 0.0, %v199
  %v201 = vpop.f32.mrb[0].mxu0
  %v202 = vpop.f32.mrb[0].mxu0
  %v203 = vadd.f32 0.0, %v202
  %v204 = vpop.f32.mrb[0].mxu0
  %205 = vmatprep.mubr.bf16.mxu0 0
  %206 = vmatmul.mubr.bf16.gmra.mrb[0].mxu0 %v116
  %v207 = vpop.f32.mrb[0].mxu0
  %v208 = vadd.f32 0.0, %v207
  %v209 = vpop.f32.mrb[0].mxu0
  %v210 = vpop.f32.mrb[0].mxu0
  %v211 = vadd.f32 0.0, %v210
  %v212 = vpop.f32.mrb[0].mxu0
  %213 = vmatprep.mubr.bf16.mxu0 0
  %214 = vmatmul.mubr.bf16.gmra.mrb[0].mxu0 %v119
  %v215 = vpop.f32.mrb[0].mxu0
  %v216 = vadd.f32 0.0, %v215
  %v217 = vpop.f32.mrb[0].mxu0
  %v218 = vpop.f32.mrb[0].mxu0
  %v219 = vadd.f32 0.0, %v218
  %v220 = vpop.f32.mrb[0].mxu0
  %221 = vdwg.mxu0
  %v222 = vpack.c.bf16 %v163, %v160
  %v223 = vpack.c.bf16 %v171, %v168
  %v224 = vpack.c.bf16 %v179, %v176
  %v225 = vpack.c.bf16 %v187, %v184
  %v226 = vpack.c.bf16 %v195, %v192
  %v227 = vpack.c.bf16 %v203, %v200
  %v228 = vpack.c.bf16 %v211, %v208
  %v229 = vpack.c.bf16 %v219, %v216
  %v238 = vunpack.c.l.b16 %v222
  %v239 = vunpack.c.h.b16 %v222
  %v240 = vunpack.c.l.b16 %v223
  %v241 = vunpack.c.h.b16 %v223
  %v242 = vunpack.c.l.b16 %v224
  %v243 = vunpack.c.h.b16 %v224
  %v244 = vunpack.c.l.b16 %v225
  %v245 = vunpack.c.h.b16 %v225
  %v246 = vunpack.c.l.b16 %v226
  %v247 = vunpack.c.h.b16 %v226
  %v248 = vunpack.c.l.b16 %v227
  %v249 = vunpack.c.h.b16 %v227
  %v250 = vunpack.c.l.b16 %v228
  %v251 = vunpack.c.h.b16 %v228
  %v252 = vunpack.c.l.b16 %v229
  %v253 = vunpack.c.h.b16 %v229
  %v254 = vpack.c.b16 %v238, %v238
  %v255 = vpack.c.b16 %v239, %v239
  %v256 = vpack.c.b16 %v240, %v240
  %v257 = vpack.c.b16 %v241, %v241
  %v258 = vpack.c.b16 %v242, %v242
  %v259 = vpack.c.b16 %v243, %v243
  %v260 = vpack.c.b16 %v244, %v244
  %v261 = vpack.c.b16 %v245, %v245
  %v262 = vpack.c.b16 %v246, %v246
  %v263 = vpack.c.b16 %v247, %v247
  %v264 = vpack.c.b16 %v248, %v248
  %v265 = vpack.c.b16 %v249, %v249
  %v266 = vpack.c.b16 %v250, %v250
  %v267 = vpack.c.b16 %v251, %v251
  %v268 = vpack.c.b16 %v252, %v252
  %v269 = vpack.c.b16 %v253, %v253
  %vm286 = vcmask 60416
  %287 = vst.msk [vmem:[%s4] sm:$0xf] %vm286, %v254
  %288 = vst.msk [vmem:[%s4 + $0x4] sm:$0xf] %vm286, %v255
  %289 = vst.msk [vmem:[%s4 + $0x8] sm:$0xf] %vm286, %v256
  %290 = vst.msk [vmem:[%s4 + $0xc] sm:$0xf] %vm286, %v257
  %291 = vst.msk [vmem:[%s4 + $0x10] sm:$0xf] %vm286, %v258
  %292 = vst.msk [vmem:[%s4 + $0x14] sm:$0xf] %vm286, %v259
  %293 = vst.msk [vmem:[%s4 + $0x18] sm:$0xf] %vm286, %v260
  %294 = vst.msk [vmem:[%s4 + $0x1c] sm:$0xf] %vm286, %v261
  %295 = vst.msk [vmem:[%s4 + $0x20] sm:$0xf] %vm286, %v262
  %296 = vst.msk [vmem:[%s4 + $0x24] sm:$0xf] %vm286, %v263
  %297 = vst.msk [vmem:[%s4 + $0x28] sm:$0xf] %vm286, %v264
  %298 = vst.msk [vmem:[%s4 + $0x2c] sm:$0xf] %vm286, %v265
  %299 = vst.msk [vmem:[%s4 + $0x30] sm:$0xf] %vm286, %v266
  %300 = vst.msk [vmem:[%s4 + $0x34] sm:$0xf] %vm286, %v267
  %301 = vst.msk [vmem:[%s4 + $0x38] sm:$0xf] %vm286, %v268
  %302 = vst.msk [vmem:[%s4 + $0x3c] sm:$0xf] %vm286, %v269
  %v303 = vld [vmem:[%s2] sm:$0x1]
  %v305 = vlaneseq
  %v306 = vshrl.u32 %v305, 7
  %v307 = vsub.s32 0, %v306
  %v308 = vrot.slane %v303, %v307
  %v310 = vmul.f32 %v160, %v308
  %v311 = vmul.f32 %v163, %v308
  %v312 = vmul.f32 %v168, %v308
  %v313 = vmul.f32 %v171, %v308
  %v314 = vmul.f32 %v176, %v308
  %v315 = vmul.f32 %v179, %v308
  %v316 = vmul.f32 %v184, %v308
  %v317 = vmul.f32 %v187, %v308
  %v318 = vmul.f32 %v192, %v308
  %v319 = vmul.f32 %v195, %v308
  %v320 = vmul.f32 %v200, %v308
  %v321 = vmul.f32 %v203, %v308
  %v322 = vmul.f32 %v208, %v308
  %v323 = vmul.f32 %v211, %v308
  %v324 = vmul.f32 %v216, %v308
  %v325 = vmul.f32 %v219, %v308
  %v326 = vld [vmem:[%s3] sm:$0x1]
  %v328 = vlaneseq
  %v329 = vshrl.u32 %v328, 7
  %v330 = vsub.s32 0, %v329
  %v331 = vrot.slane %v326, %v330
  %v333 = vadd.f32 %v310, %v331
  %v334 = vadd.f32 %v311, %v331
  %v335 = vadd.f32 %v312, %v331
  %v336 = vadd.f32 %v313, %v331
  %v337 = vadd.f32 %v314, %v331
  %v338 = vadd.f32 %v315, %v331
  %v339 = vadd.f32 %v316, %v331
  %v340 = vadd.f32 %v317, %v331
  %v341 = vadd.f32 %v318, %v331
  %v342 = vadd.f32 %v319, %v331
  %v343 = vadd.f32 %v320, %v331
  %v344 = vadd.f32 %v321, %v331
  %v345 = vadd.f32 %v322, %v331
  %v346 = vadd.f32 %v323, %v331
  %v347 = vadd.f32 %v324, %v331
  %v348 = vadd.f32 %v325, %v331
  %v349 = vmax.f32 %v333, 0.0
  %v350 = vmax.f32 %v334, 0.0
  %v351 = vmax.f32 %v335, 0.0
  %v352 = vmax.f32 %v336, 0.0
  %v353 = vmax.f32 %v337, 0.0
  %v354 = vmax.f32 %v338, 0.0
  %v355 = vmax.f32 %v339, 0.0
  %v356 = vmax.f32 %v340, 0.0
  %v357 = vmax.f32 %v341, 0.0
  %v358 = vmax.f32 %v342, 0.0
  %v359 = vmax.f32 %v343, 0.0
  %v360 = vmax.f32 %v344, 0.0
  %v361 = vmax.f32 %v345, 0.0
  %v362 = vmax.f32 %v346, 0.0
  %v363 = vmax.f32 %v347, 0.0
  %v364 = vmax.f32 %v348, 0.0
  %v365 = vpack.c.bf16 %v350, %v349
  %v366 = vpack.c.bf16 %v352, %v351
  %v367 = vpack.c.bf16 %v354, %v353
  %v368 = vpack.c.bf16 %v356, %v355
  %v369 = vpack.c.bf16 %v358, %v357
  %v370 = vpack.c.bf16 %v360, %v359
  %v371 = vpack.c.bf16 %v362, %v361
  %v372 = vpack.c.bf16 %v364, %v363
  %v381 = vunpack.c.l.b16 %v365
  %v382 = vunpack.c.h.b16 %v365
  %v383 = vunpack.c.l.b16 %v366
  %v384 = vunpack.c.h.b16 %v366
  %v385 = vunpack.c.l.b16 %v367
  %v386 = vunpack.c.h.b16 %v367
  %v387 = vunpack.c.l.b16 %v368
  %v388 = vunpack.c.h.b16 %v368
  %v389 = vunpack.c.l.b16 %v369
  %v390 = vunpack.c.h.b16 %v369
  %v391 = vunpack.c.l.b16 %v370
  %v392 = vunpack.c.h.b16 %v370
  %v393 = vunpack.c.l.b16 %v371
  %v394 = vunpack.c.h.b16 %v371
  %v395 = vunpack.c.l.b16 %v372
  %v396 = vunpack.c.h.b16 %v372
  %v397 = vpack.c.b16 %v381, %v381
  %v398 = vpack.c.b16 %v382, %v382
  %v399 = vpack.c.b16 %v383, %v383
  %v400 = vpack.c.b16 %v384, %v384
  %v401 = vpack.c.b16 %v385, %v385
  %v402 = vpack.c.b16 %v386, %v386
  %v403 = vpack.c.b16 %v387, %v387
  %v404 = vpack.c.b16 %v388, %v388
  %v405 = vpack.c.b16 %v389, %v389
  %v406 = vpack.c.b16 %v390, %v390
  %v407 = vpack.c.b16 %v391, %v391
  %v408 = vpack.c.b16 %v392, %v392
  %v409 = vpack.c.b16 %v393, %v393
  %v410 = vpack.c.b16 %v394, %v394
  %v411 = vpack.c.b16 %v395, %v395
  %v412 = vpack.c.b16 %v396, %v396
  %429 = vst.msk [vmem:[%s5] sm:$0xf] %vm286, %v397
  %430 = vst.msk [vmem:[%s5 + $0x4] sm:$0xf] %vm286, %v398
  %431 = vst.msk [vmem:[%s5 + $0x8] sm:$0xf] %vm286, %v399
  %432 = vst.msk [vmem:[%s5 + $0xc] sm:$0xf] %vm286, %v400
  %433 = vst.msk [vmem:[%s5 + $0x10] sm:$0xf] %vm286, %v401
  %434 = vst.msk [vmem:[%s5 + $0x14] sm:$0xf] %vm286, %v402
  %435 = vst.msk [vmem:[%s5 + $0x18] sm:$0xf] %vm286, %v403
  %436 = vst.msk [vmem:[%s5 + $0x1c] sm:$0xf] %vm286, %v404
  %437 = vst.msk [vmem:[%s5 + $0x20] sm:$0xf] %vm286, %v405
  %438 = vst.msk [vmem:[%s5 + $0x24] sm:$0xf] %vm286, %v406
  %439 = vst.msk [vmem:[%s5 + $0x28] sm:$0xf] %vm286, %v407
  %440 = vst.msk [vmem:[%s5 + $0x2c] sm:$0xf] %vm286, %v408
  %441 = vst.msk [vmem:[%s5 + $0x30] sm:$0xf] %vm286, %v409
  %442 = vst.msk [vmem:[%s5 + $0x34] sm:$0xf] %vm286, %v410
  %443 = vst.msk [vmem:[%s5 + $0x38] sm:$0xf] %vm286, %v411
  %444 = vst.msk [vmem:[%s5 + $0x3c] sm:$0xf] %vm286, %v412
  // Predicated region
  $region18: #{feature_encoder_forward.25} parent=0 // pred_check
    _
  $region19: #{feature_encoder_forward.25} parent=0 // pred_check_branch
    %446 = sbr.rel (0) target = $region21
  $region20: #{feature_encoder_forward.25} parent=0 // pred_region
    _
  $region21: #{feature_encoder_forward.25} parent=0 // pred_fallthru
    _
  // Predicated region
  $region22: #{feature_encoder_forward.25} parent=0 // pred_check
    _
  $region23: #{feature_encoder_forward.25} parent=0 // pred_check_branch
    %448 = sbr.rel (0) target = $region25
  $region24: #{feature_encoder_forward.25} parent=0 // pred_region
    _
  $region25: #{feature_encoder_forward.25} parent=0 // pred_fallthru
    _
  // Predicated region
  $region26: #{feature_encoder_forward.25} parent=0 // pred_check
    _
  $region27: #{feature_encoder_forward.25} parent=0 // pred_check_branch
    %450 = sbr.rel (0) target = $region29
  $region28: #{feature_encoder_forward.25} parent=0 // pred_region
    _
  $region29: #{feature_encoder_forward.25} parent=0 // pred_fallthru
    _
  // Predicated region
  $region30: #{feature_encoder_forward.25} parent=0 // pred_check
    _
  $region31: #{feature_encoder_forward.25} parent=0 // pred_check_branch
    %452 = sbr.rel (0) target = $region33
  $region32: #{feature_encoder_forward.25} parent=0 // pred_region
    _
  $region33: #{feature_encoder_forward.25} parent=0 // pred_fallthru
    _

// kernel: feature_encoder_forward.26
$region0: #{feature_encoder_forward.26}
  #allocation0 [shape = 'u32[]', space=smem, size = 0x4, offset = 0x4, fixed_abs, tag = 'smem constant byte address 0x4 - core index']
  #allocation1 [shape = 'u32[144,128]{1,0:T(1,128)}', space=vmem, size = 0x12000, scoped, tag = 'internal scratch']
  %s0 = inlined_call_operand.vmem [shape: bf16[128,72], index: 0, kind: input, shape index: {}]
  %s1 = inlined_call_operand.vmem [shape: bf16[72,8], index: 1, kind: input, shape index: {}]
  %s2 = inlined_call_operand.vmem [shape: f32[1,8], index: 2, kind: input, shape index: {}]
  %s3 = inlined_call_operand.vmem [shape: f32[1,8], index: 3, kind: input, shape index: {}]
  %s4 = inlined_call_operand.vmem [shape: bf16[128,8], index: 4, kind: output, shape index: {}]
  %s5 = sld [smem:[#allocation0]]
  $region26: #{feature_encoder_forward.26} parent=0
    _
  %s7 = ssub.s32 1, %s5
  %s8 = scalar_select 0, %s7, %s5
  // Predicated region
  $region2: #{feature_encoder_forward.26} parent=0 // pred_check
    _
  $region3: #{feature_encoder_forward.26} parent=0 // pred_check_branch
    %10 = sbr.rel (0) target = $region5
  $region4: #{feature_encoder_forward.26} parent=0 // pred_region
    _
  $region5: #{feature_encoder_forward.26} parent=0 // pred_fallthru
    _
  // Predicated region
  $region6: #{feature_encoder_forward.26} parent=0 // pred_check
    _
  $region7: #{feature_encoder_forward.26} parent=0 // pred_check_branch
    %12 = sbr.rel (0) target = $region9
  $region8: #{feature_encoder_forward.26} parent=0 // pred_region
    _
  $region9: #{feature_encoder_forward.26} parent=0 // pred_fallthru
    _
  // Predicated region
  $region10: #{feature_encoder_forward.26} parent=0 // pred_check
    _
  $region11: #{feature_encoder_forward.26} parent=0 // pred_check_branch
    %14 = sbr.rel (0) target = $region13
  $region12: #{feature_encoder_forward.26} parent=0 // pred_region
    _
  $region13: #{feature_encoder_forward.26} parent=0 // pred_fallthru
    _
  // Predicated region
  $region14: #{feature_encoder_forward.26} parent=0 // pred_check
    _
  $region15: #{feature_encoder_forward.26} parent=0 // pred_check_branch
    %16 = sbr.rel (0) target = $region17
  $region16: #{feature_encoder_forward.26} parent=0 // pred_region
    _
  $region17: #{feature_encoder_forward.26} parent=0 // pred_fallthru
    _
  %v18 = vld [vmem:[%s0] sm:$0xf]
  %v19 = vld [vmem:[%s0 + $0x4] sm:$0xf]
  %v20 = vld [vmem:[%s0 + $0x8] sm:$0xf]
  %v21 = vld [vmem:[%s0 + $0xc] sm:$0xf]
  %v22 = vld [vmem:[%s0 + $0x10] sm:$0xf]
  %v23 = vld [vmem:[%s0 + $0x14] sm:$0xf]
  %v24 = vld [vmem:[%s0 + $0x18] sm:$0xf]
  %v25 = vld [vmem:[%s0 + $0x1c] sm:$0xf]
  %v26 = vld [vmem:[%s0 + $0x20] sm:$0xf]
  %v27 = vld [vmem:[%s0 + $0x24] sm:$0xf]
  %v28 = vld [vmem:[%s0 + $0x28] sm:$0xf]
  %v29 = vld [vmem:[%s0 + $0x2c] sm:$0xf]
  %v30 = vld [vmem:[%s0 + $0x30] sm:$0xf]
  %v31 = vld [vmem:[%s0 + $0x34] sm:$0xf]
  %v32 = vld [vmem:[%s0 + $0x38] sm:$0xf]
  %v33 = vld [vmem:[%s0 + $0x3c] sm:$0xf]
  %v34 = vld [vmem:[%s1] sm:$0xf]
  %v35 = vld [vmem:[%s1 + $0x4] sm:$0xf]
  %v36 = vld [vmem:[%s1 + $0x8] sm:$0xf]
  %v37 = vld [vmem:[%s1 + $0xc] sm:$0xf]
  %v38 = vld [vmem:[%s1 + $0x10] sm:$0xf]
  %v39 = vld [vmem:[%s1 + $0x14] sm:$0xf]
  %v40 = vld [vmem:[%s1 + $0x18] sm:$0xf]
  %v41 = vld [vmem:[%s1 + $0x1c] sm:$0xf]
  %v42 = vld [vmem:[%s1 + $0x20] sm:$0xf]
  %v59 = vunpack.c.l.b16 %v18
  %v60 = vunpack.c.l.b16 %v19
  %v61 = vunpack.c.l.b16 %v20
  %v62 = vunpack.c.l.b16 %v21
  %v63 = vunpack.c.l.b16 %v22
  %v64 = vunpack.c.l.b16 %v23
  %v65 = vunpack.c.l.b16 %v24
  %v66 = vunpack.c.l.b16 %v25
  %v67 = vunpack.c.l.b16 %v26
  %v68 = vunpack.c.l.b16 %v27
  %v69 = vunpack.c.l.b16 %v28
  %v70 = vunpack.c.l.b16 %v29
  %v71 = vunpack.c.l.b16 %v30
  %v72 = vunpack.c.l.b16 %v31
  %v73 = vunpack.c.l.b16 %v32
  %v74 = vunpack.c.l.b16 %v33
  %v75 = vpack.c.b16 %v60, %v59
  %v76 = vpack.c.b16 %v62, %v61
  %v77 = vpack.c.b16 %v64, %v63
  %v78 = vpack.c.b16 %v66, %v65
  %v79 = vpack.c.b16 %v68, %v67
  %v80 = vpack.c.b16 %v70, %v69
  %v81 = vpack.c.b16 %v72, %v71
  %v82 = vpack.c.b16 %v74, %v73
  %v92 = vunpack.c.l.b16 %v34
  %v93 = vunpack.c.l.b16 %v35
  %v94 = vunpack.c.l.b16 %v36
  %v95 = vunpack.c.l.b16 %v37
  %v96 = vunpack.c.l.b16 %v38
  %v97 = vunpack.c.l.b16 %v39
  %v98 = vunpack.c.l.b16 %v40
  %v99 = vunpack.c.l.b16 %v41
  %v100 = vunpack.c.l.b16 %v42
  %v101 = vpack.c.b16 %v93, %v92
  %v102 = vpack.c.b16 %v95, %v94
  %v103 = vpack.c.b16 %v97, %v96
  %v104 = vpack.c.b16 %v99, %v98
  %v105 = vpack.c.b16 %v100, %v100
  %vm110 = vcmask 588800
  %v112 = vsel %vm110, %v75, 0
  %v115 = vsel %vm110, %v76, 0
  %v118 = vsel %vm110, %v77, 0
  %v121 = vsel %vm110, %v78, 0
  %v124 = vsel %vm110, %v79, 0
  %v127 = vsel %vm110, %v80, 0
  %v130 = vsel %vm110, %v81, 0
  %v133 = vsel %vm110, %v82, 0
  %vm135 = vcmask 1043456
  %v137 = vsel %vm135, %v105, 0
  %139 = vmatprep.subr.bf16.mxu0 0
  %140 = vmatpush1.bf16.msra.mxu0 %v101
  %141 = vmatprep.subr.bf16.mxu0 0
  %142 = vmatpush1.bf16.msra.mxu0 %v102
  %143 = vmatprep.subr.bf16.mxu0 0
  %144 = vmatpush1.bf16.msra.mxu0 %v103
  %145 = vmatprep.subr.bf16.mxu0 0
  %146 = vmatpush1.bf16.msra.mxu0 %v104
  %147 = vmatprep.subr.bf16.mxu0 0
  %148 = vmatpush1.bf16.msra.mxu0 %v137
  %149 = vmatprep.subr.bf16.mxu0 0
  %150 = vmatpush1.bf16.msra.mxu0 0
  %151 = vmatprep.subr.bf16.mxu0 0
  %152 = vmatpush1.bf16.msra.mxu0 0
  %153 = vmatprep.subr.bf16.mxu0 0
  %154 = vmatpush1.bf16.msra.mxu0 0
  %155 = vmatprep.subr.bf16.mxu0 0
  %156 = vmatpush1.bf16.msra.mxu0 0
  %157 = vmatprep.subr.bf16.mxu0 0
  %158 = vmatpush1.bf16.msra.mxu0 0
  %159 = vmatprep.subr.bf16.mxu0 0
  %160 = vmatpush1.bf16.msra.mxu0 0
  %161 = vmatprep.subr.bf16.mxu0 0
  %162 = vmatpush1.bf16.msra.mxu0 0
  %163 = vmatprep.subr.bf16.mxu0 0
  %164 = vmatpush1.bf16.msra.mxu0 0
  %165 = vmatprep.subr.bf16.mxu0 0
  %166 = vmatpush1.bf16.msra.mxu0 0
  %167 = vmatprep.subr.bf16.mxu0 0
  %168 = vmatpush1.bf16.msra.mxu0 0
  %169 = vmatprep.subr.bf16.mxu0 0
  %170 = vmatpush1.bf16.msra.mxu0 0
  %171 = vmatprep.mubr.bf16.mxu0 0
  %172 = vmatmul.mubr.bf16.gmra.mrb[0].mxu0 %v112
  %v173 = vpop.f32.mrb[0].mxu0
  %v174 = vadd.f32 0.0, %v173
  %v175 = vpop.f32.mrb[0].mxu0
  %v176 = vpop.f32.mrb[0].mxu0
  %v177 = vadd.f32 0.0, %v176
  %v178 = vpop.f32.mrb[0].mxu0
  %179 = vmatprep.mubr.bf16.mxu0 0
  %180 = vmatmul.mubr.bf16.gmra.mrb[0].mxu0 %v115
  %v181 = vpop.f32.mrb[0].mxu0
  %v182 = vadd.f32 0.0, %v181
  %v183 = vpop.f32.mrb[0].mxu0
  %v184 = vpop.f32.mrb[0].mxu0
  %v185 = vadd.f32 0.0, %v184
  %v186 = vpop.f32.mrb[0].mxu0
  %187 = vmatprep.mubr.bf16.mxu0 0
  %188 = vmatmul.mubr.bf16.gmra.mrb[0].mxu0 %v118
  %v189 = vpop.f32.mrb[0].mxu0
  %v190 = vadd.f32 0.0, %v189
  %v191 = vpop.f32.mrb[0].mxu0
  %v192 = vpop.f32.mrb[0].mxu0
  %v193 = vadd.f32 0.0, %v192
  %v194 = vpop.f32.mrb[0].mxu0
  %195 = vmatprep.mubr.bf16.mxu0 0
  %196 = vmatmul.mubr.bf16.gmra.mrb[0].mxu0 %v121
  %v197 = vpop.f32.mrb[0].mxu0
  %v198 = vadd.f32 0.0, %v197
  %v199 = vpop.f32.mrb[0].mxu0
  %v200 = vpop.f32.mrb[0].mxu0
  %v201 = vadd.f32 0.0, %v200
  %v202 = vpop.f32.mrb[0].mxu0
  %203 = vmatprep.mubr.bf16.mxu0 0
  %204 = vmatmul.mubr.bf16.gmra.mrb[0].mxu0 %v124
  %v205 = vpop.f32.mrb[0].mxu0
  %v206 = vadd.f32 0.0, %v205
  %v207 = vpop.f32.mrb[0].mxu0
  %v208 = vpop.f32.mrb[0].mxu0
  %v209 = vadd.f32 0.0, %v208
  %v210 = vpop.f32.mrb[0].mxu0
  %211 = vmatprep.mubr.bf16.mxu0 0
  %212 = vmatmul.mubr.bf16.gmra.mrb[0].mxu0 %v127
  %v213 = vpop.f32.mrb[0].mxu0
  %v214 = vadd.f32 0.0, %v213
  %v215 = vpop.f32.mrb[0].mxu0
  %v216 = vpop.f32.mrb[0].mxu0
  %v217 = vadd.f32 0.0, %v216
  %v218 = vpop.f32.mrb[0].mxu0
  %219 = vmatprep.mubr.bf16.mxu0 0
  %220 = vmatmul.mubr.bf16.gmra.mrb[0].mxu0 %v130
  %v221 = vpop.f32.mrb[0].mxu0
  %v222 = vadd.f32 0.0, %v221
  %v223 = vpop.f32.mrb[0].mxu0
  %v224 = vpop.f32.mrb[0].mxu0
  %v225 = vadd.f32 0.0, %v224
  %v226 = vpop.f32.mrb[0].mxu0
  %227 = vmatprep.mubr.bf16.mxu0 0
  %228 = vmatmul.mubr.bf16.gmra.mrb[0].mxu0 %v133
  %v229 = vpop.f32.mrb[0].mxu0
  %v230 = vadd.f32 0.0, %v229
  %v231 = vpop.f32.mrb[0].mxu0
  %v232 = vpop.f32.mrb[0].mxu0
  %v233 = vadd.f32 0.0, %v232
  %v234 = vpop.f32.mrb[0].mxu0
  %235 = vdwg.mxu0
  %v236 = vld [vmem:[%s2] sm:$0x1]
  %v238 = vlaneseq
  %v239 = vshrl.u32 %v238, 7
  %v240 = vsub.s32 0, %v239
  %v241 = vrot.slane %v236, %v240
  %v243 = vmul.f32 %v174, %v241
  %v244 = vmul.f32 %v177, %v241
  %v245 = vmul.f32 %v182, %v241
  %v246 = vmul.f32 %v185, %v241
  %v247 = vmul.f32 %v190, %v241
  %v248 = vmul.f32 %v193, %v241
  %v249 = vmul.f32 %v198, %v241
  %v250 = vmul.f32 %v201, %v241
  %v251 = vmul.f32 %v206, %v241
  %v252 = vmul.f32 %v209, %v241
  %v253 = vmul.f32 %v214, %v241
  %v254 = vmul.f32 %v217, %v241
  %v255 = vmul.f32 %v222, %v241
  %v256 = vmul.f32 %v225, %v241
  %v257 = vmul.f32 %v230, %v241
  %v258 = vmul.f32 %v233, %v241
  %v259 = vld [vmem:[%s3] sm:$0x1]
  %v261 = vlaneseq
  %v262 = vshrl.u32 %v261, 7
  %v263 = vsub.s32 0, %v262
  %v264 = vrot.slane %v259, %v263
  %v266 = vadd.f32 %v243, %v264
  %v267 = vadd.f32 %v244, %v264
  %v268 = vadd.f32 %v245, %v264
  %v269 = vadd.f32 %v246, %v264
  %v270 = vadd.f32 %v247, %v264
  %v271 = vadd.f32 %v248, %v264
  %v272 = vadd.f32 %v249, %v264
  %v273 = vadd.f32 %v250, %v264
  %v274 = vadd.f32 %v251, %v264
  %v275 = vadd.f32 %v252, %v264
  %v276 = vadd.f32 %v253, %v264
  %v277 = vadd.f32 %v254, %v264
  %v278 = vadd.f32 %v255, %v264
  %v279 = vadd.f32 %v256, %v264
  %v280 = vadd.f32 %v257, %v264
  %v281 = vadd.f32 %v258, %v264
  %v282 = vmax.f32 %v266, 0.0
  %v283 = vmax.f32 %v267, 0.0
  %v284 = vmax.f32 %v268, 0.0
  %v285 = vmax.f32 %v269, 0.0
  %v286 = vmax.f32 %v270, 0.0
  %v287 = vmax.f32 %v271, 0.0
  %v288 = vmax.f32 %v272, 0.0
  %v289 = vmax.f32 %v273, 0.0
  %v290 = vmax.f32 %v274, 0.0
  %v291 = vmax.f32 %v275, 0.0
  %v292 = vmax.f32 %v276, 0.0
  %v293 = vmax.f32 %v277, 0.0
  %v294 = vmax.f32 %v278, 0.0
  %v295 = vmax.f32 %v279, 0.0
  %v296 = vmax.f32 %v280, 0.0
  %v297 = vmax.f32 %v281, 0.0
  %v298 = vpack.c.bf16 %v283, %v282
  %v299 = vpack.c.bf16 %v285, %v284
  %v300 = vpack.c.bf16 %v287, %v286
  %v301 = vpack.c.bf16 %v289, %v288
  %v302 = vpack.c.bf16 %v291, %v290
  %v303 = vpack.c.bf16 %v293, %v292
  %v304 = vpack.c.bf16 %v295, %v294
  %v305 = vpack.c.bf16 %v297, %v296
  %v314 = vunpack.c.l.b16 %v298
  %v315 = vunpack.c.h.b16 %v298
  %v316 = vunpack.c.l.b16 %v299
  %v317 = vunpack.c.h.b16 %v299
  %v318 = vunpack.c.l.b16 %v300
  %v319 = vunpack.c.h.b16 %v300
  %v320 = vunpack.c.l.b16 %v301
  %v321 = vunpack.c.h.b16 %v301
  %v322 = vunpack.c.l.b16 %v302
  %v323 = vunpack.c.h.b16 %v302
  %v324 = vunpack.c.l.b16 %v303
  %v325 = vunpack.c.h.b16 %v303
  %v326 = vunpack.c.l.b16 %v304
  %v327 = vunpack.c.h.b16 %v304
  %v328 = vunpack.c.l.b16 %v305
  %v329 = vunpack.c.h.b16 %v305
  %v330 = vpack.c.b16 %v314, %v314
  %v331 = vpack.c.b16 %v315, %v315
  %v332 = vpack.c.b16 %v316, %v316
  %v333 = vpack.c.b16 %v317, %v317
  %v334 = vpack.c.b16 %v318, %v318
  %v335 = vpack.c.b16 %v319, %v319
  %v336 = vpack.c.b16 %v320, %v320
  %v337 = vpack.c.b16 %v321, %v321
  %v338 = vpack.c.b16 %v322, %v322
  %v339 = vpack.c.b16 %v323, %v323
  %v340 = vpack.c.b16 %v324, %v324
  %v341 = vpack.c.b16 %v325, %v325
  %v342 = vpack.c.b16 %v326, %v326
  %v343 = vpack.c.b16 %v327, %v327
  %v344 = vpack.c.b16 %v328, %v328
  %v345 = vpack.c.b16 %v329, %v329
  %vm362 = vcmask 60416
  %363 = vst.msk [vmem:[%s4] sm:$0xf] %vm362, %v330
  %364 = vst.msk [vmem:[%s4 + $0x4] sm:$0xf] %vm362, %v331
  %365 = vst.msk [vmem:[%s4 + $0x8] sm:$0xf] %vm362, %v332
  %366 = vst.msk [vmem:[%s4 + $0xc] sm:$0xf] %vm362, %v333
  %367 = vst.msk [vmem:[%s4 + $0x10] sm:$0xf] %vm362, %v334
  %368 = vst.msk [vmem:[%s4 + $0x14] sm:$0xf] %vm362, %v335
  %369 = vst.msk [vmem:[%s4 + $0x18] sm:$0xf] %vm362, %v336
  %370 = vst.msk [vmem:[%s4 + $0x1c] sm:$0xf] %vm362, %v337
  %371 = vst.msk [vmem:[%s4 + $0x20] sm:$0xf] %vm362, %v338
  %372 = vst.msk [vmem:[%s4 + $0x24] sm:$0xf] %vm362, %v339
  %373 = vst.msk [vmem:[%s4 + $0x28] sm:$0xf] %vm362, %v340
  %374 = vst.msk [vmem:[%s4 + $0x2c] sm:$0xf] %vm362, %v341
  %375 = vst.msk [vmem:[%s4 + $0x30] sm:$0xf] %vm362, %v342
  %376 = vst.msk [vmem:[%s4 + $0x34] sm:$0xf] %vm362, %v343
  %377 = vst.msk [vmem:[%s4 + $0x38] sm:$0xf] %vm362, %v344
  %378 = vst.msk [vmem:[%s4 + $0x3c] sm:$0xf] %vm362, %v345
  // Predicated region
  $region18: #{feature_encoder_forward.26} parent=0 // pred_check
    _
  $region19: #{feature_encoder_forward.26} parent=0 // pred_check_branch
    %380 = sbr.rel (0) target = $region21
  $region20: #{feature_encoder_forward.26} parent=0 // pred_region
    _
  $region21: #{feature_encoder_forward.26} parent=0 // pred_fallthru
    _
  // Predicated region
  $region22: #{feature_encoder_forward.26} parent=0 // pred_check
    _
  $region23: #{feature_encoder_forward.26} parent=0 // pred_check_branch
    %382 = sbr.rel (0) target = $region25
  $region24: #{feature_encoder_forward.26} parent=0 // pred_region
    _
  $region25: #{feature_encoder_forward.26} parent=0 // pred_fallthru
    _

// kernel: feature_encoder_forward.29
$region0: #{feature_encoder_forward.29}
  #allocation0 [shape = 'u32[]', space=smem, size = 0x4, offset = 0x4, fixed_abs, tag = 'smem constant byte address 0x4 - core index']
  #allocation1 [shape = 'u32[144,128]{1,0:T(1,128)}', space=vmem, size = 0x12000, scoped, tag = 'internal scratch']
  %s0 = inlined_call_operand.vmem [shape: bf16[128,72], index: 0, kind: input, shape index: {}]
  %s1 = inlined_call_operand.vmem [shape: bf16[72,8], index: 1, kind: input, shape index: {}]
  %s2 = inlined_call_operand.vmem [shape: bf16[128,8], index: 2, kind: input, shape index: {}]
  %s3 = inlined_call_operand.vmem [shape: f32[1,8], index: 3, kind: input, shape index: {}]
  %s4 = inlined_call_operand.vmem [shape: f32[1,8], index: 4, kind: input, shape index: {}]
  %s5 = inlined_call_operand.vmem [shape: f32[128,8], index: 5, kind: output, shape index: {0}]
  %s6 = inlined_call_operand.vmem [shape: bf16[128,8], index: 6, kind: output, shape index: {1}]
  %7 = xla_tuple %s5, %s6
  %s8 = sld [smem:[#allocation0]]
  $region38: #{feature_encoder_forward.29} parent=0
    _
  %s10 = ssub.s32 1, %s8
  %s11 = scalar_select 0, %s10, %s8
  // Predicated region
  $region2: #{feature_encoder_forward.29} parent=0 // pred_check
    _
  $region3: #{feature_encoder_forward.29} parent=0 // pred_check_branch
    %13 = sbr.rel (0) target = $region5
  $region4: #{feature_encoder_forward.29} parent=0 // pred_region
    _
  $region5: #{feature_encoder_forward.29} parent=0 // pred_fallthru
    _
  // Predicated region
  $region6: #{feature_encoder_forward.29} parent=0 // pred_check
    _
  $region7: #{feature_encoder_forward.29} parent=0 // pred_check_branch
    %15 = sbr.rel (0) target = $region9
  $region8: #{feature_encoder_forward.29} parent=0 // pred_region
    _
  $region9: #{feature_encoder_forward.29} parent=0 // pred_fallthru
    _
  // Predicated region
  $region10: #{feature_encoder_forward.29} parent=0 // pred_check
    _
  $region11: #{feature_encoder_forward.29} parent=0 // pred_check_branch
    %17 = sbr.rel (0) target = $region13
  $region12: #{feature_encoder_forward.29} parent=0 // pred_region
    _
  $region13: #{feature_encoder_forward.29} parent=0 // pred_fallthru
    _
  // Predicated region
  $region14: #{feature_encoder_forward.29} parent=0 // pred_check
    _
  $region15: #{feature_encoder_forward.29} parent=0 // pred_check_branch
    %19 = sbr.rel (0) target = $region17
  $region16: #{feature_encoder_forward.29} parent=0 // pred_region
    _
  $region17: #{feature_encoder_forward.29} parent=0 // pred_fallthru
    _
  // Predicated region
  $region18: #{feature_encoder_forward.29} parent=0 // pred_check
    _
  $region19: #{feature_encoder_forward.29} parent=0 // pred_check_branch
    %21 = sbr.rel (0) target = $region21
  $region20: #{feature_encoder_forward.29} parent=0 // pred_region
    _
  $region21: #{feature_encoder_forward.29} parent=0 // pred_fallthru
    _
  %v23 = vld [vmem:[%s0] sm:$0xf]
  %v24 = vld [vmem:[%s0 + $0x4] sm:$0xf]
  %v25 = vld [vmem:[%s0 + $0x8] sm:$0xf]
  %v26 = vld [vmem:[%s0 + $0xc] sm:$0xf]
  %v27 = vld [vmem:[%s0 + $0x10] sm:$0xf]
  %v28 = vld [vmem:[%s0 + $0x14] sm:$0xf]
  %v29 = vld [vmem:[%s0 + $0x18] sm:$0xf]
  %v30 = vld [vmem:[%s0 + $0x1c] sm:$0xf]
  %v31 = vld [vmem:[%s0 + $0x20] sm:$0xf]
  %v32 = vld [vmem:[%s0 + $0x24] sm:$0xf]
  %v33 = vld [vmem:[%s0 + $0x28] sm:$0xf]
  %v34 = vld [vmem:[%s0 + $0x2c] sm:$0xf]
  %v35 = vld [vmem:[%s0 + $0x30] sm:$0xf]
  %v36 = vld [vmem:[%s0 + $0x34] sm:$0xf]
  %v37 = vld [vmem:[%s0 + $0x38] sm:$0xf]
  %v38 = vld [vmem:[%s0 + $0x3c] sm:$0xf]
  %v39 = vld [vmem:[%s1] sm:$0xf]
  %v40 = vld [vmem:[%s1 + $0x4] sm:$0xf]
  %v41 = vld [vmem:[%s1 + $0x8] sm:$0xf]
  %v42 = vld [vmem:[%s1 + $0xc] sm:$0xf]
  %v43 = vld [vmem:[%s1 + $0x10] sm:$0xf]
  %v44 = vld [vmem:[%s1 + $0x14] sm:$0xf]
  %v45 = vld [vmem:[%s1 + $0x18] sm:$0xf]
  %v46 = vld [vmem:[%s1 + $0x1c] sm:$0xf]
  %v47 = vld [vmem:[%s1 + $0x20] sm:$0xf]
  %v48 = vld [vmem:[%s2] sm:$0xf]
  %v49 = vld [vmem:[%s2 + $0x4] sm:$0xf]
  %v50 = vld [vmem:[%s2 + $0x8] sm:$0xf]
  %v51 = vld [vmem:[%s2 + $0xc] sm:$0xf]
  %v52 = vld [vmem:[%s2 + $0x10] sm:$0xf]
  %v53 = vld [vmem:[%s2 + $0x14] sm:$0xf]
  %v54 = vld [vmem:[%s2 + $0x18] sm:$0xf]
  %v55 = vld [vmem:[%s2 + $0x1c] sm:$0xf]
  %v56 = vld [vmem:[%s2 + $0x20] sm:$0xf]
  %v57 = vld [vmem:[%s2 + $0x24] sm:$0xf]
  %v58 = vld [vmem:[%s2 + $0x28] sm:$0xf]
  %v59 = vld [vmem:[%s2 + $0x2c] sm:$0xf]
  %v60 = vld [vmem:[%s2 + $0x30] sm:$0xf]
  %v61 = vld [vmem:[%s2 + $0x34] sm:$0xf]
  %v62 = vld [vmem:[%s2 + $0x38] sm:$0xf]
  %v63 = vld [vmem:[%s2 + $0x3c] sm:$0xf]
  %v64 = vunpack.c.l.bf16 %v48
  %v65 = vunpack.c.l.bf16 %v49
  %v66 = vunpack.c.l.bf16 %v50
  %v67 = vunpack.c.l.bf16 %v51
  %v68 = vunpack.c.l.bf16 %v52
  %v69 = vunpack.c.l.bf16 %v53
  %v70 = vunpack.c.l.bf16 %v54
  %v71 = vunpack.c.l.bf16 %v55
  %v72 = vunpack.c.l.bf16 %v56
  %v73 = vunpack.c.l.bf16 %v57
  %v74 = vunpack.c.l.bf16 %v58
  %v75 = vunpack.c.l.bf16 %v59
  %v76 = vunpack.c.l.bf16 %v60
  %v77 = vunpack.c.l.bf16 %v61
  %v78 = vunpack.c.l.bf16 %v62
  %v79 = vunpack.c.l.bf16 %v63
  %v96 = vunpack.c.l.b16 %v23
  %v97 = vunpack.c.l.b16 %v24
  %v98 = vunpack.c.l.b16 %v25
  %v99 = vunpack.c.l.b16 %v26
  %v100 = vunpack.c.l.b16 %v27
  %v101 = vunpack.c.l.b16 %v28
  %v102 = vunpack.c.l.b16 %v29
  %v103 = vunpack.c.l.b16 %v30
  %v104 = vunpack.c.l.b16 %v31
  %v105 = vunpack.c.l.b16 %v32
  %v106 = vunpack.c.l.b16 %v33
  %v107 = vunpack.c.l.b16 %v34
  %v108 = vunpack.c.l.b16 %v35
  %v109 = vunpack.c.l.b16 %v36
  %v110 = vunpack.c.l.b16 %v37
  %v111 = vunpack.c.l.b16 %v38
  %v112 = vpack.c.b16 %v97, %v96
  %v113 = vpack.c.b16 %v99, %v98
  %v114 = vpack.c.b16 %v101, %v100
  %v115 = vpack.c.b16 %v103, %v102
  %v116 = vpack.c.b16 %v105, %v104
  %v117 = vpack.c.b16 %v107, %v106
  %v118 = vpack.c.b16 %v109, %v108
  %v119 = vpack.c.b16 %v111, %v110
  %v129 = vunpack.c.l.b16 %v39
  %v130 = vunpack.c.l.b16 %v40
  %v131 = vunpack.c.l.b16 %v41
  %v132 = vunpack.c.l.b16 %v42
  %v133 = vunpack.c.l.b16 %v43
  %v134 = vunpack.c.l.b16 %v44
  %v135 = vunpack.c.l.b16 %v45
  %v136 = vunpack.c.l.b16 %v46
  %v137 = vunpack.c.l.b16 %v47
  %v138 = vpack.c.b16 %v130, %v129
  %v139 = vpack.c.b16 %v132, %v131
  %v140 = vpack.c.b16 %v134, %v133
  %v141 = vpack.c.b16 %v136, %v135
  %v142 = vpack.c.b16 %v137, %v137
  %vm147 = vcmask 588800
  %v149 = vsel %vm147, %v112, 0
  %v152 = vsel %vm147, %v113, 0
  %v155 = vsel %vm147, %v114, 0
  %v158 = vsel %vm147, %v115, 0
  %v161 = vsel %vm147, %v116, 0
  %v164 = vsel %vm147, %v117, 0
  %v167 = vsel %vm147, %v118, 0
  %v170 = vsel %vm147, %v119, 0
  %vm172 = vcmask 1043456
  %v174 = vsel %vm172, %v142, 0
  %176 = vmatprep.subr.bf16.mxu0 0
  %177 = vmatpush1.bf16.msra.mxu0 %v138
  %178 = vmatprep.subr.bf16.mxu0 0
  %179 = vmatpush1.bf16.msra.mxu0 %v139
  %180 = vmatprep.subr.bf16.mxu0 0
  %181 = vmatpush1.bf16.msra.mxu0 %v140
  %182 = vmatprep.subr.bf16.mxu0 0
  %183 = vmatpush1.bf16.msra.mxu0 %v141
  %184 = vmatprep.subr.bf16.mxu0 0
  %185 = vmatpush1.bf16.msra.mxu0 %v174
  %186 = vmatprep.subr.bf16.mxu0 0
  %187 = vmatpush1.bf16.msra.mxu0 0
  %188 = vmatprep.subr.bf16.mxu0 0
  %189 = vmatpush1.bf16.msra.mxu0 0
  %190 = vmatprep.subr.bf16.mxu0 0
  %191 = vmatpush1.bf16.msra.mxu0 0
  %192 = vmatprep.subr.bf16.mxu0 0
  %193 = vmatpush1.bf16.msra.mxu0 0
  %194 = vmatprep.subr.bf16.mxu0 0
  %195 = vmatpush1.bf16.msra.mxu0 0
  %196 = vmatprep.subr.bf16.mxu0 0
  %197 = vmatpush1.bf16.msra.mxu0 0
  %198 = vmatprep.subr.bf16.mxu0 0
  %199 = vmatpush1.bf16.msra.mxu0 0
  %200 = vmatprep.subr.bf16.mxu0 0
  %201 = vmatpush1.bf16.msra.mxu0 0
  %202 = vmatprep.subr.bf16.mxu0 0
  %203 = vmatpush1.bf16.msra.mxu0 0
  %204 = vmatprep.subr.bf16.mxu0 0
  %205 = vmatpush1.bf16.msra.mxu0 0
  %206 = vmatprep.subr.bf16.mxu0 0
  %207 = vmatpush1.bf16.msra.mxu0 0
  %208 = vmatprep.mubr.bf16.mxu0 0
  %209 = vmatmul.mubr.bf16.gmra.mrb[0].mxu0 %v149
  %v210 = vpop.f32.mrb[0].mxu0
  %v211 = vadd.f32 %v64, %v210
  %v212 = vpop.f32.mrb[0].mxu0
  %v213 = vpop.f32.mrb[0].mxu0
  %v214 = vadd.f32 %v65, %v213
  %v215 = vpop.f32.mrb[0].mxu0
  %216 = vmatprep.mubr.bf16.mxu0 0
  %217 = vmatmul.mubr.bf16.gmra.mrb[0].mxu0 %v152
  %v218 = vpop.f32.mrb[0].mxu0
  %v219 = vadd.f32 %v66, %v218
  %v220 = vpop.f32.mrb[0].mxu0
  %v221 = vpop.f32.mrb[0].mxu0
  %v222 = vadd.f32 %v67, %v221
  %v223 = vpop.f32.mrb[0].mxu0
  %224 = vmatprep.mubr.bf16.mxu0 0
  %225 = vmatmul.mubr.bf16.gmra.mrb[0].mxu0 %v155
  %v226 = vpop.f32.mrb[0].mxu0
  %v227 = vadd.f32 %v68, %v226
  %v228 = vpop.f32.mrb[0].mxu0
  %v229 = vpop.f32.mrb[0].mxu0
  %v230 = vadd.f32 %v69, %v229
  %v231 = vpop.f32.mrb[0].mxu0
  %232 = vmatprep.mubr.bf16.mxu0 0
  %233 = vmatmul.mubr.bf16.gmra.mrb[0].mxu0 %v158
  %v234 = vpop.f32.mrb[0].mxu0
  %v235 = vadd.f32 %v70, %v234
  %v236 = vpop.f32.mrb[0].mxu0
  %v237 = vpop.f32.mrb[0].mxu0
  %v238 = vadd.f32 %v71, %v237
  %v239 = vpop.f32.mrb[0].mxu0
  %240 = vmatprep.mubr.bf16.mxu0 0
  %241 = vmatmul.mubr.bf16.gmra.mrb[0].mxu0 %v161
  %v242 = vpop.f32.mrb[0].mxu0
  %v243 = vadd.f32 %v72, %v242
  %v244 = vpop.f32.mrb[0].mxu0
  %v245 = vpop.f32.mrb[0].mxu0
  %v246 = vadd.f32 %v73, %v245
  %v247 = vpop.f32.mrb[0].mxu0
  %248 = vmatprep.mubr.bf16.mxu0 0
  %249 = vmatmul.mubr.bf16.gmra.mrb[0].mxu0 %v164
  %v250 = vpop.f32.mrb[0].mxu0
  %v251 = vadd.f32 %v74, %v250
  %v252 = vpop.f32.mrb[0].mxu0
  %v253 = vpop.f32.mrb[0].mxu0
  %v254 = vadd.f32 %v75, %v253
  %v255 = vpop.f32.mrb[0].mxu0
  %256 = vmatprep.mubr.bf16.mxu0 0
  %257 = vmatmul.mubr.bf16.gmra.mrb[0].mxu0 %v167
  %v258 = vpop.f32.mrb[0].mxu0
  %v259 = vadd.f32 %v76, %v258
  %v260 = vpop.f32.mrb[0].mxu0
  %v261 = vpop.f32.mrb[0].mxu0
  %v262 = vadd.f32 %v77, %v261
  %v263 = vpop.f32.mrb[0].mxu0
  %264 = vmatprep.mubr.bf16.mxu0 0
  %265 = vmatmul.mubr.bf16.gmra.mrb[0].mxu0 %v170
  %v266 = vpop.f32.mrb[0].mxu0
  %v267 = vadd.f32 %v78, %v266
  %v268 = vpop.f32.mrb[0].mxu0
  %v269 = vpop.f32.mrb[0].mxu0
  %v270 = vadd.f32 %v79, %v269
  %v271 = vpop.f32.mrb[0].mxu0
  %272 = vdwg.mxu0
  %vm273 = vcmask 64512
  %274 = vst.msk [vmem:[%s5] sm:$0xff] %vm273, %v211
  %275 = vst.msk [vmem:[%s5 + $0x8] sm:$0xff] %vm273, %v214
  %276 = vst.msk [vmem:[%s5 + $0x10] sm:$0xff] %vm273, %v219
  %277 = vst.msk [vmem:[%s5 + $0x18] sm:$0xff] %vm273, %v222
  %278 = vst.msk [vmem:[%s5 + $0x20] sm:$0xff] %vm273, %v227
  %279 = vst.msk [vmem:[%s5 + $0x28] sm:$0xff] %vm273, %v230
  %280 = vst.msk [vmem:[%s5 + $0x30] sm:$0xff] %vm273, %v235
  %281 = vst.msk [vmem:[%s5 + $0x38] sm:$0xff] %vm273, %v238
  %282 = vst.msk [vmem:[%s5 + $0x40] sm:$0xff] %vm273, %v243
  %283 = vst.msk [vmem:[%s5 + $0x48] sm:$0xff] %vm273, %v246
  %284 = vst.msk [vmem:[%s5 + $0x50] sm:$0xff] %vm273, %v251
  %285 = vst.msk [vmem:[%s5 + $0x58] sm:$0xff] %vm273, %v254
  %286 = vst.msk [vmem:[%s5 + $0x60] sm:$0xff] %vm273, %v259
  %287 = vst.msk [vmem:[%s5 + $0x68] sm:$0xff] %vm273, %v262
  %288 = vst.msk [vmem:[%s5 + $0x70] sm:$0xff] %vm273, %v267
  %289 = vst.msk [vmem:[%s5 + $0x78] sm:$0xff] %vm273, %v270
  %v290 = vld [vmem:[%s3] sm:$0x1]
  %v292 = vlaneseq
  %v293 = vshrl.u32 %v292, 7
  %v294 = vsub.s32 0, %v293
  %v295 = vrot.slane %v290, %v294
  %v297 = vmul.f32 %v211, %v295
  %v298 = vmul.f32 %v214, %v295
  %v299 = vmul.f32 %v219, %v295
  %v300 = vmul.f32 %v222, %v295
  %v301 = vmul.f32 %v227, %v295
  %v302 = vmul.f32 %v230, %v295
  %v303 = vmul.f32 %v235, %v295
  %v304 = vmul.f32 %v238, %v295
  %v305 = vmul.f32 %v243, %v295
  %v306 = vmul.f32 %v246, %v295
  %v307 = vmul.f32 %v251, %v295
  %v308 = vmul.f32 %v254, %v295
  %v309 = vmul.f32 %v259, %v295
  %v310 = vmul.f32 %v262, %v295
  %v311 = vmul.f32 %v267, %v295
  %v312 = vmul.f32 %v270, %v295
  %v313 = vld [vmem:[%s4] sm:$0x1]
  %v315 = vlaneseq
  %v316 = vshrl.u32 %v315, 7
  %v317 = vsub.s32 0, %v316
  %v318 = vrot.slane %v313, %v317
  %v320 = vadd.f32 %v297, %v318
  %v321 = vadd.f32 %v298, %v318
  %v322 = vadd.f32 %v299, %v318
  %v323 = vadd.f32 %v300, %v318
  %v324 = vadd.f32 %v301, %v318
  %v325 = vadd.f32 %v302, %v318
  %v326 = vadd.f32 %v303, %v318
  %v327 = vadd.f32 %v304, %v318
  %v328 = vadd.f32 %v305, %v318
  %v329 = vadd.f32 %v306, %v318
  %v330 = vadd.f32 %v307, %v318
  %v331 = vadd.f32 %v308, %v318
  %v332 = vadd.f32 %v309, %v318
  %v333 = vadd.f32 %v310, %v318
  %v334 = vadd.f32 %v311, %v318
  %v335 = vadd.f32 %v312, %v318
  %v336 = vmax.f32 %v320, 0.0
  %v337 = vmax.f32 %v321, 0.0
  %v338 = vmax.f32 %v322, 0.0
  %v339 = vmax.f32 %v323, 0.0
  %v340 = vmax.f32 %v324, 0.0
  %v341 = vmax.f32 %v325, 0.0
  %v342 = vmax.f32 %v326, 0.0
  %v343 = vmax.f32 %v327, 0.0
  %v344 = vmax.f32 %v328, 0.0
  %v345 = vmax.f32 %v329, 0.0
  %v346 = vmax.f32 %v330, 0.0
  %v347 = vmax.f32 %v331, 0.0
  %v348 = vmax.f32 %v332, 0.0
  %v349 = vmax.f32 %v333, 0.0
  %v350 = vmax.f32 %v334, 0.0
  %v351 = vmax.f32 %v335, 0.0
  %v352 = vpack.c.bf16 %v337, %v336
  %v353 = vpack.c.bf16 %v339, %v338
  %v354 = vpack.c.bf16 %v341, %v340
  %v355 = vpack.c.bf16 %v343, %v342
  %v356 = vpack.c.bf16 %v345, %v344
  %v357 = vpack.c.bf16 %v347, %v346
  %v358 = vpack.c.bf16 %v349, %v348
  %v359 = vpack.c.bf16 %v351, %v350
  %v368 = vunpack.c.l.b16 %v352
  %v369 = vunpack.c.h.b16 %v352
  %v370 = vunpack.c.l.b16 %v353
  %v371 = vunpack.c.h.b16 %v353
  %v372 = vunpack.c.l.b16 %v354
  %v373 = vunpack.c.h.b16 %v354
  %v374 = vunpack.c.l.b16 %v355
  %v375 = vunpack.c.h.b16 %v355
  %v376 = vunpack.c.l.b16 %v356
  %v377 = vunpack.c.h.b16 %v356
  %v378 = vunpack.c.l.b16 %v357
  %v379 = vunpack.c.h.b16 %v357
  %v380 = vunpack.c.l.b16 %v358
  %v381 = vunpack.c.h.b16 %v358
  %v382 = vunpack.c.l.b16 %v359
  %v383 = vunpack.c.h.b16 %v359
  %v384 = vpack.c.b16 %v368, %v368
  %v385 = vpack.c.b16 %v369, %v369
  %v386 = vpack.c.b16 %v370, %v370
  %v387 = vpack.c.b16 %v371, %v371
  %v388 = vpack.c.b16 %v372, %v372
  %v389 = vpack.c.b16 %v373, %v373
  %v390 = vpack.c.b16 %v374, %v374
  %v391 = vpack.c.b16 %v375, %v375
  %v392 = vpack.c.b16 %v376, %v376
  %v393 = vpack.c.b16 %v377, %v377
  %v394 = vpack.c.b16 %v378, %v378
  %v395 = vpack.c.b16 %v379, %v379
  %v396 = vpack.c.b16 %v380, %v380
  %v397 = vpack.c.b16 %v381, %v381
  %v398 = vpack.c.b16 %v382, %v382
  %v399 = vpack.c.b16 %v383, %v383
  %vm416 = vcmask 60416
  %417 = vst.msk [vmem:[%s6] sm:$0xf] %vm416, %v384
  %418 = vst.msk [vmem:[%s6 + $0x4] sm:$0xf] %vm416, %v385
  %419 = vst.msk [vmem:[%s6 + $0x8] sm:$0xf] %vm416, %v386
  %420 = vst.msk [vmem:[%s6 + $0xc] sm:$0xf] %vm416, %v387
  %421 = vst.msk [vmem:[%s6 + $0x10] sm:$0xf] %vm416, %v388
  %422 = vst.msk [vmem:[%s6 + $0x14] sm:$0xf] %vm416, %v389
  %423 = vst.msk [vmem:[%s6 + $0x18] sm:$0xf] %vm416, %v390
  %424 = vst.msk [vmem:[%s6 + $0x1c] sm:$0xf] %vm416, %v391
  %425 = vst.msk [vmem:[%s6 + $0x20] sm:$0xf] %vm416, %v392
  %426 = vst.msk [vmem:[%s6 + $0x24] sm:$0xf] %vm416, %v393
  %427 = vst.msk [vmem:[%s6 + $0x28] sm:$0xf] %vm416, %v394
  %428 = vst.msk [vmem:[%s6 + $0x2c] sm:$0xf] %vm416, %v395
  %429 = vst.msk [vmem:[%s6 + $0x30] sm:$0xf] %vm416, %v396
  %430 = vst.msk [vmem:[%s6 + $0x34] sm:$0xf] %vm416, %v397
  %431 = vst.msk [vmem:[%s6 + $0x38] sm:$0xf] %vm416, %v398
  %432 = vst.msk [vmem:[%s6 + $0x3c] sm:$0xf] %vm416, %v399
  // Predicated region
  $region22: #{feature_encoder_forward.29} parent=0 // pred_check
    _
  $region23: #{feature_encoder_forward.29} parent=0 // pred_check_branch
    %434 = sbr.rel (0) target = $region25
  $region24: #{feature_encoder_forward.29} parent=0 // pred_region
    _
  $region25: #{feature_encoder_forward.29} parent=0 // pred_fallthru
    _
  // Predicated region
  $region26: #{feature_encoder_forward.29} parent=0 // pred_check
    _
  $region27: #{feature_encoder_forward.29} parent=0 // pred_check_branch
    %436 = sbr.rel (0) target = $region29
  $region28: #{feature_encoder_forward.29} parent=0 // pred_region
    _
  $region29: #{feature_encoder_forward.29} parent=0 // pred_fallthru
    _
  // Predicated region
  $region30: #{feature_encoder_forward.29} parent=0 // pred_check
    _
  $region31: #{feature_encoder_forward.29} parent=0 // pred_check_branch
    %438 = sbr.rel (0) target = $region33
  $region32: #{feature_encoder_forward.29} parent=0 // pred_region
    _
  $region33: #{feature_encoder_forward.29} parent=0 // pred_fallthru
    _
  // Predicated region
  $region34: #{feature_encoder_forward.29} parent=0 // pred_check
    _
  $region35: #{feature_encoder_forward.29} parent=0 // pred_check_branch
    %440 = sbr.rel (0) target = $region37
  $region36: #{feature_encoder_forward.29} parent=0 // pred_region
    _
  $region37: #{feature_encoder_forward.29} parent=0 // pred_fallthru
    _

// kernel: feature_encoder_forward.27
$region0: #{feature_encoder_forward.27}
  #allocation0 [shape = 'u32[]', space=smem, size = 0x4, offset = 0x4, fixed_abs, tag = 'smem constant byte address 0x4 - core index']
  #allocation1 [shape = 'u32[144,128]{1,0:T(1,128)}', space=vmem, size = 0x12000, scoped, tag = 'internal scratch']
  %s0 = inlined_call_operand.vmem [shape: bf16[128,72], index: 0, kind: input, shape index: {}]
  %s1 = inlined_call_operand.vmem [shape: bf16[72,8], index: 1, kind: input, shape index: {}]
  %s2 = inlined_call_operand.vmem [shape: bf16[128,8], index: 2, kind: input, shape index: {}]
  %s3 = inlined_call_operand.vmem [shape: f32[1,8], index: 3, kind: input, shape index: {}]
  %s4 = inlined_call_operand.vmem [shape: f32[1,8], index: 4, kind: input, shape index: {}]
  %s5 = inlined_call_operand.vmem [shape: bf16[128,8], index: 5, kind: output, shape index: {0}]
  %s6 = inlined_call_operand.vmem [shape: bf16[128,8], index: 6, kind: output, shape index: {1}]
  %7 = xla_tuple %s5, %s6
  %s8 = sld [smem:[#allocation0]]
  $region38: #{feature_encoder_forward.27} parent=0
    _
  %s10 = ssub.s32 1, %s8
  %s11 = scalar_select 0, %s10, %s8
  // Predicated region
  $region2: #{feature_encoder_forward.27} parent=0 // pred_check
    _
  $region3: #{feature_encoder_forward.27} parent=0 // pred_check_branch
    %13 = sbr.rel (0) target = $region5
  $region4: #{feature_encoder_forward.27} parent=0 // pred_region
    _
  $region5: #{feature_encoder_forward.27} parent=0 // pred_fallthru
    _
  // Predicated region
  $region6: #{feature_encoder_forward.27} parent=0 // pred_check
    _
  $region7: #{feature_encoder_forward.27} parent=0 // pred_check_branch
    %15 = sbr.rel (0) target = $region9
  $region8: #{feature_encoder_forward.27} parent=0 // pred_region
    _
  $region9: #{feature_encoder_forward.27} parent=0 // pred_fallthru
    _
  // Predicated region
  $region10: #{feature_encoder_forward.27} parent=0 // pred_check
    _
  $region11: #{feature_encoder_forward.27} parent=0 // pred_check_branch
    %17 = sbr.rel (0) target = $region13
  $region12: #{feature_encoder_forward.27} parent=0 // pred_region
    _
  $region13: #{feature_encoder_forward.27} parent=0 // pred_fallthru
    _
  // Predicated region
  $region14: #{feature_encoder_forward.27} parent=0 // pred_check
    _
  $region15: #{feature_encoder_forward.27} parent=0 // pred_check_branch
    %19 = sbr.rel (0) target = $region17
  $region16: #{feature_encoder_forward.27} parent=0 // pred_region
    _
  $region17: #{feature_encoder_forward.27} parent=0 // pred_fallthru
    _
  // Predicated region
  $region18: #{feature_encoder_forward.27} parent=0 // pred_check
    _
  $region19: #{feature_encoder_forward.27} parent=0 // pred_check_branch
    %21 = sbr.rel (0) target = $region21
  $region20: #{feature_encoder_forward.27} parent=0 // pred_region
    _
  $region21: #{feature_encoder_forward.27} parent=0 // pred_fallthru
    _
  %v23 = vld [vmem:[%s0] sm:$0xf]
  %v24 = vld [vmem:[%s0 + $0x4] sm:$0xf]
  %v25 = vld [vmem:[%s0 + $0x8] sm:$0xf]
  %v26 = vld [vmem:[%s0 + $0xc] sm:$0xf]
  %v27 = vld [vmem:[%s0 + $0x10] sm:$0xf]
  %v28 = vld [vmem:[%s0 + $0x14] sm:$0xf]
  %v29 = vld [vmem:[%s0 + $0x18] sm:$0xf]
  %v30 = vld [vmem:[%s0 + $0x1c] sm:$0xf]
  %v31 = vld [vmem:[%s0 + $0x20] sm:$0xf]
  %v32 = vld [vmem:[%s0 + $0x24] sm:$0xf]
  %v33 = vld [vmem:[%s0 + $0x28] sm:$0xf]
  %v34 = vld [vmem:[%s0 + $0x2c] sm:$0xf]
  %v35 = vld [vmem:[%s0 + $0x30] sm:$0xf]
  %v36 = vld [vmem:[%s0 + $0x34] sm:$0xf]
  %v37 = vld [vmem:[%s0 + $0x38] sm:$0xf]
  %v38 = vld [vmem:[%s0 + $0x3c] sm:$0xf]
  %v39 = vld [vmem:[%s1] sm:$0xf]
  %v40 = vld [vmem:[%s1 + $0x4] sm:$0xf]
  %v41 = vld [vmem:[%s1 + $0x8] sm:$0xf]
  %v42 = vld [vmem:[%s1 + $0xc] sm:$0xf]
  %v43 = vld [vmem:[%s1 + $0x10] sm:$0xf]
  %v44 = vld [vmem:[%s1 + $0x14] sm:$0xf]
  %v45 = vld [vmem:[%s1 + $0x18] sm:$0xf]
  %v46 = vld [vmem:[%s1 + $0x1c] sm:$0xf]
  %v47 = vld [vmem:[%s1 + $0x20] sm:$0xf]
  %v48 = vld [vmem:[%s2] sm:$0xf]
  %v49 = vld [vmem:[%s2 + $0x4] sm:$0xf]
  %v50 = vld [vmem:[%s2 + $0x8] sm:$0xf]
  %v51 = vld [vmem:[%s2 + $0xc] sm:$0xf]
  %v52 = vld [vmem:[%s2 + $0x10] sm:$0xf]
  %v53 = vld [vmem:[%s2 + $0x14] sm:$0xf]
  %v54 = vld [vmem:[%s2 + $0x18] sm:$0xf]
  %v55 = vld [vmem:[%s2 + $0x1c] sm:$0xf]
  %v56 = vld [vmem:[%s2 + $0x20] sm:$0xf]
  %v57 = vld [vmem:[%s2 + $0x24] sm:$0xf]
  %v58 = vld [vmem:[%s2 + $0x28] sm:$0xf]
  %v59 = vld [vmem:[%s2 + $0x2c] sm:$0xf]
  %v60 = vld [vmem:[%s2 + $0x30] sm:$0xf]
  %v61 = vld [vmem:[%s2 + $0x34] sm:$0xf]
  %v62 = vld [vmem:[%s2 + $0x38] sm:$0xf]
  %v63 = vld [vmem:[%s2 + $0x3c] sm:$0xf]
  %v64 = vunpack.c.l.bf16 %v48
  %v65 = vunpack.c.l.bf16 %v49
  %v66 = vunpack.c.l.bf16 %v50
  %v67 = vunpack.c.l.bf16 %v51
  %v68 = vunpack.c.l.bf16 %v52
  %v69 = vunpack.c.l.bf16 %v53
  %v70 = vunpack.c.l.bf16 %v54
  %v71 = vunpack.c.l.bf16 %v55
  %v72 = vunpack.c.l.bf16 %v56
  %v73 = vunpack.c.l.bf16 %v57
  %v74 = vunpack.c.l.bf16 %v58
  %v75 = vunpack.c.l.bf16 %v59
  %v76 = vunpack.c.l.bf16 %v60
  %v77 = vunpack.c.l.bf16 %v61
  %v78 = vunpack.c.l.bf16 %v62
  %v79 = vunpack.c.l.bf16 %v63
  %v96 = vunpack.c.l.b16 %v23
  %v97 = vunpack.c.l.b16 %v24
  %v98 = vunpack.c.l.b16 %v25
  %v99 = vunpack.c.l.b16 %v26
  %v100 = vunpack.c.l.b16 %v27
  %v101 = vunpack.c.l.b16 %v28
  %v102 = vunpack.c.l.b16 %v29
  %v103 = vunpack.c.l.b16 %v30
  %v104 = vunpack.c.l.b16 %v31
  %v105 = vunpack.c.l.b16 %v32
  %v106 = vunpack.c.l.b16 %v33
  %v107 = vunpack.c.l.b16 %v34
  %v108 = vunpack.c.l.b16 %v35
  %v109 = vunpack.c.l.b16 %v36
  %v110 = vunpack.c.l.b16 %v37
  %v111 = vunpack.c.l.b16 %v38
  %v112 = vpack.c.b16 %v97, %v96
  %v113 = vpack.c.b16 %v99, %v98
  %v114 = vpack.c.b16 %v101, %v100
  %v115 = vpack.c.b16 %v103, %v102
  %v116 = vpack.c.b16 %v105, %v104
  %v117 = vpack.c.b16 %v107, %v106
  %v118 = vpack.c.b16 %v109, %v108
  %v119 = vpack.c.b16 %v111, %v110
  %v129 = vunpack.c.l.b16 %v39
  %v130 = vunpack.c.l.b16 %v40
  %v131 = vunpack.c.l.b16 %v41
  %v132 = vunpack.c.l.b16 %v42
  %v133 = vunpack.c.l.b16 %v43
  %v134 = vunpack.c.l.b16 %v44
  %v135 = vunpack.c.l.b16 %v45
  %v136 = vunpack.c.l.b16 %v46
  %v137 = vunpack.c.l.b16 %v47
  %v138 = vpack.c.b16 %v130, %v129
  %v139 = vpack.c.b16 %v132, %v131
  %v140 = vpack.c.b16 %v134, %v133
  %v141 = vpack.c.b16 %v136, %v135
  %v142 = vpack.c.b16 %v137, %v137
  %vm147 = vcmask 588800
  %v149 = vsel %vm147, %v112, 0
  %v152 = vsel %vm147, %v113, 0
  %v155 = vsel %vm147, %v114, 0
  %v158 = vsel %vm147, %v115, 0
  %v161 = vsel %vm147, %v116, 0
  %v164 = vsel %vm147, %v117, 0
  %v167 = vsel %vm147, %v118, 0
  %v170 = vsel %vm147, %v119, 0
  %vm172 = vcmask 1043456
  %v174 = vsel %vm172, %v142, 0
  %176 = vmatprep.subr.bf16.mxu0 0
  %177 = vmatpush1.bf16.msra.mxu0 %v138
  %178 = vmatprep.subr.bf16.mxu0 0
  %179 = vmatpush1.bf16.msra.mxu0 %v139
  %180 = vmatprep.subr.bf16.mxu0 0
  %181 = vmatpush1.bf16.msra.mxu0 %v140
  %182 = vmatprep.subr.bf16.mxu0 0
  %183 = vmatpush1.bf16.msra.mxu0 %v141
  %184 = vmatprep.subr.bf16.mxu0 0
  %185 = vmatpush1.bf16.msra.mxu0 %v174
  %186 = vmatprep.subr.bf16.mxu0 0
  %187 = vmatpush1.bf16.msra.mxu0 0
  %188 = vmatprep.subr.bf16.mxu0 0
  %189 = vmatpush1.bf16.msra.mxu0 0
  %190 = vmatprep.subr.bf16.mxu0 0
  %191 = vmatpush1.bf16.msra.mxu0 0
  %192 = vmatprep.subr.bf16.mxu0 0
  %193 = vmatpush1.bf16.msra.mxu0 0
  %194 = vmatprep.subr.bf16.mxu0 0
  %195 = vmatpush1.bf16.msra.mxu0 0
  %196 = vmatprep.subr.bf16.mxu0 0
  %197 = vmatpush1.bf16.msra.mxu0 0
  %198 = vmatprep.subr.bf16.mxu0 0
  %199 = vmatpush1.bf16.msra.mxu0 0
  %200 = vmatprep.subr.bf16.mxu0 0
  %201 = vmatpush1.bf16.msra.mxu0 0
  %202 = vmatprep.subr.bf16.mxu0 0
  %203 = vmatpush1.bf16.msra.mxu0 0
  %204 = vmatprep.subr.bf16.mxu0 0
  %205 = vmatpush1.bf16.msra.mxu0 0
  %206 = vmatprep.subr.bf16.mxu0 0
  %207 = vmatpush1.bf16.msra.mxu0 0
  %208 = vmatprep.mubr.bf16.mxu0 0
  %209 = vmatmul.mubr.bf16.gmra.mrb[0].mxu0 %v149
  %v210 = vpop.f32.mrb[0].mxu0
  %v211 = vadd.f32 %v64, %v210
  %v212 = vpop.f32.mrb[0].mxu0
  %v213 = vpop.f32.mrb[0].mxu0
  %v214 = vadd.f32 %v65, %v213
  %v215 = vpop.f32.mrb[0].mxu0
  %216 = vmatprep.mubr.bf16.mxu0 0
  %217 = vmatmul.mubr.bf16.gmra.mrb[0].mxu0 %v152
  %v218 = vpop.f32.mrb[0].mxu0
  %v219 = vadd.f32 %v66, %v218
  %v220 = vpop.f32.mrb[0].mxu0
  %v221 = vpop.f32.mrb[0].mxu0
  %v222 = vadd.f32 %v67, %v221
  %v223 = vpop.f32.mrb[0].mxu0
  %224 = vmatprep.mubr.bf16.mxu0 0
  %225 = vmatmul.mubr.bf16.gmra.mrb[0].mxu0 %v155
  %v226 = vpop.f32.mrb[0].mxu0
  %v227 = vadd.f32 %v68, %v226
  %v228 = vpop.f32.mrb[0].mxu0
  %v229 = vpop.f32.mrb[0].mxu0
  %v230 = vadd.f32 %v69, %v229
  %v231 = vpop.f32.mrb[0].mxu0
  %232 = vmatprep.mubr.bf16.mxu0 0
  %233 = vmatmul.mubr.bf16.gmra.mrb[0].mxu0 %v158
  %v234 = vpop.f32.mrb[0].mxu0
  %v235 = vadd.f32 %v70, %v234
  %v236 = vpop.f32.mrb[0].mxu0
  %v237 = vpop.f32.mrb[0].mxu0
  %v238 = vadd.f32 %v71, %v237
  %v239 = vpop.f32.mrb[0].mxu0
  %240 = vmatprep.mubr.bf16.mxu0 0
  %241 = vmatmul.mubr.bf16.gmra.mrb[0].mxu0 %v161
  %v242 = vpop.f32.mrb[0].mxu0
  %v243 = vadd.f32 %v72, %v242
  %v244 = vpop.f32.mrb[0].mxu0
  %v245 = vpop.f32.mrb[0].mxu0
  %v246 = vadd.f32 %v73, %v245
  %v247 = vpop.f32.mrb[0].mxu0
  %248 = vmatprep.mubr.bf16.mxu0 0
  %249 = vmatmul.mubr.bf16.gmra.mrb[0].mxu0 %v164
  %v250 = vpop.f32.mrb[0].mxu0
  %v251 = vadd.f32 %v74, %v250
  %v252 = vpop.f32.mrb[0].mxu0
  %v253 = vpop.f32.mrb[0].mxu0
  %v254 = vadd.f32 %v75, %v253
  %v255 = vpop.f32.mrb[0].mxu0
  %256 = vmatprep.mubr.bf16.mxu0 0
  %257 = vmatmul.mubr.bf16.gmra.mrb[0].mxu0 %v167
  %v258 = vpop.f32.mrb[0].mxu0
  %v259 = vadd.f32 %v76, %v258
  %v260 = vpop.f32.mrb[0].mxu0
  %v261 = vpop.f32.mrb[0].mxu0
  %v262 = vadd.f32 %v77, %v261
  %v263 = vpop.f32.mrb[0].mxu0
  %264 = vmatprep.mubr.bf16.mxu0 0
  %265 = vmatmul.mubr.bf16.gmra.mrb[0].mxu0 %v170
  %v266 = vpop.f32.mrb[0].mxu0
  %v267 = vadd.f32 %v78, %v266
  %v268 = vpop.f32.mrb[0].mxu0
  %v269 = vpop.f32.mrb[0].mxu0
  %v270 = vadd.f32 %v79, %v269
  %v271 = vpop.f32.mrb[0].mxu0
  %272 = vdwg.mxu0
  %v273 = vpack.c.bf16 %v214, %v211
  %v274 = vpack.c.bf16 %v222, %v219
  %v275 = vpack.c.bf16 %v230, %v227
  %v276 = vpack.c.bf16 %v238, %v235
  %v277 = vpack.c.bf16 %v246, %v243
  %v278 = vpack.c.bf16 %v254, %v251
  %v279 = vpack.c.bf16 %v262, %v259
  %v280 = vpack.c.bf16 %v270, %v267
  %v289 = vunpack.c.l.b16 %v273
  %v290 = vunpack.c.h.b16 %v273
  %v291 = vunpack.c.l.b16 %v274
  %v292 = vunpack.c.h.b16 %v274
  %v293 = vunpack.c.l.b16 %v275
  %v294 = vunpack.c.h.b16 %v275
  %v295 = vunpack.c.l.b16 %v276
  %v296 = vunpack.c.h.b16 %v276
  %v297 = vunpack.c.l.b16 %v277
  %v298 = vunpack.c.h.b16 %v277
  %v299 = vunpack.c.l.b16 %v278
  %v300 = vunpack.c.h.b16 %v278
  %v301 = vunpack.c.l.b16 %v279
  %v302 = vunpack.c.h.b16 %v279
  %v303 = vunpack.c.l.b16 %v280
  %v304 = vunpack.c.h.b16 %v280
  %v305 = vpack.c.b16 %v289, %v289
  %v306 = vpack.c.b16 %v290, %v290
  %v307 = vpack.c.b16 %v291, %v291
  %v308 = vpack.c.b16 %v292, %v292
  %v309 = vpack.c.b16 %v293, %v293
  %v310 = vpack.c.b16 %v294, %v294
  %v311 = vpack.c.b16 %v295, %v295
  %v312 = vpack.c.b16 %v296, %v296
  %v313 = vpack.c.b16 %v297, %v297
  %v314 = vpack.c.b16 %v298, %v298
  %v315 = vpack.c.b16 %v299, %v299
  %v316 = vpack.c.b16 %v300, %v300
  %v317 = vpack.c.b16 %v301, %v301
  %v318 = vpack.c.b16 %v302, %v302
  %v319 = vpack.c.b16 %v303, %v303
  %v320 = vpack.c.b16 %v304, %v304
  %vm337 = vcmask 60416
  %338 = vst.msk [vmem:[%s5] sm:$0xf] %vm337, %v305
  %339 = vst.msk [vmem:[%s5 + $0x4] sm:$0xf] %vm337, %v306
  %340 = vst.msk [vmem:[%s5 + $0x8] sm:$0xf] %vm337, %v307
  %341 = vst.msk [vmem:[%s5 + $0xc] sm:$0xf] %vm337, %v308
  %342 = vst.msk [vmem:[%s5 + $0x10] sm:$0xf] %vm337, %v309
  %343 = vst.msk [vmem:[%s5 + $0x14] sm:$0xf] %vm337, %v310
  %344 = vst.msk [vmem:[%s5 + $0x18] sm:$0xf] %vm337, %v311
  %345 = vst.msk [vmem:[%s5 + $0x1c] sm:$0xf] %vm337, %v312
  %346 = vst.msk [vmem:[%s5 + $0x20] sm:$0xf] %vm337, %v313
  %347 = vst.msk [vmem:[%s5 + $0x24] sm:$0xf] %vm337, %v314
  %348 = vst.msk [vmem:[%s5 + $0x28] sm:$0xf] %vm337, %v315
  %349 = vst.msk [vmem:[%s5 + $0x2c] sm:$0xf] %vm337, %v316
  %350 = vst.msk [vmem:[%s5 + $0x30] sm:$0xf] %vm337, %v317
  %351 = vst.msk [vmem:[%s5 + $0x34] sm:$0xf] %vm337, %v318
  %352 = vst.msk [vmem:[%s5 + $0x38] sm:$0xf] %vm337, %v319
  %353 = vst.msk [vmem:[%s5 + $0x3c] sm:$0xf] %vm337, %v320
  %v354 = vld [vmem:[%s3] sm:$0x1]
  %v356 = vlaneseq
  %v357 = vshrl.u32 %v356, 7
  %v358 = vsub.s32 0, %v357
  %v359 = vrot.slane %v354, %v358
  %v361 = vmul.f32 %v211, %v359
  %v362 = vmul.f32 %v214, %v359
  %v363 = vmul.f32 %v219, %v359
  %v364 = vmul.f32 %v222, %v359
  %v365 = vmul.f32 %v227, %v359
  %v366 = vmul.f32 %v230, %v359
  %v367 = vmul.f32 %v235, %v359
  %v368 = vmul.f32 %v238, %v359
  %v369 = vmul.f32 %v243, %v359
  %v370 = vmul.f32 %v246, %v359
  %v371 = vmul.f32 %v251, %v359
  %v372 = vmul.f32 %v254, %v359
  %v373 = vmul.f32 %v259, %v359
  %v374 = vmul.f32 %v262, %v359
  %v375 = vmul.f32 %v267, %v359
  %v376 = vmul.f32 %v270, %v359
  %v377 = vld [vmem:[%s4] sm:$0x1]
  %v379 = vlaneseq
  %v380 = vshrl.u32 %v379, 7
  %v381 = vsub.s32 0, %v380
  %v382 = vrot.slane %v377, %v381
  %v384 = vadd.f32 %v361, %v382
  %v385 = vadd.f32 %v362, %v382
  %v386 = vadd.f32 %v363, %v382
  %v387 = vadd.f32 %v364, %v382
  %v388 = vadd.f32 %v365, %v382
  %v389 = vadd.f32 %v366, %v382
  %v390 = vadd.f32 %v367, %v382
  %v391 = vadd.f32 %v368, %v382
  %v392 = vadd.f32 %v369, %v382
  %v393 = vadd.f32 %v370, %v382
  %v394 = vadd.f32 %v371, %v382
  %v395 = vadd.f32 %v372, %v382
  %v396 = vadd.f32 %v373, %v382
  %v397 = vadd.f32 %v374, %v382
  %v398 = vadd.f32 %v375, %v382
  %v399 = vadd.f32 %v376, %v382
  %v400 = vmax.f32 %v384, 0.0
  %v401 = vmax.f32 %v385, 0.0
  %v402 = vmax.f32 %v386, 0.0
  %v403 = vmax.f32 %v387, 0.0
  %v404 = vmax.f32 %v388, 0.0
  %v405 = vmax.f32 %v389, 0.0
  %v406 = vmax.f32 %v390, 0.0
  %v407 = vmax.f32 %v391, 0.0
  %v408 = vmax.f32 %v392, 0.0
  %v409 = vmax.f32 %v393, 0.0
  %v410 = vmax.f32 %v394, 0.0
  %v411 = vmax.f32 %v395, 0.0
  %v412 = vmax.f32 %v396, 0.0
  %v413 = vmax.f32 %v397, 0.0
  %v414 = vmax.f32 %v398, 0.0
  %v415 = vmax.f32 %v399, 0.0
  %v416 = vpack.c.bf16 %v401, %v400
  %v417 = vpack.c.bf16 %v403, %v402
  %v418 = vpack.c.bf16 %v405, %v404
  %v419 = vpack.c.bf16 %v407, %v406
  %v420 = vpack.c.bf16 %v409, %v408
  %v421 = vpack.c.bf16 %v411, %v410
  %v422 = vpack.c.bf16 %v413, %v412
  %v423 = vpack.c.bf16 %v415, %v414
  %v432 = vunpack.c.l.b16 %v416
  %v433 = vunpack.c.h.b16 %v416
  %v434 = vunpack.c.l.b16 %v417
  %v435 = vunpack.c.h.b16 %v417
  %v436 = vunpack.c.l.b16 %v418
  %v437 = vunpack.c.h.b16 %v418
  %v438 = vunpack.c.l.b16 %v419
  %v439 = vunpack.c.h.b16 %v419
  %v440 = vunpack.c.l.b16 %v420
  %v441 = vunpack.c.h.b16 %v420
  %v442 = vunpack.c.l.b16 %v421
  %v443 = vunpack.c.h.b16 %v421
  %v444 = vunpack.c.l.b16 %v422
  %v445 = vunpack.c.h.b16 %v422
  %v446 = vunpack.c.l.b16 %v423
  %v447 = vunpack.c.h.b16 %v423
  %v448 = vpack.c.b16 %v432, %v432
  %v449 = vpack.c.b16 %v433, %v433
  %v450 = vpack.c.b16 %v434, %v434
  %v451 = vpack.c.b16 %v435, %v435
  %v452 = vpack.c.b16 %v436, %v436
  %v453 = vpack.c.b16 %v437, %v437
  %v454 = vpack.c.b16 %v438, %v438
  %v455 = vpack.c.b16 %v439, %v439
  %v456 = vpack.c.b16 %v440, %v440
  %v457 = vpack.c.b16 %v441, %v441
  %v458 = vpack.c.b16 %v442, %v442
  %v459 = vpack.c.b16 %v443, %v443
  %v460 = vpack.c.b16 %v444, %v444
  %v461 = vpack.c.b16 %v445, %v445
  %v462 = vpack.c.b16 %v446, %v446
  %v463 = vpack.c.b16 %v447, %v447
  %480 = vst.msk [vmem:[%s6] sm:$0xf] %vm337, %v448
  %481 = vst.msk [vmem:[%s6 + $0x4] sm:$0xf] %vm337, %v449
  %482 = vst.msk [vmem:[%s6 + $0x8] sm:$0xf] %vm337, %v450
  %483 = vst.msk [vmem:[%s6 + $0xc] sm:$0xf] %vm337, %v451
  %484 = vst.msk [vmem:[%s6 + $0x10] sm:$0xf] %vm337, %v452
  %485 = vst.msk [vmem:[%s6 + $0x14] sm:$0xf] %vm337, %v453
  %486 = vst.msk [vmem:[%s6 + $0x18] sm:$0xf] %vm337, %v454
  %487 = vst.msk [vmem:[%s6 + $0x1c] sm:$0xf] %vm337, %v455
  %488 = vst.msk [vmem:[%s6 + $0x20] sm:$0xf] %vm337, %v456
  %489 = vst.msk [vmem:[%s6 + $0x24] sm:$0xf] %vm337, %v457
  %490 = vst.msk [vmem:[%s6 + $0x28] sm:$0xf] %vm337, %v458
  %491 = vst.msk [vmem:[%s6 + $0x2c] sm:$0xf] %vm337, %v459
  %492 = vst.msk [vmem:[%s6 + $0x30] sm:$0xf] %vm337, %v460
  %493 = vst.msk [vmem:[%s6 + $0x34] sm:$0xf] %vm337, %v461
  %494 = vst.msk [vmem:[%s6 + $0x38] sm:$0xf] %vm337, %v462
  %495 = vst.msk [vmem:[%s6 + $0x3c] sm:$0xf] %vm337, %v463
  // Predicated region
  $region22: #{feature_encoder_forward.27} parent=0 // pred_check
    _
  $region23: #{feature_encoder_forward.27} parent=0 // pred_check_branch
    %497 = sbr.rel (0) target = $region25
  $region24: #{feature_encoder_forward.27} parent=0 // pred_region
    _
  $region25: #{feature_encoder_forward.27} parent=0 // pred_fallthru
    _
  // Predicated region
  $region26: #{feature_encoder_forward.27} parent=0 // pred_check
    _
  $region27: #{feature_encoder_forward.27} parent=0 // pred_check_branch
    %499 = sbr.rel (0) target = $region29
  $region28: #{feature_encoder_forward.27} parent=0 // pred_region
    _
  $region29: #{feature_encoder_forward.27} parent=0 // pred_fallthru
    _
  // Predicated region
  $region30: #{feature_encoder_forward.27} parent=0 // pred_check
    _
  $region31: #{feature_encoder_forward.27} parent=0 // pred_check_branch
    %501 = sbr.rel (0) target = $region33
  $region32: #{feature_encoder_forward.27} parent=0 // pred_region
    _
  $region33: #{feature_encoder_forward.27} parent=0 // pred_fallthru
    _
  // Predicated region
  $region34: #{feature_encoder_forward.27} parent=0 // pred_check
    _
  $region35: #{feature_encoder_forward.27} parent=0 // pred_check_branch
    %503 = sbr.rel (0) target = $region37
  $region36: #{feature_encoder_forward.27} parent=0 // pred_region
    _
  $region37: #{feature_encoder_forward.27} parent=0 // pred_fallthru
    _

// kernel: feature_encoder_forward.30
$region0: #{feature_encoder_forward.30}
  #allocation0 [shape = 'u32[]', space=smem, size = 0x4, offset = 0x4, fixed_abs, tag = 'smem constant byte address 0x4 - core index']
  #allocation1 [shape = 'u32[144,128]{1,0:T(1,128)}', space=vmem, size = 0x12000, scoped, tag = 'internal scratch']
  %s0 = inlined_call_operand.vmem [shape: bf16[32,72], index: 0, kind: input, shape index: {}]
  %s1 = inlined_call_operand.vmem [shape: bf16[72,16], index: 1, kind: input, shape index: {}]
  %s2 = inlined_call_operand.vmem [shape: f32[1,16], index: 2, kind: input, shape index: {}]
  %s3 = inlined_call_operand.vmem [shape: f32[1,16], index: 3, kind: input, shape index: {}]
  %s4 = inlined_call_operand.vmem [shape: bf16[32,16], index: 4, kind: output, shape index: {0}]
  %s5 = inlined_call_operand.vmem [shape: bf16[32,16], index: 5, kind: output, shape index: {1}]
  %6 = xla_tuple %s4, %s5
  %s7 = sld [smem:[#allocation0]]
  $region34: #{feature_encoder_forward.30} parent=0
    _
  %s9 = ssub.s32 1, %s7
  %s10 = scalar_select 0, %s9, %s7
  // Predicated region
  $region2: #{feature_encoder_forward.30} parent=0 // pred_check
    _
  $region3: #{feature_encoder_forward.30} parent=0 // pred_check_branch
    %12 = sbr.rel (0) target = $region5
  $region4: #{feature_encoder_forward.30} parent=0 // pred_region
    _
  $region5: #{feature_encoder_forward.30} parent=0 // pred_fallthru
    _
  // Predicated region
  $region6: #{feature_encoder_forward.30} parent=0 // pred_check
    _
  $region7: #{feature_encoder_forward.30} parent=0 // pred_check_branch
    %14 = sbr.rel (0) target = $region9
  $region8: #{feature_encoder_forward.30} parent=0 // pred_region
    _
  $region9: #{feature_encoder_forward.30} parent=0 // pred_fallthru
    _
  // Predicated region
  $region10: #{feature_encoder_forward.30} parent=0 // pred_check
    _
  $region11: #{feature_encoder_forward.30} parent=0 // pred_check_branch
    %16 = sbr.rel (0) target = $region13
  $region12: #{feature_encoder_forward.30} parent=0 // pred_region
    _
  $region13: #{feature_encoder_forward.30} parent=0 // pred_fallthru
    _
  // Predicated region
  $region14: #{feature_encoder_forward.30} parent=0 // pred_check
    _
  $region15: #{feature_encoder_forward.30} parent=0 // pred_check_branch
    %18 = sbr.rel (0) target = $region17
  $region16: #{feature_encoder_forward.30} parent=0 // pred_region
    _
  $region17: #{feature_encoder_forward.30} parent=0 // pred_fallthru
    _
  %v20 = vld [vmem:[%s0] sm:$0xf]
  %v21 = vld [vmem:[%s0 + $0x4] sm:$0xf]
  %v22 = vld [vmem:[%s0 + $0x8] sm:$0xf]
  %v23 = vld [vmem:[%s0 + $0xc] sm:$0xf]
  %v24 = vld [vmem:[%s1] sm:$0xf]
  %v25 = vld [vmem:[%s1 + $0x4] sm:$0xf]
  %v26 = vld [vmem:[%s1 + $0x8] sm:$0xf]
  %v27 = vld [vmem:[%s1 + $0xc] sm:$0xf]
  %v28 = vld [vmem:[%s1 + $0x10] sm:$0xf]
  %v29 = vld [vmem:[%s1 + $0x14] sm:$0xf]
  %v30 = vld [vmem:[%s1 + $0x18] sm:$0xf]
  %v31 = vld [vmem:[%s1 + $0x1c] sm:$0xf]
  %v32 = vld [vmem:[%s1 + $0x20] sm:$0xf]
  %v37 = vunpack.c.l.b16 %v20
  %v38 = vunpack.c.l.b16 %v21
  %v39 = vunpack.c.l.b16 %v22
  %v40 = vunpack.c.l.b16 %v23
  %v41 = vpack.c.b16 %v38, %v37
  %v42 = vpack.c.b16 %v40, %v39
  %v52 = vunpack.c.l.b16 %v24
  %v53 = vunpack.c.l.b16 %v25
  %v54 = vunpack.c.l.b16 %v26
  %v55 = vunpack.c.l.b16 %v27
  %v56 = vunpack.c.l.b16 %v28
  %v57 = vunpack.c.l.b16 %v29
  %v58 = vunpack.c.l.b16 %v30
  %v59 = vunpack.c.l.b16 %v31
  %v60 = vunpack.c.l.b16 %v32
  %v61 = vpack.c.b16 %v53, %v52
  %v62 = vpack.c.b16 %v55, %v54
  %v63 = vpack.c.b16 %v57, %v56
  %v64 = vpack.c.b16 %v59, %v58
  %v65 = vpack.c.b16 %v60, %v60
  %vm70 = vcmask 588800
  %v72 = vsel %vm70, %v41, 0
  %v75 = vsel %vm70, %v42, 0
  %vm77 = vcmask 1043456
  %v79 = vsel %vm77, %v65, 0
  %81 = vmatprep.subr.bf16.mxu0 0
  %82 = vmatpush1.bf16.msra.mxu0 %v61
  %83 = vmatprep.subr.bf16.mxu0 0
  %84 = vmatpush1.bf16.msra.mxu0 %v62
  %85 = vmatprep.subr.bf16.mxu0 0
  %86 = vmatpush1.bf16.msra.mxu0 %v63
  %87 = vmatprep.subr.bf16.mxu0 0
  %88 = vmatpush1.bf16.msra.mxu0 %v64
  %89 = vmatprep.subr.bf16.mxu0 0
  %90 = vmatpush1.bf16.msra.mxu0 %v79
  %91 = vmatprep.subr.bf16.mxu0 0
  %92 = vmatpush1.bf16.msra.mxu0 0
  %93 = vmatprep.subr.bf16.mxu0 0
  %94 = vmatpush1.bf16.msra.mxu0 0
  %95 = vmatprep.subr.bf16.mxu0 0
  %96 = vmatpush1.bf16.msra.mxu0 0
  %97 = vmatprep.subr.bf16.mxu0 0
  %98 = vmatpush1.bf16.msra.mxu0 0
  %99 = vmatprep.subr.bf16.mxu0 0
  %100 = vmatpush1.bf16.msra.mxu0 0
  %101 = vmatprep.subr.bf16.mxu0 0
  %102 = vmatpush1.bf16.msra.mxu0 0
  %103 = vmatprep.subr.bf16.mxu0 0
  %104 = vmatpush1.bf16.msra.mxu0 0
  %105 = vmatprep.subr.bf16.mxu0 0
  %106 = vmatpush1.bf16.msra.mxu0 0
  %107 = vmatprep.subr.bf16.mxu0 0
  %108 = vmatpush1.bf16.msra.mxu0 0
  %109 = vmatprep.subr.bf16.mxu0 0
  %110 = vmatpush1.bf16.msra.mxu0 0
  %111 = vmatprep.subr.bf16.mxu0 0
  %112 = vmatpush1.bf16.msra.mxu0 0
  %113 = vmatprep.mubr.bf16.mxu0 0
  %114 = vmatmul.mubr.bf16.gmra.mrb[0].mxu0 %v72
  %v115 = vpop.f32.mrb[0].mxu0
  %v116 = vadd.f32 0.0, %v115
  %v117 = vpop.f32.mrb[0].mxu0
  %v118 = vpop.f32.mrb[0].mxu0
  %v119 = vadd.f32 0.0, %v118
  %v120 = vpop.f32.mrb[0].mxu0
  %121 = vmatprep.mubr.bf16.mxu0 0
  %122 = vmatmul.mubr.bf16.gmra.mrb[0].mxu0 %v75
  %v123 = vpop.f32.mrb[0].mxu0
  %v124 = vadd.f32 0.0, %v123
  %v125 = vpop.f32.mrb[0].mxu0
  %v126 = vpop.f32.mrb[0].mxu0
  %v127 = vadd.f32 0.0, %v126
  %v128 = vpop.f32.mrb[0].mxu0
  %129 = vdwg.mxu0
  %v130 = vpack.c.bf16 %v119, %v116
  %v131 = vpack.c.bf16 %v127, %v124
  %v134 = vunpack.c.l.b16 %v130
  %v135 = vunpack.c.h.b16 %v130
  %v136 = vunpack.c.l.b16 %v131
  %v137 = vunpack.c.h.b16 %v131
  %v138 = vpack.c.b16 %v134, %v134
  %v139 = vpack.c.b16 %v135, %v135
  %v140 = vpack.c.b16 %v136, %v136
  %v141 = vpack.c.b16 %v137, %v137
  %vm146 = vcmask 125952
  %147 = vst.msk [vmem:[%s4] sm:$0xf] %vm146, %v138
  %148 = vst.msk [vmem:[%s4 + $0x4] sm:$0xf] %vm146, %v139
  %149 = vst.msk [vmem:[%s4 + $0x8] sm:$0xf] %vm146, %v140
  %150 = vst.msk [vmem:[%s4 + $0xc] sm:$0xf] %vm146, %v141
  %v151 = vld [vmem:[%s2] sm:$0x1]
  %v153 = vlaneseq
  %v154 = vshrl.u32 %v153, 7
  %v155 = vsub.s32 0, %v154
  %v156 = vrot.slane %v151, %v155
  %v158 = vmul.f32 %v116, %v156
  %v159 = vmul.f32 %v119, %v156
  %v160 = vmul.f32 %v124, %v156
  %v161 = vmul.f32 %v127, %v156
  %v162 = vld [vmem:[%s3] sm:$0x1]
  %v164 = vlaneseq
  %v165 = vshrl.u32 %v164, 7
  %v166 = vsub.s32 0, %v165
  %v167 = vrot.slane %v162, %v166
  %v169 = vadd.f32 %v158, %v167
  %v170 = vadd.f32 %v159, %v167
  %v171 = vadd.f32 %v160, %v167
  %v172 = vadd.f32 %v161, %v167
  %v173 = vmax.f32 %v169, 0.0
  %v174 = vmax.f32 %v170, 0.0
  %v175 = vmax.f32 %v171, 0.0
  %v176 = vmax.f32 %v172, 0.0
  %v177 = vpack.c.bf16 %v174, %v173
  %v178 = vpack.c.bf16 %v176, %v175
  %v181 = vunpack.c.l.b16 %v177
  %v182 = vunpack.c.h.b16 %v177
  %v183 = vunpack.c.l.b16 %v178
  %v184 = vunpack.c.h.b16 %v178
  %v185 = vpack.c.b16 %v181, %v181
  %v186 = vpack.c.b16 %v182, %v182
  %v187 = vpack.c.b16 %v183, %v183
  %v188 = vpack.c.b16 %v184, %v184
  %193 = vst.msk [vmem:[%s5] sm:$0xf] %vm146, %v185
  %194 = vst.msk [vmem:[%s5 + $0x4] sm:$0xf] %vm146, %v186
  %195 = vst.msk [vmem:[%s5 + $0x8] sm:$0xf] %vm146, %v187
  %196 = vst.msk [vmem:[%s5 + $0xc] sm:$0xf] %vm146, %v188
  // Predicated region
  $region18: #{feature_encoder_forward.30} parent=0 // pred_check
    _
  $region19: #{feature_encoder_forward.30} parent=0 // pred_check_branch
    %198 = sbr.rel (0) target = $region21
  $region20: #{feature_encoder_forward.30} parent=0 // pred_region
    _
  $region21: #{feature_encoder_forward.30} parent=0 // pred_fallthru
    _
  // Predicated region
  $region22: #{feature_encoder_forward.30} parent=0 // pred_check
    _
  $region23: #{feature_encoder_forward.30} parent=0 // pred_check_branch
    %200 = sbr.rel (0) target = $region25
  $region24: #{feature_encoder_forward.30} parent=0 // pred_region
    _
  $region25: #{feature_encoder_forward.30} parent=0 // pred_fallthru
    _
  // Predicated region
  $region26: #{feature_encoder_forward.30} parent=0 // pred_check
    _
  $region27: #{feature_encoder_forward.30} parent=0 // pred_check_branch
    %202 = sbr.rel (0) target = $region29
  $region28: #{feature_encoder_forward.30} parent=0 // pred_region
    _
  $region29: #{feature_encoder_forward.30} parent=0 // pred_fallthru
    _
  // Predicated region
  $region30: #{feature_encoder_forward.30} parent=0 // pred_check
    _
  $region31: #{feature_encoder_forward.30} parent=0 // pred_check_branch
    %204 = sbr.rel (0) target = $region33
  $region32: #{feature_encoder_forward.30} parent=0 // pred_region
    _
  $region33: #{feature_encoder_forward.30} parent=0 // pred_fallthru
    _

// kernel: feature_encoder_forward.31
$region0: #{feature_encoder_forward.31}
  #allocation0 [shape = 'u32[]', space=smem, size = 0x4, offset = 0x4, fixed_abs, tag = 'smem constant byte address 0x4 - core index']
  #allocation1 [shape = 'u32[144,128]{1,0:T(1,128)}', space=vmem, size = 0x12000, scoped, tag = 'internal scratch']
  %s0 = inlined_call_operand.vmem [shape: bf16[32,144], index: 0, kind: input, shape index: {}]
  %s1 = inlined_call_operand.vmem [shape: bf16[144,16], index: 1, kind: input, shape index: {}]
  %s2 = inlined_call_operand.vmem [shape: f32[1,16], index: 2, kind: input, shape index: {}]
  %s3 = inlined_call_operand.vmem [shape: f32[1,16], index: 3, kind: input, shape index: {}]
  %s4 = inlined_call_operand.vmem [shape: bf16[32,16], index: 4, kind: output, shape index: {}]
  %s5 = sld [smem:[#allocation0]]
  $region26: #{feature_encoder_forward.31} parent=0
    _
  %s7 = ssub.s32 1, %s5
  %s8 = scalar_select 0, %s7, %s5
  // Predicated region
  $region2: #{feature_encoder_forward.31} parent=0 // pred_check
    _
  $region3: #{feature_encoder_forward.31} parent=0 // pred_check_branch
    %10 = sbr.rel (0) target = $region5
  $region4: #{feature_encoder_forward.31} parent=0 // pred_region
    _
  $region5: #{feature_encoder_forward.31} parent=0 // pred_fallthru
    _
  // Predicated region
  $region6: #{feature_encoder_forward.31} parent=0 // pred_check
    _
  $region7: #{feature_encoder_forward.31} parent=0 // pred_check_branch
    %12 = sbr.rel (0) target = $region9
  $region8: #{feature_encoder_forward.31} parent=0 // pred_region
    _
  $region9: #{feature_encoder_forward.31} parent=0 // pred_fallthru
    _
  // Predicated region
  $region10: #{feature_encoder_forward.31} parent=0 // pred_check
    _
  $region11: #{feature_encoder_forward.31} parent=0 // pred_check_branch
    %14 = sbr.rel (0) target = $region13
  $region12: #{feature_encoder_forward.31} parent=0 // pred_region
    _
  $region13: #{feature_encoder_forward.31} parent=0 // pred_fallthru
    _
  // Predicated region
  $region14: #{feature_encoder_forward.31} parent=0 // pred_check
    _
  $region15: #{feature_encoder_forward.31} parent=0 // pred_check_branch
    %16 = sbr.rel (0) target = $region17
  $region16: #{feature_encoder_forward.31} parent=0 // pred_region
    _
  $region17: #{feature_encoder_forward.31} parent=0 // pred_fallthru
    _
  %v18 = vld [vmem:[%s0] sm:$0xff]
  %v19 = vld [vmem:[%s0 + $0x8] sm:$0xff]
  %v20 = vld [vmem:[%s0 + $0x10] sm:$0xff]
  %v21 = vld [vmem:[%s0 + $0x18] sm:$0xff]
  %v22 = vld [vmem:[%s1] sm:$0xf]
  %v23 = vld [vmem:[%s1 + $0x4] sm:$0xf]
  %v24 = vld [vmem:[%s1 + $0x8] sm:$0xf]
  %v25 = vld [vmem:[%s1 + $0xc] sm:$0xf]
  %v26 = vld [vmem:[%s1 + $0x10] sm:$0xf]
  %v27 = vld [vmem:[%s1 + $0x14] sm:$0xf]
  %v28 = vld [vmem:[%s1 + $0x18] sm:$0xf]
  %v29 = vld [vmem:[%s1 + $0x1c] sm:$0xf]
  %v30 = vld [vmem:[%s1 + $0x20] sm:$0xf]
  %v31 = vld [vmem:[%s1 + $0x24] sm:$0xf]
  %v32 = vld [vmem:[%s1 + $0x28] sm:$0xf]
  %v33 = vld [vmem:[%s1 + $0x2c] sm:$0xf]
  %v34 = vld [vmem:[%s1 + $0x30] sm:$0xf]
  %v35 = vld [vmem:[%s1 + $0x34] sm:$0xf]
  %v36 = vld [vmem:[%s1 + $0x38] sm:$0xf]
  %v37 = vld [vmem:[%s1 + $0x3c] sm:$0xf]
  %v38 = vld [vmem:[%s1 + $0x40] sm:$0xf]
  %v39 = vld [vmem:[%s1 + $0x44] sm:$0xf]
  %v44 = vunpack.c.l.b16 %v18
  %v45 = vunpack.c.h.b16 %v18
  %v46 = vunpack.c.l.b16 %v19
  %v47 = vunpack.c.h.b16 %v19
  %v48 = vunpack.c.l.b16 %v20
  %v49 = vunpack.c.h.b16 %v20
  %v50 = vunpack.c.l.b16 %v21
  %v51 = vunpack.c.h.b16 %v21
  %v52 = vpack.c.b16 %v46, %v44
  %v53 = vpack.c.b16 %v47, %v45
  %v54 = vpack.c.b16 %v50, %v48
  %v55 = vpack.c.b16 %v51, %v49
  %v76 = vunpack.c.l.b16 %v22
  %v77 = vunpack.c.l.b16 %v23
  %v78 = vunpack.c.l.b16 %v24
  %v79 = vunpack.c.l.b16 %v25
  %v80 = vunpack.c.l.b16 %v26
  %v81 = vunpack.c.l.b16 %v27
  %v82 = vunpack.c.l.b16 %v28
  %v83 = vunpack.c.l.b16 %v29
  %v84 = vunpack.c.l.b16 %v30
  %v85 = vunpack.c.l.b16 %v31
  %v86 = vunpack.c.l.b16 %v32
  %v87 = vunpack.c.l.b16 %v33
  %v88 = vunpack.c.l.b16 %v34
  %v89 = vunpack.c.l.b16 %v35
  %v90 = vunpack.c.l.b16 %v36
  %v91 = vunpack.c.l.b16 %v37
  %v92 = vunpack.c.l.b16 %v38
  %v93 = vunpack.c.l.b16 %v39
  %v94 = vpack.c.b16 %v77, %v76
  %v95 = vpack.c.b16 %v79, %v78
  %v96 = vpack.c.b16 %v81, %v80
  %v97 = vpack.c.b16 %v83, %v82
  %v98 = vpack.c.b16 %v85, %v84
  %v99 = vpack.c.b16 %v87, %v86
  %v100 = vpack.c.b16 %v89, %v88
  %v101 = vpack.c.b16 %v91, %v90
  %v102 = vpack.c.b16 %v93, %v92
  %vm112 = vcmask 130048
  %v114 = vsel %vm112, %v53, 0
  %v117 = vsel %vm112, %v55, 0
  %119 = vmatprep.subr.bf16.mxu0 0
  %120 = vmatpush1.bf16.msra.mxu0 %v94
  %121 = vmatprep.subr.bf16.mxu0 0
  %122 = vmatpush1.bf16.msra.mxu0 %v95
  %123 = vmatprep.subr.bf16.mxu0 0
  %124 = vmatpush1.bf16.msra.mxu0 %v96
  %125 = vmatprep.subr.bf16.mxu0 0
  %126 = vmatpush1.bf16.msra.mxu0 %v97
  %127 = vmatprep.subr.bf16.mxu0 0
  %128 = vmatpush1.bf16.msra.mxu0 %v98
  %129 = vmatprep.subr.bf16.mxu0 0
  %130 = vmatpush1.bf16.msra.mxu0 %v99
  %131 = vmatprep.subr.bf16.mxu0 0
  %132 = vmatpush1.bf16.msra.mxu0 %v100
  %133 = vmatprep.subr.bf16.mxu0 0
  %134 = vmatpush1.bf16.msra.mxu0 %v101
  %135 = vmatprep.subr.bf16.mxu0 0
  %136 = vmatpush1.bf16.msra.mxu0 %v102
  %137 = vmatprep.subr.bf16.mxu0 0
  %138 = vmatpush1.bf16.msra.mxu0 0
  %139 = vmatprep.subr.bf16.mxu0 0
  %140 = vmatpush1.bf16.msra.mxu0 0
  %141 = vmatprep.subr.bf16.mxu0 0
  %142 = vmatpush1.bf16.msra.mxu0 0
  %143 = vmatprep.subr.bf16.mxu0 0
  %144 = vmatpush1.bf16.msra.mxu0 0
  %145 = vmatprep.subr.bf16.mxu0 0
  %146 = vmatpush1.bf16.msra.mxu0 0
  %147 = vmatprep.subr.bf16.mxu0 0
  %148 = vmatpush1.bf16.msra.mxu0 0
  %149 = vmatprep.subr.bf16.mxu0 0
  %150 = vmatpush1.bf16.msra.mxu0 0
  %151 = vmatprep.mubr.bf16.mxu0 %v114
  %152 = vmatmul.mubr.bf16.gmra.mrb[0].mxu0 %v52
  %v153 = vpop.f32.mrb[0].mxu0
  %v154 = vadd.f32 0.0, %v153
  %v155 = vpop.f32.mrb[0].mxu0
  %v156 = vpop.f32.mrb[0].mxu0
  %v157 = vadd.f32 0.0, %v156
  %v158 = vpop.f32.mrb[0].mxu0
  %159 = vmatprep.mubr.bf16.mxu0 %v117
  %160 = vmatmul.mubr.bf16.gmra.mrb[0].mxu0 %v54
  %v161 = vpop.f32.mrb[0].mxu0
  %v162 = vadd.f32 0.0, %v161
  %v163 = vpop.f32.mrb[0].mxu0
  %v164 = vpop.f32.mrb[0].mxu0
  %v165 = vadd.f32 0.0, %v164
  %v166 = vpop.f32.mrb[0].mxu0
  %167 = vdwg.mxu0
  %v168 = vld [vmem:[%s2] sm:$0x1]
  %v170 = vlaneseq
  %v171 = vshrl.u32 %v170, 7
  %v172 = vsub.s32 0, %v171
  %v173 = vrot.slane %v168, %v172
  %v175 = vmul.f32 %v154, %v173
  %v176 = vmul.f32 %v157, %v173
  %v177 = vmul.f32 %v162, %v173
  %v178 = vmul.f32 %v165, %v173
  %v179 = vld [vmem:[%s3] sm:$0x1]
  %v181 = vlaneseq
  %v182 = vshrl.u32 %v181, 7
  %v183 = vsub.s32 0, %v182
  %v184 = vrot.slane %v179, %v183
  %v186 = vadd.f32 %v175, %v184
  %v187 = vadd.f32 %v176, %v184
  %v188 = vadd.f32 %v177, %v184
  %v189 = vadd.f32 %v178, %v184
  %v190 = vmax.f32 %v186, 0.0
  %v191 = vmax.f32 %v187, 0.0
  %v192 = vmax.f32 %v188, 0.0
  %v193 = vmax.f32 %v189, 0.0
  %v194 = vpack.c.bf16 %v191, %v190
  %v195 = vpack.c.bf16 %v193, %v192
  %v198 = vunpack.c.l.b16 %v194
  %v199 = vunpack.c.h.b16 %v194
  %v200 = vunpack.c.l.b16 %v195
  %v201 = vunpack.c.h.b16 %v195
  %v202 = vpack.c.b16 %v198, %v198
  %v203 = vpack.c.b16 %v199, %v199
  %v204 = vpack.c.b16 %v200, %v200
  %v205 = vpack.c.b16 %v201, %v201
  %vm210 = vcmask 125952
  %211 = vst.msk [vmem:[%s4] sm:$0xf] %vm210, %v202
  %212 = vst.msk [vmem:[%s4 + $0x4] sm:$0xf] %vm210, %v203
  %213 = vst.msk [vmem:[%s4 + $0x8] sm:$0xf] %vm210, %v204
  %214 = vst.msk [vmem:[%s4 + $0xc] sm:$0xf] %vm210, %v205
  // Predicated region
  $region18: #{feature_encoder_forward.31} parent=0 // pred_check
    _
  $region19: #{feature_encoder_forward.31} parent=0 // pred_check_branch
    %216 = sbr.rel (0) target = $region21
  $region20: #{feature_encoder_forward.31} parent=0 // pred_region
    _
  $region21: #{feature_encoder_forward.31} parent=0 // pred_fallthru
    _
  // Predicated region
  $region22: #{feature_encoder_forward.31} parent=0 // pred_check
    _
  $region23: #{feature_encoder_forward.31} parent=0 // pred_check_branch
    %218 = sbr.rel (0) target = $region25
  $region24: #{feature_encoder_forward.31} parent=0 // pred_region
    _
  $region25: #{feature_encoder_forward.31} parent=0 // pred_fallthru
    _

// kernel: feature_encoder_forward.34
$region0: #{feature_encoder_forward.34}
  #allocation0 [shape = 'u32[]', space=smem, size = 0x4, offset = 0x4, fixed_abs, tag = 'smem constant byte address 0x4 - core index']
  #allocation1 [shape = 'u32[144,128]{1,0:T(1,128)}', space=vmem, size = 0x12000, scoped, tag = 'internal scratch']
  %s0 = inlined_call_operand.vmem [shape: bf16[32,144], index: 0, kind: input, shape index: {}]
  %s1 = inlined_call_operand.vmem [shape: bf16[144,16], index: 1, kind: input, shape index: {}]
  %s2 = inlined_call_operand.vmem [shape: bf16[32,16], index: 2, kind: input, shape index: {}]
  %s3 = inlined_call_operand.vmem [shape: f32[1,16], index: 3, kind: input, shape index: {}]
  %s4 = inlined_call_operand.vmem [shape: f32[1,16], index: 4, kind: input, shape index: {}]
  %s5 = inlined_call_operand.hbm [shape: f32[32,16], index: 5, kind: output, shape index: {0}]
  %s6 = inlined_call_operand.vmem [shape: bf16[32,16], index: 6, kind: output, shape index: {1}]
  %7 = xla_tuple %s5, %s6
  %s8 = sld [smem:[#allocation0]]
  $region38: #{feature_encoder_forward.34} parent=0
    _
  %s10 = ssub.s32 1, %s8
  %s11 = scalar_select 0, %s10, %s8
  $region1: #{feature_encoder_forward.34} parent=0
    #allocation2 [shape = 'u8[16384]{0}', space=vmem, size = 0x4000, scoped, tag = 'output window, operand 0, single buffered']
    #allocation3 [shape = 's32[1]{0}', space=sflag, size = 0x4, scoped, tag = 'scoped memory for feature_encoder_forward.34']
    %12 = vsyncpa [#allocation3], 0
    // Predicated region
    $region2: #{feature_encoder_forward.34} parent=1 // pred_check
      _
    $region3: #{feature_encoder_forward.34} parent=1 // pred_check_branch
      %14 = sbr.rel (0) target = $region5
    $region4: #{feature_encoder_forward.34} parent=1 // pred_region
      _
    $region5: #{feature_encoder_forward.34} parent=1 // pred_fallthru
      _
    // Predicated region
    $region6: #{feature_encoder_forward.34} parent=1 // pred_check
      _
    $region7: #{feature_encoder_forward.34} parent=1 // pred_check_branch
      %16 = sbr.rel (0) target = $region9
    $region8: #{feature_encoder_forward.34} parent=1 // pred_region
      _
    $region9: #{feature_encoder_forward.34} parent=1 // pred_fallthru
      _
    // Predicated region
    $region10: #{feature_encoder_forward.34} parent=1 // pred_check
      _
    $region11: #{feature_encoder_forward.34} parent=1 // pred_check_branch
      %18 = sbr.rel (0) target = $region13
    $region12: #{feature_encoder_forward.34} parent=1 // pred_region
      _
    $region13: #{feature_encoder_forward.34} parent=1 // pred_fallthru
      _
    // Predicated region
    $region14: #{feature_encoder_forward.34} parent=1 // pred_check
      _
    $region15: #{feature_encoder_forward.34} parent=1 // pred_check_branch
      %20 = sbr.rel (0) target = $region17
    $region16: #{feature_encoder_forward.34} parent=1 // pred_region
      _
    $region17: #{feature_encoder_forward.34} parent=1 // pred_fallthru
      _
    // Predicated region
    $region18: #{feature_encoder_forward.34} parent=1 // pred_check
      _
    $region19: #{feature_encoder_forward.34} parent=1 // pred_check_branch
      %22 = sbr.rel (0) target = $region21
    $region20: #{feature_encoder_forward.34} parent=1 // pred_region
      _
    $region21: #{feature_encoder_forward.34} parent=1 // pred_fallthru
      _
    %v24 = vld [vmem:[%s0] sm:$0xff]
    %v25 = vld [vmem:[%s0 + $0x8] sm:$0xff]
    %v26 = vld [vmem:[%s0 + $0x10] sm:$0xff]
    %v27 = vld [vmem:[%s0 + $0x18] sm:$0xff]
    %v28 = vld [vmem:[%s1] sm:$0xf]
    %v29 = vld [vmem:[%s1 + $0x4] sm:$0xf]
    %v30 = vld [vmem:[%s1 + $0x8] sm:$0xf]
    %v31 = vld [vmem:[%s1 + $0xc] sm:$0xf]
    %v32 = vld [vmem:[%s1 + $0x10] sm:$0xf]
    %v33 = vld [vmem:[%s1 + $0x14] sm:$0xf]
    %v34 = vld [vmem:[%s1 + $0x18] sm:$0xf]
    %v35 = vld [vmem:[%s1 + $0x1c] sm:$0xf]
    %v36 = vld [vmem:[%s1 + $0x20] sm:$0xf]
    %v37 = vld [vmem:[%s1 + $0x24] sm:$0xf]
    %v38 = vld [vmem:[%s1 + $0x28] sm:$0xf]
    %v39 = vld [vmem:[%s1 + $0x2c] sm:$0xf]
    %v40 = vld [vmem:[%s1 + $0x30] sm:$0xf]
    %v41 = vld [vmem:[%s1 + $0x34] sm:$0xf]
    %v42 = vld [vmem:[%s1 + $0x38] sm:$0xf]
    %v43 = vld [vmem:[%s1 + $0x3c] sm:$0xf]
    %v44 = vld [vmem:[%s1 + $0x40] sm:$0xf]
    %v45 = vld [vmem:[%s1 + $0x44] sm:$0xf]
    %v46 = vld [vmem:[%s2] sm:$0xf]
    %v47 = vld [vmem:[%s2 + $0x4] sm:$0xf]
    %v48 = vld [vmem:[%s2 + $0x8] sm:$0xf]
    %v49 = vld [vmem:[%s2 + $0xc] sm:$0xf]
    %v50 = vunpack.c.l.bf16 %v46
    %v51 = vunpack.c.l.bf16 %v47
    %v52 = vunpack.c.l.bf16 %v48
    %v53 = vunpack.c.l.bf16 %v49
    %v58 = vunpack.c.l.b16 %v24
    %v59 = vunpack.c.h.b16 %v24
    %v60 = vunpack.c.l.b16 %v25
    %v61 = vunpack.c.h.b16 %v25
    %v62 = vunpack.c.l.b16 %v26
    %v63 = vunpack.c.h.b16 %v26
    %v64 = vunpack.c.l.b16 %v27
    %v65 = vunpack.c.h.b16 %v27
    %v66 = vpack.c.b16 %v60, %v58
    %v67 = vpack.c.b16 %v61, %v59
    %v68 = vpack.c.b16 %v64, %v62
    %v69 = vpack.c.b16 %v65, %v63
    %v90 = vunpack.c.l.b16 %v28
    %v91 = vunpack.c.l.b16 %v29
    %v92 = vunpack.c.l.b16 %v30
    %v93 = vunpack.c.l.b16 %v31
    %v94 = vunpack.c.l.b16 %v32
    %v95 = vunpack.c.l.b16 %v33
    %v96 = vunpack.c.l.b16 %v34
    %v97 = vunpack.c.l.b16 %v35
    %v98 = vunpack.c.l.b16 %v36
    %v99 = vunpack.c.l.b16 %v37
    %v100 = vunpack.c.l.b16 %v38
    %v101 = vunpack.c.l.b16 %v39
    %v102 = vunpack.c.l.b16 %v40
    %v103 = vunpack.c.l.b16 %v41
    %v104 = vunpack.c.l.b16 %v42
    %v105 = vunpack.c.l.b16 %v43
    %v106 = vunpack.c.l.b16 %v44
    %v107 = vunpack.c.l.b16 %v45
    %v108 = vpack.c.b16 %v91, %v90
    %v109 = vpack.c.b16 %v93, %v92
    %v110 = vpack.c.b16 %v95, %v94
    %v111 = vpack.c.b16 %v97, %v96
    %v112 = vpack.c.b16 %v99, %v98
    %v113 = vpack.c.b16 %v101, %v100
    %v114 = vpack.c.b16 %v103, %v102
    %v115 = vpack.c.b16 %v105, %v104
    %v116 = vpack.c.b16 %v107, %v106
    %vm126 = vcmask 130048
    %v128 = vsel %vm126, %v67, 0
    %v131 = vsel %vm126, %v69, 0
    %133 = vmatprep.subr.bf16.mxu0 0
    %134 = vmatpush1.bf16.msra.mxu0 %v108
    %135 = vmatprep.subr.bf16.mxu0 0
    %136 = vmatpush1.bf16.msra.mxu0 %v109
    %137 = vmatprep.subr.bf16.mxu0 0
    %138 = vmatpush1.bf16.msra.mxu0 %v110
    %139 = vmatprep.subr.bf16.mxu0 0
    %140 = vmatpush1.bf16.msra.mxu0 %v111
    %141 = vmatprep.subr.bf16.mxu0 0
    %142 = vmatpush1.bf16.msra.mxu0 %v112
    %143 = vmatprep.subr.bf16.mxu0 0
    %144 = vmatpush1.bf16.msra.mxu0 %v113
    %145 = vmatprep.subr.bf16.mxu0 0
    %146 = vmatpush1.bf16.msra.mxu0 %v114
    %147 = vmatprep.subr.bf16.mxu0 0
    %148 = vmatpush1.bf16.msra.mxu0 %v115
    %149 = vmatprep.subr.bf16.mxu0 0
    %150 = vmatpush1.bf16.msra.mxu0 %v116
    %151 = vmatprep.subr.bf16.mxu0 0
    %152 = vmatpush1.bf16.msra.mxu0 0
    %153 = vmatprep.subr.bf16.mxu0 0
    %154 = vmatpush1.bf16.msra.mxu0 0
    %155 = vmatprep.subr.bf16.mxu0 0
    %156 = vmatpush1.bf16.msra.mxu0 0
    %157 = vmatprep.subr.bf16.mxu0 0
    %158 = vmatpush1.bf16.msra.mxu0 0
    %159 = vmatprep.subr.bf16.mxu0 0
    %160 = vmatpush1.bf16.msra.mxu0 0
    %161 = vmatprep.subr.bf16.mxu0 0
    %162 = vmatpush1.bf16.msra.mxu0 0
    %163 = vmatprep.subr.bf16.mxu0 0
    %164 = vmatpush1.bf16.msra.mxu0 0
    %165 = vmatprep.mubr.bf16.mxu0 %v128
    %166 = vmatmul.mubr.bf16.gmra.mrb[0].mxu0 %v66
    %v167 = vpop.f32.mrb[0].mxu0
    %v168 = vadd.f32 %v50, %v167
    %v169 = vpop.f32.mrb[0].mxu0
    %v170 = vpop.f32.mrb[0].mxu0
    %v171 = vadd.f32 %v51, %v170
    %v172 = vpop.f32.mrb[0].mxu0
    %173 = vmatprep.mubr.bf16.mxu0 %v131
    %174 = vmatmul.mubr.bf16.gmra.mrb[0].mxu0 %v68
    %v175 = vpop.f32.mrb[0].mxu0
    %v176 = vadd.f32 %v52, %v175
    %v177 = vpop.f32.mrb[0].mxu0
    %v178 = vpop.f32.mrb[0].mxu0
    %v179 = vadd.f32 %v53, %v178
    %v180 = vpop.f32.mrb[0].mxu0
    %181 = vdwg.mxu0
    %182 = vst.msk [vmem:[#allocation2] sm:$0xff] %vm126, %v168
    %183 = vst.msk [vmem:[#allocation2 + $0x8] sm:$0xff] %vm126, %v171
    %184 = vst.msk [vmem:[#allocation2 + $0x10] sm:$0xff] %vm126, %v176
    %185 = vst.msk [vmem:[#allocation2 + $0x18] sm:$0xff] %vm126, %v179
    %v186 = vld [vmem:[%s3] sm:$0x1]
    %v188 = vlaneseq
    %v189 = vshrl.u32 %v188, 7
    %v190 = vsub.s32 0, %v189
    %v191 = vrot.slane %v186, %v190
    %v193 = vmul.f32 %v168, %v191
    %v194 = vmul.f32 %v171, %v191
    %v195 = vmul.f32 %v176, %v191
    %v196 = vmul.f32 %v179, %v191
    %v197 = vld [vmem:[%s4] sm:$0x1]
    %v199 = vlaneseq
    %v200 = vshrl.u32 %v199, 7
    %v201 = vsub.s32 0, %v200
    %v202 = vrot.slane %v197, %v201
    %v204 = vadd.f32 %v193, %v202
    %v205 = vadd.f32 %v194, %v202
    %v206 = vadd.f32 %v195, %v202
    %v207 = vadd.f32 %v196, %v202
    %v208 = vmax.f32 %v204, 0.0
    %v209 = vmax.f32 %v205, 0.0
    %v210 = vmax.f32 %v206, 0.0
    %v211 = vmax.f32 %v207, 0.0
    %v212 = vpack.c.bf16 %v209, %v208
    %v213 = vpack.c.bf16 %v211, %v210
    %v216 = vunpack.c.l.b16 %v212
    %v217 = vunpack.c.h.b16 %v212
    %v218 = vunpack.c.l.b16 %v213
    %v219 = vunpack.c.h.b16 %v213
    %v220 = vpack.c.b16 %v216, %v216
    %v221 = vpack.c.b16 %v217, %v217
    %v222 = vpack.c.b16 %v218, %v218
    %v223 = vpack.c.b16 %v219, %v219
    %vm228 = vcmask 125952
    %229 = vst.msk [vmem:[%s6] sm:$0xf] %vm228, %v220
    %230 = vst.msk [vmem:[%s6 + $0x4] sm:$0xf] %vm228, %v221
    %231 = vst.msk [vmem:[%s6 + $0x8] sm:$0xf] %vm228, %v222
    %232 = vst.msk [vmem:[%s6 + $0xc] sm:$0xf] %vm228, %v223
    // Predicated region
    $region22: #{feature_encoder_forward.34} parent=1 // pred_check
      _
    $region23: #{feature_encoder_forward.34} parent=1 // pred_check_branch
      %234 = sbr.rel (0) target = $region25
    $region24: #{feature_encoder_forward.34} parent=1 // pred_region
      %s236 = ssub.s32 512, 512
      %237 = vsyncadd [#allocation3], %s236
      %s238 = sshll.u32 [#allocation2], 4
      %s239 = int_to_ptr.vmem [resolvable:$true] %s238
      %244 = dma.vmem_to_hbm [thread:$0]  %s239, 512, %s5, [#allocation3], 128, 128, 8
    $region25: #{feature_encoder_forward.34} parent=1 // pred_fallthru
      _
    // Predicated region
    $region26: #{feature_encoder_forward.34} parent=1 // pred_check
      _
    $region27: #{feature_encoder_forward.34} parent=1 // pred_check_branch
      %246 = sbr.rel (0) target = $region29
    $region28: #{feature_encoder_forward.34} parent=1 // pred_region
      _
    $region29: #{feature_encoder_forward.34} parent=1 // pred_fallthru
      _
    // Predicated region
    $region30: #{feature_encoder_forward.34} parent=1 // pred_check
      _
    $region31: #{feature_encoder_forward.34} parent=1 // pred_check_branch
      %248 = sbr.rel (0) target = $region33
    $region32: #{feature_encoder_forward.34} parent=1 // pred_region
      %249 = dma.done [#allocation3], 512
    $region33: #{feature_encoder_forward.34} parent=1 // pred_fallthru
      _
    // Predicated region
    $region34: #{feature_encoder_forward.34} parent=1 // pred_check
      _
    $region35: #{feature_encoder_forward.34} parent=1 // pred_check_branch
      %251 = sbr.rel (0) target = $region37
    $region36: #{feature_encoder_forward.34} parent=1 // pred_region
      _
    $region37: #{feature_encoder_forward.34} parent=1 // pred_fallthru
      _
    %252 = vsyncpa [#allocation3], 1

// kernel: feature_encoder_forward.32
$region0: #{feature_encoder_forward.32}
  #allocation0 [shape = 'u32[]', space=smem, size = 0x4, offset = 0x4, fixed_abs, tag = 'smem constant byte address 0x4 - core index']
  #allocation1 [shape = 'u32[144,128]{1,0:T(1,128)}', space=vmem, size = 0x12000, scoped, tag = 'internal scratch']
  %s0 = inlined_call_operand.vmem [shape: bf16[32,144], index: 0, kind: input, shape index: {}]
  %s1 = inlined_call_operand.vmem [shape: bf16[144,16], index: 1, kind: input, shape index: {}]
  %s2 = inlined_call_operand.vmem [shape: bf16[32,16], index: 2, kind: input, shape index: {}]
  %s3 = inlined_call_operand.vmem [shape: f32[1,16], index: 3, kind: input, shape index: {}]
  %s4 = inlined_call_operand.vmem [shape: f32[1,16], index: 4, kind: input, shape index: {}]
  %s5 = inlined_call_operand.vmem [shape: bf16[32,16], index: 5, kind: output, shape index: {0}]
  %s6 = inlined_call_operand.vmem [shape: bf16[32,16], index: 6, kind: output, shape index: {1}]
  %7 = xla_tuple %s5, %s6
  %s8 = sld [smem:[#allocation0]]
  $region38: #{feature_encoder_forward.32} parent=0
    _
  %s10 = ssub.s32 1, %s8
  %s11 = scalar_select 0, %s10, %s8
  // Predicated region
  $region2: #{feature_encoder_forward.32} parent=0 // pred_check
    _
  $region3: #{feature_encoder_forward.32} parent=0 // pred_check_branch
    %13 = sbr.rel (0) target = $region5
  $region4: #{feature_encoder_forward.32} parent=0 // pred_region
    _
  $region5: #{feature_encoder_forward.32} parent=0 // pred_fallthru
    _
  // Predicated region
  $region6: #{feature_encoder_forward.32} parent=0 // pred_check
    _
  $region7: #{feature_encoder_forward.32} parent=0 // pred_check_branch
    %15 = sbr.rel (0) target = $region9
  $region8: #{feature_encoder_forward.32} parent=0 // pred_region
    _
  $region9: #{feature_encoder_forward.32} parent=0 // pred_fallthru
    _
  // Predicated region
  $region10: #{feature_encoder_forward.32} parent=0 // pred_check
    _
  $region11: #{feature_encoder_forward.32} parent=0 // pred_check_branch
    %17 = sbr.rel (0) target = $region13
  $region12: #{feature_encoder_forward.32} parent=0 // pred_region
    _
  $region13: #{feature_encoder_forward.32} parent=0 // pred_fallthru
    _
  // Predicated region
  $region14: #{feature_encoder_forward.32} parent=0 // pred_check
    _
  $region15: #{feature_encoder_forward.32} parent=0 // pred_check_branch
    %19 = sbr.rel (0) target = $region17
  $region16: #{feature_encoder_forward.32} parent=0 // pred_region
    _
  $region17: #{feature_encoder_forward.32} parent=0 // pred_fallthru
    _
  // Predicated region
  $region18: #{feature_encoder_forward.32} parent=0 // pred_check
    _
  $region19: #{feature_encoder_forward.32} parent=0 // pred_check_branch
    %21 = sbr.rel (0) target = $region21
  $region20: #{feature_encoder_forward.32} parent=0 // pred_region
    _
  $region21: #{feature_encoder_forward.32} parent=0 // pred_fallthru
    _
  %v23 = vld [vmem:[%s0] sm:$0xff]
  %v24 = vld [vmem:[%s0 + $0x8] sm:$0xff]
  %v25 = vld [vmem:[%s0 + $0x10] sm:$0xff]
  %v26 = vld [vmem:[%s0 + $0x18] sm:$0xff]
  %v27 = vld [vmem:[%s1] sm:$0xf]
  %v28 = vld [vmem:[%s1 + $0x4] sm:$0xf]
  %v29 = vld [vmem:[%s1 + $0x8] sm:$0xf]
  %v30 = vld [vmem:[%s1 + $0xc] sm:$0xf]
  %v31 = vld [vmem:[%s1 + $0x10] sm:$0xf]
  %v32 = vld [vmem:[%s1 + $0x14] sm:$0xf]
  %v33 = vld [vmem:[%s1 + $0x18] sm:$0xf]
  %v34 = vld [vmem:[%s1 + $0x1c] sm:$0xf]
  %v35 = vld [vmem:[%s1 + $0x20] sm:$0xf]
  %v36 = vld [vmem:[%s1 + $0x24] sm:$0xf]
  %v37 = vld [vmem:[%s1 + $0x28] sm:$0xf]
  %v38 = vld [vmem:[%s1 + $0x2c] sm:$0xf]
  %v39 = vld [vmem:[%s1 + $0x30] sm:$0xf]
  %v40 = vld [vmem:[%s1 + $0x34] sm:$0xf]
  %v41 = vld [vmem:[%s1 + $0x38] sm:$0xf]
  %v42 = vld [vmem:[%s1 + $0x3c] sm:$0xf]
  %v43 = vld [vmem:[%s1 + $0x40] sm:$0xf]
  %v44 = vld [vmem:[%s1 + $0x44] sm:$0xf]
  %v45 = vld [vmem:[%s2] sm:$0xf]
  %v46 = vld [vmem:[%s2 + $0x4] sm:$0xf]
  %v47 = vld [vmem:[%s2 + $0x8] sm:$0xf]
  %v48 = vld [vmem:[%s2 + $0xc] sm:$0xf]
  %v49 = vunpack.c.l.bf16 %v45
  %v50 = vunpack.c.l.bf16 %v46
  %v51 = vunpack.c.l.bf16 %v47
  %v52 = vunpack.c.l.bf16 %v48
  %v57 = vunpack.c.l.b16 %v23
  %v58 = vunpack.c.h.b16 %v23
  %v59 = vunpack.c.l.b16 %v24
  %v60 = vunpack.c.h.b16 %v24
  %v61 = vunpack.c.l.b16 %v25
  %v62 = vunpack.c.h.b16 %v25
  %v63 = vunpack.c.l.b16 %v26
  %v64 = vunpack.c.h.b16 %v26
  %v65 = vpack.c.b16 %v59, %v57
  %v66 = vpack.c.b16 %v60, %v58
  %v67 = vpack.c.b16 %v63, %v61
  %v68 = vpack.c.b16 %v64, %v62
  %v89 = vunpack.c.l.b16 %v27
  %v90 = vunpack.c.l.b16 %v28
  %v91 = vunpack.c.l.b16 %v29
  %v92 = vunpack.c.l.b16 %v30
  %v93 = vunpack.c.l.b16 %v31
  %v94 = vunpack.c.l.b16 %v32
  %v95 = vunpack.c.l.b16 %v33
  %v96 = vunpack.c.l.b16 %v34
  %v97 = vunpack.c.l.b16 %v35
  %v98 = vunpack.c.l.b16 %v36
  %v99 = vunpack.c.l.b16 %v37
  %v100 = vunpack.c.l.b16 %v38
  %v101 = vunpack.c.l.b16 %v39
  %v102 = vunpack.c.l.b16 %v40
  %v103 = vunpack.c.l.b16 %v41
  %v104 = vunpack.c.l.b16 %v42
  %v105 = vunpack.c.l.b16 %v43
  %v106 = vunpack.c.l.b16 %v44
  %v107 = vpack.c.b16 %v90, %v89
  %v108 = vpack.c.b16 %v92, %v91
  %v109 = vpack.c.b16 %v94, %v93
  %v110 = vpack.c.b16 %v96, %v95
  %v111 = vpack.c.b16 %v98, %v97
  %v112 = vpack.c.b16 %v100, %v99
  %v113 = vpack.c.b16 %v102, %v101
  %v114 = vpack.c.b16 %v104, %v103
  %v115 = vpack.c.b16 %v106, %v105
  %vm125 = vcmask 130048
  %v127 = vsel %vm125, %v66, 0
  %v130 = vsel %vm125, %v68, 0
  %132 = vmatprep.subr.bf16.mxu0 0
  %133 = vmatpush1.bf16.msra.mxu0 %v107
  %134 = vmatprep.subr.bf16.mxu0 0
  %135 = vmatpush1.bf16.msra.mxu0 %v108
  %136 = vmatprep.subr.bf16.mxu0 0
  %137 = vmatpush1.bf16.msra.mxu0 %v109
  %138 = vmatprep.subr.bf16.mxu0 0
  %139 = vmatpush1.bf16.msra.mxu0 %v110
  %140 = vmatprep.subr.bf16.mxu0 0
  %141 = vmatpush1.bf16.msra.mxu0 %v111
  %142 = vmatprep.subr.bf16.mxu0 0
  %143 = vmatpush1.bf16.msra.mxu0 %v112
  %144 = vmatprep.subr.bf16.mxu0 0
  %145 = vmatpush1.bf16.msra.mxu0 %v113
  %146 = vmatprep.subr.bf16.mxu0 0
  %147 = vmatpush1.bf16.msra.mxu0 %v114
  %148 = vmatprep.subr.bf16.mxu0 0
  %149 = vmatpush1.bf16.msra.mxu0 %v115
  %150 = vmatprep.subr.bf16.mxu0 0
  %151 = vmatpush1.bf16.msra.mxu0 0
  %152 = vmatprep.subr.bf16.mxu0 0
  %153 = vmatpush1.bf16.msra.mxu0 0
  %154 = vmatprep.subr.bf16.mxu0 0
  %155 = vmatpush1.bf16.msra.mxu0 0
  %156 = vmatprep.subr.bf16.mxu0 0
  %157 = vmatpush1.bf16.msra.mxu0 0
  %158 = vmatprep.subr.bf16.mxu0 0
  %159 = vmatpush1.bf16.msra.mxu0 0
  %160 = vmatprep.subr.bf16.mxu0 0
  %161 = vmatpush1.bf16.msra.mxu0 0
  %162 = vmatprep.subr.bf16.mxu0 0
  %163 = vmatpush1.bf16.msra.mxu0 0
  %164 = vmatprep.mubr.bf16.mxu0 %v127
  %165 = vmatmul.mubr.bf16.gmra.mrb[0].mxu0 %v65
  %v166 = vpop.f32.mrb[0].mxu0
  %v167 = vadd.f32 %v49, %v166
  %v168 = vpop.f32.mrb[0].mxu0
  %v169 = vpop.f32.mrb[0].mxu0
  %v170 = vadd.f32 %v50, %v169
  %v171 = vpop.f32.mrb[0].mxu0
  %172 = vmatprep.mubr.bf16.mxu0 %v130
  %173 = vmatmul.mubr.bf16.gmra.mrb[0].mxu0 %v67
  %v174 = vpop.f32.mrb[0].mxu0
  %v175 = vadd.f32 %v51, %v174
  %v176 = vpop.f32.mrb[0].mxu0
  %v177 = vpop.f32.mrb[0].mxu0
  %v178 = vadd.f32 %v52, %v177
  %v179 = vpop.f32.mrb[0].mxu0
  %180 = vdwg.mxu0
  %v181 = vpack.c.bf16 %v170, %v167
  %v182 = vpack.c.bf16 %v178, %v175
  %v185 = vunpack.c.l.b16 %v181
  %v186 = vunpack.c.h.b16 %v181
  %v187 = vunpack.c.l.b16 %v182
  %v188 = vunpack.c.h.b16 %v182
  %v189 = vpack.c.b16 %v185, %v185
  %v190 = vpack.c.b16 %v186, %v186
  %v191 = vpack.c.b16 %v187, %v187
  %v192 = vpack.c.b16 %v188, %v188
  %vm197 = vcmask 125952
  %198 = vst.msk [vmem:[%s5] sm:$0xf] %vm197, %v189
  %199 = vst.msk [vmem:[%s5 + $0x4] sm:$0xf] %vm197, %v190
  %200 = vst.msk [vmem:[%s5 + $0x8] sm:$0xf] %vm197, %v191
  %201 = vst.msk [vmem:[%s5 + $0xc] sm:$0xf] %vm197, %v192
  %v202 = vld [vmem:[%s3] sm:$0x1]
  %v204 = vlaneseq
  %v205 = vshrl.u32 %v204, 7
  %v206 = vsub.s32 0, %v205
  %v207 = vrot.slane %v202, %v206
  %v209 = vmul.f32 %v167, %v207
  %v210 = vmul.f32 %v170, %v207
  %v211 = vmul.f32 %v175, %v207
  %v212 = vmul.f32 %v178, %v207
  %v213 = vld [vmem:[%s4] sm:$0x1]
  %v215 = vlaneseq
  %v216 = vshrl.u32 %v215, 7
  %v217 = vsub.s32 0, %v216
  %v218 = vrot.slane %v213, %v217
  %v220 = vadd.f32 %v209, %v218
  %v221 = vadd.f32 %v210, %v218
  %v222 = vadd.f32 %v211, %v218
  %v223 = vadd.f32 %v212, %v218
  %v224 = vmax.f32 %v220, 0.0
  %v225 = vmax.f32 %v221, 0.0
  %v226 = vmax.f32 %v222, 0.0
  %v227 = vmax.f32 %v223, 0.0
  %v228 = vpack.c.bf16 %v225, %v224
  %v229 = vpack.c.bf16 %v227, %v226
  %v232 = vunpack.c.l.b16 %v228
  %v233 = vunpack.c.h.b16 %v228
  %v234 = vunpack.c.l.b16 %v229
  %v235 = vunpack.c.h.b16 %v229
  %v236 = vpack.c.b16 %v232, %v232
  %v237 = vpack.c.b16 %v233, %v233
  %v238 = vpack.c.b16 %v234, %v234
  %v239 = vpack.c.b16 %v235, %v235
  %244 = vst.msk [vmem:[%s6] sm:$0xf] %vm197, %v236
  %245 = vst.msk [vmem:[%s6 + $0x4] sm:$0xf] %vm197, %v237
  %246 = vst.msk [vmem:[%s6 + $0x8] sm:$0xf] %vm197, %v238
  %247 = vst.msk [vmem:[%s6 + $0xc] sm:$0xf] %vm197, %v239
  // Predicated region
  $region22: #{feature_encoder_forward.32} parent=0 // pred_check
    _
  $region23: #{feature_encoder_forward.32} parent=0 // pred_check_branch
    %249 = sbr.rel (0) target = $region25
  $region24: #{feature_encoder_forward.32} parent=0 // pred_region
    _
  $region25: #{feature_encoder_forward.32} parent=0 // pred_fallthru
    _
  // Predicated region
  $region26: #{feature_encoder_forward.32} parent=0 // pred_check
    _
  $region27: #{feature_encoder_forward.32} parent=0 // pred_check_branch
    %251 = sbr.rel (0) target = $region29
  $region28: #{feature_encoder_forward.32} parent=0 // pred_region
    _
  $region29: #{feature_encoder_forward.32} parent=0 // pred_fallthru
    _
  // Predicated region
  $region30: #{feature_encoder_forward.32} parent=0 // pred_check
    _
  $region31: #{feature_encoder_forward.32} parent=0 // pred_check_branch
    %253 = sbr.rel (0) target = $region33
  $region32: #{feature_encoder_forward.32} parent=0 // pred_region
    _
  $region33: #{feature_encoder_forward.32} parent=0 // pred_fallthru
    _
  // Predicated region
  $region34: #{feature_encoder_forward.32} parent=0 // pred_check
    _
  $region35: #{feature_encoder_forward.32} parent=0 // pred_check_branch
    %255 = sbr.rel (0) target = $region37
  $region36: #{feature_encoder_forward.32} parent=0 // pred_region
    _
  $region37: #{feature_encoder_forward.32} parent=0 // pred_fallthru
    _

// kernel: feature_encoder_forward.35
$region0: #{feature_encoder_forward.35}
  #allocation0 [shape = 'u32[]', space=smem, size = 0x4, offset = 0x4, fixed_abs, tag = 'smem constant byte address 0x4 - core index']
  #allocation1 [shape = 'u32[144,128]{1,0:T(1,128)}', space=vmem, size = 0x12000, scoped, tag = 'internal scratch']
  %s0 = inlined_call_operand.vmem [shape: bf16[16,144], index: 0, kind: input, shape index: {}]
  %s1 = inlined_call_operand.vmem [shape: bf16[144,32], index: 1, kind: input, shape index: {}]
  %s2 = inlined_call_operand.vmem [shape: f32[1,32], index: 2, kind: input, shape index: {}]
  %s3 = inlined_call_operand.vmem [shape: f32[1,32], index: 3, kind: input, shape index: {}]
  %s4 = inlined_call_operand.vmem [shape: bf16[16,32], index: 4, kind: output, shape index: {0}]
  %s5 = inlined_call_operand.vmem [shape: bf16[16,32], index: 5, kind: output, shape index: {1}]
  %6 = xla_tuple %s4, %s5
  %s7 = sld [smem:[#allocation0]]
  $region34: #{feature_encoder_forward.35} parent=0
    _
  %s9 = ssub.s32 1, %s7
  %s10 = scalar_select 0, %s9, %s7
  // Predicated region
  $region2: #{feature_encoder_forward.35} parent=0 // pred_check
    _
  $region3: #{feature_encoder_forward.35} parent=0 // pred_check_branch
    %12 = sbr.rel (0) target = $region5
  $region4: #{feature_encoder_forward.35} parent=0 // pred_region
    _
  $region5: #{feature_encoder_forward.35} parent=0 // pred_fallthru
    _
  // Predicated region
  $region6: #{feature_encoder_forward.35} parent=0 // pred_check
    _
  $region7: #{feature_encoder_forward.35} parent=0 // pred_check_branch
    %14 = sbr.rel (0) target = $region9
  $region8: #{feature_encoder_forward.35} parent=0 // pred_region
    _
  $region9: #{feature_encoder_forward.35} parent=0 // pred_fallthru
    _
  // Predicated region
  $region10: #{feature_encoder_forward.35} parent=0 // pred_check
    _
  $region11: #{feature_encoder_forward.35} parent=0 // pred_check_branch
    %16 = sbr.rel (0) target = $region13
  $region12: #{feature_encoder_forward.35} parent=0 // pred_region
    _
  $region13: #{feature_encoder_forward.35} parent=0 // pred_fallthru
    _
  // Predicated region
  $region14: #{feature_encoder_forward.35} parent=0 // pred_check
    _
  $region15: #{feature_encoder_forward.35} parent=0 // pred_check_branch
    %18 = sbr.rel (0) target = $region17
  $region16: #{feature_encoder_forward.35} parent=0 // pred_region
    _
  $region17: #{feature_encoder_forward.35} parent=0 // pred_fallthru
    _
  %v20 = vld [vmem:[%s0] sm:$0xff]
  %v21 = vld [vmem:[%s0 + $0x8] sm:$0xff]
  %v22 = vld [vmem:[%s1] sm:$0xf]
  %v23 = vld [vmem:[%s1 + $0x4] sm:$0xf]
  %v24 = vld [vmem:[%s1 + $0x8] sm:$0xf]
  %v25 = vld [vmem:[%s1 + $0xc] sm:$0xf]
  %v26 = vld [vmem:[%s1 + $0x10] sm:$0xf]
  %v27 = vld [vmem:[%s1 + $0x14] sm:$0xf]
  %v28 = vld [vmem:[%s1 + $0x18] sm:$0xf]
  %v29 = vld [vmem:[%s1 + $0x1c] sm:$0xf]
  %v30 = vld [vmem:[%s1 + $0x20] sm:$0xf]
  %v31 = vld [vmem:[%s1 + $0x24] sm:$0xf]
  %v32 = vld [vmem:[%s1 + $0x28] sm:$0xf]
  %v33 = vld [vmem:[%s1 + $0x2c] sm:$0xf]
  %v34 = vld [vmem:[%s1 + $0x30] sm:$0xf]
  %v35 = vld [vmem:[%s1 + $0x34] sm:$0xf]
  %v36 = vld [vmem:[%s1 + $0x38] sm:$0xf]
  %v37 = vld [vmem:[%s1 + $0x3c] sm:$0xf]
  %v38 = vld [vmem:[%s1 + $0x40] sm:$0xf]
  %v39 = vld [vmem:[%s1 + $0x44] sm:$0xf]
  %v42 = vunpack.c.l.b16 %v20
  %v43 = vunpack.c.h.b16 %v20
  %v44 = vunpack.c.l.b16 %v21
  %v45 = vunpack.c.h.b16 %v21
  %v46 = vpack.c.b16 %v44, %v42
  %v47 = vpack.c.b16 %v45, %v43
  %v67 = vunpack.c.l.b16 %v22
  %v68 = vunpack.c.l.b16 %v23
  %v69 = vunpack.c.l.b16 %v24
  %v70 = vunpack.c.l.b16 %v25
  %v71 = vunpack.c.l.b16 %v26
  %v72 = vunpack.c.l.b16 %v27
  %v73 = vunpack.c.l.b16 %v28
  %v74 = vunpack.c.l.b16 %v29
  %v75 = vunpack.c.l.b16 %v30
  %v76 = vunpack.c.l.b16 %v31
  %v77 = vunpack.c.l.b16 %v32
  %v78 = vunpack.c.l.b16 %v33
  %v79 = vunpack.c.l.b16 %v34
  %v80 = vunpack.c.l.b16 %v35
  %v81 = vunpack.c.l.b16 %v36
  %v82 = vunpack.c.l.b16 %v37
  %v83 = vunpack.c.l.b16 %v38
  %v84 = vunpack.c.l.b16 %v39
  %v85 = vpack.c.b16 %v68, %v67
  %v86 = vpack.c.b16 %v70, %v69
  %v87 = vpack.c.b16 %v72, %v71
  %v88 = vpack.c.b16 %v74, %v73
  %v89 = vpack.c.b16 %v76, %v75
  %v90 = vpack.c.b16 %v78, %v77
  %v91 = vpack.c.b16 %v80, %v79
  %v92 = vpack.c.b16 %v82, %v81
  %v93 = vpack.c.b16 %v84, %v83
  %vm103 = vcmask 130048
  %v105 = vsel %vm103, %v47, 0
  %107 = vmatprep.subr.bf16.mxu0 0
  %108 = vmatpush1.bf16.msra.mxu0 %v85
  %109 = vmatprep.subr.bf16.mxu0 0
  %110 = vmatpush1.bf16.msra.mxu0 %v86
  %111 = vmatprep.subr.bf16.mxu0 0
  %112 = vmatpush1.bf16.msra.mxu0 %v87
  %113 = vmatprep.subr.bf16.mxu0 0
  %114 = vmatpush1.bf16.msra.mxu0 %v88
  %115 = vmatprep.subr.bf16.mxu0 0
  %116 = vmatpush1.bf16.msra.mxu0 %v89
  %117 = vmatprep.subr.bf16.mxu0 0
  %118 = vmatpush1.bf16.msra.mxu0 %v90
  %119 = vmatprep.subr.bf16.mxu0 0
  %120 = vmatpush1.bf16.msra.mxu0 %v91
  %121 = vmatprep.subr.bf16.mxu0 0
  %122 = vmatpush1.bf16.msra.mxu0 %v92
  %123 = vmatprep.subr.bf16.mxu0 0
  %124 = vmatpush1.bf16.msra.mxu0 %v93
  %125 = vmatprep.subr.bf16.mxu0 0
  %126 = vmatpush1.bf16.msra.mxu0 0
  %127 = vmatprep.subr.bf16.mxu0 0
  %128 = vmatpush1.bf16.msra.mxu0 0
  %129 = vmatprep.subr.bf16.mxu0 0
  %130 = vmatpush1.bf16.msra.mxu0 0
  %131 = vmatprep.subr.bf16.mxu0 0
  %132 = vmatpush1.bf16.msra.mxu0 0
  %133 = vmatprep.subr.bf16.mxu0 0
  %134 = vmatpush1.bf16.msra.mxu0 0
  %135 = vmatprep.subr.bf16.mxu0 0
  %136 = vmatpush1.bf16.msra.mxu0 0
  %137 = vmatprep.subr.bf16.mxu0 0
  %138 = vmatpush1.bf16.msra.mxu0 0
  %139 = vmatprep.mubr.bf16.mxu0 %v105
  %140 = vmatmul.mubr.bf16.gmra.mrb[0].mxu0 %v46
  %v141 = vpop.f32.mrb[0].mxu0
  %v142 = vadd.f32 0.0, %v141
  %v143 = vpop.f32.mrb[0].mxu0
  %v144 = vpop.f32.mrb[0].mxu0
  %v145 = vadd.f32 0.0, %v144
  %v146 = vpop.f32.mrb[0].mxu0
  %147 = vdwg.mxu0
  %v148 = vpack.c.bf16 %v145, %v142
  %v150 = vunpack.c.l.b16 %v148
  %v151 = vunpack.c.h.b16 %v148
  %v152 = vpack.c.b16 %v150, %v150
  %v153 = vpack.c.b16 %v151, %v151
  %vm156 = vcmask 257024
  %157 = vst.msk [vmem:[%s4] sm:$0xf] %vm156, %v152
  %158 = vst.msk [vmem:[%s4 + $0x4] sm:$0xf] %vm156, %v153
  %v159 = vld [vmem:[%s2] sm:$0x1]
  %v161 = vlaneseq
  %v162 = vshrl.u32 %v161, 7
  %v163 = vsub.s32 0, %v162
  %v164 = vrot.slane %v159, %v163
  %v166 = vmul.f32 %v142, %v164
  %v167 = vmul.f32 %v145, %v164
  %v168 = vld [vmem:[%s3] sm:$0x1]
  %v170 = vlaneseq
  %v171 = vshrl.u32 %v170, 7
  %v172 = vsub.s32 0, %v171
  %v173 = vrot.slane %v168, %v172
  %v175 = vadd.f32 %v166, %v173
  %v176 = vadd.f32 %v167, %v173
  %v177 = vmax.f32 %v175, 0.0
  %v178 = vmax.f32 %v176, 0.0
  %v179 = vpack.c.bf16 %v178, %v177
  %v181 = vunpack.c.l.b16 %v179
  %v182 = vunpack.c.h.b16 %v179
  %v183 = vpack.c.b16 %v181, %v181
  %v184 = vpack.c.b16 %v182, %v182
  %187 = vst.msk [vmem:[%s5] sm:$0xf] %vm156, %v183
  %188 = vst.msk [vmem:[%s5 + $0x4] sm:$0xf] %vm156, %v184
  // Predicated region
  $region18: #{feature_encoder_forward.35} parent=0 // pred_check
    _
  $region19: #{feature_encoder_forward.35} parent=0 // pred_check_branch
    %190 = sbr.rel (0) target = $region21
  $region20: #{feature_encoder_forward.35} parent=0 // pred_region
    _
  $region21: #{feature_encoder_forward.35} parent=0 // pred_fallthru
    _
  // Predicated region
  $region22: #{feature_encoder_forward.35} parent=0 // pred_check
    _
  $region23: #{feature_encoder_forward.35} parent=0 // pred_check_branch
    %192 = sbr.rel (0) target = $region25
  $region24: #{feature_encoder_forward.35} parent=0 // pred_region
    _
  $region25: #{feature_encoder_forward.35} parent=0 // pred_fallthru
    _
  // Predicated region
  $region26: #{feature_encoder_forward.35} parent=0 // pred_check
    _
  $region27: #{feature_encoder_forward.35} parent=0 // pred_check_branch
    %194 = sbr.rel (0) target = $region29
  $region28: #{feature_encoder_forward.35} parent=0 // pred_region
    _
  $region29: #{feature_encoder_forward.35} parent=0 // pred_fallthru
    _
  // Predicated region
  $region30: #{feature_encoder_forward.35} parent=0 // pred_check
    _
  $region31: #{feature_encoder_forward.35} parent=0 // pred_check_branch
    %196 = sbr.rel (0) target = $region33
  $region32: #{feature_encoder_forward.35} parent=0 // pred_region
    _
  $region33: #{feature_encoder_forward.35} parent=0 // pred_fallthru
    _

// kernel: feature_encoder_forward.37
$region0: #{feature_encoder_forward.37}
  #allocation0 [shape = 'u32[]', space=smem, size = 0x4, offset = 0x4, fixed_abs, tag = 'smem constant byte address 0x4 - core index']
  #allocation1 [shape = 'u32[144,128]{1,0:T(1,128)}', space=vmem, size = 0x12000, scoped, tag = 'internal scratch']
  %s0 = inlined_call_operand.vmem [shape: bf16[16,288], index: 0, kind: input, shape index: {}]
  %s1 = inlined_call_operand.vmem [shape: bf16[288,32], index: 1, kind: input, shape index: {}]
  %s2 = inlined_call_operand.vmem [shape: bf16[16,32], index: 2, kind: input, shape index: {}]
  %s3 = inlined_call_operand.vmem [shape: f32[1,32], index: 3, kind: input, shape index: {}]
  %s4 = inlined_call_operand.vmem [shape: f32[1,32], index: 4, kind: input, shape index: {}]
  %s5 = inlined_call_operand.vmem [shape: bf16[16,32], index: 5, kind: output, shape index: {0}]
  %s6 = inlined_call_operand.vmem [shape: bf16[16,32], index: 6, kind: output, shape index: {1}]
  %7 = xla_tuple %s5, %s6
  %s8 = sld [smem:[#allocation0]]
  $region38: #{feature_encoder_forward.37} parent=0
    _
  %s10 = ssub.s32 1, %s8
  %s11 = scalar_select 0, %s10, %s8
  // Predicated region
  $region2: #{feature_encoder_forward.37} parent=0 // pred_check
    _
  $region3: #{feature_encoder_forward.37} parent=0 // pred_check_branch
    %13 = sbr.rel (0) target = $region5
  $region4: #{feature_encoder_forward.37} parent=0 // pred_region
    _
  $region5: #{feature_encoder_forward.37} parent=0 // pred_fallthru
    _
  // Predicated region
  $region6: #{feature_encoder_forward.37} parent=0 // pred_check
    _
  $region7: #{feature_encoder_forward.37} parent=0 // pred_check_branch
    %15 = sbr.rel (0) target = $region9
  $region8: #{feature_encoder_forward.37} parent=0 // pred_region
    _
  $region9: #{feature_encoder_forward.37} parent=0 // pred_fallthru
    _
  // Predicated region
  $region10: #{feature_encoder_forward.37} parent=0 // pred_check
    _
  $region11: #{feature_encoder_forward.37} parent=0 // pred_check_branch
    %17 = sbr.rel (0) target = $region13
  $region12: #{feature_encoder_forward.37} parent=0 // pred_region
    _
  $region13: #{feature_encoder_forward.37} parent=0 // pred_fallthru
    _
  // Predicated region
  $region14: #{feature_encoder_forward.37} parent=0 // pred_check
    _
  $region15: #{feature_encoder_forward.37} parent=0 // pred_check_branch
    %19 = sbr.rel (0) target = $region17
  $region16: #{feature_encoder_forward.37} parent=0 // pred_region
    _
  $region17: #{feature_encoder_forward.37} parent=0 // pred_fallthru
    _
  // Predicated region
  $region18: #{feature_encoder_forward.37} parent=0 // pred_check
    _
  $region19: #{feature_encoder_forward.37} parent=0 // pred_check_branch
    %21 = sbr.rel (0) target = $region21
  $region20: #{feature_encoder_forward.37} parent=0 // pred_region
    _
  $region21: #{feature_encoder_forward.37} parent=0 // pred_fallthru
    _
  %v23 = vld [vmem:[%s0] sm:$0xff]
  %v24 = vld [vmem:[%s0 + $0x8] sm:$0xf]
  %v25 = vld [vmem:[%s0 + $0xc] sm:$0xff]
  %v26 = vld [vmem:[%s0 + $0x14] sm:$0xf]
  %v27 = vld [vmem:[%s1] sm:$0xf]
  %v28 = vld [vmem:[%s1 + $0x4] sm:$0xf]
  %v29 = vld [vmem:[%s1 + $0x8] sm:$0xf]
  %v30 = vld [vmem:[%s1 + $0xc] sm:$0xf]
  %v31 = vld [vmem:[%s1 + $0x10] sm:$0xf]
  %v32 = vld [vmem:[%s1 + $0x14] sm:$0xf]
  %v33 = vld [vmem:[%s1 + $0x18] sm:$0xf]
  %v34 = vld [vmem:[%s1 + $0x1c] sm:$0xf]
  %v35 = vld [vmem:[%s1 + $0x20] sm:$0xf]
  %v36 = vld [vmem:[%s1 + $0x24] sm:$0xf]
  %v37 = vld [vmem:[%s1 + $0x28] sm:$0xf]
  %v38 = vld [vmem:[%s1 + $0x2c] sm:$0xf]
  %v39 = vld [vmem:[%s1 + $0x30] sm:$0xf]
  %v40 = vld [vmem:[%s1 + $0x34] sm:$0xf]
  %v41 = vld [vmem:[%s1 + $0x38] sm:$0xf]
  %v42 = vld [vmem:[%s1 + $0x3c] sm:$0xf]
  %v43 = vld [vmem:[%s1 + $0x40] sm:$0xf]
  %v44 = vld [vmem:[%s1 + $0x44] sm:$0xf]
  %v45 = vld [vmem:[%s1 + $0x48] sm:$0xf]
  %v46 = vld [vmem:[%s1 + $0x4c] sm:$0xf]
  %v47 = vld [vmem:[%s1 + $0x50] sm:$0xf]
  %v48 = vld [vmem:[%s1 + $0x54] sm:$0xf]
  %v49 = vld [vmem:[%s1 + $0x58] sm:$0xf]
  %v50 = vld [vmem:[%s1 + $0x5c] sm:$0xf]
  %v51 = vld [vmem:[%s1 + $0x60] sm:$0xf]
  %v52 = vld [vmem:[%s1 + $0x64] sm:$0xf]
  %v53 = vld [vmem:[%s1 + $0x68] sm:$0xf]
  %v54 = vld [vmem:[%s1 + $0x6c] sm:$0xf]
  %v55 = vld [vmem:[%s1 + $0x70] sm:$0xf]
  %v56 = vld [vmem:[%s1 + $0x74] sm:$0xf]
  %v57 = vld [vmem:[%s1 + $0x78] sm:$0xf]
  %v58 = vld [vmem:[%s1 + $0x7c] sm:$0xf]
  %v59 = vld [vmem:[%s1 + $0x80] sm:$0xf]
  %v60 = vld [vmem:[%s1 + $0x84] sm:$0xf]
  %v61 = vld [vmem:[%s1 + $0x88] sm:$0xf]
  %v62 = vld [vmem:[%s1 + $0x8c] sm:$0xf]
  %v63 = vld [vmem:[%s2] sm:$0xf]
  %v64 = vld [vmem:[%s2 + $0x4] sm:$0xf]
  %v65 = vunpack.c.l.bf16 %v63
  %v66 = vunpack.c.l.bf16 %v64
  %v71 = vunpack.c.l.b16 %v23
  %v72 = vunpack.c.h.b16 %v23
  %v73 = vunpack.c.l.b16 %v24
  %v74 = vunpack.c.l.b16 %v25
  %v75 = vunpack.c.h.b16 %v25
  %v76 = vunpack.c.l.b16 %v26
  %v77 = vpack.c.b16 %v74, %v71
  %v78 = vpack.c.b16 %v75, %v72
  %v79 = vpack.c.b16 %v76, %v73
  %v118 = vunpack.c.l.b16 %v27
  %v119 = vunpack.c.l.b16 %v28
  %v120 = vunpack.c.l.b16 %v29
  %v121 = vunpack.c.l.b16 %v30
  %v122 = vunpack.c.l.b16 %v31
  %v123 = vunpack.c.l.b16 %v32
  %v124 = vunpack.c.l.b16 %v33
  %v125 = vunpack.c.l.b16 %v34
  %v126 = vunpack.c.l.b16 %v35
  %v127 = vunpack.c.l.b16 %v36
  %v128 = vunpack.c.l.b16 %v37
  %v129 = vunpack.c.l.b16 %v38
  %v130 = vunpack.c.l.b16 %v39
  %v131 = vunpack.c.l.b16 %v40
  %v132 = vunpack.c.l.b16 %v41
  %v133 = vunpack.c.l.b16 %v42
  %v134 = vunpack.c.l.b16 %v43
  %v135 = vunpack.c.l.b16 %v44
  %v136 = vunpack.c.l.b16 %v45
  %v137 = vunpack.c.l.b16 %v46
  %v138 = vunpack.c.l.b16 %v47
  %v139 = vunpack.c.l.b16 %v48
  %v140 = vunpack.c.l.b16 %v49
  %v141 = vunpack.c.l.b16 %v50
  %v142 = vunpack.c.l.b16 %v51
  %v143 = vunpack.c.l.b16 %v52
  %v144 = vunpack.c.l.b16 %v53
  %v145 = vunpack.c.l.b16 %v54
  %v146 = vunpack.c.l.b16 %v55
  %v147 = vunpack.c.l.b16 %v56
  %v148 = vunpack.c.l.b16 %v57
  %v149 = vunpack.c.l.b16 %v58
  %v150 = vunpack.c.l.b16 %v59
  %v151 = vunpack.c.l.b16 %v60
  %v152 = vunpack.c.l.b16 %v61
  %v153 = vunpack.c.l.b16 %v62
  %v154 = vpack.c.b16 %v119, %v118
  %v155 = vpack.c.b16 %v121, %v120
  %v156 = vpack.c.b16 %v123, %v122
  %v157 = vpack.c.b16 %v125, %v124
  %v158 = vpack.c.b16 %v127, %v126
  %v159 = vpack.c.b16 %v129, %v128
  %v160 = vpack.c.b16 %v131, %v130
  %v161 = vpack.c.b16 %v133, %v132
  %v162 = vpack.c.b16 %v135, %v134
  %v163 = vpack.c.b16 %v137, %v136
  %v164 = vpack.c.b16 %v139, %v138
  %v165 = vpack.c.b16 %v141, %v140
  %v166 = vpack.c.b16 %v143, %v142
  %v167 = vpack.c.b16 %v145, %v144
  %v168 = vpack.c.b16 %v147, %v146
  %v169 = vpack.c.b16 %v149, %v148
  %v170 = vpack.c.b16 %v151, %v150
  %v171 = vpack.c.b16 %v153, %v152
  %vm190 = vcmask 261120
  %v192 = vsel %vm190, %v79, 0
  %194 = vmatprep.subr.bf16.mxu0 0
  %195 = vmatpush1.bf16.msra.mxu0 %v154
  %196 = vmatprep.subr.bf16.mxu0 0
  %197 = vmatpush1.bf16.msra.mxu0 %v155
  %198 = vmatprep.subr.bf16.mxu0 0
  %199 = vmatpush1.bf16.msra.mxu0 %v156
  %200 = vmatprep.subr.bf16.mxu0 0
  %201 = vmatpush1.bf16.msra.mxu0 %v157
  %202 = vmatprep.subr.bf16.mxu0 0
  %203 = vmatpush1.bf16.msra.mxu0 %v158
  %204 = vmatprep.subr.bf16.mxu0 0
  %205 = vmatpush1.bf16.msra.mxu0 %v159
  %206 = vmatprep.subr.bf16.mxu0 0
  %207 = vmatpush1.bf16.msra.mxu0 %v160
  %208 = vmatprep.subr.bf16.mxu0 0
  %209 = vmatpush1.bf16.msra.mxu0 %v161
  %210 = vmatprep.subr.bf16.mxu0 0
  %211 = vmatpush1.bf16.msra.mxu0 %v162
  %212 = vmatprep.subr.bf16.mxu0 0
  %213 = vmatpush1.bf16.msra.mxu0 %v163
  %214 = vmatprep.subr.bf16.mxu0 0
  %215 = vmatpush1.bf16.msra.mxu0 %v164
  %216 = vmatprep.subr.bf16.mxu0 0
  %217 = vmatpush1.bf16.msra.mxu0 %v165
  %218 = vmatprep.subr.bf16.mxu0 0
  %219 = vmatpush1.bf16.msra.mxu0 %v166
  %220 = vmatprep.subr.bf16.mxu0 0
  %221 = vmatpush1.bf16.msra.mxu0 %v167
  %222 = vmatprep.subr.bf16.mxu0 0
  %223 = vmatpush1.bf16.msra.mxu0 %v168
  %224 = vmatprep.subr.bf16.mxu0 0
  %225 = vmatpush1.bf16.msra.mxu0 %v169
  %226 = vmatprep.mubr.bf16.mxu0 %v78
  %227 = vmatmul.mubr.bf16.gmra.mrb[0].mxu0 %v77
  %v228 = vpop.f32.mrb[0].mxu0
  %v229 = vadd.f32 %v65, %v228
  %v230 = vpop.f32.mrb[0].mxu0
  %v231 = vpop.f32.mrb[0].mxu0
  %v232 = vadd.f32 %v66, %v231
  %v233 = vpop.f32.mrb[0].mxu0
  %234 = vdwg.mxu0
  %235 = vmatprep.subr.bf16.mxu0 0
  %236 = vmatpush1.bf16.msra.mxu0 %v170
  %237 = vmatprep.subr.bf16.mxu0 0
  %238 = vmatpush1.bf16.msra.mxu0 %v171
  %239 = vmatprep.subr.bf16.mxu0 0
  %240 = vmatpush1.bf16.msra.mxu0 0
  %241 = vmatprep.subr.bf16.mxu0 0
  %242 = vmatpush1.bf16.msra.mxu0 0
  %243 = vmatprep.subr.bf16.mxu0 0
  %244 = vmatpush1.bf16.msra.mxu0 0
  %245 = vmatprep.subr.bf16.mxu0 0
  %246 = vmatpush1.bf16.msra.mxu0 0
  %247 = vmatprep.subr.bf16.mxu0 0
  %248 = vmatpush1.bf16.msra.mxu0 0
  %249 = vmatprep.subr.bf16.mxu0 0
  %250 = vmatpush1.bf16.msra.mxu0 0
  %251 = vmatprep.subr.bf16.mxu0 0
  %252 = vmatpush1.bf16.msra.mxu0 0
  %253 = vmatprep.subr.bf16.mxu0 0
  %254 = vmatpush1.bf16.msra.mxu0 0
  %255 = vmatprep.subr.bf16.mxu0 0
  %256 = vmatpush1.bf16.msra.mxu0 0
  %257 = vmatprep.subr.bf16.mxu0 0
  %258 = vmatpush1.bf16.msra.mxu0 0
  %259 = vmatprep.subr.bf16.mxu0 0
  %260 = vmatpush1.bf16.msra.mxu0 0
  %261 = vmatprep.subr.bf16.mxu0 0
  %262 = vmatpush1.bf16.msra.mxu0 0
  %263 = vmatprep.subr.bf16.mxu0 0
  %264 = vmatpush1.bf16.msra.mxu0 0
  %265 = vmatprep.subr.bf16.mxu0 0
  %266 = vmatpush1.bf16.msra.mxu0 0
  %267 = vmatprep.mubr.bf16.mxu0 0
  %268 = vmatmul.mubr.bf16.gmra.mrb[0].mxu0 %v192
  %v269 = vpop.f32.mrb[0].mxu0
  %v270 = vadd.f32 %v229, %v269
  %v271 = vpop.f32.mrb[0].mxu0
  %v272 = vpop.f32.mrb[0].mxu0
  %v273 = vadd.f32 %v232, %v272
  %v274 = vpop.f32.mrb[0].mxu0
  %275 = vdwg.mxu0
  %v276 = vpack.c.bf16 %v273, %v270
  %v278 = vunpack.c.l.b16 %v276
  %v279 = vunpack.c.h.b16 %v276
  %v280 = vpack.c.b16 %v278, %v278
  %v281 = vpack.c.b16 %v279, %v279
  %vm284 = vcmask 257024
  %285 = vst.msk [vmem:[%s5] sm:$0xf] %vm284, %v280
  %286 = vst.msk [vmem:[%s5 + $0x4] sm:$0xf] %vm284, %v281
  %v287 = vld [vmem:[%s3] sm:$0x1]
  %v289 = vlaneseq
  %v290 = vshrl.u32 %v289, 7
  %v291 = vsub.s32 0, %v290
  %v292 = vrot.slane %v287, %v291
  %v294 = vmul.f32 %v270, %v292
  %v295 = vmul.f32 %v273, %v292
  %v296 = vld [vmem:[%s4] sm:$0x1]
  %v298 = vlaneseq
  %v299 = vshrl.u32 %v298, 7
  %v300 = vsub.s32 0, %v299
  %v301 = vrot.slane %v296, %v300
  %v303 = vadd.f32 %v294, %v301
  %v304 = vadd.f32 %v295, %v301
  %v305 = vmax.f32 %v303, 0.0
  %v306 = vmax.f32 %v304, 0.0
  %v307 = vpack.c.bf16 %v306, %v305
  %v309 = vunpack.c.l.b16 %v307
  %v310 = vunpack.c.h.b16 %v307
  %v311 = vpack.c.b16 %v309, %v309
  %v312 = vpack.c.b16 %v310, %v310
  %315 = vst.msk [vmem:[%s6] sm:$0xf] %vm284, %v311
  %316 = vst.msk [vmem:[%s6 + $0x4] sm:$0xf] %vm284, %v312
  // Predicated region
  $region22: #{feature_encoder_forward.37} parent=0 // pred_check
    _
  $region23: #{feature_encoder_forward.37} parent=0 // pred_check_branch
    %318 = sbr.rel (0) target = $region25
  $region24: #{feature_encoder_forward.37} parent=0 // pred_region
    _
  $region25: #{feature_encoder_forward.37} parent=0 // pred_fallthru
    _
  // Predicated region
  $region26: #{feature_encoder_forward.37} parent=0 // pred_check
    _
  $region27: #{feature_encoder_forward.37} parent=0 // pred_check_branch
    %320 = sbr.rel (0) target = $region29
  $region28: #{feature_encoder_forward.37} parent=0 // pred_region
    _
  $region29: #{feature_encoder_forward.37} parent=0 // pred_fallthru
    _
  // Predicated region
  $region30: #{feature_encoder_forward.37} parent=0 // pred_check
    _
  $region31: #{feature_encoder_forward.37} parent=0 // pred_check_branch
    %322 = sbr.rel (0) target = $region33
  $region32: #{feature_encoder_forward.37} parent=0 // pred_region
    _
  $region33: #{feature_encoder_forward.37} parent=0 // pred_fallthru
    _
  // Predicated region
  $region34: #{feature_encoder_forward.37} parent=0 // pred_check
    _
  $region35: #{feature_encoder_forward.37} parent=0 // pred_check_branch
    %324 = sbr.rel (0) target = $region37
  $region36: #{feature_encoder_forward.37} parent=0 // pred_region
    _
  $region37: #{feature_encoder_forward.37} parent=0 // pred_fallthru
    _

// kernel: feature_encoder_forward.36
$region0: #{feature_encoder_forward.36}
  #allocation0 [shape = 'u32[]', space=smem, size = 0x4, offset = 0x4, fixed_abs, tag = 'smem constant byte address 0x4 - core index']
  #allocation1 [shape = 'u32[144,128]{1,0:T(1,128)}', space=vmem, size = 0x12000, scoped, tag = 'internal scratch']
  %s0 = inlined_call_operand.vmem [shape: bf16[16,288], index: 0, kind: input, shape index: {}]
  %s1 = inlined_call_operand.vmem [shape: bf16[288,32], index: 1, kind: input, shape index: {}]
  %s2 = inlined_call_operand.vmem [shape: f32[1,32], index: 2, kind: input, shape index: {}]
  %s3 = inlined_call_operand.vmem [shape: f32[1,32], index: 3, kind: input, shape index: {}]
  %s4 = inlined_call_operand.vmem [shape: bf16[16,32], index: 4, kind: output, shape index: {}]
  %s5 = sld [smem:[#allocation0]]
  $region26: #{feature_encoder_forward.36} parent=0
    _
  %s7 = ssub.s32 1, %s5
  %s8 = scalar_select 0, %s7, %s5
  // Predicated region
  $region2: #{feature_encoder_forward.36} parent=0 // pred_check
    _
  $region3: #{feature_encoder_forward.36} parent=0 // pred_check_branch
    %10 = sbr.rel (0) target = $region5
  $region4: #{feature_encoder_forward.36} parent=0 // pred_region
    _
  $region5: #{feature_encoder_forward.36} parent=0 // pred_fallthru
    _
  // Predicated region
  $region6: #{feature_encoder_forward.36} parent=0 // pred_check
    _
  $region7: #{feature_encoder_forward.36} parent=0 // pred_check_branch
    %12 = sbr.rel (0) target = $region9
  $region8: #{feature_encoder_forward.36} parent=0 // pred_region
    _
  $region9: #{feature_encoder_forward.36} parent=0 // pred_fallthru
    _
  // Predicated region
  $region10: #{feature_encoder_forward.36} parent=0 // pred_check
    _
  $region11: #{feature_encoder_forward.36} parent=0 // pred_check_branch
    %14 = sbr.rel (0) target = $region13
  $region12: #{feature_encoder_forward.36} parent=0 // pred_region
    _
  $region13: #{feature_encoder_forward.36} parent=0 // pred_fallthru
    _
  // Predicated region
  $region14: #{feature_encoder_forward.36} parent=0 // pred_check
    _
  $region15: #{feature_encoder_forward.36} parent=0 // pred_check_branch
    %16 = sbr.rel (0) target = $region17
  $region16: #{feature_encoder_forward.36} parent=0 // pred_region
    _
  $region17: #{feature_encoder_forward.36} parent=0 // pred_fallthru
    _
  %v18 = vld [vmem:[%s0] sm:$0xff]
  %v19 = vld [vmem:[%s0 + $0x8] sm:$0xf]
  %v20 = vld [vmem:[%s0 + $0xc] sm:$0xff]
  %v21 = vld [vmem:[%s0 + $0x14] sm:$0xf]
  %v22 = vld [vmem:[%s1] sm:$0xf]
  %v23 = vld [vmem:[%s1 + $0x4] sm:$0xf]
  %v24 = vld [vmem:[%s1 + $0x8] sm:$0xf]
  %v25 = vld [vmem:[%s1 + $0xc] sm:$0xf]
  %v26 = vld [vmem:[%s1 + $0x10] sm:$0xf]
  %v27 = vld [vmem:[%s1 + $0x14] sm:$0xf]
  %v28 = vld [vmem:[%s1 + $0x18] sm:$0xf]
  %v29 = vld [vmem:[%s1 + $0x1c] sm:$0xf]
  %v30 = vld [vmem:[%s1 + $0x20] sm:$0xf]
  %v31 = vld [vmem:[%s1 + $0x24] sm:$0xf]
  %v32 = vld [vmem:[%s1 + $0x28] sm:$0xf]
  %v33 = vld [vmem:[%s1 + $0x2c] sm:$0xf]
  %v34 = vld [vmem:[%s1 + $0x30] sm:$0xf]
  %v35 = vld [vmem:[%s1 + $0x34] sm:$0xf]
  %v36 = vld [vmem:[%s1 + $0x38] sm:$0xf]
  %v37 = vld [vmem:[%s1 + $0x3c] sm:$0xf]
  %v38 = vld [vmem:[%s1 + $0x40] sm:$0xf]
  %v39 = vld [vmem:[%s1 + $0x44] sm:$0xf]
  %v40 = vld [vmem:[%s1 + $0x48] sm:$0xf]
  %v41 = vld [vmem:[%s1 + $0x4c] sm:$0xf]
  %v42 = vld [vmem:[%s1 + $0x50] sm:$0xf]
  %v43 = vld [vmem:[%s1 + $0x54] sm:$0xf]
  %v44 = vld [vmem:[%s1 + $0x58] sm:$0xf]
  %v45 = vld [vmem:[%s1 + $0x5c] sm:$0xf]
  %v46 = vld [vmem:[%s1 + $0x60] sm:$0xf]
  %v47 = vld [vmem:[%s1 + $0x64] sm:$0xf]
  %v48 = vld [vmem:[%s1 + $0x68] sm:$0xf]
  %v49 = vld [vmem:[%s1 + $0x6c] sm:$0xf]
  %v50 = vld [vmem:[%s1 + $0x70] sm:$0xf]
  %v51 = vld [vmem:[%s1 + $0x74] sm:$0xf]
  %v52 = vld [vmem:[%s1 + $0x78] sm:$0xf]
  %v53 = vld [vmem:[%s1 + $0x7c] sm:$0xf]
  %v54 = vld [vmem:[%s1 + $0x80] sm:$0xf]
  %v55 = vld [vmem:[%s1 + $0x84] sm:$0xf]
  %v56 = vld [vmem:[%s1 + $0x88] sm:$0xf]
  %v57 = vld [vmem:[%s1 + $0x8c] sm:$0xf]
  %v62 = vunpack.c.l.b16 %v18
  %v63 = vunpack.c.h.b16 %v18
  %v64 = vunpack.c.l.b16 %v19
  %v65 = vunpack.c.l.b16 %v20
  %v66 = vunpack.c.h.b16 %v20
  %v67 = vunpack.c.l.b16 %v21
  %v68 = vpack.c.b16 %v65, %v62
  %v69 = vpack.c.b16 %v66, %v63
  %v70 = vpack.c.b16 %v67, %v64
  %v109 = vunpack.c.l.b16 %v22
  %v110 = vunpack.c.l.b16 %v23
  %v111 = vunpack.c.l.b16 %v24
  %v112 = vunpack.c.l.b16 %v25
  %v113 = vunpack.c.l.b16 %v26
  %v114 = vunpack.c.l.b16 %v27
  %v115 = vunpack.c.l.b16 %v28
  %v116 = vunpack.c.l.b16 %v29
  %v117 = vunpack.c.l.b16 %v30
  %v118 = vunpack.c.l.b16 %v31
  %v119 = vunpack.c.l.b16 %v32
  %v120 = vunpack.c.l.b16 %v33
  %v121 = vunpack.c.l.b16 %v34
  %v122 = vunpack.c.l.b16 %v35
  %v123 = vunpack.c.l.b16 %v36
  %v124 = vunpack.c.l.b16 %v37
  %v125 = vunpack.c.l.b16 %v38
  %v126 = vunpack.c.l.b16 %v39
  %v127 = vunpack.c.l.b16 %v40
  %v128 = vunpack.c.l.b16 %v41
  %v129 = vunpack.c.l.b16 %v42
  %v130 = vunpack.c.l.b16 %v43
  %v131 = vunpack.c.l.b16 %v44
  %v132 = vunpack.c.l.b16 %v45
  %v133 = vunpack.c.l.b16 %v46
  %v134 = vunpack.c.l.b16 %v47
  %v135 = vunpack.c.l.b16 %v48
  %v136 = vunpack.c.l.b16 %v49
  %v137 = vunpack.c.l.b16 %v50
  %v138 = vunpack.c.l.b16 %v51
  %v139 = vunpack.c.l.b16 %v52
  %v140 = vunpack.c.l.b16 %v53
  %v141 = vunpack.c.l.b16 %v54
  %v142 = vunpack.c.l.b16 %v55
  %v143 = vunpack.c.l.b16 %v56
  %v144 = vunpack.c.l.b16 %v57
  %v145 = vpack.c.b16 %v110, %v109
  %v146 = vpack.c.b16 %v112, %v111
  %v147 = vpack.c.b16 %v114, %v113
  %v148 = vpack.c.b16 %v116, %v115
  %v149 = vpack.c.b16 %v118, %v117
  %v150 = vpack.c.b16 %v120, %v119
  %v151 = vpack.c.b16 %v122, %v121
  %v152 = vpack.c.b16 %v124, %v123
  %v153 = vpack.c.b16 %v126, %v125
  %v154 = vpack.c.b16 %v128, %v127
  %v155 = vpack.c.b16 %v130, %v129
  %v156 = vpack.c.b16 %v132, %v131
  %v157 = vpack.c.b16 %v134, %v133
  %v158 = vpack.c.b16 %v136, %v135
  %v159 = vpack.c.b16 %v138, %v137
  %v160 = vpack.c.b16 %v140, %v139
  %v161 = vpack.c.b16 %v142, %v141
  %v162 = vpack.c.b16 %v144, %v143
  %vm181 = vcmask 261120
  %v183 = vsel %vm181, %v70, 0
  %185 = vmatprep.subr.bf16.mxu0 0
  %186 = vmatpush1.bf16.msra.mxu0 %v145
  %187 = vmatprep.subr.bf16.mxu0 0
  %188 = vmatpush1.bf16.msra.mxu0 %v146
  %189 = vmatprep.subr.bf16.mxu0 0
  %190 = vmatpush1.bf16.msra.mxu0 %v147
  %191 = vmatprep.subr.bf16.mxu0 0
  %192 = vmatpush1.bf16.msra.mxu0 %v148
  %193 = vmatprep.subr.bf16.mxu0 0
  %194 = vmatpush1.bf16.msra.mxu0 %v149
  %195 = vmatprep.subr.bf16.mxu0 0
  %196 = vmatpush1.bf16.msra.mxu0 %v150
  %197 = vmatprep.subr.bf16.mxu0 0
  %198 = vmatpush1.bf16.msra.mxu0 %v151
  %199 = vmatprep.subr.bf16.mxu0 0
  %200 = vmatpush1.bf16.msra.mxu0 %v152
  %201 = vmatprep.subr.bf16.mxu0 0
  %202 = vmatpush1.bf16.msra.mxu0 %v153
  %203 = vmatprep.subr.bf16.mxu0 0
  %204 = vmatpush1.bf16.msra.mxu0 %v154
  %205 = vmatprep.subr.bf16.mxu0 0
  %206 = vmatpush1.bf16.msra.mxu0 %v155
  %207 = vmatprep.subr.bf16.mxu0 0
  %208 = vmatpush1.bf16.msra.mxu0 %v156
  %209 = vmatprep.subr.bf16.mxu0 0
  %210 = vmatpush1.bf16.msra.mxu0 %v157
  %211 = vmatprep.subr.bf16.mxu0 0
  %212 = vmatpush1.bf16.msra.mxu0 %v158
  %213 = vmatprep.subr.bf16.mxu0 0
  %214 = vmatpush1.bf16.msra.mxu0 %v159
  %215 = vmatprep.subr.bf16.mxu0 0
  %216 = vmatpush1.bf16.msra.mxu0 %v160
  %217 = vmatprep.mubr.bf16.mxu0 %v69
  %218 = vmatmul.mubr.bf16.gmra.mrb[0].mxu0 %v68
  %v219 = vpop.f32.mrb[0].mxu0
  %v220 = vadd.f32 0.0, %v219
  %v221 = vpop.f32.mrb[0].mxu0
  %v222 = vpop.f32.mrb[0].mxu0
  %v223 = vadd.f32 0.0, %v222
  %v224 = vpop.f32.mrb[0].mxu0
  %225 = vdwg.mxu0
  %226 = vmatprep.subr.bf16.mxu0 0
  %227 = vmatpush1.bf16.msra.mxu0 %v161
  %228 = vmatprep.subr.bf16.mxu0 0
  %229 = vmatpush1.bf16.msra.mxu0 %v162
  %230 = vmatprep.subr.bf16.mxu0 0
  %231 = vmatpush1.bf16.msra.mxu0 0
  %232 = vmatprep.subr.bf16.mxu0 0
  %233 = vmatpush1.bf16.msra.mxu0 0
  %234 = vmatprep.subr.bf16.mxu0 0
  %235 = vmatpush1.bf16.msra.mxu0 0
  %236 = vmatprep.subr.bf16.mxu0 0
  %237 = vmatpush1.bf16.msra.mxu0 0
  %238 = vmatprep.subr.bf16.mxu0 0
  %239 = vmatpush1.bf16.msra.mxu0 0
  %240 = vmatprep.subr.bf16.mxu0 0
  %241 = vmatpush1.bf16.msra.mxu0 0
  %242 = vmatprep.subr.bf16.mxu0 0
  %243 = vmatpush1.bf16.msra.mxu0 0
  %244 = vmatprep.subr.bf16.mxu0 0
  %245 = vmatpush1.bf16.msra.mxu0 0
  %246 = vmatprep.subr.bf16.mxu0 0
  %247 = vmatpush1.bf16.msra.mxu0 0
  %248 = vmatprep.subr.bf16.mxu0 0
  %249 = vmatpush1.bf16.msra.mxu0 0
  %250 = vmatprep.subr.bf16.mxu0 0
  %251 = vmatpush1.bf16.msra.mxu0 0
  %252 = vmatprep.subr.bf16.mxu0 0
  %253 = vmatpush1.bf16.msra.mxu0 0
  %254 = vmatprep.subr.bf16.mxu0 0
  %255 = vmatpush1.bf16.msra.mxu0 0
  %256 = vmatprep.subr.bf16.mxu0 0
  %257 = vmatpush1.bf16.msra.mxu0 0
  %258 = vmatprep.mubr.bf16.mxu0 0
  %259 = vmatmul.mubr.bf16.gmra.mrb[0].mxu0 %v183
  %v260 = vpop.f32.mrb[0].mxu0
  %v261 = vadd.f32 %v220, %v260
  %v262 = vpop.f32.mrb[0].mxu0
  %v263 = vpop.f32.mrb[0].mxu0
  %v264 = vadd.f32 %v223, %v263
  %v265 = vpop.f32.mrb[0].mxu0
  %266 = vdwg.mxu0
  %v267 = vld [vmem:[%s2] sm:$0x1]
  %v269 = vlaneseq
  %v270 = vshrl.u32 %v269, 7
  %v271 = vsub.s32 0, %v270
  %v272 = vrot.slane %v267, %v271
  %v274 = vmul.f32 %v261, %v272
  %v275 = vmul.f32 %v264, %v272
  %v276 = vld [vmem:[%s3] sm:$0x1]
  %v278 = vlaneseq
  %v279 = vshrl.u32 %v278, 7
  %v280 = vsub.s32 0, %v279
  %v281 = vrot.slane %v276, %v280
  %v283 = vadd.f32 %v274, %v281
  %v284 = vadd.f32 %v275, %v281
  %v285 = vmax.f32 %v283, 0.0
  %v286 = vmax.f32 %v284, 0.0
  %v287 = vpack.c.bf16 %v286, %v285
  %v289 = vunpack.c.l.b16 %v287
  %v290 = vunpack.c.h.b16 %v287
  %v291 = vpack.c.b16 %v289, %v289
  %v292 = vpack.c.b16 %v290, %v290
  %vm295 = vcmask 257024
  %296 = vst.msk [vmem:[%s4] sm:$0xf] %vm295, %v291
  %297 = vst.msk [vmem:[%s4 + $0x4] sm:$0xf] %vm295, %v292
  // Predicated region
  $region18: #{feature_encoder_forward.36} parent=0 // pred_check
    _
  $region19: #{feature_encoder_forward.36} parent=0 // pred_check_branch
    %299 = sbr.rel (0) target = $region21
  $region20: #{feature_encoder_forward.36} parent=0 // pred_region
    _
  $region21: #{feature_encoder_forward.36} parent=0 // pred_fallthru
    _
  // Predicated region
  $region22: #{feature_encoder_forward.36} parent=0 // pred_check
    _
  $region23: #{feature_encoder_forward.36} parent=0 // pred_check_branch
    %301 = sbr.rel (0) target = $region25
  $region24: #{feature_encoder_forward.36} parent=0 // pred_region
    _
  $region25: #{feature_encoder_forward.36} parent=0 // pred_fallthru
    _

// kernel: feature_encoder_forward.39
$region0: #{feature_encoder_forward.39}
  #allocation0 [shape = 'u32[]', space=smem, size = 0x4, offset = 0x4, fixed_abs, tag = 'smem constant byte address 0x4 - core index']
  #allocation1 [shape = 'u32[144,128]{1,0:T(1,128)}', space=vmem, size = 0x12000, scoped, tag = 'internal scratch']
  %s0 = inlined_call_operand.vmem [shape: bf16[16,288], index: 0, kind: input, shape index: {}]
  %s1 = inlined_call_operand.vmem [shape: bf16[288,32], index: 1, kind: input, shape index: {}]
  %s2 = inlined_call_operand.vmem [shape: bf16[16,32], index: 2, kind: input, shape index: {}]
  %s3 = inlined_call_operand.vmem [shape: f32[1,32], index: 3, kind: input, shape index: {}]
  %s4 = inlined_call_operand.vmem [shape: f32[1,32], index: 4, kind: input, shape index: {}]
  %s5 = inlined_call_operand.vmem [shape: f32[16,32], index: 5, kind: output, shape index: {0}]
  %s6 = inlined_call_operand.vmem [shape: bf16[16,32], index: 6, kind: output, shape index: {1}]
  %7 = xla_tuple %s5, %s6
  %s8 = sld [smem:[#allocation0]]
  $region38: #{feature_encoder_forward.39} parent=0
    _
  %s10 = ssub.s32 1, %s8
  %s11 = scalar_select 0, %s10, %s8
  // Predicated region
  $region2: #{feature_encoder_forward.39} parent=0 // pred_check
    _
  $region3: #{feature_encoder_forward.39} parent=0 // pred_check_branch
    %13 = sbr.rel (0) target = $region5
  $region4: #{feature_encoder_forward.39} parent=0 // pred_region
    _
  $region5: #{feature_encoder_forward.39} parent=0 // pred_fallthru
    _
  // Predicated region
  $region6: #{feature_encoder_forward.39} parent=0 // pred_check
    _
  $region7: #{feature_encoder_forward.39} parent=0 // pred_check_branch
    %15 = sbr.rel (0) target = $region9
  $region8: #{feature_encoder_forward.39} parent=0 // pred_region
    _
  $region9: #{feature_encoder_forward.39} parent=0 // pred_fallthru
    _
  // Predicated region
  $region10: #{feature_encoder_forward.39} parent=0 // pred_check
    _
  $region11: #{feature_encoder_forward.39} parent=0 // pred_check_branch
    %17 = sbr.rel (0) target = $region13
  $region12: #{feature_encoder_forward.39} parent=0 // pred_region
    _
  $region13: #{feature_encoder_forward.39} parent=0 // pred_fallthru
    _
  // Predicated region
  $region14: #{feature_encoder_forward.39} parent=0 // pred_check
    _
  $region15: #{feature_encoder_forward.39} parent=0 // pred_check_branch
    %19 = sbr.rel (0) target = $region17
  $region16: #{feature_encoder_forward.39} parent=0 // pred_region
    _
  $region17: #{feature_encoder_forward.39} parent=0 // pred_fallthru
    _
  // Predicated region
  $region18: #{feature_encoder_forward.39} parent=0 // pred_check
    _
  $region19: #{feature_encoder_forward.39} parent=0 // pred_check_branch
    %21 = sbr.rel (0) target = $region21
  $region20: #{feature_encoder_forward.39} parent=0 // pred_region
    _
  $region21: #{feature_encoder_forward.39} parent=0 // pred_fallthru
    _
  %v23 = vld [vmem:[%s0] sm:$0xff]
  %v24 = vld [vmem:[%s0 + $0x8] sm:$0xf]
  %v25 = vld [vmem:[%s0 + $0xc] sm:$0xff]
  %v26 = vld [vmem:[%s0 + $0x14] sm:$0xf]
  %v27 = vld [vmem:[%s1] sm:$0xf]
  %v28 = vld [vmem:[%s1 + $0x4] sm:$0xf]
  %v29 = vld [vmem:[%s1 + $0x8] sm:$0xf]
  %v30 = vld [vmem:[%s1 + $0xc] sm:$0xf]
  %v31 = vld [vmem:[%s1 + $0x10] sm:$0xf]
  %v32 = vld [vmem:[%s1 + $0x14] sm:$0xf]
  %v33 = vld [vmem:[%s1 + $0x18] sm:$0xf]
  %v34 = vld [vmem:[%s1 + $0x1c] sm:$0xf]
  %v35 = vld [vmem:[%s1 + $0x20] sm:$0xf]
  %v36 = vld [vmem:[%s1 + $0x24] sm:$0xf]
  %v37 = vld [vmem:[%s1 + $0x28] sm:$0xf]
  %v38 = vld [vmem:[%s1 + $0x2c] sm:$0xf]
  %v39 = vld [vmem:[%s1 + $0x30] sm:$0xf]
  %v40 = vld [vmem:[%s1 + $0x34] sm:$0xf]
  %v41 = vld [vmem:[%s1 + $0x38] sm:$0xf]
  %v42 = vld [vmem:[%s1 + $0x3c] sm:$0xf]
  %v43 = vld [vmem:[%s1 + $0x40] sm:$0xf]
  %v44 = vld [vmem:[%s1 + $0x44] sm:$0xf]
  %v45 = vld [vmem:[%s1 + $0x48] sm:$0xf]
  %v46 = vld [vmem:[%s1 + $0x4c] sm:$0xf]
  %v47 = vld [vmem:[%s1 + $0x50] sm:$0xf]
  %v48 = vld [vmem:[%s1 + $0x54] sm:$0xf]
  %v49 = vld [vmem:[%s1 + $0x58] sm:$0xf]
  %v50 = vld [vmem:[%s1 + $0x5c] sm:$0xf]
  %v51 = vld [vmem:[%s1 + $0x60] sm:$0xf]
  %v52 = vld [vmem:[%s1 + $0x64] sm:$0xf]
  %v53 = vld [vmem:[%s1 + $0x68] sm:$0xf]
  %v54 = vld [vmem:[%s1 + $0x6c] sm:$0xf]
  %v55 = vld [vmem:[%s1 + $0x70] sm:$0xf]
  %v56 = vld [vmem:[%s1 + $0x74] sm:$0xf]
  %v57 = vld [vmem:[%s1 + $0x78] sm:$0xf]
  %v58 = vld [vmem:[%s1 + $0x7c] sm:$0xf]
  %v59 = vld [vmem:[%s1 + $0x80] sm:$0xf]
  %v60 = vld [vmem:[%s1 + $0x84] sm:$0xf]
  %v61 = vld [vmem:[%s1 + $0x88] sm:$0xf]
  %v62 = vld [vmem:[%s1 + $0x8c] sm:$0xf]
  %v63 = vld [vmem:[%s2] sm:$0xf]
  %v64 = vld [vmem:[%s2 + $0x4] sm:$0xf]
  %v65 = vunpack.c.l.bf16 %v63
  %v66 = vunpack.c.l.bf16 %v64
  %v71 = vunpack.c.l.b16 %v23
  %v72 = vunpack.c.h.b16 %v23
  %v73 = vunpack.c.l.b16 %v24
  %v74 = vunpack.c.l.b16 %v25
  %v75 = vunpack.c.h.b16 %v25
  %v76 = vunpack.c.l.b16 %v26
  %v77 = vpack.c.b16 %v74, %v71
  %v78 = vpack.c.b16 %v75, %v72
  %v79 = vpack.c.b16 %v76, %v73
  %v118 = vunpack.c.l.b16 %v27
  %v119 = vunpack.c.l.b16 %v28
  %v120 = vunpack.c.l.b16 %v29
  %v121 = vunpack.c.l.b16 %v30
  %v122 = vunpack.c.l.b16 %v31
  %v123 = vunpack.c.l.b16 %v32
  %v124 = vunpack.c.l.b16 %v33
  %v125 = vunpack.c.l.b16 %v34
  %v126 = vunpack.c.l.b16 %v35
  %v127 = vunpack.c.l.b16 %v36
  %v128 = vunpack.c.l.b16 %v37
  %v129 = vunpack.c.l.b16 %v38
  %v130 = vunpack.c.l.b16 %v39
  %v131 = vunpack.c.l.b16 %v40
  %v132 = vunpack.c.l.b16 %v41
  %v133 = vunpack.c.l.b16 %v42
  %v134 = vunpack.c.l.b16 %v43
  %v135 = vunpack.c.l.b16 %v44
  %v136 = vunpack.c.l.b16 %v45
  %v137 = vunpack.c.l.b16 %v46
  %v138 = vunpack.c.l.b16 %v47
  %v139 = vunpack.c.l.b16 %v48
  %v140 = vunpack.c.l.b16 %v49
  %v141 = vunpack.c.l.b16 %v50
  %v142 = vunpack.c.l.b16 %v51
  %v143 = vunpack.c.l.b16 %v52
  %v144 = vunpack.c.l.b16 %v53
  %v145 = vunpack.c.l.b16 %v54
  %v146 = vunpack.c.l.b16 %v55
  %v147 = vunpack.c.l.b16 %v56
  %v148 = vunpack.c.l.b16 %v57
  %v149 = vunpack.c.l.b16 %v58
  %v150 = vunpack.c.l.b16 %v59
  %v151 = vunpack.c.l.b16 %v60
  %v152 = vunpack.c.l.b16 %v61
  %v153 = vunpack.c.l.b16 %v62
  %v154 = vpack.c.b16 %v119, %v118
  %v155 = vpack.c.b16 %v121, %v120
  %v156 = vpack.c.b16 %v123, %v122
  %v157 = vpack.c.b16 %v125, %v124
  %v158 = vpack.c.b16 %v127, %v126
  %v159 = vpack.c.b16 %v129, %v128
  %v160 = vpack.c.b16 %v131, %v130
  %v161 = vpack.c.b16 %v133, %v132
  %v162 = vpack.c.b16 %v135, %v134
  %v163 = vpack.c.b16 %v137, %v136
  %v164 = vpack.c.b16 %v139, %v138
  %v165 = vpack.c.b16 %v141, %v140
  %v166 = vpack.c.b16 %v143, %v142
  %v167 = vpack.c.b16 %v145, %v144
  %v168 = vpack.c.b16 %v147, %v146
  %v169 = vpack.c.b16 %v149, %v148
  %v170 = vpack.c.b16 %v151, %v150
  %v171 = vpack.c.b16 %v153, %v152
  %vm190 = vcmask 261120
  %v192 = vsel %vm190, %v79, 0
  %194 = vmatprep.subr.bf16.mxu0 0
  %195 = vmatpush1.bf16.msra.mxu0 %v154
  %196 = vmatprep.subr.bf16.mxu0 0
  %197 = vmatpush1.bf16.msra.mxu0 %v155
  %198 = vmatprep.subr.bf16.mxu0 0
  %199 = vmatpush1.bf16.msra.mxu0 %v156
  %200 = vmatprep.subr.bf16.mxu0 0
  %201 = vmatpush1.bf16.msra.mxu0 %v157
  %202 = vmatprep.subr.bf16.mxu0 0
  %203 = vmatpush1.bf16.msra.mxu0 %v158
  %204 = vmatprep.subr.bf16.mxu0 0
  %205 = vmatpush1.bf16.msra.mxu0 %v159
  %206 = vmatprep.subr.bf16.mxu0 0
  %207 = vmatpush1.bf16.msra.mxu0 %v160
  %208 = vmatprep.subr.bf16.mxu0 0
  %209 = vmatpush1.bf16.msra.mxu0 %v161
  %210 = vmatprep.subr.bf16.mxu0 0
  %211 = vmatpush1.bf16.msra.mxu0 %v162
  %212 = vmatprep.subr.bf16.mxu0 0
  %213 = vmatpush1.bf16.msra.mxu0 %v163
  %214 = vmatprep.subr.bf16.mxu0 0
  %215 = vmatpush1.bf16.msra.mxu0 %v164
  %216 = vmatprep.subr.bf16.mxu0 0
  %217 = vmatpush1.bf16.msra.mxu0 %v165
  %218 = vmatprep.subr.bf16.mxu0 0
  %219 = vmatpush1.bf16.msra.mxu0 %v166
  %220 = vmatprep.subr.bf16.mxu0 0
  %221 = vmatpush1.bf16.msra.mxu0 %v167
  %222 = vmatprep.subr.bf16.mxu0 0
  %223 = vmatpush1.bf16.msra.mxu0 %v168
  %224 = vmatprep.subr.bf16.mxu0 0
  %225 = vmatpush1.bf16.msra.mxu0 %v169
  %226 = vmatprep.mubr.bf16.mxu0 %v78
  %227 = vmatmul.mubr.bf16.gmra.mrb[0].mxu0 %v77
  %v228 = vpop.f32.mrb[0].mxu0
  %v229 = vadd.f32 %v65, %v228
  %v230 = vpop.f32.mrb[0].mxu0
  %v231 = vpop.f32.mrb[0].mxu0
  %v232 = vadd.f32 %v66, %v231
  %v233 = vpop.f32.mrb[0].mxu0
  %234 = vdwg.mxu0
  %235 = vmatprep.subr.bf16.mxu0 0
  %236 = vmatpush1.bf16.msra.mxu0 %v170
  %237 = vmatprep.subr.bf16.mxu0 0
  %238 = vmatpush1.bf16.msra.mxu0 %v171
  %239 = vmatprep.subr.bf16.mxu0 0
  %240 = vmatpush1.bf16.msra.mxu0 0
  %241 = vmatprep.subr.bf16.mxu0 0
  %242 = vmatpush1.bf16.msra.mxu0 0
  %243 = vmatprep.subr.bf16.mxu0 0
  %244 = vmatpush1.bf16.msra.mxu0 0
  %245 = vmatprep.subr.bf16.mxu0 0
  %246 = vmatpush1.bf16.msra.mxu0 0
  %247 = vmatprep.subr.bf16.mxu0 0
  %248 = vmatpush1.bf16.msra.mxu0 0
  %249 = vmatprep.subr.bf16.mxu0 0
  %250 = vmatpush1.bf16.msra.mxu0 0
  %251 = vmatprep.subr.bf16.mxu0 0
  %252 = vmatpush1.bf16.msra.mxu0 0
  %253 = vmatprep.subr.bf16.mxu0 0
  %254 = vmatpush1.bf16.msra.mxu0 0
  %255 = vmatprep.subr.bf16.mxu0 0
  %256 = vmatpush1.bf16.msra.mxu0 0
  %257 = vmatprep.subr.bf16.mxu0 0
  %258 = vmatpush1.bf16.msra.mxu0 0
  %259 = vmatprep.subr.bf16.mxu0 0
  %260 = vmatpush1.bf16.msra.mxu0 0
  %261 = vmatprep.subr.bf16.mxu0 0
  %262 = vmatpush1.bf16.msra.mxu0 0
  %263 = vmatprep.subr.bf16.mxu0 0
  %264 = vmatpush1.bf16.msra.mxu0 0
  %265 = vmatprep.subr.bf16.mxu0 0
  %266 = vmatpush1.bf16.msra.mxu0 0
  %267 = vmatprep.mubr.bf16.mxu0 0
  %268 = vmatmul.mubr.bf16.gmra.mrb[0].mxu0 %v192
  %v269 = vpop.f32.mrb[0].mxu0
  %v270 = vadd.f32 %v229, %v269
  %v271 = vpop.f32.mrb[0].mxu0
  %v272 = vpop.f32.mrb[0].mxu0
  %v273 = vadd.f32 %v232, %v272
  %v274 = vpop.f32.mrb[0].mxu0
  %275 = vdwg.mxu0
  %276 = vst.msk [vmem:[%s5] sm:$0xff] %vm190, %v270
  %277 = vst.msk [vmem:[%s5 + $0x8] sm:$0xff] %vm190, %v273
  %v278 = vld [vmem:[%s3] sm:$0x1]
  %v280 = vlaneseq
  %v281 = vshrl.u32 %v280, 7
  %v282 = vsub.s32 0, %v281
  %v283 = vrot.slane %v278, %v282
  %v285 = vmul.f32 %v270, %v283
  %v286 = vmul.f32 %v273, %v283
  %v287 = vld [vmem:[%s4] sm:$0x1]
  %v289 = vlaneseq
  %v290 = vshrl.u32 %v289, 7
  %v291 = vsub.s32 0, %v290
  %v292 = vrot.slane %v287, %v291
  %v294 = vadd.f32 %v285, %v292
  %v295 = vadd.f32 %v286, %v292
  %v296 = vmax.f32 %v294, 0.0
  %v297 = vmax.f32 %v295, 0.0
  %v298 = vpack.c.bf16 %v297, %v296
  %v300 = vunpack.c.l.b16 %v298
  %v301 = vunpack.c.h.b16 %v298
  %v302 = vpack.c.b16 %v300, %v300
  %v303 = vpack.c.b16 %v301, %v301
  %vm306 = vcmask 257024
  %307 = vst.msk [vmem:[%s6] sm:$0xf] %vm306, %v302
  %308 = vst.msk [vmem:[%s6 + $0x4] sm:$0xf] %vm306, %v303
  // Predicated region
  $region22: #{feature_encoder_forward.39} parent=0 // pred_check
    _
  $region23: #{feature_encoder_forward.39} parent=0 // pred_check_branch
    %310 = sbr.rel (0) target = $region25
  $region24: #{feature_encoder_forward.39} parent=0 // pred_region
    _
  $region25: #{feature_encoder_forward.39} parent=0 // pred_fallthru
    _
  // Predicated region
  $region26: #{feature_encoder_forward.39} parent=0 // pred_check
    _
  $region27: #{feature_encoder_forward.39} parent=0 // pred_check_branch
    %312 = sbr.rel (0) target = $region29
  $region28: #{feature_encoder_forward.39} parent=0 // pred_region
    _
  $region29: #{feature_encoder_forward.39} parent=0 // pred_fallthru
    _
  // Predicated region
  $region30: #{feature_encoder_forward.39} parent=0 // pred_check
    _
  $region31: #{feature_encoder_forward.39} parent=0 // pred_check_branch
    %314 = sbr.rel (0) target = $region33
  $region32: #{feature_encoder_forward.39} parent=0 // pred_region
    _
  $region33: #{feature_encoder_forward.39} parent=0 // pred_fallthru
    _
  // Predicated region
  $region34: #{feature_encoder_forward.39} parent=0 // pred_check
    _
  $region35: #{feature_encoder_forward.39} parent=0 // pred_check_branch
    %316 = sbr.rel (0) target = $region37
  $region36: #{feature_encoder_forward.39} parent=0 // pred_region
    _
  $region37: #{feature_encoder_forward.39} parent=0 // pred_fallthru
    _

// kernel: feature_encoder_forward.40
$region0: #{feature_encoder_forward.40}
  #allocation0 [shape = 'u32[]', space=smem, size = 0x4, offset = 0x4, fixed_abs, tag = 'smem constant byte address 0x4 - core index']
  #allocation1 [shape = 'u32[144,128]{1,0:T(1,128)}', space=vmem, size = 0x12000, scoped, tag = 'internal scratch']
  %s0 = inlined_call_operand.vmem [shape: bf16[16,288], index: 0, kind: input, shape index: {}]
  %s1 = inlined_call_operand.vmem [shape: bf16[288,32], index: 1, kind: input, shape index: {}]
  %s2 = inlined_call_operand.vmem [shape: f32[1,32], index: 2, kind: input, shape index: {}]
  %s3 = inlined_call_operand.vmem [shape: f32[1,32], index: 3, kind: input, shape index: {}]
  %s4 = inlined_call_operand.vmem [shape: bf16[16,32], index: 4, kind: output, shape index: {0}]
  %s5 = inlined_call_operand.vmem [shape: bf16[16,32], index: 5, kind: output, shape index: {1}]
  %6 = xla_tuple %s4, %s5
  %s7 = sld [smem:[#allocation0]]
  $region34: #{feature_encoder_forward.40} parent=0
    _
  %s9 = ssub.s32 1, %s7
  %s10 = scalar_select 0, %s9, %s7
  // Predicated region
  $region2: #{feature_encoder_forward.40} parent=0 // pred_check
    _
  $region3: #{feature_encoder_forward.40} parent=0 // pred_check_branch
    %12 = sbr.rel (0) target = $region5
  $region4: #{feature_encoder_forward.40} parent=0 // pred_region
    _
  $region5: #{feature_encoder_forward.40} parent=0 // pred_fallthru
    _
  // Predicated region
  $region6: #{feature_encoder_forward.40} parent=0 // pred_check
    _
  $region7: #{feature_encoder_forward.40} parent=0 // pred_check_branch
    %14 = sbr.rel (0) target = $region9
  $region8: #{feature_encoder_forward.40} parent=0 // pred_region
    _
  $region9: #{feature_encoder_forward.40} parent=0 // pred_fallthru
    _
  // Predicated region
  $region10: #{feature_encoder_forward.40} parent=0 // pred_check
    _
  $region11: #{feature_encoder_forward.40} parent=0 // pred_check_branch
    %16 = sbr.rel (0) target = $region13
  $region12: #{feature_encoder_forward.40} parent=0 // pred_region
    _
  $region13: #{feature_encoder_forward.40} parent=0 // pred_fallthru
    _
  // Predicated region
  $region14: #{feature_encoder_forward.40} parent=0 // pred_check
    _
  $region15: #{feature_encoder_forward.40} parent=0 // pred_check_branch
    %18 = sbr.rel (0) target = $region17
  $region16: #{feature_encoder_forward.40} parent=0 // pred_region
    _
  $region17: #{feature_encoder_forward.40} parent=0 // pred_fallthru
    _
  %v20 = vld [vmem:[%s0] sm:$0xff]
  %v21 = vld [vmem:[%s0 + $0x8] sm:$0xf]
  %v22 = vld [vmem:[%s0 + $0xc] sm:$0xff]
  %v23 = vld [vmem:[%s0 + $0x14] sm:$0xf]
  %v24 = vld [vmem:[%s1] sm:$0xf]
  %v25 = vld [vmem:[%s1 + $0x4] sm:$0xf]
  %v26 = vld [vmem:[%s1 + $0x8] sm:$0xf]
  %v27 = vld [vmem:[%s1 + $0xc] sm:$0xf]
  %v28 = vld [vmem:[%s1 + $0x10] sm:$0xf]
  %v29 = vld [vmem:[%s1 + $0x14] sm:$0xf]
  %v30 = vld [vmem:[%s1 + $0x18] sm:$0xf]
  %v31 = vld [vmem:[%s1 + $0x1c] sm:$0xf]
  %v32 = vld [vmem:[%s1 + $0x20] sm:$0xf]
  %v33 = vld [vmem:[%s1 + $0x24] sm:$0xf]
  %v34 = vld [vmem:[%s1 + $0x28] sm:$0xf]
  %v35 = vld [vmem:[%s1 + $0x2c] sm:$0xf]
  %v36 = vld [vmem:[%s1 + $0x30] sm:$0xf]
  %v37 = vld [vmem:[%s1 + $0x34] sm:$0xf]
  %v38 = vld [vmem:[%s1 + $0x38] sm:$0xf]
  %v39 = vld [vmem:[%s1 + $0x3c] sm:$0xf]
  %v40 = vld [vmem:[%s1 + $0x40] sm:$0xf]
  %v41 = vld [vmem:[%s1 + $0x44] sm:$0xf]
  %v42 = vld [vmem:[%s1 + $0x48] sm:$0xf]
  %v43 = vld [vmem:[%s1 + $0x4c] sm:$0xf]
  %v44 = vld [vmem:[%s1 + $0x50] sm:$0xf]
  %v45 = vld [vmem:[%s1 + $0x54] sm:$0xf]
  %v46 = vld [vmem:[%s1 + $0x58] sm:$0xf]
  %v47 = vld [vmem:[%s1 + $0x5c] sm:$0xf]
  %v48 = vld [vmem:[%s1 + $0x60] sm:$0xf]
  %v49 = vld [vmem:[%s1 + $0x64] sm:$0xf]
  %v50 = vld [vmem:[%s1 + $0x68] sm:$0xf]
  %v51 = vld [vmem:[%s1 + $0x6c] sm:$0xf]
  %v52 = vld [vmem:[%s1 + $0x70] sm:$0xf]
  %v53 = vld [vmem:[%s1 + $0x74] sm:$0xf]
  %v54 = vld [vmem:[%s1 + $0x78] sm:$0xf]
  %v55 = vld [vmem:[%s1 + $0x7c] sm:$0xf]
  %v56 = vld [vmem:[%s1 + $0x80] sm:$0xf]
  %v57 = vld [vmem:[%s1 + $0x84] sm:$0xf]
  %v58 = vld [vmem:[%s1 + $0x88] sm:$0xf]
  %v59 = vld [vmem:[%s1 + $0x8c] sm:$0xf]
  %v64 = vunpack.c.l.b16 %v20
  %v65 = vunpack.c.h.b16 %v20
  %v66 = vunpack.c.l.b16 %v21
  %v67 = vunpack.c.l.b16 %v22
  %v68 = vunpack.c.h.b16 %v22
  %v69 = vunpack.c.l.b16 %v23
  %v70 = vpack.c.b16 %v67, %v64
  %v71 = vpack.c.b16 %v68, %v65
  %v72 = vpack.c.b16 %v69, %v66
  %v111 = vunpack.c.l.b16 %v24
  %v112 = vunpack.c.l.b16 %v25
  %v113 = vunpack.c.l.b16 %v26
  %v114 = vunpack.c.l.b16 %v27
  %v115 = vunpack.c.l.b16 %v28
  %v116 = vunpack.c.l.b16 %v29
  %v117 = vunpack.c.l.b16 %v30
  %v118 = vunpack.c.l.b16 %v31
  %v119 = vunpack.c.l.b16 %v32
  %v120 = vunpack.c.l.b16 %v33
  %v121 = vunpack.c.l.b16 %v34
  %v122 = vunpack.c.l.b16 %v35
  %v123 = vunpack.c.l.b16 %v36
  %v124 = vunpack.c.l.b16 %v37
  %v125 = vunpack.c.l.b16 %v38
  %v126 = vunpack.c.l.b16 %v39
  %v127 = vunpack.c.l.b16 %v40
  %v128 = vunpack.c.l.b16 %v41
  %v129 = vunpack.c.l.b16 %v42
  %v130 = vunpack.c.l.b16 %v43
  %v131 = vunpack.c.l.b16 %v44
  %v132 = vunpack.c.l.b16 %v45
  %v133 = vunpack.c.l.b16 %v46
  %v134 = vunpack.c.l.b16 %v47
  %v135 = vunpack.c.l.b16 %v48
  %v136 = vunpack.c.l.b16 %v49
  %v137 = vunpack.c.l.b16 %v50
  %v138 = vunpack.c.l.b16 %v51
  %v139 = vunpack.c.l.b16 %v52
  %v140 = vunpack.c.l.b16 %v53
  %v141 = vunpack.c.l.b16 %v54
  %v142 = vunpack.c.l.b16 %v55
  %v143 = vunpack.c.l.b16 %v56
  %v144 = vunpack.c.l.b16 %v57
  %v145 = vunpack.c.l.b16 %v58
  %v146 = vunpack.c.l.b16 %v59
  %v147 = vpack.c.b16 %v112, %v111
  %v148 = vpack.c.b16 %v114, %v113
  %v149 = vpack.c.b16 %v116, %v115
  %v150 = vpack.c.b16 %v118, %v117
  %v151 = vpack.c.b16 %v120, %v119
  %v152 = vpack.c.b16 %v122, %v121
  %v153 = vpack.c.b16 %v124, %v123
  %v154 = vpack.c.b16 %v126, %v125
  %v155 = vpack.c.b16 %v128, %v127
  %v156 = vpack.c.b16 %v130, %v129
  %v157 = vpack.c.b16 %v132, %v131
  %v158 = vpack.c.b16 %v134, %v133
  %v159 = vpack.c.b16 %v136, %v135
  %v160 = vpack.c.b16 %v138, %v137
  %v161 = vpack.c.b16 %v140, %v139
  %v162 = vpack.c.b16 %v142, %v141
  %v163 = vpack.c.b16 %v144, %v143
  %v164 = vpack.c.b16 %v146, %v145
  %vm183 = vcmask 261120
  %v185 = vsel %vm183, %v72, 0
  %187 = vmatprep.subr.bf16.mxu0 0
  %188 = vmatpush1.bf16.msra.mxu0 %v147
  %189 = vmatprep.subr.bf16.mxu0 0
  %190 = vmatpush1.bf16.msra.mxu0 %v148
  %191 = vmatprep.subr.bf16.mxu0 0
  %192 = vmatpush1.bf16.msra.mxu0 %v149
  %193 = vmatprep.subr.bf16.mxu0 0
  %194 = vmatpush1.bf16.msra.mxu0 %v150
  %195 = vmatprep.subr.bf16.mxu0 0
  %196 = vmatpush1.bf16.msra.mxu0 %v151
  %197 = vmatprep.subr.bf16.mxu0 0
  %198 = vmatpush1.bf16.msra.mxu0 %v152
  %199 = vmatprep.subr.bf16.mxu0 0
  %200 = vmatpush1.bf16.msra.mxu0 %v153
  %201 = vmatprep.subr.bf16.mxu0 0
  %202 = vmatpush1.bf16.msra.mxu0 %v154
  %203 = vmatprep.subr.bf16.mxu0 0
  %204 = vmatpush1.bf16.msra.mxu0 %v155
  %205 = vmatprep.subr.bf16.mxu0 0
  %206 = vmatpush1.bf16.msra.mxu0 %v156
  %207 = vmatprep.subr.bf16.mxu0 0
  %208 = vmatpush1.bf16.msra.mxu0 %v157
  %209 = vmatprep.subr.bf16.mxu0 0
  %210 = vmatpush1.bf16.msra.mxu0 %v158
  %211 = vmatprep.subr.bf16.mxu0 0
  %212 = vmatpush1.bf16.msra.mxu0 %v159
  %213 = vmatprep.subr.bf16.mxu0 0
  %214 = vmatpush1.bf16.msra.mxu0 %v160
  %215 = vmatprep.subr.bf16.mxu0 0
  %216 = vmatpush1.bf16.msra.mxu0 %v161
  %217 = vmatprep.subr.bf16.mxu0 0
  %218 = vmatpush1.bf16.msra.mxu0 %v162
  %219 = vmatprep.mubr.bf16.mxu0 %v71
  %220 = vmatmul.mubr.bf16.gmra.mrb[0].mxu0 %v70
  %v221 = vpop.f32.mrb[0].mxu0
  %v222 = vadd.f32 0.0, %v221
  %v223 = vpop.f32.mrb[0].mxu0
  %v224 = vpop.f32.mrb[0].mxu0
  %v225 = vadd.f32 0.0, %v224
  %v226 = vpop.f32.mrb[0].mxu0
  %227 = vdwg.mxu0
  %228 = vmatprep.subr.bf16.mxu0 0
  %229 = vmatpush1.bf16.msra.mxu0 %v163
  %230 = vmatprep.subr.bf16.mxu0 0
  %231 = vmatpush1.bf16.msra.mxu0 %v164
  %232 = vmatprep.subr.bf16.mxu0 0
  %233 = vmatpush1.bf16.msra.mxu0 0
  %234 = vmatprep.subr.bf16.mxu0 0
  %235 = vmatpush1.bf16.msra.mxu0 0
  %236 = vmatprep.subr.bf16.mxu0 0
  %237 = vmatpush1.bf16.msra.mxu0 0
  %238 = vmatprep.subr.bf16.mxu0 0
  %239 = vmatpush1.bf16.msra.mxu0 0
  %240 = vmatprep.subr.bf16.mxu0 0
  %241 = vmatpush1.bf16.msra.mxu0 0
  %242 = vmatprep.subr.bf16.mxu0 0
  %243 = vmatpush1.bf16.msra.mxu0 0
  %244 = vmatprep.subr.bf16.mxu0 0
  %245 = vmatpush1.bf16.msra.mxu0 0
  %246 = vmatprep.subr.bf16.mxu0 0
  %247 = vmatpush1.bf16.msra.mxu0 0
  %248 = vmatprep.subr.bf16.mxu0 0
  %249 = vmatpush1.bf16.msra.mxu0 0
  %250 = vmatprep.subr.bf16.mxu0 0
  %251 = vmatpush1.bf16.msra.mxu0 0
  %252 = vmatprep.subr.bf16.mxu0 0
  %253 = vmatpush1.bf16.msra.mxu0 0
  %254 = vmatprep.subr.bf16.mxu0 0
  %255 = vmatpush1.bf16.msra.mxu0 0
  %256 = vmatprep.subr.bf16.mxu0 0
  %257 = vmatpush1.bf16.msra.mxu0 0
  %258 = vmatprep.subr.bf16.mxu0 0
  %259 = vmatpush1.bf16.msra.mxu0 0
  %260 = vmatprep.mubr.bf16.mxu0 0
  %261 = vmatmul.mubr.bf16.gmra.mrb[0].mxu0 %v185
  %v262 = vpop.f32.mrb[0].mxu0
  %v263 = vadd.f32 %v222, %v262
  %v264 = vpop.f32.mrb[0].mxu0
  %v265 = vpop.f32.mrb[0].mxu0
  %v266 = vadd.f32 %v225, %v265
  %v267 = vpop.f32.mrb[0].mxu0
  %268 = vdwg.mxu0
  %v269 = vpack.c.bf16 %v266, %v263
  %v271 = vunpack.c.l.b16 %v269
  %v272 = vunpack.c.h.b16 %v269
  %v273 = vpack.c.b16 %v271, %v271
  %v274 = vpack.c.b16 %v272, %v272
  %vm277 = vcmask 257024
  %278 = vst.msk [vmem:[%s4] sm:$0xf] %vm277, %v273
  %279 = vst.msk [vmem:[%s4 + $0x4] sm:$0xf] %vm277, %v274
  %v280 = vld [vmem:[%s2] sm:$0x1]
  %v282 = vlaneseq
  %v283 = vshrl.u32 %v282, 7
  %v284 = vsub.s32 0, %v283
  %v285 = vrot.slane %v280, %v284
  %v287 = vmul.f32 %v263, %v285
  %v288 = vmul.f32 %v266, %v285
  %v289 = vld [vmem:[%s3] sm:$0x1]
  %v291 = vlaneseq
  %v292 = vshrl.u32 %v291, 7
  %v293 = vsub.s32 0, %v292
  %v294 = vrot.slane %v289, %v293
  %v296 = vadd.f32 %v287, %v294
  %v297 = vadd.f32 %v288, %v294
  %v298 = vmax.f32 %v296, 0.0
  %v299 = vmax.f32 %v297, 0.0
  %v300 = vpack.c.bf16 %v299, %v298
  %v302 = vunpack.c.l.b16 %v300
  %v303 = vunpack.c.h.b16 %v300
  %v304 = vpack.c.b16 %v302, %v302
  %v305 = vpack.c.b16 %v303, %v303
  %308 = vst.msk [vmem:[%s5] sm:$0xf] %vm277, %v304
  %309 = vst.msk [vmem:[%s5 + $0x4] sm:$0xf] %vm277, %v305
  // Predicated region
  $region18: #{feature_encoder_forward.40} parent=0 // pred_check
    _
  $region19: #{feature_encoder_forward.40} parent=0 // pred_check_branch
    %311 = sbr.rel (0) target = $region21
  $region20: #{feature_encoder_forward.40} parent=0 // pred_region
    _
  $region21: #{feature_encoder_forward.40} parent=0 // pred_fallthru
    _
  // Predicated region
  $region22: #{feature_encoder_forward.40} parent=0 // pred_check
    _
  $region23: #{feature_encoder_forward.40} parent=0 // pred_check_branch
    %313 = sbr.rel (0) target = $region25
  $region24: #{feature_encoder_forward.40} parent=0 // pred_region
    _
  $region25: #{feature_encoder_forward.40} parent=0 // pred_fallthru
    _
  // Predicated region
  $region26: #{feature_encoder_forward.40} parent=0 // pred_check
    _
  $region27: #{feature_encoder_forward.40} parent=0 // pred_check_branch
    %315 = sbr.rel (0) target = $region29
  $region28: #{feature_encoder_forward.40} parent=0 // pred_region
    _
  $region29: #{feature_encoder_forward.40} parent=0 // pred_fallthru
    _
  // Predicated region
  $region30: #{feature_encoder_forward.40} parent=0 // pred_check
    _
  $region31: #{feature_encoder_forward.40} parent=0 // pred_check_branch
    %317 = sbr.rel (0) target = $region33
  $region32: #{feature_encoder_forward.40} parent=0 // pred_region
    _
  $region33: #{feature_encoder_forward.40} parent=0 // pred_fallthru
    _

// kernel: feature_encoder_forward.49
$region0: #{feature_encoder_forward.49}
  #allocation0 [shape = 'u32[]', space=smem, size = 0x4, offset = 0x4, fixed_abs, tag = 'smem constant byte address 0x4 - core index']
  #allocation1 [shape = 'u32[144,128]{1,0:T(1,128)}', space=vmem, size = 0x12000, scoped, tag = 'internal scratch']
  %s0 = inlined_call_operand.vmem [shape: bf16[16,288], index: 0, kind: input, shape index: {}]
  %s1 = inlined_call_operand.vmem [shape: bf16[288,32], index: 1, kind: input, shape index: {}]
  %s2 = inlined_call_operand.vmem [shape: bf16[16,32], index: 2, kind: input, shape index: {}]
  %s3 = inlined_call_operand.vmem [shape: f32[16,32], index: 3, kind: output, shape index: {}]
  %s4 = sld [smem:[#allocation0]]
  $region22: #{feature_encoder_forward.49} parent=0
    _
  %s6 = ssub.s32 1, %s4
  %s7 = scalar_select 0, %s6, %s4
  // Predicated region
  $region2: #{feature_encoder_forward.49} parent=0 // pred_check
    _
  $region3: #{feature_encoder_forward.49} parent=0 // pred_check_branch
    %9 = sbr.rel (0) target = $region5
  $region4: #{feature_encoder_forward.49} parent=0 // pred_region
    _
  $region5: #{feature_encoder_forward.49} parent=0 // pred_fallthru
    _
  // Predicated region
  $region6: #{feature_encoder_forward.49} parent=0 // pred_check
    _
  $region7: #{feature_encoder_forward.49} parent=0 // pred_check_branch
    %11 = sbr.rel (0) target = $region9
  $region8: #{feature_encoder_forward.49} parent=0 // pred_region
    _
  $region9: #{feature_encoder_forward.49} parent=0 // pred_fallthru
    _
  // Predicated region
  $region10: #{feature_encoder_forward.49} parent=0 // pred_check
    _
  $region11: #{feature_encoder_forward.49} parent=0 // pred_check_branch
    %13 = sbr.rel (0) target = $region13
  $region12: #{feature_encoder_forward.49} parent=0 // pred_region
    _
  $region13: #{feature_encoder_forward.49} parent=0 // pred_fallthru
    _
  %v15 = vld [vmem:[%s0] sm:$0xff]
  %v16 = vld [vmem:[%s0 + $0x8] sm:$0xf]
  %v17 = vld [vmem:[%s0 + $0xc] sm:$0xff]
  %v18 = vld [vmem:[%s0 + $0x14] sm:$0xf]
  %v19 = vld [vmem:[%s1] sm:$0xf]
  %v20 = vld [vmem:[%s1 + $0x4] sm:$0xf]
  %v21 = vld [vmem:[%s1 + $0x8] sm:$0xf]
  %v22 = vld [vmem:[%s1 + $0xc] sm:$0xf]
  %v23 = vld [vmem:[%s1 + $0x10] sm:$0xf]
  %v24 = vld [vmem:[%s1 + $0x14] sm:$0xf]
  %v25 = vld [vmem:[%s1 + $0x18] sm:$0xf]
  %v26 = vld [vmem:[%s1 + $0x1c] sm:$0xf]
  %v27 = vld [vmem:[%s1 + $0x20] sm:$0xf]
  %v28 = vld [vmem:[%s1 + $0x24] sm:$0xf]
  %v29 = vld [vmem:[%s1 + $0x28] sm:$0xf]
  %v30 = vld [vmem:[%s1 + $0x2c] sm:$0xf]
  %v31 = vld [vmem:[%s1 + $0x30] sm:$0xf]
  %v32 = vld [vmem:[%s1 + $0x34] sm:$0xf]
  %v33 = vld [vmem:[%s1 + $0x38] sm:$0xf]
  %v34 = vld [vmem:[%s1 + $0x3c] sm:$0xf]
  %v35 = vld [vmem:[%s1 + $0x40] sm:$0xf]
  %v36 = vld [vmem:[%s1 + $0x44] sm:$0xf]
  %v37 = vld [vmem:[%s1 + $0x48] sm:$0xf]
  %v38 = vld [vmem:[%s1 + $0x4c] sm:$0xf]
  %v39 = vld [vmem:[%s1 + $0x50] sm:$0xf]
  %v40 = vld [vmem:[%s1 + $0x54] sm:$0xf]
  %v41 = vld [vmem:[%s1 + $0x58] sm:$0xf]
  %v42 = vld [vmem:[%s1 + $0x5c] sm:$0xf]
  %v43 = vld [vmem:[%s1 + $0x60] sm:$0xf]
  %v44 = vld [vmem:[%s1 + $0x64] sm:$0xf]
  %v45 = vld [vmem:[%s1 + $0x68] sm:$0xf]
  %v46 = vld [vmem:[%s1 + $0x6c] sm:$0xf]
  %v47 = vld [vmem:[%s1 + $0x70] sm:$0xf]
  %v48 = vld [vmem:[%s1 + $0x74] sm:$0xf]
  %v49 = vld [vmem:[%s1 + $0x78] sm:$0xf]
  %v50 = vld [vmem:[%s1 + $0x7c] sm:$0xf]
  %v51 = vld [vmem:[%s1 + $0x80] sm:$0xf]
  %v52 = vld [vmem:[%s1 + $0x84] sm:$0xf]
  %v53 = vld [vmem:[%s1 + $0x88] sm:$0xf]
  %v54 = vld [vmem:[%s1 + $0x8c] sm:$0xf]
  %v55 = vld [vmem:[%s2] sm:$0xf]
  %v56 = vld [vmem:[%s2 + $0x4] sm:$0xf]
  %v57 = vunpack.c.l.bf16 %v55
  %v58 = vunpack.c.l.bf16 %v56
  %v63 = vunpack.c.l.b16 %v15
  %v64 = vunpack.c.h.b16 %v15
  %v65 = vunpack.c.l.b16 %v16
  %v66 = vunpack.c.l.b16 %v17
  %v67 = vunpack.c.h.b16 %v17
  %v68 = vunpack.c.l.b16 %v18
  %v69 = vpack.c.b16 %v66, %v63
  %v70 = vpack.c.b16 %v67, %v64
  %v71 = vpack.c.b16 %v68, %v65
  %v110 = vunpack.c.l.b16 %v19
  %v111 = vunpack.c.l.b16 %v20
  %v112 = vunpack.c.l.b16 %v21
  %v113 = vunpack.c.l.b16 %v22
  %v114 = vunpack.c.l.b16 %v23
  %v115 = vunpack.c.l.b16 %v24
  %v116 = vunpack.c.l.b16 %v25
  %v117 = vunpack.c.l.b16 %v26
  %v118 = vunpack.c.l.b16 %v27
  %v119 = vunpack.c.l.b16 %v28
  %v120 = vunpack.c.l.b16 %v29
  %v121 = vunpack.c.l.b16 %v30
  %v122 = vunpack.c.l.b16 %v31
  %v123 = vunpack.c.l.b16 %v32
  %v124 = vunpack.c.l.b16 %v33
  %v125 = vunpack.c.l.b16 %v34
  %v126 = vunpack.c.l.b16 %v35
  %v127 = vunpack.c.l.b16 %v36
  %v128 = vunpack.c.l.b16 %v37
  %v129 = vunpack.c.l.b16 %v38
  %v130 = vunpack.c.l.b16 %v39
  %v131 = vunpack.c.l.b16 %v40
  %v132 = vunpack.c.l.b16 %v41
  %v133 = vunpack.c.l.b16 %v42
  %v134 = vunpack.c.l.b16 %v43
  %v135 = vunpack.c.l.b16 %v44
  %v136 = vunpack.c.l.b16 %v45
  %v137 = vunpack.c.l.b16 %v46
  %v138 = vunpack.c.l.b16 %v47
  %v139 = vunpack.c.l.b16 %v48
  %v140 = vunpack.c.l.b16 %v49
  %v141 = vunpack.c.l.b16 %v50
  %v142 = vunpack.c.l.b16 %v51
  %v143 = vunpack.c.l.b16 %v52
  %v144 = vunpack.c.l.b16 %v53
  %v145 = vunpack.c.l.b16 %v54
  %v146 = vpack.c.b16 %v111, %v110
  %v147 = vpack.c.b16 %v113, %v112
  %v148 = vpack.c.b16 %v115, %v114
  %v149 = vpack.c.b16 %v117, %v116
  %v150 = vpack.c.b16 %v119, %v118
  %v151 = vpack.c.b16 %v121, %v120
  %v152 = vpack.c.b16 %v123, %v122
  %v153 = vpack.c.b16 %v125, %v124
  %v154 = vpack.c.b16 %v127, %v126
  %v155 = vpack.c.b16 %v129, %v128
  %v156 = vpack.c.b16 %v131, %v130
  %v157 = vpack.c.b16 %v133, %v132
  %v158 = vpack.c.b16 %v135, %v134
  %v159 = vpack.c.b16 %v137, %v136
  %v160 = vpack.c.b16 %v139, %v138
  %v161 = vpack.c.b16 %v141, %v140
  %v162 = vpack.c.b16 %v143, %v142
  %v163 = vpack.c.b16 %v145, %v144
  %vm182 = vcmask 261120
  %v184 = vsel %vm182, %v71, 0
  %186 = vmatprep.subr.bf16.mxu0 0
  %187 = vmatpush1.bf16.msra.mxu0 %v146
  %188 = vmatprep.subr.bf16.mxu0 0
  %189 = vmatpush1.bf16.msra.mxu0 %v147
  %190 = vmatprep.subr.bf16.mxu0 0
  %191 = vmatpush1.bf16.msra.mxu0 %v148
  %192 = vmatprep.subr.bf16.mxu0 0
  %193 = vmatpush1.bf16.msra.mxu0 %v149
  %194 = vmatprep.subr.bf16.mxu0 0
  %195 = vmatpush1.bf16.msra.mxu0 %v150
  %196 = vmatprep.subr.bf16.mxu0 0
  %197 = vmatpush1.bf16.msra.mxu0 %v151
  %198 = vmatprep.subr.bf16.mxu0 0
  %199 = vmatpush1.bf16.msra.mxu0 %v152
  %200 = vmatprep.subr.bf16.mxu0 0
  %201 = vmatpush1.bf16.msra.mxu0 %v153
  %202 = vmatprep.subr.bf16.mxu0 0
  %203 = vmatpush1.bf16.msra.mxu0 %v154
  %204 = vmatprep.subr.bf16.mxu0 0
  %205 = vmatpush1.bf16.msra.mxu0 %v155
  %206 = vmatprep.subr.bf16.mxu0 0
  %207 = vmatpush1.bf16.msra.mxu0 %v156
  %208 = vmatprep.subr.bf16.mxu0 0
  %209 = vmatpush1.bf16.msra.mxu0 %v157
  %210 = vmatprep.subr.bf16.mxu0 0
  %211 = vmatpush1.bf16.msra.mxu0 %v158
  %212 = vmatprep.subr.bf16.mxu0 0
  %213 = vmatpush1.bf16.msra.mxu0 %v159
  %214 = vmatprep.subr.bf16.mxu0 0
  %215 = vmatpush1.bf16.msra.mxu0 %v160
  %216 = vmatprep.subr.bf16.mxu0 0
  %217 = vmatpush1.bf16.msra.mxu0 %v161
  %218 = vmatprep.mubr.bf16.mxu0 %v70
  %219 = vmatmul.mubr.bf16.gmra.mrb[0].mxu0 %v69
  %v220 = vpop.f32.mrb[0].mxu0
  %v221 = vadd.f32 %v57, %v220
  %v222 = vpop.f32.mrb[0].mxu0
  %v223 = vpop.f32.mrb[0].mxu0
  %v224 = vadd.f32 %v58, %v223
  %v225 = vpop.f32.mrb[0].mxu0
  %226 = vdwg.mxu0
  %227 = vmatprep.subr.bf16.mxu0 0
  %228 = vmatpush1.bf16.msra.mxu0 %v162
  %229 = vmatprep.subr.bf16.mxu0 0
  %230 = vmatpush1.bf16.msra.mxu0 %v163
  %231 = vmatprep.subr.bf16.mxu0 0
  %232 = vmatpush1.bf16.msra.mxu0 0
  %233 = vmatprep.subr.bf16.mxu0 0
  %234 = vmatpush1.bf16.msra.mxu0 0
  %235 = vmatprep.subr.bf16.mxu0 0
  %236 = vmatpush1.bf16.msra.mxu0 0
  %237 = vmatprep.subr.bf16.mxu0 0
  %238 = vmatpush1.bf16.msra.mxu0 0
  %239 = vmatprep.subr.bf16.mxu0 0
  %240 = vmatpush1.bf16.msra.mxu0 0
  %241 = vmatprep.subr.bf16.mxu0 0
  %242 = vmatpush1.bf16.msra.mxu0 0
  %243 = vmatprep.subr.bf16.mxu0 0
  %244 = vmatpush1.bf16.msra.mxu0 0
  %245 = vmatprep.subr.bf16.mxu0 0
  %246 = vmatpush1.bf16.msra.mxu0 0
  %247 = vmatprep.subr.bf16.mxu0 0
  %248 = vmatpush1.bf16.msra.mxu0 0
  %249 = vmatprep.subr.bf16.mxu0 0
  %250 = vmatpush1.bf16.msra.mxu0 0
  %251 = vmatprep.subr.bf16.mxu0 0
  %252 = vmatpush1.bf16.msra.mxu0 0
  %253 = vmatprep.subr.bf16.mxu0 0
  %254 = vmatpush1.bf16.msra.mxu0 0
  %255 = vmatprep.subr.bf16.mxu0 0
  %256 = vmatpush1.bf16.msra.mxu0 0
  %257 = vmatprep.subr.bf16.mxu0 0
  %258 = vmatpush1.bf16.msra.mxu0 0
  %259 = vmatprep.mubr.bf16.mxu0 0
  %260 = vmatmul.mubr.bf16.gmra.mrb[0].mxu0 %v184
  %v261 = vpop.f32.mrb[0].mxu0
  %v262 = vadd.f32 %v221, %v261
  %v263 = vpop.f32.mrb[0].mxu0
  %v264 = vpop.f32.mrb[0].mxu0
  %v265 = vadd.f32 %v224, %v264
  %v266 = vpop.f32.mrb[0].mxu0
  %267 = vdwg.mxu0
  %268 = vst.msk [vmem:[%s3] sm:$0xff] %vm182, %v262
  %269 = vst.msk [vmem:[%s3 + $0x8] sm:$0xff] %vm182, %v265
  // Predicated region
  $region14: #{feature_encoder_forward.49} parent=0 // pred_check
    _
  $region15: #{feature_encoder_forward.49} parent=0 // pred_check_branch
    %271 = sbr.rel (0) target = $region17
  $region16: #{feature_encoder_forward.49} parent=0 // pred_region
    _
  $region17: #{feature_encoder_forward.49} parent=0 // pred_fallthru
    _
  // Predicated region
  $region18: #{feature_encoder_forward.49} parent=0 // pred_check
    _
  $region19: #{feature_encoder_forward.49} parent=0 // pred_check_branch
    %273 = sbr.rel (0) target = $region21
  $region20: #{feature_encoder_forward.49} parent=0 // pred_region
    _
  $region21: #{feature_encoder_forward.49} parent=0 // pred_fallthru
    _

</llo_original>
